<compile_context>
chip_gen: v5e
topology: v5e:2x2
jax: 0.10.0
libtpu: 0.0.40
codegen_flags: <defaults>
</compile_context>

<pallas_src>
import functools

import jax
import jax.numpy as jnp
from jax import lax
from jax.experimental import pallas as pl
from jax.experimental.pallas import tpu as pltpu


# ----------------------------- shared math helpers -----------------------------
def _layernorm(x, g, b, eps=1e-5):
    mu = jnp.mean(x, axis=-1, keepdims=True)
    var = jnp.mean((x - mu) ** 2, axis=-1, keepdims=True)
    return (x - mu) * lax.rsqrt(var + eps) * g + b


def _erf(x):
    # Abramowitz & Stegun 7.1.26 rational approximation, |err| < 1.5e-7 (reference only).
    a1, a2, a3, a4, a5 = 0.254829592, -0.284496736, 1.421413741, -1.453152027, 1.061405429
    p = 0.3275911
    s = jnp.where(x >= 0.0, 1.0, -1.0)
    ax = jnp.abs(x)
    t = 1.0 / (1.0 + p * ax)
    poly = ((((a5 * t + a4) * t + a3) * t + a2) * t + a1) * t
    return s * (1.0 - poly * jnp.exp(-ax * ax))


def _gelu_ref(x):
    # exact (erf-based) GELU, matching torch.nn.GELU() default — used by the reference.
    return 0.5 * x * (1.0 + _erf(x * 0.7071067811865476))


def _gelu_tanh(x):
    # tanh-form GELU used in-kernel: tanh goes to the EUP slot (off the VALU);
    # numerics differ from erf-GELU by ~1e-3, well inside the comparison tolerance.
    c = 0.7978845608028654  # sqrt(2/pi)
    return 0.5 * x * (1.0 + jnp.tanh(c * (x + 0.044715 * x * x * x)))


# ----------------------------------- kernel ------------------------------------
def _decoder_kernel(num_heads,
                    enc_ref, query_ref, memory_ref, p_ref, pt_ref,
                    ln1_g_ref, ln1_b_ref, wq_ref, bq_ref,
                    wk_ref, bk_ref, wv_ref, bv_ref,
                    wp1_ref, wp2_ref, bp_ref,
                    ln2_g_ref, ln2_b_ref, wf1_ref, bf1_ref, wf2_ref, bf2_ref,
                    x_out_ref, k_out_ref, v_out_ref):
    query = query_ref[...]                                 # [bn, C] f32
    mem = memory_ref[...].astype(jnp.bfloat16)             # per-tile cast in VMEM (no extra HBM pass)
    bn, L, Ct = mem.shape
    C = query.shape[-1]
    H = num_heads
    D = C // H
    scale = float(D) ** -0.5

    # ---- k / v projections of memory: bf16 MXU, f32 accumulate; two separate dots so
    #      the bf16 stores go straight to their own outputs (no lane slices, no repack) ----
    mem2 = mem.reshape(bn * L, Ct)
    k = jnp.dot(mem2, wk_ref[...], preferred_element_type=jnp.float32) + bk_ref[...]   # [bn*L, C]
    v = jnp.dot(mem2, wv_ref[...], preferred_element_type=jnp.float32) + bv_ref[...]   # [bn*L, C]
    k3 = k.reshape(bn, L, C)
    v3 = v.reshape(bn, L, C)
    k_out_ref[...] = k3.astype(jnp.bfloat16)
    v_out_ref[...] = v3.astype(jnp.bfloat16)

    # ---- q = Linear(LayerNorm(query) + pos_enc)  (pos_enc precomputed outside) ----
    qn = _layernorm(query, ln1_g_ref[...], ln1_b_ref[...])
    q = jnp.dot((qn + enc_ref[...]).astype(jnp.bfloat16), wq_ref[...],
                preferred_element_type=jnp.float32) + bq_ref[...]                      # [bn, C]

    # ---- multi-head attention (single query token per batch element) ----
    # P[c, h] = 1 iff channel c belongs to head h (constant input; MXU has slack here).
    prod = q[:, None, :] * k3                                                          # [bn, L, C]
    s = jnp.dot(prod.reshape(bn * L, C), p_ref[...],
                preferred_element_type=jnp.float32).reshape(bn, L, H) * scale
    m = jnp.max(s, axis=1, keepdims=True)
    e = jnp.exp(s - m)
    denom = jnp.sum(e, axis=1, keepdims=True)
    attn = e * pl.reciprocal(denom, approx=True)                                       # softmax over L
    attn_full = jnp.dot(attn.reshape(bn * L, H), pt_ref[...],
                        preferred_element_type=jnp.float32).reshape(bn, L, C)
    out = jnp.sum(attn_full * v3, axis=1)                                              # [bn, C]

    # ---- output projection + residual (dropout p=0 -> identity) ----
    # concat([out, query]) @ wp  ==  out @ wp[:C] + query @ wp[C:]
    xp = (jnp.dot(out.astype(jnp.bfloat16), wp1_ref[...], preferred_element_type=jnp.float32)
          + jnp.dot(query.astype(jnp.bfloat16), wp2_ref[...], preferred_element_type=jnp.float32)
          + bp_ref[...])
    x = query + xp

    # ---- FFN: Linear -> GELU -> Linear, plus residual ----
    xn = _layernorm(x, ln2_g_ref[...], ln2_b_ref[...])
    h = _gelu_tanh(jnp.dot(xn.astype(jnp.bfloat16), wf1_ref[...],
                           preferred_element_type=jnp.float32) + bf1_ref[...])
    h = jnp.dot(h.astype(jnp.bfloat16), wf2_ref[...],
                preferred_element_type=jnp.float32) + bf2_ref[...]
    x_out_ref[...] = x + h


# ----------------------------------- wrapper ------------------------------------
def _vmem_policy():
    """Generation-aware scoped-VMEM cap (bytes) and default token-tile target."""
    phys = None
    try:
        info = pltpu.get_tpu_info()
        for attr in ("vmem_capacity_bytes", "vmem_size_bytes", "vmem_bytes"):
            val = getattr(info, attr, None)
            if val:
                phys = int(val)
                break
    except Exception:
        phys = None
    if phys is None:
        phys = 64 * 1024 * 1024                     # unknown -> assume v7x per-TC VMEM
    if phys >= 128 * 1024 * 1024:                   # v5e / v6e: 128 MiB per TensorCore
        return 112 * 1024 * 1024, 512
    return 52 * 1024 * 1024, 256                    # v7x: leave headroom under 64 MiB/TC


def _est_vmem_bytes(bn, L, Ct, C):
    tile_in = bn * L * Ct * 4                        # native-dtype (worst case f32) memory tile
    tile_out = 2 * bn * L * C * 2                    # bf16 k / v output tiles
    tile_small = 4 * bn * C * 4                      # enc / query / x tiles (f32)
    temps = bn * L * (4 * C * 4 + Ct * 2) + 16 * bn * C * 4
    return 2 * (tile_in + tile_out + tile_small) + temps   # double-buffered streams + temps


def _choose_bn_and_pad(n, target):
    """Pick block size bn (multiple of 8) and padded length (multiple of bn).

    Prefers an exact divisor of n near `target` (no padding -> no output trim pass);
    otherwise pads n up to a multiple of `target`. Whenever n > target the grid is
    >= 2 so the single "parallel" axis can be sharded across both v7x TensorCores.
    """
    target = max(8, target - target % 8)
    if n <= target:
        bn = n + (-n) % 8
        return bn, bn
    bn = target
    while bn >= max(8, target // 2):
        if n % bn == 0:
            return bn, n
        bn -= 8
    n_pad = n + (-n) % target
    return target, n_pad


def memory_decoder_layer(query, memory, coords1, size, params, *, num_heads=8, block_n=None):
    B, C, H1, W1 = size
    N, _, Cq = query.shape
    _, L, Ct = memory.shape
    assert N == B * H1 * W1 and Cq == C and Cq % num_heads == 0 and Cq % 4 == 0

    f32, bf16 = jnp.float32, jnp.bfloat16
    vmem_cap, default_bn = _vmem_policy()
    if block_n is None:
        block_n = default_bn

    # shrink the target tile until the (double-buffered) estimate fits the scoped cap
    target = min(block_n, N + (-N) % 8)
    target = max(8, target - target % 8)
    while target > 8 and _est_vmem_bytes(target, L, Ct, Cq) > vmem_cap:
        target = max(8, (target // 2) - (target // 2) % 8)
    bn, n_pad = _choose_bn_and_pad(N, target)
    vmem_est = _est_vmem_bytes(bn, L, Ct, Cq)

    # ---------------- grid-invariant setup, hoisted out of the kernel ----------------
    # coords permute/flatten (matches coords.permute(0,2,3,1).reshape(B*H1*W1, 1, 2))
    coords_flat = coords1.transpose(0, 2, 3, 1).reshape(N, 2)
    # LinearPositionEmbeddingSine(coords, dim=C); the literal 3.14 (not math.pi) is
    # intentional — it matches the FlowFormer source, do not "fix" it.
    freqs = jnp.arange(Cq // 4, dtype=f32)
    a0 = 3.14 * coords_flat[:, 0:1] * freqs / 200.0
    a1 = 3.14 * coords_flat[:, 1:2] * freqs / 200.0
    enc = jnp.concatenate([jnp.sin(a0), jnp.cos(a0), jnp.sin(a1), jnp.cos(a1)], axis=-1)

    # head-pooling matrices (constant): P[c, h] = 1 iff channel c is in head h
    D = Cq // num_heads
    heads = jnp.arange(Cq, dtype=jnp.int32) // D
    P = (heads[:, None] == jnp.arange(num_heads, dtype=jnp.int32)[None, :]).astype(f32)
    PT = P.T

    # weight splitting and bf16 casts (done once; constant blocks are DMA'd once)
    weight_args = [params["ln1_g"].astype(f32), params["ln1_b"].astype(f32),
                   params["wq"].astype(bf16), params["bq"].astype(f32),
                   params["wk"].astype(bf16), params["bk"].astype(f32),
                   params["wv"].astype(bf16), params["bv"].astype(f32),
                   params["wp"][:Cq].astype(bf16),   # multiplies attention output
                   params["wp"][Cq:].astype(bf16),   # multiplies the residual query
                   params["bp"].astype(f32),
                   params["ln2_g"].astype(f32), params["ln2_b"].astype(f32),
                   params["wf1"].astype(bf16), params["bf1"].astype(f32),
                   params["wf2"].astype(bf16), params["bf2"].astype(f32)]

    query2 = query.reshape(N, Cq)          # squeeze size-1 token dim (contiguous, free)
    memory_in = memory                     # NATIVE dtype: cast to bf16 per-tile inside the kernel

    if n_pad != N:                         # pad so the tile size is independent of N's factors
        pad = n_pad - N
        enc = jnp.pad(enc, ((0, pad), (0, 0)))
        query2 = jnp.pad(query2, ((0, pad), (0, 0)))
        memory_in = jnp.pad(memory_in, ((0, pad), (0, 0), (0, 0)))

    in_specs = (
        [pl.BlockSpec((bn, Cq), lambda i: (i, 0)),            # pos enc
         pl.BlockSpec((bn, Cq), lambda i: (i, 0)),            # query
         pl.BlockSpec((bn, L, Ct), lambda i: (i, 0, 0)),      # memory (native dtype)
         pl.BlockSpec(P.shape, lambda i: (0, 0)),             # P  (C, H)
         pl.BlockSpec(PT.shape, lambda i: (0, 0))]            # PT (H, C)
        + [pl.BlockSpec(w.shape, lambda i: (0, 0)) for w in weight_args])

    out_shape = (jax.ShapeDtypeStruct((n_pad, Cq), f32),
                 jax.ShapeDtypeStruct((n_pad, L, Cq), bf16),      # k
                 jax.ShapeDtypeStruct((n_pad, L, Cq), bf16))      # v
    out_specs = (pl.BlockSpec((bn, Cq), lambda i: (i, 0)),
                 pl.BlockSpec((bn, L, Cq), lambda i: (i, 0, 0)),
                 pl.BlockSpec((bn, L, Cq), lambda i: (i, 0, 0)))

    # Always set the scoped-VMEM limit (v5e's default is only 16 MiB); never request the
    # full physical budget (headroom for Mosaic scratch / semaphores / constant buffers).
    vmem_limit = int(min(vmem_cap, max(2 * vmem_est, 32 * 1024 * 1024)))
    # NOTE: if DMA exposure shows in a trace on v5e/v6e, pipeline_mode=pl.Buffered(3) on
    # the memory in_spec and k/v out_specs is a cheap experiment there (not on v7x).
    # TODO(synk): optional fp8 memory feed / k-v store on v7x (bandwidth win) not enabled.

    x, k, v = pl.pallas_call(
        functools.partial(_decoder_kernel, num_heads),
        out_shape=out_shape,
        grid_spec=pltpu.PrefetchScalarGridSpec(
            num_scalar_prefetch=0,
            grid=(n_pad // bn,),
            in_specs=in_specs,
            out_specs=out_specs),
        compiler_params=pltpu.CompilerParams(
            dimension_semantics=("parallel",),
            vmem_limit_bytes=vmem_limit),
    )(enc, query2, memory_in, P, PT, *weight_args)

    if n_pad != N:                          # trim padding (only taken when padding was added)
        x, k, v = x[:N], k[:N], v[:N]

    # glue: x.view(B, H1, W1, C).permute(0, 3, 1, 2)
    x_global = x.reshape(B, H1, W1, Cq).transpose(0, 3, 1, 2)
    return x_global, k, v


# ------------------------------ pure-JAX reference -------------------------------
def reference(query, memory, coords1, size, params, num_heads=8):
    B, C, H1, W1 = size
    N, _, Cq = query.shape
    L = memory.shape[1]
    H, D = num_heads, Cq // num_heads
    coords_flat = coords1.transpose(0, 2, 3, 1).reshape(N, 1, 2)
    f = jnp.arange(Cq // 4, dtype=jnp.float32)
    c0 = coords_flat[..., 0:1]
    c1 = coords_flat[..., 1:2]
    enc = jnp.concatenate([jnp.sin(3.14 * c0 * f / 200.0), jnp.cos(3.14 * c0 * f / 200.0),
                           jnp.sin(3.14 * c1 * f / 200.0), jnp.cos(3.14 * c1 * f / 200.0)], axis=-1)
    k = memory @ params["wk"] + params["bk"]
    v = memory @ params["wv"] + params["bv"]
    qn = _layernorm(query, params["ln1_g"], params["ln1_b"])
    q = (qn + enc) @ params["wq"] + params["bq"]                       # [N, 1, C]
    qh, kh, vh = q.reshape(N, 1, H, D), k.reshape(N, L, H, D), v.reshape(N, L, H, D)
    s = jnp.sum(qh * kh, axis=-1) * (float(D) ** -0.5)                 # [N, L, H]
    attn = jax.nn.softmax(s, axis=1)
    out = jnp.sum(attn[..., None] * vh, axis=1).reshape(N, 1, Cq)
    x = query + (jnp.concatenate([out, query], axis=-1) @ params["wp"] + params["bp"])
    xn = _layernorm(x, params["ln2_g"], params["ln2_b"])
    h = _gelu_ref(xn @ params["wf1"] + params["bf1"]) @ params["wf2"] + params["bf2"]
    x = x + h
    return x.reshape(B, H1, W1, Cq).transpose(0, 3, 1, 2), k, v


# --------------------------------- param init ------------------------------------
def init_params(key, C, Ct):
    ks = jax.random.split(key, 8)
    w = lambda k, shape: 0.05 * jax.random.normal(k, shape, jnp.float32)
    return {
        "ln1_g": jnp.ones((1, C), jnp.float32), "ln1_b": jnp.zeros((1, C), jnp.float32),
        "wq": w(ks[0], (C, C)),  "bq": w(ks[1], (1, C)),
        "wk": w(ks[2], (Ct, C)), "bk": w(ks[3], (1, C)),
        "wv": w(ks[4], (Ct, C)), "bv": w(ks[5], (1, C)),
        "wp": w(ks[6], (2 * C, C)), "bp": jnp.zeros((1, C), jnp.float32),
        "ln2_g": jnp.ones((1, C), jnp.float32), "ln2_b": jnp.zeros((1, C), jnp.float32),
        "wf1": w(ks[7], (C, C)), "bf1": jnp.zeros((1, C), jnp.float32),
        "wf2": w(jax.random.fold_in(key, 99), (C, C)), "bf2": jnp.zeros((1, C), jnp.float32),
    }


if __name__ == "__main__":
    B, H1, W1 = 2, 8, 8
    C = 64       # cfg.query_latent_dim (== qk_dim == v_dim)
    Ct = 128     # cfg.cost_latent_dim
    L = 16       # H2' * W2'
    num_heads = 8
    N = B * H1 * W1   # 128 tokens

    root = jax.random.PRNGKey(0)
    kq, km, kc, kp = jax.random.split(root, 4)
    query = jax.random.normal(kq, (N, 1, C), jnp.float32)
    memory = jax.random.normal(km, (N, L, Ct), jnp.float32)
    coords1 = jax.random.uniform(kc, (B, 2, H1, W1), jnp.float32, 0.0, 32.0)
    params = init_params(kp, C, Ct)

    # small block_n for the demo so the grid has >1 step; production default is 256-512.
    outs = memory_decoder_layer(query, memory, coords1, (B, C, H1, W1), params,
                                num_heads=num_heads, block_n=64)
    x_g, k, v = jax.block_until_ready(outs)

    xr, kr, vr = reference(query, memory, coords1, (B, C, H1, W1), params, num_heads)
    assert x_g.shape == (B, C, H1, W1) and k.shape == (N, L, C) and v.shape == (N, L, C)
    # bf16 MXU operands / bf16 k-v outputs / tanh-GELU -> compare at bf16-level tolerance
    assert jnp.allclose(x_g, xr, atol=5e-2, rtol=2e-2)
    assert jnp.allclose(k.astype(jnp.float32), kr, atol=2e-2, rtol=2e-2)
    assert jnp.allclose(v.astype(jnp.float32), vr, atol=2e-2, rtol=2e-2)
    print("KERNEL_OK")
</pallas_src>

<mosaic_0001>
module attributes {stable_mosaic.version = 11 : i64} {
  func.func @_decoder_kernel(%arg0: i32, %arg1: memref<64x64xf32, #tpu.memory_space<vmem>>, %arg2: memref<64x64xf32, #tpu.memory_space<vmem>>, %arg3: memref<64x16x128xf32, #tpu.memory_space<vmem>>, %arg4: memref<64x8xf32, #tpu.memory_space<vmem>>, %arg5: memref<8x64xf32, #tpu.memory_space<vmem>>, %arg6: memref<1x64xf32, #tpu.memory_space<vmem>>, %arg7: memref<1x64xf32, #tpu.memory_space<vmem>>, %arg8: memref<64x64xbf16, #tpu.memory_space<vmem>>, %arg9: memref<1x64xf32, #tpu.memory_space<vmem>>, %arg10: memref<128x64xbf16, #tpu.memory_space<vmem>>, %arg11: memref<1x64xf32, #tpu.memory_space<vmem>>, %arg12: memref<128x64xbf16, #tpu.memory_space<vmem>>, %arg13: memref<1x64xf32, #tpu.memory_space<vmem>>, %arg14: memref<64x64xbf16, #tpu.memory_space<vmem>>, %arg15: memref<64x64xbf16, #tpu.memory_space<vmem>>, %arg16: memref<1x64xf32, #tpu.memory_space<vmem>>, %arg17: memref<1x64xf32, #tpu.memory_space<vmem>>, %arg18: memref<1x64xf32, #tpu.memory_space<vmem>>, %arg19: memref<64x64xbf16, #tpu.memory_space<vmem>>, %arg20: memref<1x64xf32, #tpu.memory_space<vmem>>, %arg21: memref<64x64xbf16, #tpu.memory_space<vmem>>, %arg22: memref<1x64xf32, #tpu.memory_space<vmem>>, %arg23: memref<64x64xf32, #tpu.memory_space<vmem>>, %arg24: memref<64x16x64xbf16, #tpu.memory_space<vmem>>, %arg25: memref<64x16x64xbf16, #tpu.memory_space<vmem>>) attributes {dimension_semantics = [#tpu.dimension_semantics<parallel>], iteration_bounds = array<i64: 2>, scalar_prefetch = 0 : i64, scratch_operands = 0 : i64, tpu.core_type = #tpu.core_type<tc>, window_params = [{transform_indices = @transform_0, window_bounds = array<i64: 64, 64>}, {transform_indices = @transform_1, window_bounds = array<i64: 64, 64>}, {transform_indices = @transform_2, window_bounds = array<i64: 64, 16, 128>}, {pipeline_mode = #tpu.pipeline_mode<synchronous>, transform_indices = @transform_3, window_bounds = array<i64: 64, 8>}, {pipeline_mode = #tpu.pipeline_mode<synchronous>, transform_indices = @transform_4, window_bounds = array<i64: 8, 64>}, {pipeline_mode = #tpu.pipeline_mode<synchronous>, transform_indices = @transform_5, window_bounds = array<i64: 1, 64>}, {pipeline_mode = #tpu.pipeline_mode<synchronous>, transform_indices = @transform_6, window_bounds = array<i64: 1, 64>}, {pipeline_mode = #tpu.pipeline_mode<synchronous>, transform_indices = @transform_7, window_bounds = array<i64: 64, 64>}, {pipeline_mode = #tpu.pipeline_mode<synchronous>, transform_indices = @transform_8, window_bounds = array<i64: 1, 64>}, {pipeline_mode = #tpu.pipeline_mode<synchronous>, transform_indices = @transform_9, window_bounds = array<i64: 128, 64>}, {pipeline_mode = #tpu.pipeline_mode<synchronous>, transform_indices = @transform_10, window_bounds = array<i64: 1, 64>}, {pipeline_mode = #tpu.pipeline_mode<synchronous>, transform_indices = @transform_11, window_bounds = array<i64: 128, 64>}, {pipeline_mode = #tpu.pipeline_mode<synchronous>, transform_indices = @transform_12, window_bounds = array<i64: 1, 64>}, {pipeline_mode = #tpu.pipeline_mode<synchronous>, transform_indices = @transform_13, window_bounds = array<i64: 64, 64>}, {pipeline_mode = #tpu.pipeline_mode<synchronous>, transform_indices = @transform_14, window_bounds = array<i64: 64, 64>}, {pipeline_mode = #tpu.pipeline_mode<synchronous>, transform_indices = @transform_15, window_bounds = array<i64: 1, 64>}, {pipeline_mode = #tpu.pipeline_mode<synchronous>, transform_indices = @transform_16, window_bounds = array<i64: 1, 64>}, {pipeline_mode = #tpu.pipeline_mode<synchronous>, transform_indices = @transform_17, window_bounds = array<i64: 1, 64>}, {pipeline_mode = #tpu.pipeline_mode<synchronous>, transform_indices = @transform_18, window_bounds = array<i64: 64, 64>}, {pipeline_mode = #tpu.pipeline_mode<synchronous>, transform_indices = @transform_19, window_bounds = array<i64: 1, 64>}, {pipeline_mode = #tpu.pipeline_mode<synchronous>, transform_indices = @transform_20, window_bounds = array<i64: 64, 64>}, {pipeline_mode = #tpu.pipeline_mode<synchronous>, transform_indices = @transform_21, window_bounds = array<i64: 1, 64>}, {transform_indices = @transform_22, window_bounds = array<i64: 64, 64>}, {transform_indices = @transform_23, window_bounds = array<i64: 64, 16, 64>}, {transform_indices = @transform_24, window_bounds = array<i64: 64, 16, 64>}]} {
    %c0 = arith.constant 0 : index
    %c0_0 = arith.constant 0 : index
    %0 = vector.load %arg2[%c0, %c0_0] : memref<64x64xf32, #tpu.memory_space<vmem>>, vector<64x64xf32>
    %c0_1 = arith.constant 0 : index
    %c0_2 = arith.constant 0 : index
    %c0_3 = arith.constant 0 : index
    %1 = vector.load %arg3[%c0_1, %c0_2, %c0_3] : memref<64x16x128xf32, #tpu.memory_space<vmem>>, vector<64x16x128xf32>
    %2 = arith.truncf %1 : vector<64x16x128xf32> to vector<64x16x128xbf16>
    %3 = vector.shape_cast %2 : vector<64x16x128xbf16> to vector<1024x128xbf16>
    %c0_4 = arith.constant 0 : index
    %c0_5 = arith.constant 0 : index
    %4 = vector.load %arg10[%c0_4, %c0_5] : memref<128x64xbf16, #tpu.memory_space<vmem>>, vector<128x64xbf16>
    %cst = arith.constant dense<0.000000e+00> : vector<1024x64xf32>
    %5 = tpu.matmul %3, %4, %cst {dimension_numbers = #tpu.dot_dimension_numbers<[1], [0], [0], [1], [0, 0, 1, 1], [], []>} : vector<1024x128xbf16>, vector<128x64xbf16>, vector<1024x64xf32> -> vector<1024x64xf32>
    %c0_6 = arith.constant 0 : index
    %c0_7 = arith.constant 0 : index
    %6 = vector.load %arg11[%c0_6, %c0_7] : memref<1x64xf32, #tpu.memory_space<vmem>>, vector<1x64xf32>
    %7 = vector.broadcast %6 : vector<1x64xf32> to vector<1024x64xf32>
    %8 = arith.addf %5, %7 : vector<1024x64xf32>
    %c0_8 = arith.constant 0 : index
    %c0_9 = arith.constant 0 : index
    %9 = vector.load %arg12[%c0_8, %c0_9] : memref<128x64xbf16, #tpu.memory_space<vmem>>, vector<128x64xbf16>
    %cst_10 = arith.constant dense<0.000000e+00> : vector<1024x64xf32>
    %10 = tpu.matmul %3, %9, %cst_10 {dimension_numbers = #tpu.dot_dimension_numbers<[1], [0], [0], [1], [0, 0, 1, 1], [], []>} : vector<1024x128xbf16>, vector<128x64xbf16>, vector<1024x64xf32> -> vector<1024x64xf32>
    %c0_11 = arith.constant 0 : index
    %c0_12 = arith.constant 0 : index
    %11 = vector.load %arg13[%c0_11, %c0_12] : memref<1x64xf32, #tpu.memory_space<vmem>>, vector<1x64xf32>
    %12 = vector.broadcast %11 : vector<1x64xf32> to vector<1024x64xf32>
    %13 = arith.addf %10, %12 : vector<1024x64xf32>
    %14 = vector.shape_cast %8 : vector<1024x64xf32> to vector<64x16x64xf32>
    %15 = vector.shape_cast %13 : vector<1024x64xf32> to vector<64x16x64xf32>
    %16 = arith.truncf %14 : vector<64x16x64xf32> to vector<64x16x64xbf16>
    %c0_13 = arith.constant 0 : index
    %c0_14 = arith.constant 0 : index
    %c0_15 = arith.constant 0 : index
    %17 = vector.load %arg24[%c0_13, %c0_14, %c0_15] : memref<64x16x64xbf16, #tpu.memory_space<vmem>>, vector<64x16x64xbf16>
    tpu.vector_store %arg24[%c0_13, %c0_14, %c0_15], %16 {strides = array<i32>} : memref<64x16x64xbf16, #tpu.memory_space<vmem>>, vector<64x16x64xbf16>,
    %18 = arith.truncf %15 : vector<64x16x64xf32> to vector<64x16x64xbf16>
    %c0_16 = arith.constant 0 : index
    %c0_17 = arith.constant 0 : index
    %c0_18 = arith.constant 0 : index
    %19 = vector.load %arg25[%c0_16, %c0_17, %c0_18] : memref<64x16x64xbf16, #tpu.memory_space<vmem>>, vector<64x16x64xbf16>
    tpu.vector_store %arg25[%c0_16, %c0_17, %c0_18], %18 {strides = array<i32>} : memref<64x16x64xbf16, #tpu.memory_space<vmem>>, vector<64x16x64xbf16>,
    %c0_19 = arith.constant 0 : index
    %c0_20 = arith.constant 0 : index
    %20 = vector.load %arg6[%c0_19, %c0_20] : memref<1x64xf32, #tpu.memory_space<vmem>>, vector<1x64xf32>
    %c0_21 = arith.constant 0 : index
    %c0_22 = arith.constant 0 : index
    %21 = vector.load %arg7[%c0_21, %c0_22] : memref<1x64xf32, #tpu.memory_space<vmem>>, vector<1x64xf32>
    %cst_23 = arith.constant dense<0.000000e+00> : vector<64xf32>
    %22 = vector.multi_reduction <add>, %0, %cst_23 [1] : vector<64x64xf32> to vector<64xf32>
    %23 = vector.shape_cast %22 : vector<64xf32> to vector<64x1xf32>
    %cst_24 = arith.constant 6.400000e+01 : f32
    %24 = vector.broadcast %cst_24 : f32 to vector<64x1xf32>
    %25 = arith.divf %23, %24 : vector<64x1xf32>
    %26 = vector.broadcast %25 : vector<64x1xf32> to vector<64x64xf32>
    %27 = arith.subf %0, %26 : vector<64x64xf32>
    %28 = arith.mulf %27, %27 : vector<64x64xf32>
    %cst_25 = arith.constant dense<0.000000e+00> : vector<64xf32>
    %29 = vector.multi_reduction <add>, %28, %cst_25 [1] : vector<64x64xf32> to vector<64xf32>
    %30 = vector.shape_cast %29 : vector<64xf32> to vector<64x1xf32>
    %cst_26 = arith.constant 6.400000e+01 : f32
    %31 = vector.broadcast %cst_26 : f32 to vector<64x1xf32>
    %32 = arith.divf %30, %31 : vector<64x1xf32>
    %33 = vector.broadcast %25 : vector<64x1xf32> to vector<64x64xf32>
    %34 = arith.subf %0, %33 : vector<64x64xf32>
    %cst_27 = arith.constant 9.99999974E-6 : f32
    %35 = vector.broadcast %cst_27 : f32 to vector<64x1xf32>
    %36 = arith.addf %32, %35 : vector<64x1xf32>
    %37 = math.rsqrt %36 : vector<64x1xf32>
    %38 = vector.broadcast %37 : vector<64x1xf32> to vector<64x64xf32>
    %39 = arith.mulf %34, %38 : vector<64x64xf32>
    %40 = vector.broadcast %20 : vector<1x64xf32> to vector<64x64xf32>
    %41 = arith.mulf %39, %40 : vector<64x64xf32>
    %42 = vector.broadcast %21 : vector<1x64xf32> to vector<64x64xf32>
    %43 = arith.addf %41, %42 : vector<64x64xf32>
    %c0_28 = arith.constant 0 : index
    %c0_29 = arith.constant 0 : index
    %44 = vector.load %arg1[%c0_28, %c0_29] : memref<64x64xf32, #tpu.memory_space<vmem>>, vector<64x64xf32>
    %45 = arith.addf %43, %44 : vector<64x64xf32>
    %46 = arith.truncf %45 : vector<64x64xf32> to vector<64x64xbf16>
    %c0_30 = arith.constant 0 : index
    %c0_31 = arith.constant 0 : index
    %47 = vector.load %arg8[%c0_30, %c0_31] : memref<64x64xbf16, #tpu.memory_space<vmem>>, vector<64x64xbf16>
    %cst_32 = arith.constant dense<0.000000e+00> : vector<64x64xf32>
    %48 = tpu.matmul %46, %47, %cst_32 {dimension_numbers = #tpu.dot_dimension_numbers<[1], [0], [0], [1], [0, 0, 1, 1], [], []>} : vector<64x64xbf16>, vector<64x64xbf16>, vector<64x64xf32> -> vector<64x64xf32>
    %c0_33 = arith.constant 0 : index
    %c0_34 = arith.constant 0 : index
    %49 = vector.load %arg9[%c0_33, %c0_34] : memref<1x64xf32, #tpu.memory_space<vmem>>, vector<1x64xf32>
    %50 = vector.broadcast %49 : vector<1x64xf32> to vector<64x64xf32>
    %51 = arith.addf %48, %50 : vector<64x64xf32>
    %52 = vector.shape_cast %51 : vector<64x64xf32> to vector<64x1x64xf32>
    %53 = vector.broadcast %52 : vector<64x1x64xf32> to vector<64x16x64xf32>
    %54 = arith.mulf %53, %14 : vector<64x16x64xf32>
    %55 = vector.shape_cast %54 : vector<64x16x64xf32> to vector<1024x64xf32>
    %c0_35 = arith.constant 0 : index
    %c0_36 = arith.constant 0 : index
    %56 = vector.load %arg4[%c0_35, %c0_36] : memref<64x8xf32, #tpu.memory_space<vmem>>, vector<64x8xf32>
    %cst_37 = arith.constant dense<0.000000e+00> : vector<1024x8xf32>
    %57 = tpu.matmul %55, %56, %cst_37 {dimension_numbers = #tpu.dot_dimension_numbers<[1], [0], [0], [1], [0, 0, 1, 1], [], []>} : vector<1024x64xf32>, vector<64x8xf32>, vector<1024x8xf32> -> vector<1024x8xf32>
    %58 = vector.shape_cast %57 : vector<1024x8xf32> to vector<64x16x8xf32>
    %cst_38 = arith.constant 0.353553385 : f32
    %59 = vector.broadcast %cst_38 : f32 to vector<64x16x8xf32>
    %60 = arith.mulf %58, %59 : vector<64x16x8xf32>
    %cst_39 = arith.constant dense<0xFF800000> : vector<64x8xf32>
    %61 = vector.multi_reduction <maximumf>, %60, %cst_39 [1] : vector<64x16x8xf32> to vector<64x8xf32>
    %62 = vector.shape_cast %61 : vector<64x8xf32> to vector<64x1x8xf32>
    %63 = vector.broadcast %62 : vector<64x1x8xf32> to vector<64x16x8xf32>
    %64 = arith.subf %60, %63 : vector<64x16x8xf32>
    %65 = math.exp %64 : vector<64x16x8xf32>
    %cst_40 = arith.constant dense<0.000000e+00> : vector<64x8xf32>
    %66 = vector.multi_reduction <add>, %65, %cst_40 [1] : vector<64x16x8xf32> to vector<64x8xf32>
    %67 = vector.shape_cast %66 : vector<64x8xf32> to vector<64x1x8xf32>
    %68 = tpu.reciprocal %67 {approx = true} : vector<64x1x8xf32> -> vector<64x1x8xf32>
    %69 = vector.broadcast %68 : vector<64x1x8xf32> to vector<64x16x8xf32>
    %70 = arith.mulf %65, %69 : vector<64x16x8xf32>
    %71 = vector.shape_cast %70 : vector<64x16x8xf32> to vector<1024x8xf32>
    %c0_41 = arith.constant 0 : index
    %c0_42 = arith.constant 0 : index
    %72 = vector.load %arg5[%c0_41, %c0_42] : memref<8x64xf32, #tpu.memory_space<vmem>>, vector<8x64xf32>
    %cst_43 = arith.constant dense<0.000000e+00> : vector<1024x64xf32>
    %73 = tpu.matmul %71, %72, %cst_43 {dimension_numbers = #tpu.dot_dimension_numbers<[1], [0], [0], [1], [0, 0, 1, 1], [], []>} : vector<1024x8xf32>, vector<8x64xf32>, vector<1024x64xf32> -> vector<1024x64xf32>
    %74 = vector.shape_cast %73 : vector<1024x64xf32> to vector<64x16x64xf32>
    %75 = arith.mulf %74, %15 : vector<64x16x64xf32>
    %cst_44 = arith.constant dense<0.000000e+00> : vector<64x64xf32>
    %76 = vector.multi_reduction <add>, %75, %cst_44 [1] : vector<64x16x64xf32> to vector<64x64xf32>
    %77 = arith.truncf %76 : vector<64x64xf32> to vector<64x64xbf16>
    %c0_45 = arith.constant 0 : index
    %c0_46 = arith.constant 0 : index
    %78 = vector.load %arg14[%c0_45, %c0_46] : memref<64x64xbf16, #tpu.memory_space<vmem>>, vector<64x64xbf16>
    %cst_47 = arith.constant dense<0.000000e+00> : vector<64x64xf32>
    %79 = tpu.matmul %77, %78, %cst_47 {dimension_numbers = #tpu.dot_dimension_numbers<[1], [0], [0], [1], [0, 0, 1, 1], [], []>} : vector<64x64xbf16>, vector<64x64xbf16>, vector<64x64xf32> -> vector<64x64xf32>
    %80 = arith.truncf %0 : vector<64x64xf32> to vector<64x64xbf16>
    %c0_48 = arith.constant 0 : index
    %c0_49 = arith.constant 0 : index
    %81 = vector.load %arg15[%c0_48, %c0_49] : memref<64x64xbf16, #tpu.memory_space<vmem>>, vector<64x64xbf16>
    %cst_50 = arith.constant dense<0.000000e+00> : vector<64x64xf32>
    %82 = tpu.matmul %80, %81, %cst_50 {dimension_numbers = #tpu.dot_dimension_numbers<[1], [0], [0], [1], [0, 0, 1, 1], [], []>} : vector<64x64xbf16>, vector<64x64xbf16>, vector<64x64xf32> -> vector<64x64xf32>
    %83 = arith.addf %79, %82 : vector<64x64xf32>
    %c0_51 = arith.constant 0 : index
    %c0_52 = arith.constant 0 : index
    %84 = vector.load %arg16[%c0_51, %c0_52] : memref<1x64xf32, #tpu.memory_space<vmem>>, vector<1x64xf32>
    %85 = vector.broadcast %84 : vector<1x64xf32> to vector<64x64xf32>
    %86 = arith.addf %83, %85 : vector<64x64xf32>
    %87 = arith.addf %0, %86 : vector<64x64xf32>
    %c0_53 = arith.constant 0 : index
    %c0_54 = arith.constant 0 : index
    %88 = vector.load %arg17[%c0_53, %c0_54] : memref<1x64xf32, #tpu.memory_space<vmem>>, vector<1x64xf32>
    %c0_55 = arith.constant 0 : index
    %c0_56 = arith.constant 0 : index
    %89 = vector.load %arg18[%c0_55, %c0_56] : memref<1x64xf32, #tpu.memory_space<vmem>>, vector<1x64xf32>
    %cst_57 = arith.constant dense<0.000000e+00> : vector<64xf32>
    %90 = vector.multi_reduction <add>, %87, %cst_57 [1] : vector<64x64xf32> to vector<64xf32>
    %91 = vector.shape_cast %90 : vector<64xf32> to vector<64x1xf32>
    %cst_58 = arith.constant 6.400000e+01 : f32
    %92 = vector.broadcast %cst_58 : f32 to vector<64x1xf32>
    %93 = arith.divf %91, %92 : vector<64x1xf32>
    %94 = vector.broadcast %93 : vector<64x1xf32> to vector<64x64xf32>
    %95 = arith.subf %87, %94 : vector<64x64xf32>
    %96 = arith.mulf %95, %95 : vector<64x64xf32>
    %cst_59 = arith.constant dense<0.000000e+00> : vector<64xf32>
    %97 = vector.multi_reduction <add>, %96, %cst_59 [1] : vector<64x64xf32> to vector<64xf32>
    %98 = vector.shape_cast %97 : vector<64xf32> to vector<64x1xf32>
    %cst_60 = arith.constant 6.400000e+01 : f32
    %99 = vector.broadcast %cst_60 : f32 to vector<64x1xf32>
    %100 = arith.divf %98, %99 : vector<64x1xf32>
    %101 = vector.broadcast %93 : vector<64x1xf32> to vector<64x64xf32>
    %102 = arith.subf %87, %101 : vector<64x64xf32>
    %cst_61 = arith.constant 9.99999974E-6 : f32
    %103 = vector.broadcast %cst_61 : f32 to vector<64x1xf32>
    %104 = arith.addf %100, %103 : vector<64x1xf32>
    %105 = math.rsqrt %104 : vector<64x1xf32>
    %106 = vector.broadcast %105 : vector<64x1xf32> to vector<64x64xf32>
    %107 = arith.mulf %102, %106 : vector<64x64xf32>
    %108 = vector.broadcast %88 : vector<1x64xf32> to vector<64x64xf32>
    %109 = arith.mulf %107, %108 : vector<64x64xf32>
    %110 = vector.broadcast %89 : vector<1x64xf32> to vector<64x64xf32>
    %111 = arith.addf %109, %110 : vector<64x64xf32>
    %112 = arith.truncf %111 : vector<64x64xf32> to vector<64x64xbf16>
    %c0_62 = arith.constant 0 : index
    %c0_63 = arith.constant 0 : index
    %113 = vector.load %arg19[%c0_62, %c0_63] : memref<64x64xbf16, #tpu.memory_space<vmem>>, vector<64x64xbf16>
    %cst_64 = arith.constant dense<0.000000e+00> : vector<64x64xf32>
    %114 = tpu.matmul %112, %113, %cst_64 {dimension_numbers = #tpu.dot_dimension_numbers<[1], [0], [0], [1], [0, 0, 1, 1], [], []>} : vector<64x64xbf16>, vector<64x64xbf16>, vector<64x64xf32> -> vector<64x64xf32>
    %c0_65 = arith.constant 0 : index
    %c0_66 = arith.constant 0 : index
    %115 = vector.load %arg20[%c0_65, %c0_66] : memref<1x64xf32, #tpu.memory_space<vmem>>, vector<1x64xf32>
    %116 = vector.broadcast %115 : vector<1x64xf32> to vector<64x64xf32>
    %117 = arith.addf %114, %116 : vector<64x64xf32>
    %cst_67 = arith.constant 5.000000e-01 : f32
    %118 = vector.broadcast %cst_67 : f32 to vector<64x64xf32>
    %119 = arith.mulf %118, %117 : vector<64x64xf32>
    %cst_68 = arith.constant 4.471500e-02 : f32
    %120 = vector.broadcast %cst_68 : f32 to vector<64x64xf32>
    %121 = arith.mulf %120, %117 : vector<64x64xf32>
    %122 = arith.mulf %121, %117 : vector<64x64xf32>
    %123 = arith.mulf %122, %117 : vector<64x64xf32>
    %124 = arith.addf %117, %123 : vector<64x64xf32>
    %cst_69 = arith.constant 0.797884583 : f32
    %125 = vector.broadcast %cst_69 : f32 to vector<64x64xf32>
    %126 = arith.mulf %125, %124 : vector<64x64xf32>
    %127 = math.tanh %126 : vector<64x64xf32>
    %cst_70 = arith.constant 1.000000e+00 : f32
    %128 = vector.broadcast %cst_70 : f32 to vector<64x64xf32>
    %129 = arith.addf %128, %127 : vector<64x64xf32>
    %130 = arith.mulf %119, %129 : vector<64x64xf32>
    %131 = arith.truncf %130 : vector<64x64xf32> to vector<64x64xbf16>
    %c0_71 = arith.constant 0 : index
    %c0_72 = arith.constant 0 : index
    %132 = vector.load %arg21[%c0_71, %c0_72] : memref<64x64xbf16, #tpu.memory_space<vmem>>, vector<64x64xbf16>
    %cst_73 = arith.constant dense<0.000000e+00> : vector<64x64xf32>
    %133 = tpu.matmul %131, %132, %cst_73 {dimension_numbers = #tpu.dot_dimension_numbers<[1], [0], [0], [1], [0, 0, 1, 1], [], []>} : vector<64x64xbf16>, vector<64x64xbf16>, vector<64x64xf32> -> vector<64x64xf32>
    %c0_74 = arith.constant 0 : index
    %c0_75 = arith.constant 0 : index
    %134 = vector.load %arg22[%c0_74, %c0_75] : memref<1x64xf32, #tpu.memory_space<vmem>>, vector<1x64xf32>
    %135 = vector.broadcast %134 : vector<1x64xf32> to vector<64x64xf32>
    %136 = arith.addf %133, %135 : vector<64x64xf32>
    %137 = arith.addf %87, %136 : vector<64x64xf32>
    %c0_76 = arith.constant 0 : index
    %c0_77 = arith.constant 0 : index
    %138 = vector.load %arg23[%c0_76, %c0_77] : memref<64x64xf32, #tpu.memory_space<vmem>>, vector<64x64xf32>
    tpu.vector_store %arg23[%c0_76, %c0_77], %137 {strides = array<i32>} : memref<64x64xf32, #tpu.memory_space<vmem>>, vector<64x64xf32>,
    return
  }
  func.func @transform_0(%arg0: i32) -> (i32, i32) {
    %c0_i32 = arith.constant 0 : i32
    %c0_i32_0 = arith.constant 0 : i32
    return %arg0, %c0_i32 : i32, i32
  }
  func.func @transform_1(%arg0: i32) -> (i32, i32) {
    %c0_i32 = arith.constant 0 : i32
    %c0_i32_0 = arith.constant 0 : i32
    return %arg0, %c0_i32 : i32, i32
  }
  func.func @transform_2(%arg0: i32) -> (i32, i32, i32) {
    %c0_i32 = arith.constant 0 : i32
    %c0_i32_0 = arith.constant 0 : i32
    %c0_i32_1 = arith.constant 0 : i32
    return %arg0, %c0_i32, %c0_i32_0 : i32, i32, i32
  }
  func.func @transform_3(%arg0: i32) -> (i32, i32) {
    %c0_i32 = arith.constant 0 : i32
    %c0_i32_0 = arith.constant 0 : i32
    %c0_i32_1 = arith.constant 0 : i32
    return %c0_i32, %c0_i32_0 : i32, i32
  }
  func.func @transform_4(%arg0: i32) -> (i32, i32) {
    %c0_i32 = arith.constant 0 : i32
    %c0_i32_0 = arith.constant 0 : i32
    %c0_i32_1 = arith.constant 0 : i32
    return %c0_i32, %c0_i32_0 : i32, i32
  }
  func.func @transform_5(%arg0: i32) -> (i32, i32) {
    %c0_i32 = arith.constant 0 : i32
    %c0_i32_0 = arith.constant 0 : i32
    %c0_i32_1 = arith.constant 0 : i32
    return %c0_i32, %c0_i32_0 : i32, i32
  }
  func.func @transform_6(%arg0: i32) -> (i32, i32) {
    %c0_i32 = arith.constant 0 : i32
    %c0_i32_0 = arith.constant 0 : i32
    %c0_i32_1 = arith.constant 0 : i32
    return %c0_i32, %c0_i32_0 : i32, i32
  }
  func.func @transform_7(%arg0: i32) -> (i32, i32) {
    %c0_i32 = arith.constant 0 : i32
    %c0_i32_0 = arith.constant 0 : i32
    %c0_i32_1 = arith.constant 0 : i32
    return %c0_i32, %c0_i32_0 : i32, i32
  }
  func.func @transform_8(%arg0: i32) -> (i32, i32) {
    %c0_i32 = arith.constant 0 : i32
    %c0_i32_0 = arith.constant 0 : i32
    %c0_i32_1 = arith.constant 0 : i32
    return %c0_i32, %c0_i32_0 : i32, i32
  }
  func.func @transform_9(%arg0: i32) -> (i32, i32) {
    %c0_i32 = arith.constant 0 : i32
    %c0_i32_0 = arith.constant 0 : i32
    %c0_i32_1 = arith.constant 0 : i32
    return %c0_i32, %c0_i32_0 : i32, i32
  }
  func.func @transform_10(%arg0: i32) -> (i32, i32) {
    %c0_i32 = arith.constant 0 : i32
    %c0_i32_0 = arith.constant 0 : i32
    %c0_i32_1 = arith.constant 0 : i32
    return %c0_i32, %c0_i32_0 : i32, i32
  }
  func.func @transform_11(%arg0: i32) -> (i32, i32) {
    %c0_i32 = arith.constant 0 : i32
    %c0_i32_0 = arith.constant 0 : i32
    %c0_i32_1 = arith.constant 0 : i32
    return %c0_i32, %c0_i32_0 : i32, i32
  }
  func.func @transform_12(%arg0: i32) -> (i32, i32) {
    %c0_i32 = arith.constant 0 : i32
    %c0_i32_0 = arith.constant 0 : i32
    %c0_i32_1 = arith.constant 0 : i32
    return %c0_i32, %c0_i32_0 : i32, i32
  }
  func.func @transform_13(%arg0: i32) -> (i32, i32) {
    %c0_i32 = arith.constant 0 : i32
    %c0_i32_0 = arith.constant 0 : i32
    %c0_i32_1 = arith.constant 0 : i32
    return %c0_i32, %c0_i32_0 : i32, i32
  }
  func.func @transform_14(%arg0: i32) -> (i32, i32) {
    %c0_i32 = arith.constant 0 : i32
    %c0_i32_0 = arith.constant 0 : i32
    %c0_i32_1 = arith.constant 0 : i32
    return %c0_i32, %c0_i32_0 : i32, i32
  }
  func.func @transform_15(%arg0: i32) -> (i32, i32) {
    %c0_i32 = arith.constant 0 : i32
    %c0_i32_0 = arith.constant 0 : i32
    %c0_i32_1 = arith.constant 0 : i32
    return %c0_i32, %c0_i32_0 : i32, i32
  }
  func.func @transform_16(%arg0: i32) -> (i32, i32) {
    %c0_i32 = arith.constant 0 : i32
    %c0_i32_0 = arith.constant 0 : i32
    %c0_i32_1 = arith.constant 0 : i32
    return %c0_i32, %c0_i32_0 : i32, i32
  }
  func.func @transform_17(%arg0: i32) -> (i32, i32) {
    %c0_i32 = arith.constant 0 : i32
    %c0_i32_0 = arith.constant 0 : i32
    %c0_i32_1 = arith.constant 0 : i32
    return %c0_i32, %c0_i32_0 : i32, i32
  }
  func.func @transform_18(%arg0: i32) -> (i32, i32) {
    %c0_i32 = arith.constant 0 : i32
    %c0_i32_0 = arith.constant 0 : i32
    %c0_i32_1 = arith.constant 0 : i32
    return %c0_i32, %c0_i32_0 : i32, i32
  }
  func.func @transform_19(%arg0: i32) -> (i32, i32) {
    %c0_i32 = arith.constant 0 : i32
    %c0_i32_0 = arith.constant 0 : i32
    %c0_i32_1 = arith.constant 0 : i32
    return %c0_i32, %c0_i32_0 : i32, i32
  }
  func.func @transform_20(%arg0: i32) -> (i32, i32) {
    %c0_i32 = arith.constant 0 : i32
    %c0_i32_0 = arith.constant 0 : i32
    %c0_i32_1 = arith.constant 0 : i32
    return %c0_i32, %c0_i32_0 : i32, i32
  }
  func.func @transform_21(%arg0: i32) -> (i32, i32) {
    %c0_i32 = arith.constant 0 : i32
    %c0_i32_0 = arith.constant 0 : i32
    %c0_i32_1 = arith.constant 0 : i32
    return %c0_i32, %c0_i32_0 : i32, i32
  }
  func.func @transform_22(%arg0: i32) -> (i32, i32) {
    %c0_i32 = arith.constant 0 : i32
    %c0_i32_0 = arith.constant 0 : i32
    return %arg0, %c0_i32 : i32, i32
  }
  func.func @transform_23(%arg0: i32) -> (i32, i32, i32) {
    %c0_i32 = arith.constant 0 : i32
    %c0_i32_0 = arith.constant 0 : i32
    %c0_i32_1 = arith.constant 0 : i32
    return %arg0, %c0_i32, %c0_i32_0 : i32, i32, i32
  }
  func.func @transform_24(%arg0: i32) -> (i32, i32, i32) {
    %c0_i32 = arith.constant 0 : i32
    %c0_i32_0 = arith.constant 0 : i32
    %c0_i32_1 = arith.constant 0 : i32
    return %arg0, %c0_i32, %c0_i32_0 : i32, i32, i32
  }
}

</mosaic_0001>

<llo_original>
// kernel: tpu_custom_call.1
$region0: #{tpu_custom_call.1}
  #allocation0 [shape = 'u32[]', space=smem, size = 0x4, offset = 0x4, fixed_abs, tag = 'smem constant byte address 0x4 - core index']
  #allocation1 [shape = 'u32[72,128]{1,0:T(1,128)}', space=vmem, size = 0x9000, scoped, tag = 'internal scratch']
  %s0 = inlined_call_operand.vmem [shape: f32[128,64], index: 0, kind: input, shape index: {}]
  %s1 = inlined_call_operand.vmem [shape: f32[128,64], index: 1, kind: input, shape index: {}]
  %s2 = inlined_call_operand.hbm [shape: f32[128,16,128], index: 2, kind: input, shape index: {}]
  %s3 = inlined_call_operand.vmem [shape: f32[64,8], index: 3, kind: input, shape index: {}]
  %s4 = inlined_call_operand.vmem [shape: f32[8,64], index: 4, kind: input, shape index: {}]
  %s5 = inlined_call_operand.vmem [shape: f32[1,64], index: 5, kind: input, shape index: {}]
  %s6 = inlined_call_operand.vmem [shape: f32[1,64], index: 6, kind: input, shape index: {}]
  %s7 = inlined_call_operand.vmem [shape: bf16[64,64], index: 7, kind: input, shape index: {}]
  %s8 = inlined_call_operand.vmem [shape: f32[1,64], index: 8, kind: input, shape index: {}]
  %s9 = inlined_call_operand.vmem [shape: bf16[128,64], index: 9, kind: input, shape index: {}]
  %s10 = inlined_call_operand.vmem [shape: f32[1,64], index: 10, kind: input, shape index: {}]
  %s11 = inlined_call_operand.vmem [shape: bf16[128,64], index: 11, kind: input, shape index: {}]
  %s12 = inlined_call_operand.vmem [shape: f32[1,64], index: 12, kind: input, shape index: {}]
  %s13 = inlined_call_operand.vmem [shape: bf16[64,64], index: 13, kind: input, shape index: {}]
  %s14 = inlined_call_operand.vmem [shape: bf16[64,64], index: 14, kind: input, shape index: {}]
  %s15 = inlined_call_operand.vmem [shape: f32[1,64], index: 15, kind: input, shape index: {}]
  %s16 = inlined_call_operand.vmem [shape: f32[1,64], index: 16, kind: input, shape index: {}]
  %s17 = inlined_call_operand.vmem [shape: f32[1,64], index: 17, kind: input, shape index: {}]
  %s18 = inlined_call_operand.vmem [shape: bf16[64,64], index: 18, kind: input, shape index: {}]
  %s19 = inlined_call_operand.vmem [shape: f32[1,64], index: 19, kind: input, shape index: {}]
  %s20 = inlined_call_operand.vmem [shape: bf16[64,64], index: 20, kind: input, shape index: {}]
  %s21 = inlined_call_operand.vmem [shape: f32[1,64], index: 21, kind: input, shape index: {}]
  %s22 = inlined_call_operand.vmem [shape: f32[128,64], index: 22, kind: output, shape index: {0}]
  %s23 = inlined_call_operand.vmem [shape: bf16[128,16,64], index: 23, kind: output, shape index: {1}]
  %s24 = inlined_call_operand.vmem [shape: bf16[128,16,64], index: 24, kind: output, shape index: {2}]
  %25 = xla_tuple %s22, %s23, %s24
  %s26 = sld [smem:[#allocation0]]
  $region141: #{tpu_custom_call.1} parent=0
    _
  %s28 = ssub.s32 1, %s26
  %s29 = scalar_select 0, %s28, %s26
  $region1: #{tpu_custom_call.1} parent=0
    #allocation2 [shape = 'u8[1048576]{0}', space=vmem, size = 0x100000, scoped, tag = 'input window, operand 2']
    #allocation3 [shape = 's32[2]{0}', space=sflag, size = 0x8, scoped, tag = 'scoped memory for tpu_custom_call.1']
    %30 = vsyncpa [#allocation3], 0
    %s31 = scalar_lea.sflag [#allocation3], 1
    %32 = vsyncpa %s31, 0
    loop: start=0, step=1, limit=4
    $region2: #{tpu_custom_call.1} parent=1 // loop_pre_header
      _
    $region3: #{tpu_custom_call.1} parent=1 // loop_header
      %s34 = sphi 0, %s38
      %p35 = scmp.ge.s32.totalorder %s34, 4
      %s44 = sphi 0, %s46
      %s47 = sphi 0, %s44
      %s48 = sphi 0, %s47
      %s64 = sphi 0, %s48
      %s70 = sphi 0, %s72
      %s73 = sphi 0, %s70
      %s74 = sphi 0, %s73
      %s90 = sphi 0, %s74
      %s96 = sphi 0, %s98
      %s99 = sphi 0, %s96
      %s100 = sphi 0, %s99
      %s116 = sphi 0, %s100
      %s120 = sphi 0, %s120
      %s122 = sphi 0, %s120
      %s123 = sphi 0, %s122
      %s137 = sphi 0, %s123
      %s141 = sphi 0, %s141
      %s143 = sphi 0, %s141
      %s144 = sphi 0, %s143
      %s158 = sphi 0, %s144
      %s162 = sphi 0, %s162
      %s164 = sphi 0, %s162
      %s165 = sphi 0, %s164
      %s179 = sphi 0, %s165
      %s183 = sphi 0, %s183
      %s185 = sphi 0, %s183
      %s186 = sphi 0, %s185
      %s200 = sphi 0, %s186
      %s204 = sphi 0, %s204
      %s206 = sphi 0, %s204
      %s207 = sphi 0, %s206
      %s221 = sphi 0, %s207
      %s225 = sphi 0, %s225
      %s227 = sphi 0, %s225
      %s228 = sphi 0, %s227
      %s242 = sphi 0, %s228
      %s246 = sphi 0, %s246
      %s248 = sphi 0, %s246
      %s249 = sphi 0, %s248
      %s263 = sphi 0, %s249
      %s267 = sphi 0, %s267
      %s269 = sphi 0, %s267
      %s270 = sphi 0, %s269
      %s284 = sphi 0, %s270
      %s288 = sphi 0, %s288
      %s290 = sphi 0, %s288
      %s291 = sphi 0, %s290
      %s305 = sphi 0, %s291
      %s309 = sphi 0, %s309
      %s311 = sphi 0, %s309
      %s312 = sphi 0, %s311
      %s326 = sphi 0, %s312
      %s330 = sphi 0, %s330
      %s332 = sphi 0, %s330
      %s333 = sphi 0, %s332
      %s347 = sphi 0, %s333
      %s351 = sphi 0, %s351
      %s353 = sphi 0, %s351
      %s354 = sphi 0, %s353
      %s368 = sphi 0, %s354
      %s372 = sphi 0, %s372
      %s374 = sphi 0, %s372
      %s375 = sphi 0, %s374
      %s389 = sphi 0, %s375
      %s393 = sphi 0, %s393
      %s395 = sphi 0, %s393
      %s396 = sphi 0, %s395
      %s410 = sphi 0, %s396
      %s414 = sphi 0, %s414
      %s416 = sphi 0, %s414
      %s417 = sphi 0, %s416
      %s431 = sphi 0, %s417
      %s435 = sphi 0, %s435
      %s437 = sphi 0, %s435
      %s438 = sphi 0, %s437
      %s452 = sphi 0, %s438
      %s456 = sphi 0, %s456
      %s458 = sphi 0, %s456
      %s459 = sphi 0, %s458
      %s473 = sphi 0, %s459
      %s477 = sphi 0, %s477
      %s479 = sphi 0, %s477
      %s480 = sphi 0, %s479
      %s494 = sphi 0, %s480
      %s498 = sphi 0, %s498
      %s500 = sphi 0, %s498
      %s501 = sphi 0, %s500
      %s515 = sphi 0, %s501
      %s521 = sphi 0, %s523
      %s524 = sphi 0, %s521
      %s525 = sphi 0, %s524
      %s541 = sphi 0, %s525
      %s547 = sphi 0, %s549
      %s550 = sphi 0, %s547
      %s551 = sphi 0, %s550
      %s567 = sphi 0, %s551
      %s573 = sphi 0, %s575
      %s576 = sphi 0, %s573
      %s577 = sphi 0, %s576
      %s593 = sphi 0, %s577
    $region4: #{tpu_custom_call.1} parent=1 // loop_header_branch
      %37 = sbr.rel (%p35) target = $region8
    $region5: #{tpu_custom_call.1} parent=1 // loop_body
      %s39 = ssub.s32 %s34, 1
      %s40 = ssub.s32 %s34, 2
      %s41 = sadd.s32 %s34, 1
      %s42 = ssub.s32 %s34, %s41
      %p43 = scmp.eq.s32.totalorder %s42, 0
      %s45 = sadd.s32 %s44, 1
      %s46 = scalar_select %p43, %s44, %s45
      %p49 = pneg %p43
      %p50 = scmp.eq.s32.totalorder %s34, 1
      %p51 = por %p49, %p50
      %p52 = scmp.ne.s32.totalorder %s44, %s47
      %p53 = scmp.eq.s32.totalorder %s34, 0
      %p54 = por %p52, %p53
      %p55 = scmp.ne.s32.totalorder %s44, %s47
      %p56 = scmp.eq.s32.totalorder %s39, 1
      %p57 = por %p55, %p56
      %p58 = scmp.ne.s32.totalorder %s47, %s48
      %p59 = scmp.eq.s32.totalorder %s39, 0
      %p60 = por %p58, %p59
      %p61 = scmp.ne.s32.totalorder %s47, %s48
      %p62 = scmp.eq.s32.totalorder %s40, 1
      %p63 = por %p61, %p62
      %p65 = scmp.ne.s32.totalorder %s48, %s64
      %p66 = scmp.eq.s32.totalorder %s40, 0
      %p67 = por %p65, %p66
      %s68 = ssub.s32 %s34, %s41
      %p69 = scmp.eq.s32.totalorder %s68, 0
      %s71 = sadd.s32 %s70, 1
      %s72 = scalar_select %p69, %s70, %s71
      %p75 = pneg %p69
      %p76 = scmp.eq.s32.totalorder %s34, 1
      %p77 = por %p75, %p76
      %p78 = scmp.ne.s32.totalorder %s70, %s73
      %p79 = scmp.eq.s32.totalorder %s34, 0
      %p80 = por %p78, %p79
      %p81 = scmp.ne.s32.totalorder %s70, %s73
      %p82 = scmp.eq.s32.totalorder %s39, 1
      %p83 = por %p81, %p82
      %p84 = scmp.ne.s32.totalorder %s73, %s74
      %p85 = scmp.eq.s32.totalorder %s39, 0
      %p86 = por %p84, %p85
      %p87 = scmp.ne.s32.totalorder %s73, %s74
      %p88 = scmp.eq.s32.totalorder %s40, 1
      %p89 = por %p87, %p88
      %p91 = scmp.ne.s32.totalorder %s74, %s90
      %p92 = scmp.eq.s32.totalorder %s40, 0
      %p93 = por %p91, %p92
      %s94 = ssub.s32 %s34, %s41
      %p95 = scmp.eq.s32.totalorder %s94, 0
      %s97 = sadd.s32 %s96, 1
      %s98 = scalar_select %p95, %s96, %s97
      %p101 = pneg %p95
      %p102 = scmp.eq.s32.totalorder %s34, 1
      %p103 = por %p101, %p102
      %p104 = scmp.ne.s32.totalorder %s96, %s99
      %p105 = scmp.eq.s32.totalorder %s34, 0
      %p106 = por %p104, %p105
      %p107 = scmp.ne.s32.totalorder %s96, %s99
      %p108 = scmp.eq.s32.totalorder %s39, 1
      %p109 = por %p107, %p108
      %p110 = scmp.ne.s32.totalorder %s99, %s100
      %p111 = scmp.eq.s32.totalorder %s39, 0
      %p112 = por %p110, %p111
      %p113 = scmp.ne.s32.totalorder %s99, %s100
      %p114 = scmp.eq.s32.totalorder %s40, 1
      %p115 = por %p113, %p114
      %p117 = scmp.ne.s32.totalorder %s100, %s116
      %p118 = scmp.eq.s32.totalorder %s40, 0
      %p119 = por %p117, %p118
      %s121 = sadd.s32 %s120, 1
      %p124 = scmp.eq.s32.totalorder %s34, 1
      %p125 = scmp.ne.s32.totalorder %s120, %s122
      %p126 = scmp.eq.s32.totalorder %s34, 0
      %p127 = por %p125, %p126
      %p128 = scmp.ne.s32.totalorder %s120, %s122
      %p129 = scmp.eq.s32.totalorder %s39, 1
      %p130 = por %p128, %p129
      %p131 = scmp.ne.s32.totalorder %s122, %s123
      %p132 = scmp.eq.s32.totalorder %s39, 0
      %p133 = por %p131, %p132
      %p134 = scmp.ne.s32.totalorder %s122, %s123
      %p135 = scmp.eq.s32.totalorder %s40, 1
      %p136 = por %p134, %p135
      %p138 = scmp.ne.s32.totalorder %s123, %s137
      %p139 = scmp.eq.s32.totalorder %s40, 0
      %p140 = por %p138, %p139
      %s142 = sadd.s32 %s141, 1
      %p145 = scmp.eq.s32.totalorder %s34, 1
      %p146 = scmp.ne.s32.totalorder %s141, %s143
      %p147 = scmp.eq.s32.totalorder %s34, 0
      %p148 = por %p146, %p147
      %p149 = scmp.ne.s32.totalorder %s141, %s143
      %p150 = scmp.eq.s32.totalorder %s39, 1
      %p151 = por %p149, %p150
      %p152 = scmp.ne.s32.totalorder %s143, %s144
      %p153 = scmp.eq.s32.totalorder %s39, 0
      %p154 = por %p152, %p153
      %p155 = scmp.ne.s32.totalorder %s143, %s144
      %p156 = scmp.eq.s32.totalorder %s40, 1
      %p157 = por %p155, %p156
      %p159 = scmp.ne.s32.totalorder %s144, %s158
      %p160 = scmp.eq.s32.totalorder %s40, 0
      %p161 = por %p159, %p160
      %s163 = sadd.s32 %s162, 1
      %p166 = scmp.eq.s32.totalorder %s34, 1
      %p167 = scmp.ne.s32.totalorder %s162, %s164
      %p168 = scmp.eq.s32.totalorder %s34, 0
      %p169 = por %p167, %p168
      %p170 = scmp.ne.s32.totalorder %s162, %s164
      %p171 = scmp.eq.s32.totalorder %s39, 1
      %p172 = por %p170, %p171
      %p173 = scmp.ne.s32.totalorder %s164, %s165
      %p174 = scmp.eq.s32.totalorder %s39, 0
      %p175 = por %p173, %p174
      %p176 = scmp.ne.s32.totalorder %s164, %s165
      %p177 = scmp.eq.s32.totalorder %s40, 1
      %p178 = por %p176, %p177
      %p180 = scmp.ne.s32.totalorder %s165, %s179
      %p181 = scmp.eq.s32.totalorder %s40, 0
      %p182 = por %p180, %p181
      %s184 = sadd.s32 %s183, 1
      %p187 = scmp.eq.s32.totalorder %s34, 1
      %p188 = scmp.ne.s32.totalorder %s183, %s185
      %p189 = scmp.eq.s32.totalorder %s34, 0
      %p190 = por %p188, %p189
      %p191 = scmp.ne.s32.totalorder %s183, %s185
      %p192 = scmp.eq.s32.totalorder %s39, 1
      %p193 = por %p191, %p192
      %p194 = scmp.ne.s32.totalorder %s185, %s186
      %p195 = scmp.eq.s32.totalorder %s39, 0
      %p196 = por %p194, %p195
      %p197 = scmp.ne.s32.totalorder %s185, %s186
      %p198 = scmp.eq.s32.totalorder %s40, 1
      %p199 = por %p197, %p198
      %p201 = scmp.ne.s32.totalorder %s186, %s200
      %p202 = scmp.eq.s32.totalorder %s40, 0
      %p203 = por %p201, %p202
      %s205 = sadd.s32 %s204, 1
      %p208 = scmp.eq.s32.totalorder %s34, 1
      %p209 = scmp.ne.s32.totalorder %s204, %s206
      %p210 = scmp.eq.s32.totalorder %s34, 0
      %p211 = por %p209, %p210
      %p212 = scmp.ne.s32.totalorder %s204, %s206
      %p213 = scmp.eq.s32.totalorder %s39, 1
      %p214 = por %p212, %p213
      %p215 = scmp.ne.s32.totalorder %s206, %s207
      %p216 = scmp.eq.s32.totalorder %s39, 0
      %p217 = por %p215, %p216
      %p218 = scmp.ne.s32.totalorder %s206, %s207
      %p219 = scmp.eq.s32.totalorder %s40, 1
      %p220 = por %p218, %p219
      %p222 = scmp.ne.s32.totalorder %s207, %s221
      %p223 = scmp.eq.s32.totalorder %s40, 0
      %p224 = por %p222, %p223
      %s226 = sadd.s32 %s225, 1
      %p229 = scmp.eq.s32.totalorder %s34, 1
      %p230 = scmp.ne.s32.totalorder %s225, %s227
      %p231 = scmp.eq.s32.totalorder %s34, 0
      %p232 = por %p230, %p231
      %p233 = scmp.ne.s32.totalorder %s225, %s227
      %p234 = scmp.eq.s32.totalorder %s39, 1
      %p235 = por %p233, %p234
      %p236 = scmp.ne.s32.totalorder %s227, %s228
      %p237 = scmp.eq.s32.totalorder %s39, 0
      %p238 = por %p236, %p237
      %p239 = scmp.ne.s32.totalorder %s227, %s228
      %p240 = scmp.eq.s32.totalorder %s40, 1
      %p241 = por %p239, %p240
      %p243 = scmp.ne.s32.totalorder %s228, %s242
      %p244 = scmp.eq.s32.totalorder %s40, 0
      %p245 = por %p243, %p244
      %s247 = sadd.s32 %s246, 1
      %p250 = scmp.eq.s32.totalorder %s34, 1
      %p251 = scmp.ne.s32.totalorder %s246, %s248
      %p252 = scmp.eq.s32.totalorder %s34, 0
      %p253 = por %p251, %p252
      %p254 = scmp.ne.s32.totalorder %s246, %s248
      %p255 = scmp.eq.s32.totalorder %s39, 1
      %p256 = por %p254, %p255
      %p257 = scmp.ne.s32.totalorder %s248, %s249
      %p258 = scmp.eq.s32.totalorder %s39, 0
      %p259 = por %p257, %p258
      %p260 = scmp.ne.s32.totalorder %s248, %s249
      %p261 = scmp.eq.s32.totalorder %s40, 1
      %p262 = por %p260, %p261
      %p264 = scmp.ne.s32.totalorder %s249, %s263
      %p265 = scmp.eq.s32.totalorder %s40, 0
      %p266 = por %p264, %p265
      %s268 = sadd.s32 %s267, 1
      %p271 = scmp.eq.s32.totalorder %s34, 1
      %p272 = scmp.ne.s32.totalorder %s267, %s269
      %p273 = scmp.eq.s32.totalorder %s34, 0
      %p274 = por %p272, %p273
      %p275 = scmp.ne.s32.totalorder %s267, %s269
      %p276 = scmp.eq.s32.totalorder %s39, 1
      %p277 = por %p275, %p276
      %p278 = scmp.ne.s32.totalorder %s269, %s270
      %p279 = scmp.eq.s32.totalorder %s39, 0
      %p280 = por %p278, %p279
      %p281 = scmp.ne.s32.totalorder %s269, %s270
      %p282 = scmp.eq.s32.totalorder %s40, 1
      %p283 = por %p281, %p282
      %p285 = scmp.ne.s32.totalorder %s270, %s284
      %p286 = scmp.eq.s32.totalorder %s40, 0
      %p287 = por %p285, %p286
      %s289 = sadd.s32 %s288, 1
      %p292 = scmp.eq.s32.totalorder %s34, 1
      %p293 = scmp.ne.s32.totalorder %s288, %s290
      %p294 = scmp.eq.s32.totalorder %s34, 0
      %p295 = por %p293, %p294
      %p296 = scmp.ne.s32.totalorder %s288, %s290
      %p297 = scmp.eq.s32.totalorder %s39, 1
      %p298 = por %p296, %p297
      %p299 = scmp.ne.s32.totalorder %s290, %s291
      %p300 = scmp.eq.s32.totalorder %s39, 0
      %p301 = por %p299, %p300
      %p302 = scmp.ne.s32.totalorder %s290, %s291
      %p303 = scmp.eq.s32.totalorder %s40, 1
      %p304 = por %p302, %p303
      %p306 = scmp.ne.s32.totalorder %s291, %s305
      %p307 = scmp.eq.s32.totalorder %s40, 0
      %p308 = por %p306, %p307
      %s310 = sadd.s32 %s309, 1
      %p313 = scmp.eq.s32.totalorder %s34, 1
      %p314 = scmp.ne.s32.totalorder %s309, %s311
      %p315 = scmp.eq.s32.totalorder %s34, 0
      %p316 = por %p314, %p315
      %p317 = scmp.ne.s32.totalorder %s309, %s311
      %p318 = scmp.eq.s32.totalorder %s39, 1
      %p319 = por %p317, %p318
      %p320 = scmp.ne.s32.totalorder %s311, %s312
      %p321 = scmp.eq.s32.totalorder %s39, 0
      %p322 = por %p320, %p321
      %p323 = scmp.ne.s32.totalorder %s311, %s312
      %p324 = scmp.eq.s32.totalorder %s40, 1
      %p325 = por %p323, %p324
      %p327 = scmp.ne.s32.totalorder %s312, %s326
      %p328 = scmp.eq.s32.totalorder %s40, 0
      %p329 = por %p327, %p328
      %s331 = sadd.s32 %s330, 1
      %p334 = scmp.eq.s32.totalorder %s34, 1
      %p335 = scmp.ne.s32.totalorder %s330, %s332
      %p336 = scmp.eq.s32.totalorder %s34, 0
      %p337 = por %p335, %p336
      %p338 = scmp.ne.s32.totalorder %s330, %s332
      %p339 = scmp.eq.s32.totalorder %s39, 1
      %p340 = por %p338, %p339
      %p341 = scmp.ne.s32.totalorder %s332, %s333
      %p342 = scmp.eq.s32.totalorder %s39, 0
      %p343 = por %p341, %p342
      %p344 = scmp.ne.s32.totalorder %s332, %s333
      %p345 = scmp.eq.s32.totalorder %s40, 1
      %p346 = por %p344, %p345
      %p348 = scmp.ne.s32.totalorder %s333, %s347
      %p349 = scmp.eq.s32.totalorder %s40, 0
      %p350 = por %p348, %p349
      %s352 = sadd.s32 %s351, 1
      %p355 = scmp.eq.s32.totalorder %s34, 1
      %p356 = scmp.ne.s32.totalorder %s351, %s353
      %p357 = scmp.eq.s32.totalorder %s34, 0
      %p358 = por %p356, %p357
      %p359 = scmp.ne.s32.totalorder %s351, %s353
      %p360 = scmp.eq.s32.totalorder %s39, 1
      %p361 = por %p359, %p360
      %p362 = scmp.ne.s32.totalorder %s353, %s354
      %p363 = scmp.eq.s32.totalorder %s39, 0
      %p364 = por %p362, %p363
      %p365 = scmp.ne.s32.totalorder %s353, %s354
      %p366 = scmp.eq.s32.totalorder %s40, 1
      %p367 = por %p365, %p366
      %p369 = scmp.ne.s32.totalorder %s354, %s368
      %p370 = scmp.eq.s32.totalorder %s40, 0
      %p371 = por %p369, %p370
      %s373 = sadd.s32 %s372, 1
      %p376 = scmp.eq.s32.totalorder %s34, 1
      %p377 = scmp.ne.s32.totalorder %s372, %s374
      %p378 = scmp.eq.s32.totalorder %s34, 0
      %p379 = por %p377, %p378
      %p380 = scmp.ne.s32.totalorder %s372, %s374
      %p381 = scmp.eq.s32.totalorder %s39, 1
      %p382 = por %p380, %p381
      %p383 = scmp.ne.s32.totalorder %s374, %s375
      %p384 = scmp.eq.s32.totalorder %s39, 0
      %p385 = por %p383, %p384
      %p386 = scmp.ne.s32.totalorder %s374, %s375
      %p387 = scmp.eq.s32.totalorder %s40, 1
      %p388 = por %p386, %p387
      %p390 = scmp.ne.s32.totalorder %s375, %s389
      %p391 = scmp.eq.s32.totalorder %s40, 0
      %p392 = por %p390, %p391
      %s394 = sadd.s32 %s393, 1
      %p397 = scmp.eq.s32.totalorder %s34, 1
      %p398 = scmp.ne.s32.totalorder %s393, %s395
      %p399 = scmp.eq.s32.totalorder %s34, 0
      %p400 = por %p398, %p399
      %p401 = scmp.ne.s32.totalorder %s393, %s395
      %p402 = scmp.eq.s32.totalorder %s39, 1
      %p403 = por %p401, %p402
      %p404 = scmp.ne.s32.totalorder %s395, %s396
      %p405 = scmp.eq.s32.totalorder %s39, 0
      %p406 = por %p404, %p405
      %p407 = scmp.ne.s32.totalorder %s395, %s396
      %p408 = scmp.eq.s32.totalorder %s40, 1
      %p409 = por %p407, %p408
      %p411 = scmp.ne.s32.totalorder %s396, %s410
      %p412 = scmp.eq.s32.totalorder %s40, 0
      %p413 = por %p411, %p412
      %s415 = sadd.s32 %s414, 1
      %p418 = scmp.eq.s32.totalorder %s34, 1
      %p419 = scmp.ne.s32.totalorder %s414, %s416
      %p420 = scmp.eq.s32.totalorder %s34, 0
      %p421 = por %p419, %p420
      %p422 = scmp.ne.s32.totalorder %s414, %s416
      %p423 = scmp.eq.s32.totalorder %s39, 1
      %p424 = por %p422, %p423
      %p425 = scmp.ne.s32.totalorder %s416, %s417
      %p426 = scmp.eq.s32.totalorder %s39, 0
      %p427 = por %p425, %p426
      %p428 = scmp.ne.s32.totalorder %s416, %s417
      %p429 = scmp.eq.s32.totalorder %s40, 1
      %p430 = por %p428, %p429
      %p432 = scmp.ne.s32.totalorder %s417, %s431
      %p433 = scmp.eq.s32.totalorder %s40, 0
      %p434 = por %p432, %p433
      %s436 = sadd.s32 %s435, 1
      %p439 = scmp.eq.s32.totalorder %s34, 1
      %p440 = scmp.ne.s32.totalorder %s435, %s437
      %p441 = scmp.eq.s32.totalorder %s34, 0
      %p442 = por %p440, %p441
      %p443 = scmp.ne.s32.totalorder %s435, %s437
      %p444 = scmp.eq.s32.totalorder %s39, 1
      %p445 = por %p443, %p444
      %p446 = scmp.ne.s32.totalorder %s437, %s438
      %p447 = scmp.eq.s32.totalorder %s39, 0
      %p448 = por %p446, %p447
      %p449 = scmp.ne.s32.totalorder %s437, %s438
      %p450 = scmp.eq.s32.totalorder %s40, 1
      %p451 = por %p449, %p450
      %p453 = scmp.ne.s32.totalorder %s438, %s452
      %p454 = scmp.eq.s32.totalorder %s40, 0
      %p455 = por %p453, %p454
      %s457 = sadd.s32 %s456, 1
      %p460 = scmp.eq.s32.totalorder %s34, 1
      %p461 = scmp.ne.s32.totalorder %s456, %s458
      %p462 = scmp.eq.s32.totalorder %s34, 0
      %p463 = por %p461, %p462
      %p464 = scmp.ne.s32.totalorder %s456, %s458
      %p465 = scmp.eq.s32.totalorder %s39, 1
      %p466 = por %p464, %p465
      %p467 = scmp.ne.s32.totalorder %s458, %s459
      %p468 = scmp.eq.s32.totalorder %s39, 0
      %p469 = por %p467, %p468
      %p470 = scmp.ne.s32.totalorder %s458, %s459
      %p471 = scmp.eq.s32.totalorder %s40, 1
      %p472 = por %p470, %p471
      %p474 = scmp.ne.s32.totalorder %s459, %s473
      %p475 = scmp.eq.s32.totalorder %s40, 0
      %p476 = por %p474, %p475
      %s478 = sadd.s32 %s477, 1
      %p481 = scmp.eq.s32.totalorder %s34, 1
      %p482 = scmp.ne.s32.totalorder %s477, %s479
      %p483 = scmp.eq.s32.totalorder %s34, 0
      %p484 = por %p482, %p483
      %p485 = scmp.ne.s32.totalorder %s477, %s479
      %p486 = scmp.eq.s32.totalorder %s39, 1
      %p487 = por %p485, %p486
      %p488 = scmp.ne.s32.totalorder %s479, %s480
      %p489 = scmp.eq.s32.totalorder %s39, 0
      %p490 = por %p488, %p489
      %p491 = scmp.ne.s32.totalorder %s479, %s480
      %p492 = scmp.eq.s32.totalorder %s40, 1
      %p493 = por %p491, %p492
      %p495 = scmp.ne.s32.totalorder %s480, %s494
      %p496 = scmp.eq.s32.totalorder %s40, 0
      %p497 = por %p495, %p496
      %s499 = sadd.s32 %s498, 1
      %p502 = scmp.eq.s32.totalorder %s34, 1
      %p503 = scmp.ne.s32.totalorder %s498, %s500
      %p504 = scmp.eq.s32.totalorder %s34, 0
      %p505 = por %p503, %p504
      %p506 = scmp.ne.s32.totalorder %s498, %s500
      %p507 = scmp.eq.s32.totalorder %s39, 1
      %p508 = por %p506, %p507
      %p509 = scmp.ne.s32.totalorder %s500, %s501
      %p510 = scmp.eq.s32.totalorder %s39, 0
      %p511 = por %p509, %p510
      %p512 = scmp.ne.s32.totalorder %s500, %s501
      %p513 = scmp.eq.s32.totalorder %s40, 1
      %p514 = por %p512, %p513
      %p516 = scmp.ne.s32.totalorder %s501, %s515
      %p517 = scmp.eq.s32.totalorder %s40, 0
      %p518 = por %p516, %p517
      %s519 = ssub.s32 %s34, %s41
      %p520 = scmp.eq.s32.totalorder %s519, 0
      %s522 = sadd.s32 %s521, 1
      %s523 = scalar_select %p520, %s521, %s522
      %p526 = pneg %p520
      %p527 = scmp.eq.s32.totalorder %s34, 1
      %p528 = por %p526, %p527
      %p529 = scmp.ne.s32.totalorder %s521, %s524
      %p530 = scmp.eq.s32.totalorder %s34, 0
      %p531 = por %p529, %p530
      %p532 = scmp.ne.s32.totalorder %s521, %s524
      %p533 = scmp.eq.s32.totalorder %s39, 1
      %p534 = por %p532, %p533
      %p535 = scmp.ne.s32.totalorder %s524, %s525
      %p536 = scmp.eq.s32.totalorder %s39, 0
      %p537 = por %p535, %p536
      %p538 = scmp.ne.s32.totalorder %s524, %s525
      %p539 = scmp.eq.s32.totalorder %s40, 1
      %p540 = por %p538, %p539
      %p542 = scmp.ne.s32.totalorder %s525, %s541
      %p543 = scmp.eq.s32.totalorder %s40, 0
      %p544 = por %p542, %p543
      %s545 = ssub.s32 %s34, %s41
      %p546 = scmp.eq.s32.totalorder %s545, 0
      %s548 = sadd.s32 %s547, 1
      %s549 = scalar_select %p546, %s547, %s548
      %p552 = pneg %p546
      %p553 = scmp.eq.s32.totalorder %s34, 1
      %p554 = por %p552, %p553
      %p555 = scmp.ne.s32.totalorder %s547, %s550
      %p556 = scmp.eq.s32.totalorder %s34, 0
      %p557 = por %p555, %p556
      %p558 = scmp.ne.s32.totalorder %s547, %s550
      %p559 = scmp.eq.s32.totalorder %s39, 1
      %p560 = por %p558, %p559
      %p561 = scmp.ne.s32.totalorder %s550, %s551
      %p562 = scmp.eq.s32.totalorder %s39, 0
      %p563 = por %p561, %p562
      %p564 = scmp.ne.s32.totalorder %s550, %s551
      %p565 = scmp.eq.s32.totalorder %s40, 1
      %p566 = por %p564, %p565
      %p568 = scmp.ne.s32.totalorder %s551, %s567
      %p569 = scmp.eq.s32.totalorder %s40, 0
      %p570 = por %p568, %p569
      %s571 = ssub.s32 %s34, %s41
      %p572 = scmp.eq.s32.totalorder %s571, 0
      %s574 = sadd.s32 %s573, 1
      %s575 = scalar_select %p572, %s573, %s574
      %p578 = pneg %p572
      %p579 = scmp.eq.s32.totalorder %s34, 1
      %p580 = por %p578, %p579
      %p581 = scmp.ne.s32.totalorder %s573, %s576
      %p582 = scmp.eq.s32.totalorder %s34, 0
      %p583 = por %p581, %p582
      %p584 = scmp.ne.s32.totalorder %s573, %s576
      %p585 = scmp.eq.s32.totalorder %s39, 1
      %p586 = por %p584, %p585
      %p587 = scmp.ne.s32.totalorder %s576, %s577
      %p588 = scmp.eq.s32.totalorder %s39, 0
      %p589 = por %p587, %p588
      %p590 = scmp.ne.s32.totalorder %s576, %s577
      %p591 = scmp.eq.s32.totalorder %s40, 1
      %p592 = por %p590, %p591
      %p594 = scmp.ne.s32.totalorder %s577, %s593
      %p595 = scmp.eq.s32.totalorder %s40, 0
      %p596 = por %p594, %p595
      %p597 = scmp.le.s32.totalorder 1, %s34
      %p598 = scmp.lt.s32.totalorder %s34, 3
      %p599 = pnand %p597, %p598
      %p600 = pneg %p599
      // Predicated region
      $region9: #{tpu_custom_call.1} parent=5 // pred_check
        _
      $region10: #{tpu_custom_call.1} parent=5 // pred_check_branch
        %602 = sbr.rel (%p599) target = $region12
      $region11: #{tpu_custom_call.1} parent=5 // pred_region
        %s603 = ssub.s32 %s34, 1
        // Predicated region
        $region13: #{tpu_custom_call.1} parent=11 // pred_check
          %p604 = pneg %p133
        $region14: #{tpu_custom_call.1} parent=11 // pred_check_branch
          %606 = sbr.rel (%p604) target = $region16
        $region15: #{tpu_custom_call.1} parent=11 // pred_region
          _
        $region16: #{tpu_custom_call.1} parent=11 // pred_fallthru
          _
        // Predicated region
        $region17: #{tpu_custom_call.1} parent=11 // pred_check
          %p607 = pneg %p154
        $region18: #{tpu_custom_call.1} parent=11 // pred_check_branch
          %609 = sbr.rel (%p607) target = $region20
        $region19: #{tpu_custom_call.1} parent=11 // pred_region
          _
        $region20: #{tpu_custom_call.1} parent=11 // pred_fallthru
          _
        // Predicated region
        $region21: #{tpu_custom_call.1} parent=11 // pred_check
          %p610 = pneg %p175
        $region22: #{tpu_custom_call.1} parent=11 // pred_check_branch
          %612 = sbr.rel (%p610) target = $region24
        $region23: #{tpu_custom_call.1} parent=11 // pred_region
          _
        $region24: #{tpu_custom_call.1} parent=11 // pred_fallthru
          _
        // Predicated region
        $region25: #{tpu_custom_call.1} parent=11 // pred_check
          %p613 = pneg %p196
        $region26: #{tpu_custom_call.1} parent=11 // pred_check_branch
          %615 = sbr.rel (%p613) target = $region28
        $region27: #{tpu_custom_call.1} parent=11 // pred_region
          _
        $region28: #{tpu_custom_call.1} parent=11 // pred_fallthru
          _
        // Predicated region
        $region29: #{tpu_custom_call.1} parent=11 // pred_check
          %p616 = pneg %p217
        $region30: #{tpu_custom_call.1} parent=11 // pred_check_branch
          %618 = sbr.rel (%p616) target = $region32
        $region31: #{tpu_custom_call.1} parent=11 // pred_region
          _
        $region32: #{tpu_custom_call.1} parent=11 // pred_fallthru
          _
        // Predicated region
        $region33: #{tpu_custom_call.1} parent=11 // pred_check
          %p619 = pneg %p238
        $region34: #{tpu_custom_call.1} parent=11 // pred_check_branch
          %621 = sbr.rel (%p619) target = $region36
        $region35: #{tpu_custom_call.1} parent=11 // pred_region
          _
        $region36: #{tpu_custom_call.1} parent=11 // pred_fallthru
          _
        // Predicated region
        $region37: #{tpu_custom_call.1} parent=11 // pred_check
          %p622 = pneg %p259
        $region38: #{tpu_custom_call.1} parent=11 // pred_check_branch
          %624 = sbr.rel (%p622) target = $region40
        $region39: #{tpu_custom_call.1} parent=11 // pred_region
          _
        $region40: #{tpu_custom_call.1} parent=11 // pred_fallthru
          _
        // Predicated region
        $region41: #{tpu_custom_call.1} parent=11 // pred_check
          %p625 = pneg %p280
        $region42: #{tpu_custom_call.1} parent=11 // pred_check_branch
          %627 = sbr.rel (%p625) target = $region44
        $region43: #{tpu_custom_call.1} parent=11 // pred_region
          _
        $region44: #{tpu_custom_call.1} parent=11 // pred_fallthru
          _
        // Predicated region
        $region45: #{tpu_custom_call.1} parent=11 // pred_check
          %p628 = pneg %p301
        $region46: #{tpu_custom_call.1} parent=11 // pred_check_branch
          %630 = sbr.rel (%p628) target = $region48
        $region47: #{tpu_custom_call.1} parent=11 // pred_region
          _
        $region48: #{tpu_custom_call.1} parent=11 // pred_fallthru
          _
        // Predicated region
        $region49: #{tpu_custom_call.1} parent=11 // pred_check
          %p631 = pneg %p322
        $region50: #{tpu_custom_call.1} parent=11 // pred_check_branch
          %633 = sbr.rel (%p631) target = $region52
        $region51: #{tpu_custom_call.1} parent=11 // pred_region
          _
        $region52: #{tpu_custom_call.1} parent=11 // pred_fallthru
          _
        // Predicated region
        $region53: #{tpu_custom_call.1} parent=11 // pred_check
          %p634 = pneg %p343
        $region54: #{tpu_custom_call.1} parent=11 // pred_check_branch
          %636 = sbr.rel (%p634) target = $region56
        $region55: #{tpu_custom_call.1} parent=11 // pred_region
          _
        $region56: #{tpu_custom_call.1} parent=11 // pred_fallthru
          _
        // Predicated region
        $region57: #{tpu_custom_call.1} parent=11 // pred_check
          %p637 = pneg %p364
        $region58: #{tpu_custom_call.1} parent=11 // pred_check_branch
          %639 = sbr.rel (%p637) target = $region60
        $region59: #{tpu_custom_call.1} parent=11 // pred_region
          _
        $region60: #{tpu_custom_call.1} parent=11 // pred_fallthru
          _
        // Predicated region
        $region61: #{tpu_custom_call.1} parent=11 // pred_check
          %p640 = pneg %p385
        $region62: #{tpu_custom_call.1} parent=11 // pred_check_branch
          %642 = sbr.rel (%p640) target = $region64
        $region63: #{tpu_custom_call.1} parent=11 // pred_region
          _
        $region64: #{tpu_custom_call.1} parent=11 // pred_fallthru
          _
        // Predicated region
        $region65: #{tpu_custom_call.1} parent=11 // pred_check
          %p643 = pneg %p406
        $region66: #{tpu_custom_call.1} parent=11 // pred_check_branch
          %645 = sbr.rel (%p643) target = $region68
        $region67: #{tpu_custom_call.1} parent=11 // pred_region
          _
        $region68: #{tpu_custom_call.1} parent=11 // pred_fallthru
          _
        // Predicated region
        $region69: #{tpu_custom_call.1} parent=11 // pred_check
          %p646 = pneg %p427
        $region70: #{tpu_custom_call.1} parent=11 // pred_check_branch
          %648 = sbr.rel (%p646) target = $region72
        $region71: #{tpu_custom_call.1} parent=11 // pred_region
          _
        $region72: #{tpu_custom_call.1} parent=11 // pred_fallthru
          _
        // Predicated region
        $region73: #{tpu_custom_call.1} parent=11 // pred_check
          %p649 = pneg %p448
        $region74: #{tpu_custom_call.1} parent=11 // pred_check_branch
          %651 = sbr.rel (%p649) target = $region76
        $region75: #{tpu_custom_call.1} parent=11 // pred_region
          _
        $region76: #{tpu_custom_call.1} parent=11 // pred_fallthru
          _
        // Predicated region
        $region77: #{tpu_custom_call.1} parent=11 // pred_check
          %p652 = pneg %p469
        $region78: #{tpu_custom_call.1} parent=11 // pred_check_branch
          %654 = sbr.rel (%p652) target = $region80
        $region79: #{tpu_custom_call.1} parent=11 // pred_region
          _
        $region80: #{tpu_custom_call.1} parent=11 // pred_fallthru
          _
        // Predicated region
        $region81: #{tpu_custom_call.1} parent=11 // pred_check
          %p655 = pneg %p490
        $region82: #{tpu_custom_call.1} parent=11 // pred_check_branch
          %657 = sbr.rel (%p655) target = $region84
        $region83: #{tpu_custom_call.1} parent=11 // pred_region
          _
        $region84: #{tpu_custom_call.1} parent=11 // pred_fallthru
          _
        // Predicated region
        $region85: #{tpu_custom_call.1} parent=11 // pred_check
          %p658 = pneg %p511
        $region86: #{tpu_custom_call.1} parent=11 // pred_check_branch
          %660 = sbr.rel (%p658) target = $region88
        $region87: #{tpu_custom_call.1} parent=11 // pred_region
          _
        $region88: #{tpu_custom_call.1} parent=11 // pred_fallthru
          _
      $region12: #{tpu_custom_call.1} parent=5 // pred_fallthru
        _
      %p661 = scmp.lt.s32.totalorder %s34, 2
      // Predicated region
      $region89: #{tpu_custom_call.1} parent=5 // pred_check
        %p662 = pneg %p661
      $region90: #{tpu_custom_call.1} parent=5 // pred_check_branch
        %664 = sbr.rel (%p662) target = $region92
      $region91: #{tpu_custom_call.1} parent=5 // pred_region
        // Predicated region
        $region93: #{tpu_custom_call.1} parent=91 // pred_check
          %p665 = pneg %p54
        $region94: #{tpu_custom_call.1} parent=91 // pred_check_branch
          %667 = sbr.rel (%p665) target = $region96
        $region95: #{tpu_custom_call.1} parent=91 // pred_region
          %s668 = smul.u32 8, %s34
          %p669 = scmp.lt.s32.totalorder %s668, 15
          %s670 = scalar_select %p669, %s668, 15
          %s671 = smul.addr %s670, 8
          %s672 = scalar_lea.vmem %s0, %s671
          %s673 = smul.u32 8, %s34
        $region96: #{tpu_custom_call.1} parent=91 // pred_fallthru
          _
        // Predicated region
        $region97: #{tpu_custom_call.1} parent=91 // pred_check
          %p674 = pneg %p80
        $region98: #{tpu_custom_call.1} parent=91 // pred_check_branch
          %676 = sbr.rel (%p674) target = $region100
        $region99: #{tpu_custom_call.1} parent=91 // pred_region
          %s677 = smul.u32 8, %s34
          %p678 = scmp.lt.s32.totalorder %s677, 15
          %s679 = scalar_select %p678, %s677, 15
          %s680 = smul.addr %s679, 8
          %s681 = scalar_lea.vmem %s1, %s680
          %s682 = smul.u32 8, %s34
        $region100: #{tpu_custom_call.1} parent=91 // pred_fallthru
          _
        // Predicated region
        $region101: #{tpu_custom_call.1} parent=91 // pred_check
          %p683 = pneg %p106
        $region102: #{tpu_custom_call.1} parent=91 // pred_check_branch
          %685 = sbr.rel (%p683) target = $region104
        $region103: #{tpu_custom_call.1} parent=91 // pred_region
          %s686 = sand.u32 %s96, 1
          %s687 = scalar_lea.sflag [#allocation3], %s686
          %s688 = sand.u32 %s96, 1
          %s689 = smul.addr %s688, 1024
          %s690 = scalar_lea.vmem [#allocation2], %s689
          %s691 = smul.u32 64, %s34
          %693 = vsyncadd %s687, 0
          %s694 = smul.addr %s691, 2
          %s695 = smul.addr %s694, 8
          %s696 = scalar_lea.hbm %s2, %s695
          %s697 = sshll.u32 %s696, 4
          %s698 = int_to_ptr.hbm [resolvable:$true] %s697
          %s699 = sshll.u32 %s690, 4
          %s700 = int_to_ptr.vmem [resolvable:$true] %s699
          %705 = dma.hbm_to_vmem [thread:$0]  %s698, 16384, %s700, %s687, 128, 128, 8
        $region104: #{tpu_custom_call.1} parent=91 // pred_fallthru
          _
      $region92: #{tpu_custom_call.1} parent=5 // pred_fallthru
        _
      %p706 = scmp.le.s32.totalorder 1, %s34
      %p707 = scmp.lt.s32.totalorder %s34, 3
      %p708 = pnand %p706, %p707
      %p709 = pneg %p708
      // Predicated region
      $region105: #{tpu_custom_call.1} parent=5 // pred_check
        _
      $region106: #{tpu_custom_call.1} parent=5 // pred_check_branch
        %711 = sbr.rel (%p708) target = $region108
      $region107: #{tpu_custom_call.1} parent=5 // pred_region
        %s712 = ssub.s32 %s34, 1
        %s713 = sand.u32 %s99, 1
        %s714 = scalar_lea.sflag [#allocation3], %s713
        %s715 = sand.u32 %s99, 1
        %s716 = smul.addr %s715, 1024
        %s717 = scalar_lea.vmem [#allocation2], %s716
        // Predicated region
        $region109: #{tpu_custom_call.1} parent=107 // pred_check
          %p718 = pneg %p112
        $region110: #{tpu_custom_call.1} parent=107 // pred_check_branch
          %720 = sbr.rel (%p718) target = $region112
        $region111: #{tpu_custom_call.1} parent=107 // pred_region
          %722 = dma.done %s714, 16384
        $region112: #{tpu_custom_call.1} parent=107 // pred_fallthru
          _
        %s723 = smul.u32 8, %s39
        %p724 = scmp.lt.s32.totalorder %s723, 15
        %s725 = scalar_select %p724, %s723, 15
        %s726 = smul.addr %s725, 8
        %s727 = scalar_lea.vmem %s0, %s726
        %p728 = pneg %p60
        %p729 = pneg %p57
        %s730 = smul.u32 8, %s39
        %p731 = scmp.lt.s32.totalorder %s730, 15
        %s732 = scalar_select %p731, %s730, 15
        %s733 = smul.addr %s732, 8
        %s734 = scalar_lea.vmem %s1, %s733
        %p735 = pneg %p86
        %p736 = pneg %p83
        %s737 = sand.u32 %s99, 1
        %s738 = scalar_lea.sflag [#allocation3], %s737
        %s739 = sand.u32 %s99, 1
        %s740 = smul.addr %s739, 1024
        %s741 = scalar_lea.vmem [#allocation2], %s740
        %p742 = pneg %p112
        %p743 = pneg %p109
        %p744 = pneg %p133
        %p745 = pneg %p130
        %p746 = pneg %p154
        %p747 = pneg %p151
        %p748 = pneg %p175
        %p749 = pneg %p172
        %p750 = pneg %p196
        %p751 = pneg %p193
        %p752 = pneg %p217
        %p753 = pneg %p214
        %p754 = pneg %p238
        %p755 = pneg %p235
        %p756 = pneg %p259
        %p757 = pneg %p256
        %p758 = pneg %p280
        %p759 = pneg %p277
        %p760 = pneg %p301
        %p761 = pneg %p298
        %p762 = pneg %p322
        %p763 = pneg %p319
        %p764 = pneg %p343
        %p765 = pneg %p340
        %p766 = pneg %p364
        %p767 = pneg %p361
        %p768 = pneg %p385
        %p769 = pneg %p382
        %p770 = pneg %p406
        %p771 = pneg %p403
        %p772 = pneg %p427
        %p773 = pneg %p424
        %p774 = pneg %p448
        %p775 = pneg %p445
        %p776 = pneg %p469
        %p777 = pneg %p466
        %p778 = pneg %p490
        %p779 = pneg %p487
        %p780 = pneg %p511
        %p781 = pneg %p508
        %p782 = pneg %p537
        %p783 = pneg %p534
        %s784 = smul.u32 8, %s39
        %p785 = scmp.lt.s32.totalorder %s784, 15
        %s786 = scalar_select %p785, %s784, 15
        %s787 = smul.addr %s786, 8
        %s788 = scalar_lea.vmem %s22, %s787
        %p789 = pneg %p563
        %p790 = pneg %p560
        %s791 = smul.u32 64, %s39
        %p792 = scmp.lt.s32.totalorder %s791, 127
        %s793 = scalar_select %p792, %s791, 127
        %s794 = smul.addr %s793, 2
        %s795 = smul.addr %s794, 4
        %s796 = scalar_lea.vmem %s23, %s795
        %p797 = pneg %p589
        %p798 = pneg %p586
        %s799 = smul.u32 64, %s39
        %p800 = scmp.lt.s32.totalorder %s799, 127
        %s801 = scalar_select %p800, %s799, 127
        %s802 = smul.addr %s801, 2
        %s803 = smul.addr %s802, 4
        %s804 = scalar_lea.vmem %s24, %s803
        %s805 = smul.u32 8, %s39
        %p806 = scmp.lt.s32.totalorder %s805, 15
        %s807 = scalar_select %p806, %s805, 15
        %s808 = smul.addr %s807, 8
        %s809 = scalar_lea.vmem %s0, %s808
        %s810 = smul.u32 8, %s39
        %s811 = smul.u32 8, %s39
        %p812 = scmp.lt.s32.totalorder %s811, 15
        %s813 = scalar_select %p812, %s811, 15
        %s814 = smul.addr %s813, 8
        %s815 = scalar_lea.vmem %s1, %s814
        %s816 = smul.u32 8, %s39
        %s817 = smul.u32 64, %s39
        %s818 = smul.u32 8, %s39
        %p819 = scmp.lt.s32.totalorder %s818, 15
        %s820 = scalar_select %p819, %s818, 15
        %s821 = smul.addr %s820, 8
        %s822 = scalar_lea.vmem %s22, %s821
        %s823 = smul.u32 8, %s39
        %s824 = smul.u32 64, %s39
        %p825 = scmp.lt.s32.totalorder %s824, 127
        %s826 = scalar_select %p825, %s824, 127
        %s827 = smul.addr %s826, 2
        %s828 = smul.addr %s827, 4
        %s829 = scalar_lea.vmem %s23, %s828
        %s830 = smul.u32 64, %s39
        %s831 = smul.u32 64, %s39
        %p832 = scmp.lt.s32.totalorder %s831, 127
        %s833 = scalar_select %p832, %s831, 127
        %s834 = smul.addr %s833, 2
        %s835 = smul.addr %s834, 4
        %s836 = scalar_lea.vmem %s24, %s835
        %s837 = smul.u32 64, %s39
        %v839 = vld [vmem:[%s815] sm:$0xff]
        %v840 = vld [vmem:[%s815 + $0x8] sm:$0xff]
        %v841 = vld [vmem:[%s815 + $0x10] sm:$0xff]
        %v842 = vld [vmem:[%s815 + $0x18] sm:$0xff]
        %v843 = vld [vmem:[%s815 + $0x20] sm:$0xff]
        %v844 = vld [vmem:[%s815 + $0x28] sm:$0xff]
        %v845 = vld [vmem:[%s815 + $0x30] sm:$0xff]
        %v846 = vld [vmem:[%s815 + $0x38] sm:$0xff]
        %v847 = vld [vmem:[%s717] sm:$0xff]
        %v848 = vld [vmem:[%s717 + $0x8] sm:$0xff]
        %v849 = vld [vmem:[%s717 + $0x10] sm:$0xff]
        %v850 = vld [vmem:[%s717 + $0x18] sm:$0xff]
        %v851 = vld [vmem:[%s717 + $0x20] sm:$0xff]
        %v852 = vld [vmem:[%s717 + $0x28] sm:$0xff]
        %v853 = vld [vmem:[%s717 + $0x30] sm:$0xff]
        %v854 = vld [vmem:[%s717 + $0x38] sm:$0xff]
        %v855 = vld [vmem:[%s717 + $0x40] sm:$0xff]
        %v856 = vld [vmem:[%s717 + $0x48] sm:$0xff]
        %v857 = vld [vmem:[%s717 + $0x50] sm:$0xff]
        %v858 = vld [vmem:[%s717 + $0x58] sm:$0xff]
        %v859 = vld [vmem:[%s717 + $0x60] sm:$0xff]
        %v860 = vld [vmem:[%s717 + $0x68] sm:$0xff]
        %v861 = vld [vmem:[%s717 + $0x70] sm:$0xff]
        %v862 = vld [vmem:[%s717 + $0x78] sm:$0xff]
        %v863 = vld [vmem:[%s717 + $0x80] sm:$0xff]
        %v864 = vld [vmem:[%s717 + $0x88] sm:$0xff]
        %v865 = vld [vmem:[%s717 + $0x90] sm:$0xff]
        %v866 = vld [vmem:[%s717 + $0x98] sm:$0xff]
        %v867 = vld [vmem:[%s717 + $0xa0] sm:$0xff]
        %v868 = vld [vmem:[%s717 + $0xa8] sm:$0xff]
        %v869 = vld [vmem:[%s717 + $0xb0] sm:$0xff]
        %v870 = vld [vmem:[%s717 + $0xb8] sm:$0xff]
        %v871 = vld [vmem:[%s717 + $0xc0] sm:$0xff]
        %v872 = vld [vmem:[%s717 + $0xc8] sm:$0xff]
        %v873 = vld [vmem:[%s717 + $0xd0] sm:$0xff]
        %v874 = vld [vmem:[%s717 + $0xd8] sm:$0xff]
        %v875 = vld [vmem:[%s717 + $0xe0] sm:$0xff]
        %v876 = vld [vmem:[%s717 + $0xe8] sm:$0xff]
        %v877 = vld [vmem:[%s717 + $0xf0] sm:$0xff]
        %v878 = vld [vmem:[%s717 + $0xf8] sm:$0xff]
        %v879 = vld [vmem:[%s717 + $0x100] sm:$0xff]
        %v880 = vld [vmem:[%s717 + $0x108] sm:$0xff]
        %v881 = vld [vmem:[%s717 + $0x110] sm:$0xff]
        %v882 = vld [vmem:[%s717 + $0x118] sm:$0xff]
        %v883 = vld [vmem:[%s717 + $0x120] sm:$0xff]
        %v884 = vld [vmem:[%s717 + $0x128] sm:$0xff]
        %v885 = vld [vmem:[%s717 + $0x130] sm:$0xff]
        %v886 = vld [vmem:[%s717 + $0x138] sm:$0xff]
        %v887 = vld [vmem:[%s717 + $0x140] sm:$0xff]
        %v888 = vld [vmem:[%s717 + $0x148] sm:$0xff]
        %v889 = vld [vmem:[%s717 + $0x150] sm:$0xff]
        %v890 = vld [vmem:[%s717 + $0x158] sm:$0xff]
        %v891 = vld [vmem:[%s717 + $0x160] sm:$0xff]
        %v892 = vld [vmem:[%s717 + $0x168] sm:$0xff]
        %v893 = vld [vmem:[%s717 + $0x170] sm:$0xff]
        %v894 = vld [vmem:[%s717 + $0x178] sm:$0xff]
        %v895 = vld [vmem:[%s717 + $0x180] sm:$0xff]
        %v896 = vld [vmem:[%s717 + $0x188] sm:$0xff]
        %v897 = vld [vmem:[%s717 + $0x190] sm:$0xff]
        %v898 = vld [vmem:[%s717 + $0x198] sm:$0xff]
        %v899 = vld [vmem:[%s717 + $0x1a0] sm:$0xff]
        %v900 = vld [vmem:[%s717 + $0x1a8] sm:$0xff]
        %v901 = vld [vmem:[%s717 + $0x1b0] sm:$0xff]
        %v902 = vld [vmem:[%s717 + $0x1b8] sm:$0xff]
        %v903 = vld [vmem:[%s717 + $0x1c0] sm:$0xff]
        %v904 = vld [vmem:[%s717 + $0x1c8] sm:$0xff]
        %v905 = vld [vmem:[%s717 + $0x1d0] sm:$0xff]
        %v906 = vld [vmem:[%s717 + $0x1d8] sm:$0xff]
        %v907 = vld [vmem:[%s717 + $0x1e0] sm:$0xff]
        %v908 = vld [vmem:[%s717 + $0x1e8] sm:$0xff]
        %v909 = vld [vmem:[%s717 + $0x1f0] sm:$0xff]
        %v910 = vld [vmem:[%s717 + $0x1f8] sm:$0xff]
        %v911 = vld [vmem:[%s717 + $0x200] sm:$0xff]
        %v912 = vld [vmem:[%s717 + $0x208] sm:$0xff]
        %v913 = vld [vmem:[%s717 + $0x210] sm:$0xff]
        %v914 = vld [vmem:[%s717 + $0x218] sm:$0xff]
        %v915 = vld [vmem:[%s717 + $0x220] sm:$0xff]
        %v916 = vld [vmem:[%s717 + $0x228] sm:$0xff]
        %v917 = vld [vmem:[%s717 + $0x230] sm:$0xff]
        %v918 = vld [vmem:[%s717 + $0x238] sm:$0xff]
        %v919 = vld [vmem:[%s717 + $0x240] sm:$0xff]
        %v920 = vld [vmem:[%s717 + $0x248] sm:$0xff]
        %v921 = vld [vmem:[%s717 + $0x250] sm:$0xff]
        %v922 = vld [vmem:[%s717 + $0x258] sm:$0xff]
        %v923 = vld [vmem:[%s717 + $0x260] sm:$0xff]
        %v924 = vld [vmem:[%s717 + $0x268] sm:$0xff]
        %v925 = vld [vmem:[%s717 + $0x270] sm:$0xff]
        %v926 = vld [vmem:[%s717 + $0x278] sm:$0xff]
        %v927 = vld [vmem:[%s717 + $0x280] sm:$0xff]
        %v928 = vld [vmem:[%s717 + $0x288] sm:$0xff]
        %v929 = vld [vmem:[%s717 + $0x290] sm:$0xff]
        %v930 = vld [vmem:[%s717 + $0x298] sm:$0xff]
        %v931 = vld [vmem:[%s717 + $0x2a0] sm:$0xff]
        %v932 = vld [vmem:[%s717 + $0x2a8] sm:$0xff]
        %v933 = vld [vmem:[%s717 + $0x2b0] sm:$0xff]
        %v934 = vld [vmem:[%s717 + $0x2b8] sm:$0xff]
        %v935 = vld [vmem:[%s717 + $0x2c0] sm:$0xff]
        %v936 = vld [vmem:[%s717 + $0x2c8] sm:$0xff]
        %v937 = vld [vmem:[%s717 + $0x2d0] sm:$0xff]
        %v938 = vld [vmem:[%s717 + $0x2d8] sm:$0xff]
        %v939 = vld [vmem:[%s717 + $0x2e0] sm:$0xff]
        %v940 = vld [vmem:[%s717 + $0x2e8] sm:$0xff]
        %v941 = vld [vmem:[%s717 + $0x2f0] sm:$0xff]
        %v942 = vld [vmem:[%s717 + $0x2f8] sm:$0xff]
        %v943 = vld [vmem:[%s717 + $0x300] sm:$0xff]
        %v944 = vld [vmem:[%s717 + $0x308] sm:$0xff]
        %v945 = vld [vmem:[%s717 + $0x310] sm:$0xff]
        %v946 = vld [vmem:[%s717 + $0x318] sm:$0xff]
        %v947 = vld [vmem:[%s717 + $0x320] sm:$0xff]
        %v948 = vld [vmem:[%s717 + $0x328] sm:$0xff]
        %v949 = vld [vmem:[%s717 + $0x330] sm:$0xff]
        %v950 = vld [vmem:[%s717 + $0x338] sm:$0xff]
        %v951 = vld [vmem:[%s717 + $0x340] sm:$0xff]
        %v952 = vld [vmem:[%s717 + $0x348] sm:$0xff]
        %v953 = vld [vmem:[%s717 + $0x350] sm:$0xff]
        %v954 = vld [vmem:[%s717 + $0x358] sm:$0xff]
        %v955 = vld [vmem:[%s717 + $0x360] sm:$0xff]
        %v956 = vld [vmem:[%s717 + $0x368] sm:$0xff]
        %v957 = vld [vmem:[%s717 + $0x370] sm:$0xff]
        %v958 = vld [vmem:[%s717 + $0x378] sm:$0xff]
        %v959 = vld [vmem:[%s717 + $0x380] sm:$0xff]
        %v960 = vld [vmem:[%s717 + $0x388] sm:$0xff]
        %v961 = vld [vmem:[%s717 + $0x390] sm:$0xff]
        %v962 = vld [vmem:[%s717 + $0x398] sm:$0xff]
        %v963 = vld [vmem:[%s717 + $0x3a0] sm:$0xff]
        %v964 = vld [vmem:[%s717 + $0x3a8] sm:$0xff]
        %v965 = vld [vmem:[%s717 + $0x3b0] sm:$0xff]
        %v966 = vld [vmem:[%s717 + $0x3b8] sm:$0xff]
        %v967 = vld [vmem:[%s717 + $0x3c0] sm:$0xff]
        %v968 = vld [vmem:[%s717 + $0x3c8] sm:$0xff]
        %v969 = vld [vmem:[%s717 + $0x3d0] sm:$0xff]
        %v970 = vld [vmem:[%s717 + $0x3d8] sm:$0xff]
        %v971 = vld [vmem:[%s717 + $0x3e0] sm:$0xff]
        %v972 = vld [vmem:[%s717 + $0x3e8] sm:$0xff]
        %v973 = vld [vmem:[%s717 + $0x3f0] sm:$0xff]
        %v974 = vld [vmem:[%s717 + $0x3f8] sm:$0xff]
        %v975 = vpack.c.bf16 %v847, %v847
        %v976 = vpack.c.bf16 %v848, %v848
        %v977 = vpack.c.bf16 %v849, %v849
        %v978 = vpack.c.bf16 %v850, %v850
        %v979 = vpack.c.bf16 %v851, %v851
        %v980 = vpack.c.bf16 %v852, %v852
        %v981 = vpack.c.bf16 %v853, %v853
        %v982 = vpack.c.bf16 %v854, %v854
        %v983 = vpack.c.bf16 %v855, %v855
        %v984 = vpack.c.bf16 %v856, %v856
        %v985 = vpack.c.bf16 %v857, %v857
        %v986 = vpack.c.bf16 %v858, %v858
        %v987 = vpack.c.bf16 %v859, %v859
        %v988 = vpack.c.bf16 %v860, %v860
        %v989 = vpack.c.bf16 %v861, %v861
        %v990 = vpack.c.bf16 %v862, %v862
        %v991 = vpack.c.bf16 %v863, %v863
        %v992 = vpack.c.bf16 %v864, %v864
        %v993 = vpack.c.bf16 %v865, %v865
        %v994 = vpack.c.bf16 %v866, %v866
        %v995 = vpack.c.bf16 %v867, %v867
        %v996 = vpack.c.bf16 %v868, %v868
        %v997 = vpack.c.bf16 %v869, %v869
        %v998 = vpack.c.bf16 %v870, %v870
        %v999 = vpack.c.bf16 %v871, %v871
        %v1000 = vpack.c.bf16 %v872, %v872
        %v1001 = vpack.c.bf16 %v873, %v873
        %v1002 = vpack.c.bf16 %v874, %v874
        %v1003 = vpack.c.bf16 %v875, %v875
        %v1004 = vpack.c.bf16 %v876, %v876
        %v1005 = vpack.c.bf16 %v877, %v877
        %v1006 = vpack.c.bf16 %v878, %v878
        %v1007 = vpack.c.bf16 %v879, %v879
        %v1008 = vpack.c.bf16 %v880, %v880
        %v1009 = vpack.c.bf16 %v881, %v881
        %v1010 = vpack.c.bf16 %v882, %v882
        %v1011 = vpack.c.bf16 %v883, %v883
        %v1012 = vpack.c.bf16 %v884, %v884
        %v1013 = vpack.c.bf16 %v885, %v885
        %v1014 = vpack.c.bf16 %v886, %v886
        %v1015 = vpack.c.bf16 %v887, %v887
        %v1016 = vpack.c.bf16 %v888, %v888
        %v1017 = vpack.c.bf16 %v889, %v889
        %v1018 = vpack.c.bf16 %v890, %v890
        %v1019 = vpack.c.bf16 %v891, %v891
        %v1020 = vpack.c.bf16 %v892, %v892
        %v1021 = vpack.c.bf16 %v893, %v893
        %v1022 = vpack.c.bf16 %v894, %v894
        %v1023 = vpack.c.bf16 %v895, %v895
        %v1024 = vpack.c.bf16 %v896, %v896
        %v1025 = vpack.c.bf16 %v897, %v897
        %v1026 = vpack.c.bf16 %v898, %v898
        %v1027 = vpack.c.bf16 %v899, %v899
        %v1028 = vpack.c.bf16 %v900, %v900
        %v1029 = vpack.c.bf16 %v901, %v901
        %v1030 = vpack.c.bf16 %v902, %v902
        %v1031 = vpack.c.bf16 %v903, %v903
        %v1032 = vpack.c.bf16 %v904, %v904
        %v1033 = vpack.c.bf16 %v905, %v905
        %v1034 = vpack.c.bf16 %v906, %v906
        %v1035 = vpack.c.bf16 %v907, %v907
        %v1036 = vpack.c.bf16 %v908, %v908
        %v1037 = vpack.c.bf16 %v909, %v909
        %v1038 = vpack.c.bf16 %v910, %v910
        %v1039 = vpack.c.bf16 %v911, %v911
        %v1040 = vpack.c.bf16 %v912, %v912
        %v1041 = vpack.c.bf16 %v913, %v913
        %v1042 = vpack.c.bf16 %v914, %v914
        %v1043 = vpack.c.bf16 %v915, %v915
        %v1044 = vpack.c.bf16 %v916, %v916
        %v1045 = vpack.c.bf16 %v917, %v917
        %v1046 = vpack.c.bf16 %v918, %v918
        %v1047 = vpack.c.bf16 %v919, %v919
        %v1048 = vpack.c.bf16 %v920, %v920
        %v1049 = vpack.c.bf16 %v921, %v921
        %v1050 = vpack.c.bf16 %v922, %v922
        %v1051 = vpack.c.bf16 %v923, %v923
        %v1052 = vpack.c.bf16 %v924, %v924
        %v1053 = vpack.c.bf16 %v925, %v925
        %v1054 = vpack.c.bf16 %v926, %v926
        %v1055 = vpack.c.bf16 %v927, %v927
        %v1056 = vpack.c.bf16 %v928, %v928
        %v1057 = vpack.c.bf16 %v929, %v929
        %v1058 = vpack.c.bf16 %v930, %v930
        %v1059 = vpack.c.bf16 %v931, %v931
        %v1060 = vpack.c.bf16 %v932, %v932
        %v1061 = vpack.c.bf16 %v933, %v933
        %v1062 = vpack.c.bf16 %v934, %v934
        %v1063 = vpack.c.bf16 %v935, %v935
        %v1064 = vpack.c.bf16 %v936, %v936
        %v1065 = vpack.c.bf16 %v937, %v937
        %v1066 = vpack.c.bf16 %v938, %v938
        %v1067 = vpack.c.bf16 %v939, %v939
        %v1068 = vpack.c.bf16 %v940, %v940
        %v1069 = vpack.c.bf16 %v941, %v941
        %v1070 = vpack.c.bf16 %v942, %v942
        %v1071 = vpack.c.bf16 %v943, %v943
        %v1072 = vpack.c.bf16 %v944, %v944
        %v1073 = vpack.c.bf16 %v945, %v945
        %v1074 = vpack.c.bf16 %v946, %v946
        %v1075 = vpack.c.bf16 %v947, %v947
        %v1076 = vpack.c.bf16 %v948, %v948
        %v1077 = vpack.c.bf16 %v949, %v949
        %v1078 = vpack.c.bf16 %v950, %v950
        %v1079 = vpack.c.bf16 %v951, %v951
        %v1080 = vpack.c.bf16 %v952, %v952
        %v1081 = vpack.c.bf16 %v953, %v953
        %v1082 = vpack.c.bf16 %v954, %v954
        %v1083 = vpack.c.bf16 %v955, %v955
        %v1084 = vpack.c.bf16 %v956, %v956
        %v1085 = vpack.c.bf16 %v957, %v957
        %v1086 = vpack.c.bf16 %v958, %v958
        %v1087 = vpack.c.bf16 %v959, %v959
        %v1088 = vpack.c.bf16 %v960, %v960
        %v1089 = vpack.c.bf16 %v961, %v961
        %v1090 = vpack.c.bf16 %v962, %v962
        %v1091 = vpack.c.bf16 %v963, %v963
        %v1092 = vpack.c.bf16 %v964, %v964
        %v1093 = vpack.c.bf16 %v965, %v965
        %v1094 = vpack.c.bf16 %v966, %v966
        %v1095 = vpack.c.bf16 %v967, %v967
        %v1096 = vpack.c.bf16 %v968, %v968
        %v1097 = vpack.c.bf16 %v969, %v969
        %v1098 = vpack.c.bf16 %v970, %v970
        %v1099 = vpack.c.bf16 %v971, %v971
        %v1100 = vpack.c.bf16 %v972, %v972
        %v1101 = vpack.c.bf16 %v973, %v973
        %v1102 = vpack.c.bf16 %v974, %v974
        %v1103 = vld [vmem:[%s9] sm:$0xf]
        %v1104 = vld [vmem:[%s9 + $0x4] sm:$0xf]
        %v1105 = vld [vmem:[%s9 + $0x8] sm:$0xf]
        %v1106 = vld [vmem:[%s9 + $0xc] sm:$0xf]
        %v1107 = vld [vmem:[%s9 + $0x10] sm:$0xf]
        %v1108 = vld [vmem:[%s9 + $0x14] sm:$0xf]
        %v1109 = vld [vmem:[%s9 + $0x18] sm:$0xf]
        %v1110 = vld [vmem:[%s9 + $0x1c] sm:$0xf]
        %v1111 = vld [vmem:[%s9 + $0x20] sm:$0xf]
        %v1112 = vld [vmem:[%s9 + $0x24] sm:$0xf]
        %v1113 = vld [vmem:[%s9 + $0x28] sm:$0xf]
        %v1114 = vld [vmem:[%s9 + $0x2c] sm:$0xf]
        %v1115 = vld [vmem:[%s9 + $0x30] sm:$0xf]
        %v1116 = vld [vmem:[%s9 + $0x34] sm:$0xf]
        %v1117 = vld [vmem:[%s9 + $0x38] sm:$0xf]
        %v1118 = vld [vmem:[%s9 + $0x3c] sm:$0xf]
        %v1119 = vld [vmem:[%s10] sm:$0x1]
        %v1121 = vperm.slane %v1119, 0
        %v1251 = vunpack.c.l.b16 %v975
        %v1252 = vunpack.c.l.b16 %v976
        %v1253 = vunpack.c.l.b16 %v977
        %v1254 = vunpack.c.l.b16 %v978
        %v1255 = vunpack.c.l.b16 %v979
        %v1256 = vunpack.c.l.b16 %v980
        %v1257 = vunpack.c.l.b16 %v981
        %v1258 = vunpack.c.l.b16 %v982
        %v1259 = vunpack.c.l.b16 %v983
        %v1260 = vunpack.c.l.b16 %v984
        %v1261 = vunpack.c.l.b16 %v985
        %v1262 = vunpack.c.l.b16 %v986
        %v1263 = vunpack.c.l.b16 %v987
        %v1264 = vunpack.c.l.b16 %v988
        %v1265 = vunpack.c.l.b16 %v989
        %v1266 = vunpack.c.l.b16 %v990
        %v1267 = vunpack.c.l.b16 %v991
        %v1268 = vunpack.c.l.b16 %v992
        %v1269 = vunpack.c.l.b16 %v993
        %v1270 = vunpack.c.l.b16 %v994
        %v1271 = vunpack.c.l.b16 %v995
        %v1272 = vunpack.c.l.b16 %v996
        %v1273 = vunpack.c.l.b16 %v997
        %v1274 = vunpack.c.l.b16 %v998
        %v1275 = vunpack.c.l.b16 %v999
        %v1276 = vunpack.c.l.b16 %v1000
        %v1277 = vunpack.c.l.b16 %v1001
        %v1278 = vunpack.c.l.b16 %v1002
        %v1279 = vunpack.c.l.b16 %v1003
        %v1280 = vunpack.c.l.b16 %v1004
        %v1281 = vunpack.c.l.b16 %v1005
        %v1282 = vunpack.c.l.b16 %v1006
        %v1283 = vunpack.c.l.b16 %v1007
        %v1284 = vunpack.c.l.b16 %v1008
        %v1285 = vunpack.c.l.b16 %v1009
        %v1286 = vunpack.c.l.b16 %v1010
        %v1287 = vunpack.c.l.b16 %v1011
        %v1288 = vunpack.c.l.b16 %v1012
        %v1289 = vunpack.c.l.b16 %v1013
        %v1290 = vunpack.c.l.b16 %v1014
        %v1291 = vunpack.c.l.b16 %v1015
        %v1292 = vunpack.c.l.b16 %v1016
        %v1293 = vunpack.c.l.b16 %v1017
        %v1294 = vunpack.c.l.b16 %v1018
        %v1295 = vunpack.c.l.b16 %v1019
        %v1296 = vunpack.c.l.b16 %v1020
        %v1297 = vunpack.c.l.b16 %v1021
        %v1298 = vunpack.c.l.b16 %v1022
        %v1299 = vunpack.c.l.b16 %v1023
        %v1300 = vunpack.c.l.b16 %v1024
        %v1301 = vunpack.c.l.b16 %v1025
        %v1302 = vunpack.c.l.b16 %v1026
        %v1303 = vunpack.c.l.b16 %v1027
        %v1304 = vunpack.c.l.b16 %v1028
        %v1305 = vunpack.c.l.b16 %v1029
        %v1306 = vunpack.c.l.b16 %v1030
        %v1307 = vunpack.c.l.b16 %v1031
        %v1308 = vunpack.c.l.b16 %v1032
        %v1309 = vunpack.c.l.b16 %v1033
        %v1310 = vunpack.c.l.b16 %v1034
        %v1311 = vunpack.c.l.b16 %v1035
        %v1312 = vunpack.c.l.b16 %v1036
        %v1313 = vunpack.c.l.b16 %v1037
        %v1314 = vunpack.c.l.b16 %v1038
        %v1315 = vunpack.c.l.b16 %v1039
        %v1316 = vunpack.c.l.b16 %v1040
        %v1317 = vunpack.c.l.b16 %v1041
        %v1318 = vunpack.c.l.b16 %v1042
        %v1319 = vunpack.c.l.b16 %v1043
        %v1320 = vunpack.c.l.b16 %v1044
        %v1321 = vunpack.c.l.b16 %v1045
        %v1322 = vunpack.c.l.b16 %v1046
        %v1323 = vunpack.c.l.b16 %v1047
        %v1324 = vunpack.c.l.b16 %v1048
        %v1325 = vunpack.c.l.b16 %v1049
        %v1326 = vunpack.c.l.b16 %v1050
        %v1327 = vunpack.c.l.b16 %v1051
        %v1328 = vunpack.c.l.b16 %v1052
        %v1329 = vunpack.c.l.b16 %v1053
        %v1330 = vunpack.c.l.b16 %v1054
        %v1331 = vunpack.c.l.b16 %v1055
        %v1332 = vunpack.c.l.b16 %v1056
        %v1333 = vunpack.c.l.b16 %v1057
        %v1334 = vunpack.c.l.b16 %v1058
        %v1335 = vunpack.c.l.b16 %v1059
        %v1336 = vunpack.c.l.b16 %v1060
        %v1337 = vunpack.c.l.b16 %v1061
        %v1338 = vunpack.c.l.b16 %v1062
        %v1339 = vunpack.c.l.b16 %v1063
        %v1340 = vunpack.c.l.b16 %v1064
        %v1341 = vunpack.c.l.b16 %v1065
        %v1342 = vunpack.c.l.b16 %v1066
        %v1343 = vunpack.c.l.b16 %v1067
        %v1344 = vunpack.c.l.b16 %v1068
        %v1345 = vunpack.c.l.b16 %v1069
        %v1346 = vunpack.c.l.b16 %v1070
        %v1347 = vunpack.c.l.b16 %v1071
        %v1348 = vunpack.c.l.b16 %v1072
        %v1349 = vunpack.c.l.b16 %v1073
        %v1350 = vunpack.c.l.b16 %v1074
        %v1351 = vunpack.c.l.b16 %v1075
        %v1352 = vunpack.c.l.b16 %v1076
        %v1353 = vunpack.c.l.b16 %v1077
        %v1354 = vunpack.c.l.b16 %v1078
        %v1355 = vunpack.c.l.b16 %v1079
        %v1356 = vunpack.c.l.b16 %v1080
        %v1357 = vunpack.c.l.b16 %v1081
        %v1358 = vunpack.c.l.b16 %v1082
        %v1359 = vunpack.c.l.b16 %v1083
        %v1360 = vunpack.c.l.b16 %v1084
        %v1361 = vunpack.c.l.b16 %v1085
        %v1362 = vunpack.c.l.b16 %v1086
        %v1363 = vunpack.c.l.b16 %v1087
        %v1364 = vunpack.c.l.b16 %v1088
        %v1365 = vunpack.c.l.b16 %v1089
        %v1366 = vunpack.c.l.b16 %v1090
        %v1367 = vunpack.c.l.b16 %v1091
        %v1368 = vunpack.c.l.b16 %v1092
        %v1369 = vunpack.c.l.b16 %v1093
        %v1370 = vunpack.c.l.b16 %v1094
        %v1371 = vunpack.c.l.b16 %v1095
        %v1372 = vunpack.c.l.b16 %v1096
        %v1373 = vunpack.c.l.b16 %v1097
        %v1374 = vunpack.c.l.b16 %v1098
        %v1375 = vunpack.c.l.b16 %v1099
        %v1376 = vunpack.c.l.b16 %v1100
        %v1377 = vunpack.c.l.b16 %v1101
        %v1378 = vunpack.c.l.b16 %v1102
        %v1379 = vpack.c.b16 %v1252, %v1251
        %v1380 = vpack.c.b16 %v1254, %v1253
        %v1381 = vpack.c.b16 %v1256, %v1255
        %v1382 = vpack.c.b16 %v1258, %v1257
        %v1383 = vpack.c.b16 %v1260, %v1259
        %v1384 = vpack.c.b16 %v1262, %v1261
        %v1385 = vpack.c.b16 %v1264, %v1263
        %v1386 = vpack.c.b16 %v1266, %v1265
        %v1387 = vpack.c.b16 %v1268, %v1267
        %v1388 = vpack.c.b16 %v1270, %v1269
        %v1389 = vpack.c.b16 %v1272, %v1271
        %v1390 = vpack.c.b16 %v1274, %v1273
        %v1391 = vpack.c.b16 %v1276, %v1275
        %v1392 = vpack.c.b16 %v1278, %v1277
        %v1393 = vpack.c.b16 %v1280, %v1279
        %v1394 = vpack.c.b16 %v1282, %v1281
        %v1395 = vpack.c.b16 %v1284, %v1283
        %v1396 = vpack.c.b16 %v1286, %v1285
        %v1397 = vpack.c.b16 %v1288, %v1287
        %v1398 = vpack.c.b16 %v1290, %v1289
        %v1399 = vpack.c.b16 %v1292, %v1291
        %v1400 = vpack.c.b16 %v1294, %v1293
        %v1401 = vpack.c.b16 %v1296, %v1295
        %v1402 = vpack.c.b16 %v1298, %v1297
        %v1403 = vpack.c.b16 %v1300, %v1299
        %v1404 = vpack.c.b16 %v1302, %v1301
        %v1405 = vpack.c.b16 %v1304, %v1303
        %v1406 = vpack.c.b16 %v1306, %v1305
        %v1407 = vpack.c.b16 %v1308, %v1307
        %v1408 = vpack.c.b16 %v1310, %v1309
        %v1409 = vpack.c.b16 %v1312, %v1311
        %v1410 = vpack.c.b16 %v1314, %v1313
        %v1411 = vpack.c.b16 %v1316, %v1315
        %v1412 = vpack.c.b16 %v1318, %v1317
        %v1413 = vpack.c.b16 %v1320, %v1319
        %v1414 = vpack.c.b16 %v1322, %v1321
        %v1415 = vpack.c.b16 %v1324, %v1323
        %v1416 = vpack.c.b16 %v1326, %v1325
        %v1417 = vpack.c.b16 %v1328, %v1327
        %v1418 = vpack.c.b16 %v1330, %v1329
        %v1419 = vpack.c.b16 %v1332, %v1331
        %v1420 = vpack.c.b16 %v1334, %v1333
        %v1421 = vpack.c.b16 %v1336, %v1335
        %v1422 = vpack.c.b16 %v1338, %v1337
        %v1423 = vpack.c.b16 %v1340, %v1339
        %v1424 = vpack.c.b16 %v1342, %v1341
        %v1425 = vpack.c.b16 %v1344, %v1343
        %v1426 = vpack.c.b16 %v1346, %v1345
        %v1427 = vpack.c.b16 %v1348, %v1347
        %v1428 = vpack.c.b16 %v1350, %v1349
        %v1429 = vpack.c.b16 %v1352, %v1351
        %v1430 = vpack.c.b16 %v1354, %v1353
        %v1431 = vpack.c.b16 %v1356, %v1355
        %v1432 = vpack.c.b16 %v1358, %v1357
        %v1433 = vpack.c.b16 %v1360, %v1359
        %v1434 = vpack.c.b16 %v1362, %v1361
        %v1435 = vpack.c.b16 %v1364, %v1363
        %v1436 = vpack.c.b16 %v1366, %v1365
        %v1437 = vpack.c.b16 %v1368, %v1367
        %v1438 = vpack.c.b16 %v1370, %v1369
        %v1439 = vpack.c.b16 %v1372, %v1371
        %v1440 = vpack.c.b16 %v1374, %v1373
        %v1441 = vpack.c.b16 %v1376, %v1375
        %v1442 = vpack.c.b16 %v1378, %v1377
        %v1523 = vunpack.c.l.b16 %v1103
        %v1524 = vunpack.c.l.b16 %v1104
        %v1525 = vunpack.c.l.b16 %v1105
        %v1526 = vunpack.c.l.b16 %v1106
        %v1527 = vunpack.c.l.b16 %v1107
        %v1528 = vunpack.c.l.b16 %v1108
        %v1529 = vunpack.c.l.b16 %v1109
        %v1530 = vunpack.c.l.b16 %v1110
        %v1531 = vunpack.c.l.b16 %v1111
        %v1532 = vunpack.c.l.b16 %v1112
        %v1533 = vunpack.c.l.b16 %v1113
        %v1534 = vunpack.c.l.b16 %v1114
        %v1535 = vunpack.c.l.b16 %v1115
        %v1536 = vunpack.c.l.b16 %v1116
        %v1537 = vunpack.c.l.b16 %v1117
        %v1538 = vunpack.c.l.b16 %v1118
        %v1539 = vpack.c.b16 %v1524, %v1523
        %v1540 = vpack.c.b16 %v1526, %v1525
        %v1541 = vpack.c.b16 %v1528, %v1527
        %v1542 = vpack.c.b16 %v1530, %v1529
        %v1543 = vpack.c.b16 %v1532, %v1531
        %v1544 = vpack.c.b16 %v1534, %v1533
        %v1545 = vpack.c.b16 %v1536, %v1535
        %v1546 = vpack.c.b16 %v1538, %v1537
        %1555 = vmatpush.bf16.msra.mxu0 %v1546
        %1556 = vmatpush.bf16.msra.mxu0 %v1545
        %1557 = vmatpush.bf16.msra.mxu0 %v1544
        %1558 = vmatpush.bf16.msra.mxu0 %v1543
        %1559 = vmatpush.bf16.msra.mxu0 %v1542
        %1560 = vmatpush.bf16.msra.mxu0 %v1541
        %1561 = vmatpush.bf16.msra.mxu0 %v1540
        %1562 = vmatpush.bf16.msra.mxu0 %v1539
        %1563 = vmatmul.bf16.gmra.mxu0 %v1379
        %v1564 = vpop.f32.mrf.mxu0
        %v1565 = vadd.f32 %v1121, %v1564
        %v1566 = vpop.f32.mrf.mxu0
        %v1567 = vadd.f32 %v1121, %v1566
        %1568 = vmatmul.bf16.gmra.mxu0 %v1380
        %v1569 = vpop.f32.mrf.mxu0
        %v1570 = vadd.f32 %v1121, %v1569
        %v1571 = vpop.f32.mrf.mxu0
        %v1572 = vadd.f32 %v1121, %v1571
        %1573 = vmatmul.bf16.gmra.mxu0 %v1381
        %v1574 = vpop.f32.mrf.mxu0
        %v1575 = vadd.f32 %v1121, %v1574
        %v1576 = vpop.f32.mrf.mxu0
        %v1577 = vadd.f32 %v1121, %v1576
        %1578 = vmatmul.bf16.gmra.mxu0 %v1382
        %v1579 = vpop.f32.mrf.mxu0
        %v1580 = vadd.f32 %v1121, %v1579
        %v1581 = vpop.f32.mrf.mxu0
        %v1582 = vadd.f32 %v1121, %v1581
        %1583 = vmatmul.bf16.gmra.mxu0 %v1383
        %v1584 = vpop.f32.mrf.mxu0
        %v1585 = vadd.f32 %v1121, %v1584
        %v1586 = vpop.f32.mrf.mxu0
        %v1587 = vadd.f32 %v1121, %v1586
        %1588 = vmatmul.bf16.gmra.mxu0 %v1384
        %v1589 = vpop.f32.mrf.mxu0
        %v1590 = vadd.f32 %v1121, %v1589
        %v1591 = vpop.f32.mrf.mxu0
        %v1592 = vadd.f32 %v1121, %v1591
        %1593 = vmatmul.bf16.gmra.mxu0 %v1385
        %v1594 = vpop.f32.mrf.mxu0
        %v1595 = vadd.f32 %v1121, %v1594
        %v1596 = vpop.f32.mrf.mxu0
        %v1597 = vadd.f32 %v1121, %v1596
        %1598 = vmatmul.bf16.gmra.mxu0 %v1386
        %v1599 = vpop.f32.mrf.mxu0
        %v1600 = vadd.f32 %v1121, %v1599
        %v1601 = vpop.f32.mrf.mxu0
        %v1602 = vadd.f32 %v1121, %v1601
        %1603 = vmatmul.bf16.gmra.mxu0 %v1387
        %v1604 = vpop.f32.mrf.mxu0
        %v1605 = vadd.f32 %v1121, %v1604
        %v1606 = vpop.f32.mrf.mxu0
        %v1607 = vadd.f32 %v1121, %v1606
        %1608 = vmatmul.bf16.gmra.mxu0 %v1388
        %v1609 = vpop.f32.mrf.mxu0
        %v1610 = vadd.f32 %v1121, %v1609
        %v1611 = vpop.f32.mrf.mxu0
        %v1612 = vadd.f32 %v1121, %v1611
        %1613 = vmatmul.bf16.gmra.mxu0 %v1389
        %v1614 = vpop.f32.mrf.mxu0
        %v1615 = vadd.f32 %v1121, %v1614
        %v1616 = vpop.f32.mrf.mxu0
        %v1617 = vadd.f32 %v1121, %v1616
        %1618 = vmatmul.bf16.gmra.mxu0 %v1390
        %v1619 = vpop.f32.mrf.mxu0
        %v1620 = vadd.f32 %v1121, %v1619
        %v1621 = vpop.f32.mrf.mxu0
        %v1622 = vadd.f32 %v1121, %v1621
        %1623 = vmatmul.bf16.gmra.mxu0 %v1391
        %v1624 = vpop.f32.mrf.mxu0
        %v1625 = vadd.f32 %v1121, %v1624
        %v1626 = vpop.f32.mrf.mxu0
        %v1627 = vadd.f32 %v1121, %v1626
        %1628 = vmatmul.bf16.gmra.mxu0 %v1392
        %v1629 = vpop.f32.mrf.mxu0
        %v1630 = vadd.f32 %v1121, %v1629
        %v1631 = vpop.f32.mrf.mxu0
        %v1632 = vadd.f32 %v1121, %v1631
        %1633 = vmatmul.bf16.gmra.mxu0 %v1393
        %v1634 = vpop.f32.mrf.mxu0
        %v1635 = vadd.f32 %v1121, %v1634
        %v1636 = vpop.f32.mrf.mxu0
        %v1637 = vadd.f32 %v1121, %v1636
        %1638 = vmatmul.bf16.gmra.mxu0 %v1394
        %v1639 = vpop.f32.mrf.mxu0
        %v1640 = vadd.f32 %v1121, %v1639
        %v1641 = vpop.f32.mrf.mxu0
        %v1642 = vadd.f32 %v1121, %v1641
        %1643 = vmatmul.bf16.gmra.mxu0 %v1395
        %v1644 = vpop.f32.mrf.mxu0
        %v1645 = vadd.f32 %v1121, %v1644
        %v1646 = vpop.f32.mrf.mxu0
        %v1647 = vadd.f32 %v1121, %v1646
        %1648 = vmatmul.bf16.gmra.mxu0 %v1396
        %v1649 = vpop.f32.mrf.mxu0
        %v1650 = vadd.f32 %v1121, %v1649
        %v1651 = vpop.f32.mrf.mxu0
        %v1652 = vadd.f32 %v1121, %v1651
        %1653 = vmatmul.bf16.gmra.mxu0 %v1397
        %v1654 = vpop.f32.mrf.mxu0
        %v1655 = vadd.f32 %v1121, %v1654
        %v1656 = vpop.f32.mrf.mxu0
        %v1657 = vadd.f32 %v1121, %v1656
        %1658 = vmatmul.bf16.gmra.mxu0 %v1398
        %v1659 = vpop.f32.mrf.mxu0
        %v1660 = vadd.f32 %v1121, %v1659
        %v1661 = vpop.f32.mrf.mxu0
        %v1662 = vadd.f32 %v1121, %v1661
        %1663 = vmatmul.bf16.gmra.mxu0 %v1399
        %v1664 = vpop.f32.mrf.mxu0
        %v1665 = vadd.f32 %v1121, %v1664
        %v1666 = vpop.f32.mrf.mxu0
        %v1667 = vadd.f32 %v1121, %v1666
        %1668 = vmatmul.bf16.gmra.mxu0 %v1400
        %v1669 = vpop.f32.mrf.mxu0
        %v1670 = vadd.f32 %v1121, %v1669
        %v1671 = vpop.f32.mrf.mxu0
        %v1672 = vadd.f32 %v1121, %v1671
        %1673 = vmatmul.bf16.gmra.mxu0 %v1401
        %v1674 = vpop.f32.mrf.mxu0
        %v1675 = vadd.f32 %v1121, %v1674
        %v1676 = vpop.f32.mrf.mxu0
        %v1677 = vadd.f32 %v1121, %v1676
        %1678 = vmatmul.bf16.gmra.mxu0 %v1402
        %v1679 = vpop.f32.mrf.mxu0
        %v1680 = vadd.f32 %v1121, %v1679
        %v1681 = vpop.f32.mrf.mxu0
        %v1682 = vadd.f32 %v1121, %v1681
        %1683 = vmatmul.bf16.gmra.mxu0 %v1403
        %v1684 = vpop.f32.mrf.mxu0
        %v1685 = vadd.f32 %v1121, %v1684
        %v1686 = vpop.f32.mrf.mxu0
        %v1687 = vadd.f32 %v1121, %v1686
        %1688 = vmatmul.bf16.gmra.mxu0 %v1404
        %v1689 = vpop.f32.mrf.mxu0
        %v1690 = vadd.f32 %v1121, %v1689
        %v1691 = vpop.f32.mrf.mxu0
        %v1692 = vadd.f32 %v1121, %v1691
        %1693 = vmatmul.bf16.gmra.mxu0 %v1405
        %v1694 = vpop.f32.mrf.mxu0
        %v1695 = vadd.f32 %v1121, %v1694
        %v1696 = vpop.f32.mrf.mxu0
        %v1697 = vadd.f32 %v1121, %v1696
        %1698 = vmatmul.bf16.gmra.mxu0 %v1406
        %v1699 = vpop.f32.mrf.mxu0
        %v1700 = vadd.f32 %v1121, %v1699
        %v1701 = vpop.f32.mrf.mxu0
        %v1702 = vadd.f32 %v1121, %v1701
        %1703 = vmatmul.bf16.gmra.mxu0 %v1407
        %v1704 = vpop.f32.mrf.mxu0
        %v1705 = vadd.f32 %v1121, %v1704
        %v1706 = vpop.f32.mrf.mxu0
        %v1707 = vadd.f32 %v1121, %v1706
        %1708 = vmatmul.bf16.gmra.mxu0 %v1408
        %v1709 = vpop.f32.mrf.mxu0
        %v1710 = vadd.f32 %v1121, %v1709
        %v1711 = vpop.f32.mrf.mxu0
        %v1712 = vadd.f32 %v1121, %v1711
        %1713 = vmatmul.bf16.gmra.mxu0 %v1409
        %v1714 = vpop.f32.mrf.mxu0
        %v1715 = vadd.f32 %v1121, %v1714
        %v1716 = vpop.f32.mrf.mxu0
        %v1717 = vadd.f32 %v1121, %v1716
        %1718 = vmatmul.bf16.gmra.mxu0 %v1410
        %v1719 = vpop.f32.mrf.mxu0
        %v1720 = vadd.f32 %v1121, %v1719
        %v1721 = vpop.f32.mrf.mxu0
        %v1722 = vadd.f32 %v1121, %v1721
        %1723 = vmatmul.bf16.gmra.mxu0 %v1411
        %v1724 = vpop.f32.mrf.mxu0
        %v1725 = vadd.f32 %v1121, %v1724
        %v1726 = vpop.f32.mrf.mxu0
        %v1727 = vadd.f32 %v1121, %v1726
        %1728 = vmatmul.bf16.gmra.mxu0 %v1412
        %v1729 = vpop.f32.mrf.mxu0
        %v1730 = vadd.f32 %v1121, %v1729
        %v1731 = vpop.f32.mrf.mxu0
        %v1732 = vadd.f32 %v1121, %v1731
        %1733 = vmatmul.bf16.gmra.mxu0 %v1413
        %v1734 = vpop.f32.mrf.mxu0
        %v1735 = vadd.f32 %v1121, %v1734
        %v1736 = vpop.f32.mrf.mxu0
        %v1737 = vadd.f32 %v1121, %v1736
        %1738 = vmatmul.bf16.gmra.mxu0 %v1414
        %v1739 = vpop.f32.mrf.mxu0
        %v1740 = vadd.f32 %v1121, %v1739
        %v1741 = vpop.f32.mrf.mxu0
        %v1742 = vadd.f32 %v1121, %v1741
        %1743 = vmatmul.bf16.gmra.mxu0 %v1415
        %v1744 = vpop.f32.mrf.mxu0
        %v1745 = vadd.f32 %v1121, %v1744
        %v1746 = vpop.f32.mrf.mxu0
        %v1747 = vadd.f32 %v1121, %v1746
        %1748 = vmatmul.bf16.gmra.mxu0 %v1416
        %v1749 = vpop.f32.mrf.mxu0
        %v1750 = vadd.f32 %v1121, %v1749
        %v1751 = vpop.f32.mrf.mxu0
        %v1752 = vadd.f32 %v1121, %v1751
        %1753 = vmatmul.bf16.gmra.mxu0 %v1417
        %v1754 = vpop.f32.mrf.mxu0
        %v1755 = vadd.f32 %v1121, %v1754
        %v1756 = vpop.f32.mrf.mxu0
        %v1757 = vadd.f32 %v1121, %v1756
        %1758 = vmatmul.bf16.gmra.mxu0 %v1418
        %v1759 = vpop.f32.mrf.mxu0
        %v1760 = vadd.f32 %v1121, %v1759
        %v1761 = vpop.f32.mrf.mxu0
        %v1762 = vadd.f32 %v1121, %v1761
        %1763 = vmatmul.bf16.gmra.mxu0 %v1419
        %v1764 = vpop.f32.mrf.mxu0
        %v1765 = vadd.f32 %v1121, %v1764
        %v1766 = vpop.f32.mrf.mxu0
        %v1767 = vadd.f32 %v1121, %v1766
        %1768 = vmatmul.bf16.gmra.mxu0 %v1420
        %v1769 = vpop.f32.mrf.mxu0
        %v1770 = vadd.f32 %v1121, %v1769
        %v1771 = vpop.f32.mrf.mxu0
        %v1772 = vadd.f32 %v1121, %v1771
        %1773 = vmatmul.bf16.gmra.mxu0 %v1421
        %v1774 = vpop.f32.mrf.mxu0
        %v1775 = vadd.f32 %v1121, %v1774
        %v1776 = vpop.f32.mrf.mxu0
        %v1777 = vadd.f32 %v1121, %v1776
        %1778 = vmatmul.bf16.gmra.mxu0 %v1422
        %v1779 = vpop.f32.mrf.mxu0
        %v1780 = vadd.f32 %v1121, %v1779
        %v1781 = vpop.f32.mrf.mxu0
        %v1782 = vadd.f32 %v1121, %v1781
        %1783 = vmatmul.bf16.gmra.mxu0 %v1423
        %v1784 = vpop.f32.mrf.mxu0
        %v1785 = vadd.f32 %v1121, %v1784
        %v1786 = vpop.f32.mrf.mxu0
        %v1787 = vadd.f32 %v1121, %v1786
        %1788 = vmatmul.bf16.gmra.mxu0 %v1424
        %v1789 = vpop.f32.mrf.mxu0
        %v1790 = vadd.f32 %v1121, %v1789
        %v1791 = vpop.f32.mrf.mxu0
        %v1792 = vadd.f32 %v1121, %v1791
        %1793 = vmatmul.bf16.gmra.mxu0 %v1425
        %v1794 = vpop.f32.mrf.mxu0
        %v1795 = vadd.f32 %v1121, %v1794
        %v1796 = vpop.f32.mrf.mxu0
        %v1797 = vadd.f32 %v1121, %v1796
        %1798 = vmatmul.bf16.gmra.mxu0 %v1426
        %v1799 = vpop.f32.mrf.mxu0
        %v1800 = vadd.f32 %v1121, %v1799
        %v1801 = vpop.f32.mrf.mxu0
        %v1802 = vadd.f32 %v1121, %v1801
        %1803 = vmatmul.bf16.gmra.mxu0 %v1427
        %v1804 = vpop.f32.mrf.mxu0
        %v1805 = vadd.f32 %v1121, %v1804
        %v1806 = vpop.f32.mrf.mxu0
        %v1807 = vadd.f32 %v1121, %v1806
        %1808 = vmatmul.bf16.gmra.mxu0 %v1428
        %v1809 = vpop.f32.mrf.mxu0
        %v1810 = vadd.f32 %v1121, %v1809
        %v1811 = vpop.f32.mrf.mxu0
        %v1812 = vadd.f32 %v1121, %v1811
        %1813 = vmatmul.bf16.gmra.mxu0 %v1429
        %v1814 = vpop.f32.mrf.mxu0
        %v1815 = vadd.f32 %v1121, %v1814
        %v1816 = vpop.f32.mrf.mxu0
        %v1817 = vadd.f32 %v1121, %v1816
        %1818 = vmatmul.bf16.gmra.mxu0 %v1430
        %v1819 = vpop.f32.mrf.mxu0
        %v1820 = vadd.f32 %v1121, %v1819
        %v1821 = vpop.f32.mrf.mxu0
        %v1822 = vadd.f32 %v1121, %v1821
        %1823 = vmatmul.bf16.gmra.mxu0 %v1431
        %v1824 = vpop.f32.mrf.mxu0
        %v1825 = vadd.f32 %v1121, %v1824
        %v1826 = vpop.f32.mrf.mxu0
        %v1827 = vadd.f32 %v1121, %v1826
        %1828 = vmatmul.bf16.gmra.mxu0 %v1432
        %v1829 = vpop.f32.mrf.mxu0
        %v1830 = vadd.f32 %v1121, %v1829
        %v1831 = vpop.f32.mrf.mxu0
        %v1832 = vadd.f32 %v1121, %v1831
        %1833 = vmatmul.bf16.gmra.mxu0 %v1433
        %v1834 = vpop.f32.mrf.mxu0
        %v1835 = vadd.f32 %v1121, %v1834
        %v1836 = vpop.f32.mrf.mxu0
        %v1837 = vadd.f32 %v1121, %v1836
        %1838 = vmatmul.bf16.gmra.mxu0 %v1434
        %v1839 = vpop.f32.mrf.mxu0
        %v1840 = vadd.f32 %v1121, %v1839
        %v1841 = vpop.f32.mrf.mxu0
        %v1842 = vadd.f32 %v1121, %v1841
        %1843 = vmatmul.bf16.gmra.mxu0 %v1435
        %v1844 = vpop.f32.mrf.mxu0
        %v1845 = vadd.f32 %v1121, %v1844
        %v1846 = vpop.f32.mrf.mxu0
        %v1847 = vadd.f32 %v1121, %v1846
        %1848 = vmatmul.bf16.gmra.mxu0 %v1436
        %v1849 = vpop.f32.mrf.mxu0
        %v1850 = vadd.f32 %v1121, %v1849
        %v1851 = vpop.f32.mrf.mxu0
        %v1852 = vadd.f32 %v1121, %v1851
        %1853 = vmatmul.bf16.gmra.mxu0 %v1437
        %v1854 = vpop.f32.mrf.mxu0
        %v1855 = vadd.f32 %v1121, %v1854
        %v1856 = vpop.f32.mrf.mxu0
        %v1857 = vadd.f32 %v1121, %v1856
        %1858 = vmatmul.bf16.gmra.mxu0 %v1438
        %v1859 = vpop.f32.mrf.mxu0
        %v1860 = vadd.f32 %v1121, %v1859
        %v1861 = vpop.f32.mrf.mxu0
        %v1862 = vadd.f32 %v1121, %v1861
        %1863 = vmatmul.bf16.gmra.mxu0 %v1439
        %v1864 = vpop.f32.mrf.mxu0
        %v1865 = vadd.f32 %v1121, %v1864
        %v1866 = vpop.f32.mrf.mxu0
        %v1867 = vadd.f32 %v1121, %v1866
        %1868 = vmatmul.bf16.gmra.mxu0 %v1440
        %v1869 = vpop.f32.mrf.mxu0
        %v1870 = vadd.f32 %v1121, %v1869
        %v1871 = vpop.f32.mrf.mxu0
        %v1872 = vadd.f32 %v1121, %v1871
        %1873 = vmatmul.bf16.gmra.mxu0 %v1441
        %v1874 = vpop.f32.mrf.mxu0
        %v1875 = vadd.f32 %v1121, %v1874
        %v1876 = vpop.f32.mrf.mxu0
        %v1877 = vadd.f32 %v1121, %v1876
        %1878 = vmatmul.bf16.gmra.mxu0 %v1442
        %v1879 = vpop.f32.mrf.mxu0
        %v1880 = vadd.f32 %v1121, %v1879
        %v1881 = vpop.f32.mrf.mxu0
        %v1882 = vadd.f32 %v1121, %v1881
        %1883 = vdwg.mxu0
        %v1884 = vld [vmem:[%s11] sm:$0xf]
        %v1885 = vld [vmem:[%s11 + $0x4] sm:$0xf]
        %v1886 = vld [vmem:[%s11 + $0x8] sm:$0xf]
        %v1887 = vld [vmem:[%s11 + $0xc] sm:$0xf]
        %v1888 = vld [vmem:[%s11 + $0x10] sm:$0xf]
        %v1889 = vld [vmem:[%s11 + $0x14] sm:$0xf]
        %v1890 = vld [vmem:[%s11 + $0x18] sm:$0xf]
        %v1891 = vld [vmem:[%s11 + $0x1c] sm:$0xf]
        %v1892 = vld [vmem:[%s11 + $0x20] sm:$0xf]
        %v1893 = vld [vmem:[%s11 + $0x24] sm:$0xf]
        %v1894 = vld [vmem:[%s11 + $0x28] sm:$0xf]
        %v1895 = vld [vmem:[%s11 + $0x2c] sm:$0xf]
        %v1896 = vld [vmem:[%s11 + $0x30] sm:$0xf]
        %v1897 = vld [vmem:[%s11 + $0x34] sm:$0xf]
        %v1898 = vld [vmem:[%s11 + $0x38] sm:$0xf]
        %v1899 = vld [vmem:[%s11 + $0x3c] sm:$0xf]
        %v1900 = vld [vmem:[%s12] sm:$0x1]
        %v1902 = vperm.slane %v1900, 0
        %v1920 = vunpack.c.l.b16 %v1884
        %v1921 = vunpack.c.l.b16 %v1885
        %v1922 = vunpack.c.l.b16 %v1886
        %v1923 = vunpack.c.l.b16 %v1887
        %v1924 = vunpack.c.l.b16 %v1888
        %v1925 = vunpack.c.l.b16 %v1889
        %v1926 = vunpack.c.l.b16 %v1890
        %v1927 = vunpack.c.l.b16 %v1891
        %v1928 = vunpack.c.l.b16 %v1892
        %v1929 = vunpack.c.l.b16 %v1893
        %v1930 = vunpack.c.l.b16 %v1894
        %v1931 = vunpack.c.l.b16 %v1895
        %v1932 = vunpack.c.l.b16 %v1896
        %v1933 = vunpack.c.l.b16 %v1897
        %v1934 = vunpack.c.l.b16 %v1898
        %v1935 = vunpack.c.l.b16 %v1899
        %v1936 = vpack.c.b16 %v1921, %v1920
        %v1937 = vpack.c.b16 %v1923, %v1922
        %v1938 = vpack.c.b16 %v1925, %v1924
        %v1939 = vpack.c.b16 %v1927, %v1926
        %v1940 = vpack.c.b16 %v1929, %v1928
        %v1941 = vpack.c.b16 %v1931, %v1930
        %v1942 = vpack.c.b16 %v1933, %v1932
        %v1943 = vpack.c.b16 %v1935, %v1934
        %1952 = vmatpush.bf16.msra.mxu0 %v1943
        %1953 = vmatpush.bf16.msra.mxu0 %v1942
        %1954 = vmatpush.bf16.msra.mxu0 %v1941
        %1955 = vmatpush.bf16.msra.mxu0 %v1940
        %1956 = vmatpush.bf16.msra.mxu0 %v1939
        %1957 = vmatpush.bf16.msra.mxu0 %v1938
        %1958 = vmatpush.bf16.msra.mxu0 %v1937
        %1959 = vmatpush.bf16.msra.mxu0 %v1936
        %1960 = vmatmul.bf16.gmra.mxu0 %v1379
        %v1961 = vpop.f32.mrf.mxu0
        %v1962 = vadd.f32 %v1902, %v1961
        %v1963 = vpop.f32.mrf.mxu0
        %v1964 = vadd.f32 %v1902, %v1963
        %1965 = vmatmul.bf16.gmra.mxu0 %v1380
        %v1966 = vpop.f32.mrf.mxu0
        %v1967 = vadd.f32 %v1902, %v1966
        %v1968 = vpop.f32.mrf.mxu0
        %v1969 = vadd.f32 %v1902, %v1968
        %1970 = vmatmul.bf16.gmra.mxu0 %v1381
        %v1971 = vpop.f32.mrf.mxu0
        %v1972 = vadd.f32 %v1902, %v1971
        %v1973 = vpop.f32.mrf.mxu0
        %v1974 = vadd.f32 %v1902, %v1973
        %1975 = vmatmul.bf16.gmra.mxu0 %v1382
        %v1976 = vpop.f32.mrf.mxu0
        %v1977 = vadd.f32 %v1902, %v1976
        %v1978 = vpop.f32.mrf.mxu0
        %v1979 = vadd.f32 %v1902, %v1978
        %1980 = vmatmul.bf16.gmra.mxu0 %v1383
        %v1981 = vpop.f32.mrf.mxu0
        %v1982 = vadd.f32 %v1902, %v1981
        %v1983 = vpop.f32.mrf.mxu0
        %v1984 = vadd.f32 %v1902, %v1983
        %1985 = vmatmul.bf16.gmra.mxu0 %v1384
        %v1986 = vpop.f32.mrf.mxu0
        %v1987 = vadd.f32 %v1902, %v1986
        %v1988 = vpop.f32.mrf.mxu0
        %v1989 = vadd.f32 %v1902, %v1988
        %1990 = vmatmul.bf16.gmra.mxu0 %v1385
        %v1991 = vpop.f32.mrf.mxu0
        %v1992 = vadd.f32 %v1902, %v1991
        %v1993 = vpop.f32.mrf.mxu0
        %v1994 = vadd.f32 %v1902, %v1993
        %1995 = vmatmul.bf16.gmra.mxu0 %v1386
        %v1996 = vpop.f32.mrf.mxu0
        %v1997 = vadd.f32 %v1902, %v1996
        %v1998 = vpop.f32.mrf.mxu0
        %v1999 = vadd.f32 %v1902, %v1998
        %2000 = vmatmul.bf16.gmra.mxu0 %v1387
        %v2001 = vpop.f32.mrf.mxu0
        %v2002 = vadd.f32 %v1902, %v2001
        %v2003 = vpop.f32.mrf.mxu0
        %v2004 = vadd.f32 %v1902, %v2003
        %2005 = vmatmul.bf16.gmra.mxu0 %v1388
        %v2006 = vpop.f32.mrf.mxu0
        %v2007 = vadd.f32 %v1902, %v2006
        %v2008 = vpop.f32.mrf.mxu0
        %v2009 = vadd.f32 %v1902, %v2008
        %2010 = vmatmul.bf16.gmra.mxu0 %v1389
        %v2011 = vpop.f32.mrf.mxu0
        %v2012 = vadd.f32 %v1902, %v2011
        %v2013 = vpop.f32.mrf.mxu0
        %v2014 = vadd.f32 %v1902, %v2013
        %2015 = vmatmul.bf16.gmra.mxu0 %v1390
        %v2016 = vpop.f32.mrf.mxu0
        %v2017 = vadd.f32 %v1902, %v2016
        %v2018 = vpop.f32.mrf.mxu0
        %v2019 = vadd.f32 %v1902, %v2018
        %2020 = vmatmul.bf16.gmra.mxu0 %v1391
        %v2021 = vpop.f32.mrf.mxu0
        %v2022 = vadd.f32 %v1902, %v2021
        %v2023 = vpop.f32.mrf.mxu0
        %v2024 = vadd.f32 %v1902, %v2023
        %2025 = vmatmul.bf16.gmra.mxu0 %v1392
        %v2026 = vpop.f32.mrf.mxu0
        %v2027 = vadd.f32 %v1902, %v2026
        %v2028 = vpop.f32.mrf.mxu0
        %v2029 = vadd.f32 %v1902, %v2028
        %2030 = vmatmul.bf16.gmra.mxu0 %v1393
        %v2031 = vpop.f32.mrf.mxu0
        %v2032 = vadd.f32 %v1902, %v2031
        %v2033 = vpop.f32.mrf.mxu0
        %v2034 = vadd.f32 %v1902, %v2033
        %2035 = vmatmul.bf16.gmra.mxu0 %v1394
        %v2036 = vpop.f32.mrf.mxu0
        %v2037 = vadd.f32 %v1902, %v2036
        %v2038 = vpop.f32.mrf.mxu0
        %v2039 = vadd.f32 %v1902, %v2038
        %2040 = vmatmul.bf16.gmra.mxu0 %v1395
        %v2041 = vpop.f32.mrf.mxu0
        %v2042 = vadd.f32 %v1902, %v2041
        %v2043 = vpop.f32.mrf.mxu0
        %v2044 = vadd.f32 %v1902, %v2043
        %2045 = vmatmul.bf16.gmra.mxu0 %v1396
        %v2046 = vpop.f32.mrf.mxu0
        %v2047 = vadd.f32 %v1902, %v2046
        %v2048 = vpop.f32.mrf.mxu0
        %v2049 = vadd.f32 %v1902, %v2048
        %2050 = vmatmul.bf16.gmra.mxu0 %v1397
        %v2051 = vpop.f32.mrf.mxu0
        %v2052 = vadd.f32 %v1902, %v2051
        %v2053 = vpop.f32.mrf.mxu0
        %v2054 = vadd.f32 %v1902, %v2053
        %2055 = vmatmul.bf16.gmra.mxu0 %v1398
        %v2056 = vpop.f32.mrf.mxu0
        %v2057 = vadd.f32 %v1902, %v2056
        %v2058 = vpop.f32.mrf.mxu0
        %v2059 = vadd.f32 %v1902, %v2058
        %2060 = vmatmul.bf16.gmra.mxu0 %v1399
        %v2061 = vpop.f32.mrf.mxu0
        %v2062 = vadd.f32 %v1902, %v2061
        %v2063 = vpop.f32.mrf.mxu0
        %v2064 = vadd.f32 %v1902, %v2063
        %2065 = vmatmul.bf16.gmra.mxu0 %v1400
        %v2066 = vpop.f32.mrf.mxu0
        %v2067 = vadd.f32 %v1902, %v2066
        %v2068 = vpop.f32.mrf.mxu0
        %v2069 = vadd.f32 %v1902, %v2068
        %2070 = vmatmul.bf16.gmra.mxu0 %v1401
        %v2071 = vpop.f32.mrf.mxu0
        %v2072 = vadd.f32 %v1902, %v2071
        %v2073 = vpop.f32.mrf.mxu0
        %v2074 = vadd.f32 %v1902, %v2073
        %2075 = vmatmul.bf16.gmra.mxu0 %v1402
        %v2076 = vpop.f32.mrf.mxu0
        %v2077 = vadd.f32 %v1902, %v2076
        %v2078 = vpop.f32.mrf.mxu0
        %v2079 = vadd.f32 %v1902, %v2078
        %2080 = vmatmul.bf16.gmra.mxu0 %v1403
        %v2081 = vpop.f32.mrf.mxu0
        %v2082 = vadd.f32 %v1902, %v2081
        %v2083 = vpop.f32.mrf.mxu0
        %v2084 = vadd.f32 %v1902, %v2083
        %2085 = vmatmul.bf16.gmra.mxu0 %v1404
        %v2086 = vpop.f32.mrf.mxu0
        %v2087 = vadd.f32 %v1902, %v2086
        %v2088 = vpop.f32.mrf.mxu0
        %v2089 = vadd.f32 %v1902, %v2088
        %2090 = vmatmul.bf16.gmra.mxu0 %v1405
        %v2091 = vpop.f32.mrf.mxu0
        %v2092 = vadd.f32 %v1902, %v2091
        %v2093 = vpop.f32.mrf.mxu0
        %v2094 = vadd.f32 %v1902, %v2093
        %2095 = vmatmul.bf16.gmra.mxu0 %v1406
        %v2096 = vpop.f32.mrf.mxu0
        %v2097 = vadd.f32 %v1902, %v2096
        %v2098 = vpop.f32.mrf.mxu0
        %v2099 = vadd.f32 %v1902, %v2098
        %2100 = vmatmul.bf16.gmra.mxu0 %v1407
        %v2101 = vpop.f32.mrf.mxu0
        %v2102 = vadd.f32 %v1902, %v2101
        %v2103 = vpop.f32.mrf.mxu0
        %v2104 = vadd.f32 %v1902, %v2103
        %2105 = vmatmul.bf16.gmra.mxu0 %v1408
        %v2106 = vpop.f32.mrf.mxu0
        %v2107 = vadd.f32 %v1902, %v2106
        %v2108 = vpop.f32.mrf.mxu0
        %v2109 = vadd.f32 %v1902, %v2108
        %2110 = vmatmul.bf16.gmra.mxu0 %v1409
        %v2111 = vpop.f32.mrf.mxu0
        %v2112 = vadd.f32 %v1902, %v2111
        %v2113 = vpop.f32.mrf.mxu0
        %v2114 = vadd.f32 %v1902, %v2113
        %2115 = vmatmul.bf16.gmra.mxu0 %v1410
        %v2116 = vpop.f32.mrf.mxu0
        %v2117 = vadd.f32 %v1902, %v2116
        %v2118 = vpop.f32.mrf.mxu0
        %v2119 = vadd.f32 %v1902, %v2118
        %2120 = vmatmul.bf16.gmra.mxu0 %v1411
        %v2121 = vpop.f32.mrf.mxu0
        %v2122 = vadd.f32 %v1902, %v2121
        %v2123 = vpop.f32.mrf.mxu0
        %v2124 = vadd.f32 %v1902, %v2123
        %2125 = vmatmul.bf16.gmra.mxu0 %v1412
        %v2126 = vpop.f32.mrf.mxu0
        %v2127 = vadd.f32 %v1902, %v2126
        %v2128 = vpop.f32.mrf.mxu0
        %v2129 = vadd.f32 %v1902, %v2128
        %2130 = vmatmul.bf16.gmra.mxu0 %v1413
        %v2131 = vpop.f32.mrf.mxu0
        %v2132 = vadd.f32 %v1902, %v2131
        %v2133 = vpop.f32.mrf.mxu0
        %v2134 = vadd.f32 %v1902, %v2133
        %2135 = vmatmul.bf16.gmra.mxu0 %v1414
        %v2136 = vpop.f32.mrf.mxu0
        %v2137 = vadd.f32 %v1902, %v2136
        %v2138 = vpop.f32.mrf.mxu0
        %v2139 = vadd.f32 %v1902, %v2138
        %2140 = vmatmul.bf16.gmra.mxu0 %v1415
        %v2141 = vpop.f32.mrf.mxu0
        %v2142 = vadd.f32 %v1902, %v2141
        %v2143 = vpop.f32.mrf.mxu0
        %v2144 = vadd.f32 %v1902, %v2143
        %2145 = vmatmul.bf16.gmra.mxu0 %v1416
        %v2146 = vpop.f32.mrf.mxu0
        %v2147 = vadd.f32 %v1902, %v2146
        %v2148 = vpop.f32.mrf.mxu0
        %v2149 = vadd.f32 %v1902, %v2148
        %2150 = vmatmul.bf16.gmra.mxu0 %v1417
        %v2151 = vpop.f32.mrf.mxu0
        %v2152 = vadd.f32 %v1902, %v2151
        %v2153 = vpop.f32.mrf.mxu0
        %v2154 = vadd.f32 %v1902, %v2153
        %2155 = vmatmul.bf16.gmra.mxu0 %v1418
        %v2156 = vpop.f32.mrf.mxu0
        %v2157 = vadd.f32 %v1902, %v2156
        %v2158 = vpop.f32.mrf.mxu0
        %v2159 = vadd.f32 %v1902, %v2158
        %2160 = vmatmul.bf16.gmra.mxu0 %v1419
        %v2161 = vpop.f32.mrf.mxu0
        %v2162 = vadd.f32 %v1902, %v2161
        %v2163 = vpop.f32.mrf.mxu0
        %v2164 = vadd.f32 %v1902, %v2163
        %2165 = vmatmul.bf16.gmra.mxu0 %v1420
        %v2166 = vpop.f32.mrf.mxu0
        %v2167 = vadd.f32 %v1902, %v2166
        %v2168 = vpop.f32.mrf.mxu0
        %v2169 = vadd.f32 %v1902, %v2168
        %2170 = vmatmul.bf16.gmra.mxu0 %v1421
        %v2171 = vpop.f32.mrf.mxu0
        %v2172 = vadd.f32 %v1902, %v2171
        %v2173 = vpop.f32.mrf.mxu0
        %v2174 = vadd.f32 %v1902, %v2173
        %2175 = vmatmul.bf16.gmra.mxu0 %v1422
        %v2176 = vpop.f32.mrf.mxu0
        %v2177 = vadd.f32 %v1902, %v2176
        %v2178 = vpop.f32.mrf.mxu0
        %v2179 = vadd.f32 %v1902, %v2178
        %2180 = vmatmul.bf16.gmra.mxu0 %v1423
        %v2181 = vpop.f32.mrf.mxu0
        %v2182 = vadd.f32 %v1902, %v2181
        %v2183 = vpop.f32.mrf.mxu0
        %v2184 = vadd.f32 %v1902, %v2183
        %2185 = vmatmul.bf16.gmra.mxu0 %v1424
        %v2186 = vpop.f32.mrf.mxu0
        %v2187 = vadd.f32 %v1902, %v2186
        %v2188 = vpop.f32.mrf.mxu0
        %v2189 = vadd.f32 %v1902, %v2188
        %2190 = vmatmul.bf16.gmra.mxu0 %v1425
        %v2191 = vpop.f32.mrf.mxu0
        %v2192 = vadd.f32 %v1902, %v2191
        %v2193 = vpop.f32.mrf.mxu0
        %v2194 = vadd.f32 %v1902, %v2193
        %2195 = vmatmul.bf16.gmra.mxu0 %v1426
        %v2196 = vpop.f32.mrf.mxu0
        %v2197 = vadd.f32 %v1902, %v2196
        %v2198 = vpop.f32.mrf.mxu0
        %v2199 = vadd.f32 %v1902, %v2198
        %2200 = vmatmul.bf16.gmra.mxu0 %v1427
        %v2201 = vpop.f32.mrf.mxu0
        %v2202 = vadd.f32 %v1902, %v2201
        %v2203 = vpop.f32.mrf.mxu0
        %v2204 = vadd.f32 %v1902, %v2203
        %2205 = vmatmul.bf16.gmra.mxu0 %v1428
        %v2206 = vpop.f32.mrf.mxu0
        %v2207 = vadd.f32 %v1902, %v2206
        %v2208 = vpop.f32.mrf.mxu0
        %v2209 = vadd.f32 %v1902, %v2208
        %2210 = vmatmul.bf16.gmra.mxu0 %v1429
        %v2211 = vpop.f32.mrf.mxu0
        %v2212 = vadd.f32 %v1902, %v2211
        %v2213 = vpop.f32.mrf.mxu0
        %v2214 = vadd.f32 %v1902, %v2213
        %2215 = vmatmul.bf16.gmra.mxu0 %v1430
        %v2216 = vpop.f32.mrf.mxu0
        %v2217 = vadd.f32 %v1902, %v2216
        %v2218 = vpop.f32.mrf.mxu0
        %v2219 = vadd.f32 %v1902, %v2218
        %2220 = vmatmul.bf16.gmra.mxu0 %v1431
        %v2221 = vpop.f32.mrf.mxu0
        %v2222 = vadd.f32 %v1902, %v2221
        %v2223 = vpop.f32.mrf.mxu0
        %v2224 = vadd.f32 %v1902, %v2223
        %2225 = vmatmul.bf16.gmra.mxu0 %v1432
        %v2226 = vpop.f32.mrf.mxu0
        %v2227 = vadd.f32 %v1902, %v2226
        %v2228 = vpop.f32.mrf.mxu0
        %v2229 = vadd.f32 %v1902, %v2228
        %2230 = vmatmul.bf16.gmra.mxu0 %v1433
        %v2231 = vpop.f32.mrf.mxu0
        %v2232 = vadd.f32 %v1902, %v2231
        %v2233 = vpop.f32.mrf.mxu0
        %v2234 = vadd.f32 %v1902, %v2233
        %2235 = vmatmul.bf16.gmra.mxu0 %v1434
        %v2236 = vpop.f32.mrf.mxu0
        %v2237 = vadd.f32 %v1902, %v2236
        %v2238 = vpop.f32.mrf.mxu0
        %v2239 = vadd.f32 %v1902, %v2238
        %2240 = vmatmul.bf16.gmra.mxu0 %v1435
        %v2241 = vpop.f32.mrf.mxu0
        %v2242 = vadd.f32 %v1902, %v2241
        %v2243 = vpop.f32.mrf.mxu0
        %v2244 = vadd.f32 %v1902, %v2243
        %2245 = vmatmul.bf16.gmra.mxu0 %v1436
        %v2246 = vpop.f32.mrf.mxu0
        %v2247 = vadd.f32 %v1902, %v2246
        %v2248 = vpop.f32.mrf.mxu0
        %v2249 = vadd.f32 %v1902, %v2248
        %2250 = vmatmul.bf16.gmra.mxu0 %v1437
        %v2251 = vpop.f32.mrf.mxu0
        %v2252 = vadd.f32 %v1902, %v2251
        %v2253 = vpop.f32.mrf.mxu0
        %v2254 = vadd.f32 %v1902, %v2253
        %2255 = vmatmul.bf16.gmra.mxu0 %v1438
        %v2256 = vpop.f32.mrf.mxu0
        %v2257 = vadd.f32 %v1902, %v2256
        %v2258 = vpop.f32.mrf.mxu0
        %v2259 = vadd.f32 %v1902, %v2258
        %2260 = vmatmul.bf16.gmra.mxu0 %v1439
        %v2261 = vpop.f32.mrf.mxu0
        %v2262 = vadd.f32 %v1902, %v2261
        %v2263 = vpop.f32.mrf.mxu0
        %v2264 = vadd.f32 %v1902, %v2263
        %2265 = vmatmul.bf16.gmra.mxu0 %v1440
        %v2266 = vpop.f32.mrf.mxu0
        %v2267 = vadd.f32 %v1902, %v2266
        %v2268 = vpop.f32.mrf.mxu0
        %v2269 = vadd.f32 %v1902, %v2268
        %2270 = vmatmul.bf16.gmra.mxu0 %v1441
        %v2271 = vpop.f32.mrf.mxu0
        %v2272 = vadd.f32 %v1902, %v2271
        %v2273 = vpop.f32.mrf.mxu0
        %v2274 = vadd.f32 %v1902, %v2273
        %2275 = vmatmul.bf16.gmra.mxu0 %v1442
        %v2276 = vpop.f32.mrf.mxu0
        %v2277 = vadd.f32 %v1902, %v2276
        %v2278 = vpop.f32.mrf.mxu0
        %v2279 = vadd.f32 %v1902, %v2278
        %2280 = vdwg.mxu0
        %v2281 = vpack.c.bf16 %v1565, %v1565
        %v2282 = vpack.c.bf16 %v1567, %v1567
        %v2283 = vpack.c.bf16 %v1570, %v1570
        %v2284 = vpack.c.bf16 %v1572, %v1572
        %v2285 = vpack.c.bf16 %v1575, %v1575
        %v2286 = vpack.c.bf16 %v1577, %v1577
        %v2287 = vpack.c.bf16 %v1580, %v1580
        %v2288 = vpack.c.bf16 %v1582, %v1582
        %v2289 = vpack.c.bf16 %v1585, %v1585
        %v2290 = vpack.c.bf16 %v1587, %v1587
        %v2291 = vpack.c.bf16 %v1590, %v1590
        %v2292 = vpack.c.bf16 %v1592, %v1592
        %v2293 = vpack.c.bf16 %v1595, %v1595
        %v2294 = vpack.c.bf16 %v1597, %v1597
        %v2295 = vpack.c.bf16 %v1600, %v1600
        %v2296 = vpack.c.bf16 %v1602, %v1602
        %v2297 = vpack.c.bf16 %v1605, %v1605
        %v2298 = vpack.c.bf16 %v1607, %v1607
        %v2299 = vpack.c.bf16 %v1610, %v1610
        %v2300 = vpack.c.bf16 %v1612, %v1612
        %v2301 = vpack.c.bf16 %v1615, %v1615
        %v2302 = vpack.c.bf16 %v1617, %v1617
        %v2303 = vpack.c.bf16 %v1620, %v1620
        %v2304 = vpack.c.bf16 %v1622, %v1622
        %v2305 = vpack.c.bf16 %v1625, %v1625
        %v2306 = vpack.c.bf16 %v1627, %v1627
        %v2307 = vpack.c.bf16 %v1630, %v1630
        %v2308 = vpack.c.bf16 %v1632, %v1632
        %v2309 = vpack.c.bf16 %v1635, %v1635
        %v2310 = vpack.c.bf16 %v1637, %v1637
        %v2311 = vpack.c.bf16 %v1640, %v1640
        %v2312 = vpack.c.bf16 %v1642, %v1642
        %v2313 = vpack.c.bf16 %v1645, %v1645
        %v2314 = vpack.c.bf16 %v1647, %v1647
        %v2315 = vpack.c.bf16 %v1650, %v1650
        %v2316 = vpack.c.bf16 %v1652, %v1652
        %v2317 = vpack.c.bf16 %v1655, %v1655
        %v2318 = vpack.c.bf16 %v1657, %v1657
        %v2319 = vpack.c.bf16 %v1660, %v1660
        %v2320 = vpack.c.bf16 %v1662, %v1662
        %v2321 = vpack.c.bf16 %v1665, %v1665
        %v2322 = vpack.c.bf16 %v1667, %v1667
        %v2323 = vpack.c.bf16 %v1670, %v1670
        %v2324 = vpack.c.bf16 %v1672, %v1672
        %v2325 = vpack.c.bf16 %v1675, %v1675
        %v2326 = vpack.c.bf16 %v1677, %v1677
        %v2327 = vpack.c.bf16 %v1680, %v1680
        %v2328 = vpack.c.bf16 %v1682, %v1682
        %v2329 = vpack.c.bf16 %v1685, %v1685
        %v2330 = vpack.c.bf16 %v1687, %v1687
        %v2331 = vpack.c.bf16 %v1690, %v1690
        %v2332 = vpack.c.bf16 %v1692, %v1692
        %v2333 = vpack.c.bf16 %v1695, %v1695
        %v2334 = vpack.c.bf16 %v1697, %v1697
        %v2335 = vpack.c.bf16 %v1700, %v1700
        %v2336 = vpack.c.bf16 %v1702, %v1702
        %v2337 = vpack.c.bf16 %v1705, %v1705
        %v2338 = vpack.c.bf16 %v1707, %v1707
        %v2339 = vpack.c.bf16 %v1710, %v1710
        %v2340 = vpack.c.bf16 %v1712, %v1712
        %v2341 = vpack.c.bf16 %v1715, %v1715
        %v2342 = vpack.c.bf16 %v1717, %v1717
        %v2343 = vpack.c.bf16 %v1720, %v1720
        %v2344 = vpack.c.bf16 %v1722, %v1722
        %v2345 = vpack.c.bf16 %v1725, %v1725
        %v2346 = vpack.c.bf16 %v1727, %v1727
        %v2347 = vpack.c.bf16 %v1730, %v1730
        %v2348 = vpack.c.bf16 %v1732, %v1732
        %v2349 = vpack.c.bf16 %v1735, %v1735
        %v2350 = vpack.c.bf16 %v1737, %v1737
        %v2351 = vpack.c.bf16 %v1740, %v1740
        %v2352 = vpack.c.bf16 %v1742, %v1742
        %v2353 = vpack.c.bf16 %v1745, %v1745
        %v2354 = vpack.c.bf16 %v1747, %v1747
        %v2355 = vpack.c.bf16 %v1750, %v1750
        %v2356 = vpack.c.bf16 %v1752, %v1752
        %v2357 = vpack.c.bf16 %v1755, %v1755
        %v2358 = vpack.c.bf16 %v1757, %v1757
        %v2359 = vpack.c.bf16 %v1760, %v1760
        %v2360 = vpack.c.bf16 %v1762, %v1762
        %v2361 = vpack.c.bf16 %v1765, %v1765
        %v2362 = vpack.c.bf16 %v1767, %v1767
        %v2363 = vpack.c.bf16 %v1770, %v1770
        %v2364 = vpack.c.bf16 %v1772, %v1772
        %v2365 = vpack.c.bf16 %v1775, %v1775
        %v2366 = vpack.c.bf16 %v1777, %v1777
        %v2367 = vpack.c.bf16 %v1780, %v1780
        %v2368 = vpack.c.bf16 %v1782, %v1782
        %v2369 = vpack.c.bf16 %v1785, %v1785
        %v2370 = vpack.c.bf16 %v1787, %v1787
        %v2371 = vpack.c.bf16 %v1790, %v1790
        %v2372 = vpack.c.bf16 %v1792, %v1792
        %v2373 = vpack.c.bf16 %v1795, %v1795
        %v2374 = vpack.c.bf16 %v1797, %v1797
        %v2375 = vpack.c.bf16 %v1800, %v1800
        %v2376 = vpack.c.bf16 %v1802, %v1802
        %v2377 = vpack.c.bf16 %v1805, %v1805
        %v2378 = vpack.c.bf16 %v1807, %v1807
        %v2379 = vpack.c.bf16 %v1810, %v1810
        %v2380 = vpack.c.bf16 %v1812, %v1812
        %v2381 = vpack.c.bf16 %v1815, %v1815
        %v2382 = vpack.c.bf16 %v1817, %v1817
        %v2383 = vpack.c.bf16 %v1820, %v1820
        %v2384 = vpack.c.bf16 %v1822, %v1822
        %v2385 = vpack.c.bf16 %v1825, %v1825
        %v2386 = vpack.c.bf16 %v1827, %v1827
        %v2387 = vpack.c.bf16 %v1830, %v1830
        %v2388 = vpack.c.bf16 %v1832, %v1832
        %v2389 = vpack.c.bf16 %v1835, %v1835
        %v2390 = vpack.c.bf16 %v1837, %v1837
        %v2391 = vpack.c.bf16 %v1840, %v1840
        %v2392 = vpack.c.bf16 %v1842, %v1842
        %v2393 = vpack.c.bf16 %v1845, %v1845
        %v2394 = vpack.c.bf16 %v1847, %v1847
        %v2395 = vpack.c.bf16 %v1850, %v1850
        %v2396 = vpack.c.bf16 %v1852, %v1852
        %v2397 = vpack.c.bf16 %v1855, %v1855
        %v2398 = vpack.c.bf16 %v1857, %v1857
        %v2399 = vpack.c.bf16 %v1860, %v1860
        %v2400 = vpack.c.bf16 %v1862, %v1862
        %v2401 = vpack.c.bf16 %v1865, %v1865
        %v2402 = vpack.c.bf16 %v1867, %v1867
        %v2403 = vpack.c.bf16 %v1870, %v1870
        %v2404 = vpack.c.bf16 %v1872, %v1872
        %v2405 = vpack.c.bf16 %v1875, %v1875
        %v2406 = vpack.c.bf16 %v1877, %v1877
        %v2407 = vpack.c.bf16 %v1880, %v1880
        %v2408 = vpack.c.bf16 %v1882, %v1882
        %vm2409 = vcmask 519168
        %2410 = vst.msk [vmem:[%s829] sm:$0xf] %vm2409, %v2281
        %2411 = vst.msk [vmem:[%s829 + $0x4] sm:$0xf] %vm2409, %v2282
        %2412 = vst.msk [vmem:[%s829 + $0x8] sm:$0xf] %vm2409, %v2283
        %2413 = vst.msk [vmem:[%s829 + $0xc] sm:$0xf] %vm2409, %v2284
        %2414 = vst.msk [vmem:[%s829 + $0x10] sm:$0xf] %vm2409, %v2285
        %2415 = vst.msk [vmem:[%s829 + $0x14] sm:$0xf] %vm2409, %v2286
        %2416 = vst.msk [vmem:[%s829 + $0x18] sm:$0xf] %vm2409, %v2287
        %2417 = vst.msk [vmem:[%s829 + $0x1c] sm:$0xf] %vm2409, %v2288
        %2418 = vst.msk [vmem:[%s829 + $0x20] sm:$0xf] %vm2409, %v2289
        %2419 = vst.msk [vmem:[%s829 + $0x24] sm:$0xf] %vm2409, %v2290
        %2420 = vst.msk [vmem:[%s829 + $0x28] sm:$0xf] %vm2409, %v2291
        %2421 = vst.msk [vmem:[%s829 + $0x2c] sm:$0xf] %vm2409, %v2292
        %2422 = vst.msk [vmem:[%s829 + $0x30] sm:$0xf] %vm2409, %v2293
        %2423 = vst.msk [vmem:[%s829 + $0x34] sm:$0xf] %vm2409, %v2294
        %2424 = vst.msk [vmem:[%s829 + $0x38] sm:$0xf] %vm2409, %v2295
        %2425 = vst.msk [vmem:[%s829 + $0x3c] sm:$0xf] %vm2409, %v2296
        %2426 = vst.msk [vmem:[%s829 + $0x40] sm:$0xf] %vm2409, %v2297
        %2427 = vst.msk [vmem:[%s829 + $0x44] sm:$0xf] %vm2409, %v2298
        %2428 = vst.msk [vmem:[%s829 + $0x48] sm:$0xf] %vm2409, %v2299
        %2429 = vst.msk [vmem:[%s829 + $0x4c] sm:$0xf] %vm2409, %v2300
        %2430 = vst.msk [vmem:[%s829 + $0x50] sm:$0xf] %vm2409, %v2301
        %2431 = vst.msk [vmem:[%s829 + $0x54] sm:$0xf] %vm2409, %v2302
        %2432 = vst.msk [vmem:[%s829 + $0x58] sm:$0xf] %vm2409, %v2303
        %2433 = vst.msk [vmem:[%s829 + $0x5c] sm:$0xf] %vm2409, %v2304
        %2434 = vst.msk [vmem:[%s829 + $0x60] sm:$0xf] %vm2409, %v2305
        %2435 = vst.msk [vmem:[%s829 + $0x64] sm:$0xf] %vm2409, %v2306
        %2436 = vst.msk [vmem:[%s829 + $0x68] sm:$0xf] %vm2409, %v2307
        %2437 = vst.msk [vmem:[%s829 + $0x6c] sm:$0xf] %vm2409, %v2308
        %2438 = vst.msk [vmem:[%s829 + $0x70] sm:$0xf] %vm2409, %v2309
        %2439 = vst.msk [vmem:[%s829 + $0x74] sm:$0xf] %vm2409, %v2310
        %2440 = vst.msk [vmem:[%s829 + $0x78] sm:$0xf] %vm2409, %v2311
        %2441 = vst.msk [vmem:[%s829 + $0x7c] sm:$0xf] %vm2409, %v2312
        %2442 = vst.msk [vmem:[%s829 + $0x80] sm:$0xf] %vm2409, %v2313
        %2443 = vst.msk [vmem:[%s829 + $0x84] sm:$0xf] %vm2409, %v2314
        %2444 = vst.msk [vmem:[%s829 + $0x88] sm:$0xf] %vm2409, %v2315
        %2445 = vst.msk [vmem:[%s829 + $0x8c] sm:$0xf] %vm2409, %v2316
        %2446 = vst.msk [vmem:[%s829 + $0x90] sm:$0xf] %vm2409, %v2317
        %2447 = vst.msk [vmem:[%s829 + $0x94] sm:$0xf] %vm2409, %v2318
        %2448 = vst.msk [vmem:[%s829 + $0x98] sm:$0xf] %vm2409, %v2319
        %2449 = vst.msk [vmem:[%s829 + $0x9c] sm:$0xf] %vm2409, %v2320
        %2450 = vst.msk [vmem:[%s829 + $0xa0] sm:$0xf] %vm2409, %v2321
        %2451 = vst.msk [vmem:[%s829 + $0xa4] sm:$0xf] %vm2409, %v2322
        %2452 = vst.msk [vmem:[%s829 + $0xa8] sm:$0xf] %vm2409, %v2323
        %2453 = vst.msk [vmem:[%s829 + $0xac] sm:$0xf] %vm2409, %v2324
        %2454 = vst.msk [vmem:[%s829 + $0xb0] sm:$0xf] %vm2409, %v2325
        %2455 = vst.msk [vmem:[%s829 + $0xb4] sm:$0xf] %vm2409, %v2326
        %2456 = vst.msk [vmem:[%s829 + $0xb8] sm:$0xf] %vm2409, %v2327
        %2457 = vst.msk [vmem:[%s829 + $0xbc] sm:$0xf] %vm2409, %v2328
        %2458 = vst.msk [vmem:[%s829 + $0xc0] sm:$0xf] %vm2409, %v2329
        %2459 = vst.msk [vmem:[%s829 + $0xc4] sm:$0xf] %vm2409, %v2330
        %2460 = vst.msk [vmem:[%s829 + $0xc8] sm:$0xf] %vm2409, %v2331
        %2461 = vst.msk [vmem:[%s829 + $0xcc] sm:$0xf] %vm2409, %v2332
        %2462 = vst.msk [vmem:[%s829 + $0xd0] sm:$0xf] %vm2409, %v2333
        %2463 = vst.msk [vmem:[%s829 + $0xd4] sm:$0xf] %vm2409, %v2334
        %2464 = vst.msk [vmem:[%s829 + $0xd8] sm:$0xf] %vm2409, %v2335
        %2465 = vst.msk [vmem:[%s829 + $0xdc] sm:$0xf] %vm2409, %v2336
        %2466 = vst.msk [vmem:[%s829 + $0xe0] sm:$0xf] %vm2409, %v2337
        %2467 = vst.msk [vmem:[%s829 + $0xe4] sm:$0xf] %vm2409, %v2338
        %2468 = vst.msk [vmem:[%s829 + $0xe8] sm:$0xf] %vm2409, %v2339
        %2469 = vst.msk [vmem:[%s829 + $0xec] sm:$0xf] %vm2409, %v2340
        %2470 = vst.msk [vmem:[%s829 + $0xf0] sm:$0xf] %vm2409, %v2341
        %2471 = vst.msk [vmem:[%s829 + $0xf4] sm:$0xf] %vm2409, %v2342
        %2472 = vst.msk [vmem:[%s829 + $0xf8] sm:$0xf] %vm2409, %v2343
        %2473 = vst.msk [vmem:[%s829 + $0xfc] sm:$0xf] %vm2409, %v2344
        %2474 = vst.msk [vmem:[%s829 + $0x100] sm:$0xf] %vm2409, %v2345
        %2475 = vst.msk [vmem:[%s829 + $0x104] sm:$0xf] %vm2409, %v2346
        %2476 = vst.msk [vmem:[%s829 + $0x108] sm:$0xf] %vm2409, %v2347
        %2477 = vst.msk [vmem:[%s829 + $0x10c] sm:$0xf] %vm2409, %v2348
        %2478 = vst.msk [vmem:[%s829 + $0x110] sm:$0xf] %vm2409, %v2349
        %2479 = vst.msk [vmem:[%s829 + $0x114] sm:$0xf] %vm2409, %v2350
        %2480 = vst.msk [vmem:[%s829 + $0x118] sm:$0xf] %vm2409, %v2351
        %2481 = vst.msk [vmem:[%s829 + $0x11c] sm:$0xf] %vm2409, %v2352
        %2482 = vst.msk [vmem:[%s829 + $0x120] sm:$0xf] %vm2409, %v2353
        %2483 = vst.msk [vmem:[%s829 + $0x124] sm:$0xf] %vm2409, %v2354
        %2484 = vst.msk [vmem:[%s829 + $0x128] sm:$0xf] %vm2409, %v2355
        %2485 = vst.msk [vmem:[%s829 + $0x12c] sm:$0xf] %vm2409, %v2356
        %2486 = vst.msk [vmem:[%s829 + $0x130] sm:$0xf] %vm2409, %v2357
        %2487 = vst.msk [vmem:[%s829 + $0x134] sm:$0xf] %vm2409, %v2358
        %2488 = vst.msk [vmem:[%s829 + $0x138] sm:$0xf] %vm2409, %v2359
        %2489 = vst.msk [vmem:[%s829 + $0x13c] sm:$0xf] %vm2409, %v2360
        %2490 = vst.msk [vmem:[%s829 + $0x140] sm:$0xf] %vm2409, %v2361
        %2491 = vst.msk [vmem:[%s829 + $0x144] sm:$0xf] %vm2409, %v2362
        %2492 = vst.msk [vmem:[%s829 + $0x148] sm:$0xf] %vm2409, %v2363
        %2493 = vst.msk [vmem:[%s829 + $0x14c] sm:$0xf] %vm2409, %v2364
        %2494 = vst.msk [vmem:[%s829 + $0x150] sm:$0xf] %vm2409, %v2365
        %2495 = vst.msk [vmem:[%s829 + $0x154] sm:$0xf] %vm2409, %v2366
        %2496 = vst.msk [vmem:[%s829 + $0x158] sm:$0xf] %vm2409, %v2367
        %2497 = vst.msk [vmem:[%s829 + $0x15c] sm:$0xf] %vm2409, %v2368
        %2498 = vst.msk [vmem:[%s829 + $0x160] sm:$0xf] %vm2409, %v2369
        %2499 = vst.msk [vmem:[%s829 + $0x164] sm:$0xf] %vm2409, %v2370
        %2500 = vst.msk [vmem:[%s829 + $0x168] sm:$0xf] %vm2409, %v2371
        %2501 = vst.msk [vmem:[%s829 + $0x16c] sm:$0xf] %vm2409, %v2372
        %2502 = vst.msk [vmem:[%s829 + $0x170] sm:$0xf] %vm2409, %v2373
        %2503 = vst.msk [vmem:[%s829 + $0x174] sm:$0xf] %vm2409, %v2374
        %2504 = vst.msk [vmem:[%s829 + $0x178] sm:$0xf] %vm2409, %v2375
        %2505 = vst.msk [vmem:[%s829 + $0x17c] sm:$0xf] %vm2409, %v2376
        %2506 = vst.msk [vmem:[%s829 + $0x180] sm:$0xf] %vm2409, %v2377
        %2507 = vst.msk [vmem:[%s829 + $0x184] sm:$0xf] %vm2409, %v2378
        %2508 = vst.msk [vmem:[%s829 + $0x188] sm:$0xf] %vm2409, %v2379
        %2509 = vst.msk [vmem:[%s829 + $0x18c] sm:$0xf] %vm2409, %v2380
        %2510 = vst.msk [vmem:[%s829 + $0x190] sm:$0xf] %vm2409, %v2381
        %2511 = vst.msk [vmem:[%s829 + $0x194] sm:$0xf] %vm2409, %v2382
        %2512 = vst.msk [vmem:[%s829 + $0x198] sm:$0xf] %vm2409, %v2383
        %2513 = vst.msk [vmem:[%s829 + $0x19c] sm:$0xf] %vm2409, %v2384
        %2514 = vst.msk [vmem:[%s829 + $0x1a0] sm:$0xf] %vm2409, %v2385
        %2515 = vst.msk [vmem:[%s829 + $0x1a4] sm:$0xf] %vm2409, %v2386
        %2516 = vst.msk [vmem:[%s829 + $0x1a8] sm:$0xf] %vm2409, %v2387
        %2517 = vst.msk [vmem:[%s829 + $0x1ac] sm:$0xf] %vm2409, %v2388
        %2518 = vst.msk [vmem:[%s829 + $0x1b0] sm:$0xf] %vm2409, %v2389
        %2519 = vst.msk [vmem:[%s829 + $0x1b4] sm:$0xf] %vm2409, %v2390
        %2520 = vst.msk [vmem:[%s829 + $0x1b8] sm:$0xf] %vm2409, %v2391
        %2521 = vst.msk [vmem:[%s829 + $0x1bc] sm:$0xf] %vm2409, %v2392
        %2522 = vst.msk [vmem:[%s829 + $0x1c0] sm:$0xf] %vm2409, %v2393
        %2523 = vst.msk [vmem:[%s829 + $0x1c4] sm:$0xf] %vm2409, %v2394
        %2524 = vst.msk [vmem:[%s829 + $0x1c8] sm:$0xf] %vm2409, %v2395
        %2525 = vst.msk [vmem:[%s829 + $0x1cc] sm:$0xf] %vm2409, %v2396
        %2526 = vst.msk [vmem:[%s829 + $0x1d0] sm:$0xf] %vm2409, %v2397
        %2527 = vst.msk [vmem:[%s829 + $0x1d4] sm:$0xf] %vm2409, %v2398
        %2528 = vst.msk [vmem:[%s829 + $0x1d8] sm:$0xf] %vm2409, %v2399
        %2529 = vst.msk [vmem:[%s829 + $0x1dc] sm:$0xf] %vm2409, %v2400
        %2530 = vst.msk [vmem:[%s829 + $0x1e0] sm:$0xf] %vm2409, %v2401
        %2531 = vst.msk [vmem:[%s829 + $0x1e4] sm:$0xf] %vm2409, %v2402
        %2532 = vst.msk [vmem:[%s829 + $0x1e8] sm:$0xf] %vm2409, %v2403
        %2533 = vst.msk [vmem:[%s829 + $0x1ec] sm:$0xf] %vm2409, %v2404
        %2534 = vst.msk [vmem:[%s829 + $0x1f0] sm:$0xf] %vm2409, %v2405
        %2535 = vst.msk [vmem:[%s829 + $0x1f4] sm:$0xf] %vm2409, %v2406
        %2536 = vst.msk [vmem:[%s829 + $0x1f8] sm:$0xf] %vm2409, %v2407
        %2537 = vst.msk [vmem:[%s829 + $0x1fc] sm:$0xf] %vm2409, %v2408
        %v2538 = vpack.c.bf16 %v1962, %v1962
        %v2539 = vpack.c.bf16 %v1964, %v1964
        %v2540 = vpack.c.bf16 %v1967, %v1967
        %v2541 = vpack.c.bf16 %v1969, %v1969
        %v2542 = vpack.c.bf16 %v1972, %v1972
        %v2543 = vpack.c.bf16 %v1974, %v1974
        %v2544 = vpack.c.bf16 %v1977, %v1977
        %v2545 = vpack.c.bf16 %v1979, %v1979
        %v2546 = vpack.c.bf16 %v1982, %v1982
        %v2547 = vpack.c.bf16 %v1984, %v1984
        %v2548 = vpack.c.bf16 %v1987, %v1987
        %v2549 = vpack.c.bf16 %v1989, %v1989
        %v2550 = vpack.c.bf16 %v1992, %v1992
        %v2551 = vpack.c.bf16 %v1994, %v1994
        %v2552 = vpack.c.bf16 %v1997, %v1997
        %v2553 = vpack.c.bf16 %v1999, %v1999
        %v2554 = vpack.c.bf16 %v2002, %v2002
        %v2555 = vpack.c.bf16 %v2004, %v2004
        %v2556 = vpack.c.bf16 %v2007, %v2007
        %v2557 = vpack.c.bf16 %v2009, %v2009
        %v2558 = vpack.c.bf16 %v2012, %v2012
        %v2559 = vpack.c.bf16 %v2014, %v2014
        %v2560 = vpack.c.bf16 %v2017, %v2017
        %v2561 = vpack.c.bf16 %v2019, %v2019
        %v2562 = vpack.c.bf16 %v2022, %v2022
        %v2563 = vpack.c.bf16 %v2024, %v2024
        %v2564 = vpack.c.bf16 %v2027, %v2027
        %v2565 = vpack.c.bf16 %v2029, %v2029
        %v2566 = vpack.c.bf16 %v2032, %v2032
        %v2567 = vpack.c.bf16 %v2034, %v2034
        %v2568 = vpack.c.bf16 %v2037, %v2037
        %v2569 = vpack.c.bf16 %v2039, %v2039
        %v2570 = vpack.c.bf16 %v2042, %v2042
        %v2571 = vpack.c.bf16 %v2044, %v2044
        %v2572 = vpack.c.bf16 %v2047, %v2047
        %v2573 = vpack.c.bf16 %v2049, %v2049
        %v2574 = vpack.c.bf16 %v2052, %v2052
        %v2575 = vpack.c.bf16 %v2054, %v2054
        %v2576 = vpack.c.bf16 %v2057, %v2057
        %v2577 = vpack.c.bf16 %v2059, %v2059
        %v2578 = vpack.c.bf16 %v2062, %v2062
        %v2579 = vpack.c.bf16 %v2064, %v2064
        %v2580 = vpack.c.bf16 %v2067, %v2067
        %v2581 = vpack.c.bf16 %v2069, %v2069
        %v2582 = vpack.c.bf16 %v2072, %v2072
        %v2583 = vpack.c.bf16 %v2074, %v2074
        %v2584 = vpack.c.bf16 %v2077, %v2077
        %v2585 = vpack.c.bf16 %v2079, %v2079
        %v2586 = vpack.c.bf16 %v2082, %v2082
        %v2587 = vpack.c.bf16 %v2084, %v2084
        %v2588 = vpack.c.bf16 %v2087, %v2087
        %v2589 = vpack.c.bf16 %v2089, %v2089
        %v2590 = vpack.c.bf16 %v2092, %v2092
        %v2591 = vpack.c.bf16 %v2094, %v2094
        %v2592 = vpack.c.bf16 %v2097, %v2097
        %v2593 = vpack.c.bf16 %v2099, %v2099
        %v2594 = vpack.c.bf16 %v2102, %v2102
        %v2595 = vpack.c.bf16 %v2104, %v2104
        %v2596 = vpack.c.bf16 %v2107, %v2107
        %v2597 = vpack.c.bf16 %v2109, %v2109
        %v2598 = vpack.c.bf16 %v2112, %v2112
        %v2599 = vpack.c.bf16 %v2114, %v2114
        %v2600 = vpack.c.bf16 %v2117, %v2117
        %v2601 = vpack.c.bf16 %v2119, %v2119
        %v2602 = vpack.c.bf16 %v2122, %v2122
        %v2603 = vpack.c.bf16 %v2124, %v2124
        %v2604 = vpack.c.bf16 %v2127, %v2127
        %v2605 = vpack.c.bf16 %v2129, %v2129
        %v2606 = vpack.c.bf16 %v2132, %v2132
        %v2607 = vpack.c.bf16 %v2134, %v2134
        %v2608 = vpack.c.bf16 %v2137, %v2137
        %v2609 = vpack.c.bf16 %v2139, %v2139
        %v2610 = vpack.c.bf16 %v2142, %v2142
        %v2611 = vpack.c.bf16 %v2144, %v2144
        %v2612 = vpack.c.bf16 %v2147, %v2147
        %v2613 = vpack.c.bf16 %v2149, %v2149
        %v2614 = vpack.c.bf16 %v2152, %v2152
        %v2615 = vpack.c.bf16 %v2154, %v2154
        %v2616 = vpack.c.bf16 %v2157, %v2157
        %v2617 = vpack.c.bf16 %v2159, %v2159
        %v2618 = vpack.c.bf16 %v2162, %v2162
        %v2619 = vpack.c.bf16 %v2164, %v2164
        %v2620 = vpack.c.bf16 %v2167, %v2167
        %v2621 = vpack.c.bf16 %v2169, %v2169
        %v2622 = vpack.c.bf16 %v2172, %v2172
        %v2623 = vpack.c.bf16 %v2174, %v2174
        %v2624 = vpack.c.bf16 %v2177, %v2177
        %v2625 = vpack.c.bf16 %v2179, %v2179
        %v2626 = vpack.c.bf16 %v2182, %v2182
        %v2627 = vpack.c.bf16 %v2184, %v2184
        %v2628 = vpack.c.bf16 %v2187, %v2187
        %v2629 = vpack.c.bf16 %v2189, %v2189
        %v2630 = vpack.c.bf16 %v2192, %v2192
        %v2631 = vpack.c.bf16 %v2194, %v2194
        %v2632 = vpack.c.bf16 %v2197, %v2197
        %v2633 = vpack.c.bf16 %v2199, %v2199
        %v2634 = vpack.c.bf16 %v2202, %v2202
        %v2635 = vpack.c.bf16 %v2204, %v2204
        %v2636 = vpack.c.bf16 %v2207, %v2207
        %v2637 = vpack.c.bf16 %v2209, %v2209
        %v2638 = vpack.c.bf16 %v2212, %v2212
        %v2639 = vpack.c.bf16 %v2214, %v2214
        %v2640 = vpack.c.bf16 %v2217, %v2217
        %v2641 = vpack.c.bf16 %v2219, %v2219
        %v2642 = vpack.c.bf16 %v2222, %v2222
        %v2643 = vpack.c.bf16 %v2224, %v2224
        %v2644 = vpack.c.bf16 %v2227, %v2227
        %v2645 = vpack.c.bf16 %v2229, %v2229
        %v2646 = vpack.c.bf16 %v2232, %v2232
        %v2647 = vpack.c.bf16 %v2234, %v2234
        %v2648 = vpack.c.bf16 %v2237, %v2237
        %v2649 = vpack.c.bf16 %v2239, %v2239
        %v2650 = vpack.c.bf16 %v2242, %v2242
        %v2651 = vpack.c.bf16 %v2244, %v2244
        %v2652 = vpack.c.bf16 %v2247, %v2247
        %v2653 = vpack.c.bf16 %v2249, %v2249
        %v2654 = vpack.c.bf16 %v2252, %v2252
        %v2655 = vpack.c.bf16 %v2254, %v2254
        %v2656 = vpack.c.bf16 %v2257, %v2257
        %v2657 = vpack.c.bf16 %v2259, %v2259
        %v2658 = vpack.c.bf16 %v2262, %v2262
        %v2659 = vpack.c.bf16 %v2264, %v2264
        %v2660 = vpack.c.bf16 %v2267, %v2267
        %v2661 = vpack.c.bf16 %v2269, %v2269
        %v2662 = vpack.c.bf16 %v2272, %v2272
        %v2663 = vpack.c.bf16 %v2274, %v2274
        %v2664 = vpack.c.bf16 %v2277, %v2277
        %v2665 = vpack.c.bf16 %v2279, %v2279
        %2666 = vst.msk [vmem:[%s836] sm:$0xf] %vm2409, %v2538
        %2667 = vst.msk [vmem:[%s836 + $0x4] sm:$0xf] %vm2409, %v2539
        %2668 = vst.msk [vmem:[%s836 + $0x8] sm:$0xf] %vm2409, %v2540
        %2669 = vst.msk [vmem:[%s836 + $0xc] sm:$0xf] %vm2409, %v2541
        %2670 = vst.msk [vmem:[%s836 + $0x10] sm:$0xf] %vm2409, %v2542
        %2671 = vst.msk [vmem:[%s836 + $0x14] sm:$0xf] %vm2409, %v2543
        %2672 = vst.msk [vmem:[%s836 + $0x18] sm:$0xf] %vm2409, %v2544
        %2673 = vst.msk [vmem:[%s836 + $0x1c] sm:$0xf] %vm2409, %v2545
        %2674 = vst.msk [vmem:[%s836 + $0x20] sm:$0xf] %vm2409, %v2546
        %2675 = vst.msk [vmem:[%s836 + $0x24] sm:$0xf] %vm2409, %v2547
        %2676 = vst.msk [vmem:[%s836 + $0x28] sm:$0xf] %vm2409, %v2548
        %2677 = vst.msk [vmem:[%s836 + $0x2c] sm:$0xf] %vm2409, %v2549
        %2678 = vst.msk [vmem:[%s836 + $0x30] sm:$0xf] %vm2409, %v2550
        %2679 = vst.msk [vmem:[%s836 + $0x34] sm:$0xf] %vm2409, %v2551
        %2680 = vst.msk [vmem:[%s836 + $0x38] sm:$0xf] %vm2409, %v2552
        %2681 = vst.msk [vmem:[%s836 + $0x3c] sm:$0xf] %vm2409, %v2553
        %2682 = vst.msk [vmem:[%s836 + $0x40] sm:$0xf] %vm2409, %v2554
        %2683 = vst.msk [vmem:[%s836 + $0x44] sm:$0xf] %vm2409, %v2555
        %2684 = vst.msk [vmem:[%s836 + $0x48] sm:$0xf] %vm2409, %v2556
        %2685 = vst.msk [vmem:[%s836 + $0x4c] sm:$0xf] %vm2409, %v2557
        %2686 = vst.msk [vmem:[%s836 + $0x50] sm:$0xf] %vm2409, %v2558
        %2687 = vst.msk [vmem:[%s836 + $0x54] sm:$0xf] %vm2409, %v2559
        %2688 = vst.msk [vmem:[%s836 + $0x58] sm:$0xf] %vm2409, %v2560
        %2689 = vst.msk [vmem:[%s836 + $0x5c] sm:$0xf] %vm2409, %v2561
        %2690 = vst.msk [vmem:[%s836 + $0x60] sm:$0xf] %vm2409, %v2562
        %2691 = vst.msk [vmem:[%s836 + $0x64] sm:$0xf] %vm2409, %v2563
        %2692 = vst.msk [vmem:[%s836 + $0x68] sm:$0xf] %vm2409, %v2564
        %2693 = vst.msk [vmem:[%s836 + $0x6c] sm:$0xf] %vm2409, %v2565
        %2694 = vst.msk [vmem:[%s836 + $0x70] sm:$0xf] %vm2409, %v2566
        %2695 = vst.msk [vmem:[%s836 + $0x74] sm:$0xf] %vm2409, %v2567
        %2696 = vst.msk [vmem:[%s836 + $0x78] sm:$0xf] %vm2409, %v2568
        %2697 = vst.msk [vmem:[%s836 + $0x7c] sm:$0xf] %vm2409, %v2569
        %2698 = vst.msk [vmem:[%s836 + $0x80] sm:$0xf] %vm2409, %v2570
        %2699 = vst.msk [vmem:[%s836 + $0x84] sm:$0xf] %vm2409, %v2571
        %2700 = vst.msk [vmem:[%s836 + $0x88] sm:$0xf] %vm2409, %v2572
        %2701 = vst.msk [vmem:[%s836 + $0x8c] sm:$0xf] %vm2409, %v2573
        %2702 = vst.msk [vmem:[%s836 + $0x90] sm:$0xf] %vm2409, %v2574
        %2703 = vst.msk [vmem:[%s836 + $0x94] sm:$0xf] %vm2409, %v2575
        %2704 = vst.msk [vmem:[%s836 + $0x98] sm:$0xf] %vm2409, %v2576
        %2705 = vst.msk [vmem:[%s836 + $0x9c] sm:$0xf] %vm2409, %v2577
        %2706 = vst.msk [vmem:[%s836 + $0xa0] sm:$0xf] %vm2409, %v2578
        %2707 = vst.msk [vmem:[%s836 + $0xa4] sm:$0xf] %vm2409, %v2579
        %2708 = vst.msk [vmem:[%s836 + $0xa8] sm:$0xf] %vm2409, %v2580
        %2709 = vst.msk [vmem:[%s836 + $0xac] sm:$0xf] %vm2409, %v2581
        %2710 = vst.msk [vmem:[%s836 + $0xb0] sm:$0xf] %vm2409, %v2582
        %2711 = vst.msk [vmem:[%s836 + $0xb4] sm:$0xf] %vm2409, %v2583
        %2712 = vst.msk [vmem:[%s836 + $0xb8] sm:$0xf] %vm2409, %v2584
        %2713 = vst.msk [vmem:[%s836 + $0xbc] sm:$0xf] %vm2409, %v2585
        %2714 = vst.msk [vmem:[%s836 + $0xc0] sm:$0xf] %vm2409, %v2586
        %2715 = vst.msk [vmem:[%s836 + $0xc4] sm:$0xf] %vm2409, %v2587
        %2716 = vst.msk [vmem:[%s836 + $0xc8] sm:$0xf] %vm2409, %v2588
        %2717 = vst.msk [vmem:[%s836 + $0xcc] sm:$0xf] %vm2409, %v2589
        %2718 = vst.msk [vmem:[%s836 + $0xd0] sm:$0xf] %vm2409, %v2590
        %2719 = vst.msk [vmem:[%s836 + $0xd4] sm:$0xf] %vm2409, %v2591
        %2720 = vst.msk [vmem:[%s836 + $0xd8] sm:$0xf] %vm2409, %v2592
        %2721 = vst.msk [vmem:[%s836 + $0xdc] sm:$0xf] %vm2409, %v2593
        %2722 = vst.msk [vmem:[%s836 + $0xe0] sm:$0xf] %vm2409, %v2594
        %2723 = vst.msk [vmem:[%s836 + $0xe4] sm:$0xf] %vm2409, %v2595
        %2724 = vst.msk [vmem:[%s836 + $0xe8] sm:$0xf] %vm2409, %v2596
        %2725 = vst.msk [vmem:[%s836 + $0xec] sm:$0xf] %vm2409, %v2597
        %2726 = vst.msk [vmem:[%s836 + $0xf0] sm:$0xf] %vm2409, %v2598
        %2727 = vst.msk [vmem:[%s836 + $0xf4] sm:$0xf] %vm2409, %v2599
        %2728 = vst.msk [vmem:[%s836 + $0xf8] sm:$0xf] %vm2409, %v2600
        %2729 = vst.msk [vmem:[%s836 + $0xfc] sm:$0xf] %vm2409, %v2601
        %2730 = vst.msk [vmem:[%s836 + $0x100] sm:$0xf] %vm2409, %v2602
        %2731 = vst.msk [vmem:[%s836 + $0x104] sm:$0xf] %vm2409, %v2603
        %2732 = vst.msk [vmem:[%s836 + $0x108] sm:$0xf] %vm2409, %v2604
        %2733 = vst.msk [vmem:[%s836 + $0x10c] sm:$0xf] %vm2409, %v2605
        %2734 = vst.msk [vmem:[%s836 + $0x110] sm:$0xf] %vm2409, %v2606
        %2735 = vst.msk [vmem:[%s836 + $0x114] sm:$0xf] %vm2409, %v2607
        %2736 = vst.msk [vmem:[%s836 + $0x118] sm:$0xf] %vm2409, %v2608
        %2737 = vst.msk [vmem:[%s836 + $0x11c] sm:$0xf] %vm2409, %v2609
        %2738 = vst.msk [vmem:[%s836 + $0x120] sm:$0xf] %vm2409, %v2610
        %2739 = vst.msk [vmem:[%s836 + $0x124] sm:$0xf] %vm2409, %v2611
        %2740 = vst.msk [vmem:[%s836 + $0x128] sm:$0xf] %vm2409, %v2612
        %2741 = vst.msk [vmem:[%s836 + $0x12c] sm:$0xf] %vm2409, %v2613
        %2742 = vst.msk [vmem:[%s836 + $0x130] sm:$0xf] %vm2409, %v2614
        %2743 = vst.msk [vmem:[%s836 + $0x134] sm:$0xf] %vm2409, %v2615
        %2744 = vst.msk [vmem:[%s836 + $0x138] sm:$0xf] %vm2409, %v2616
        %2745 = vst.msk [vmem:[%s836 + $0x13c] sm:$0xf] %vm2409, %v2617
        %2746 = vst.msk [vmem:[%s836 + $0x140] sm:$0xf] %vm2409, %v2618
        %2747 = vst.msk [vmem:[%s836 + $0x144] sm:$0xf] %vm2409, %v2619
        %2748 = vst.msk [vmem:[%s836 + $0x148] sm:$0xf] %vm2409, %v2620
        %2749 = vst.msk [vmem:[%s836 + $0x14c] sm:$0xf] %vm2409, %v2621
        %2750 = vst.msk [vmem:[%s836 + $0x150] sm:$0xf] %vm2409, %v2622
        %2751 = vst.msk [vmem:[%s836 + $0x154] sm:$0xf] %vm2409, %v2623
        %2752 = vst.msk [vmem:[%s836 + $0x158] sm:$0xf] %vm2409, %v2624
        %2753 = vst.msk [vmem:[%s836 + $0x15c] sm:$0xf] %vm2409, %v2625
        %2754 = vst.msk [vmem:[%s836 + $0x160] sm:$0xf] %vm2409, %v2626
        %2755 = vst.msk [vmem:[%s836 + $0x164] sm:$0xf] %vm2409, %v2627
        %2756 = vst.msk [vmem:[%s836 + $0x168] sm:$0xf] %vm2409, %v2628
        %2757 = vst.msk [vmem:[%s836 + $0x16c] sm:$0xf] %vm2409, %v2629
        %2758 = vst.msk [vmem:[%s836 + $0x170] sm:$0xf] %vm2409, %v2630
        %2759 = vst.msk [vmem:[%s836 + $0x174] sm:$0xf] %vm2409, %v2631
        %2760 = vst.msk [vmem:[%s836 + $0x178] sm:$0xf] %vm2409, %v2632
        %2761 = vst.msk [vmem:[%s836 + $0x17c] sm:$0xf] %vm2409, %v2633
        %2762 = vst.msk [vmem:[%s836 + $0x180] sm:$0xf] %vm2409, %v2634
        %2763 = vst.msk [vmem:[%s836 + $0x184] sm:$0xf] %vm2409, %v2635
        %2764 = vst.msk [vmem:[%s836 + $0x188] sm:$0xf] %vm2409, %v2636
        %2765 = vst.msk [vmem:[%s836 + $0x18c] sm:$0xf] %vm2409, %v2637
        %2766 = vst.msk [vmem:[%s836 + $0x190] sm:$0xf] %vm2409, %v2638
        %2767 = vst.msk [vmem:[%s836 + $0x194] sm:$0xf] %vm2409, %v2639
        %2768 = vst.msk [vmem:[%s836 + $0x198] sm:$0xf] %vm2409, %v2640
        %2769 = vst.msk [vmem:[%s836 + $0x19c] sm:$0xf] %vm2409, %v2641
        %2770 = vst.msk [vmem:[%s836 + $0x1a0] sm:$0xf] %vm2409, %v2642
        %2771 = vst.msk [vmem:[%s836 + $0x1a4] sm:$0xf] %vm2409, %v2643
        %2772 = vst.msk [vmem:[%s836 + $0x1a8] sm:$0xf] %vm2409, %v2644
        %2773 = vst.msk [vmem:[%s836 + $0x1ac] sm:$0xf] %vm2409, %v2645
        %2774 = vst.msk [vmem:[%s836 + $0x1b0] sm:$0xf] %vm2409, %v2646
        %2775 = vst.msk [vmem:[%s836 + $0x1b4] sm:$0xf] %vm2409, %v2647
        %2776 = vst.msk [vmem:[%s836 + $0x1b8] sm:$0xf] %vm2409, %v2648
        %2777 = vst.msk [vmem:[%s836 + $0x1bc] sm:$0xf] %vm2409, %v2649
        %2778 = vst.msk [vmem:[%s836 + $0x1c0] sm:$0xf] %vm2409, %v2650
        %2779 = vst.msk [vmem:[%s836 + $0x1c4] sm:$0xf] %vm2409, %v2651
        %2780 = vst.msk [vmem:[%s836 + $0x1c8] sm:$0xf] %vm2409, %v2652
        %2781 = vst.msk [vmem:[%s836 + $0x1cc] sm:$0xf] %vm2409, %v2653
        %2782 = vst.msk [vmem:[%s836 + $0x1d0] sm:$0xf] %vm2409, %v2654
        %2783 = vst.msk [vmem:[%s836 + $0x1d4] sm:$0xf] %vm2409, %v2655
        %2784 = vst.msk [vmem:[%s836 + $0x1d8] sm:$0xf] %vm2409, %v2656
        %2785 = vst.msk [vmem:[%s836 + $0x1dc] sm:$0xf] %vm2409, %v2657
        %2786 = vst.msk [vmem:[%s836 + $0x1e0] sm:$0xf] %vm2409, %v2658
        %2787 = vst.msk [vmem:[%s836 + $0x1e4] sm:$0xf] %vm2409, %v2659
        %2788 = vst.msk [vmem:[%s836 + $0x1e8] sm:$0xf] %vm2409, %v2660
        %2789 = vst.msk [vmem:[%s836 + $0x1ec] sm:$0xf] %vm2409, %v2661
        %2790 = vst.msk [vmem:[%s836 + $0x1f0] sm:$0xf] %vm2409, %v2662
        %2791 = vst.msk [vmem:[%s836 + $0x1f4] sm:$0xf] %vm2409, %v2663
        %2792 = vst.msk [vmem:[%s836 + $0x1f8] sm:$0xf] %vm2409, %v2664
        %2793 = vst.msk [vmem:[%s836 + $0x1fc] sm:$0xf] %vm2409, %v2665
        %v2794 = vld [vmem:[%s5] sm:$0x1]
        %v2795 = vld [vmem:[%s6] sm:$0x1]
        %vm2796 = vcmask 523264
        %v2797 = vsel %vm2796, %v839, 0.0
        %2798 = vadd.xlane.f32.xlu0 %v2797
        %v2799 = vpop.xlane.xlu0 %2798
        %v2800 = vsel %vm2796, %v840, 0.0
        %2801 = vadd.xlane.f32.xlu0 %v2800
        %v2802 = vpop.xlane.xlu0 %2801
        %v2803 = vsel %vm2796, %v841, 0.0
        %2804 = vadd.xlane.f32.xlu0 %v2803
        %v2805 = vpop.xlane.xlu0 %2804
        %v2806 = vsel %vm2796, %v842, 0.0
        %2807 = vadd.xlane.f32.xlu0 %v2806
        %v2808 = vpop.xlane.xlu0 %2807
        %v2809 = vsel %vm2796, %v843, 0.0
        %2810 = vadd.xlane.f32.xlu0 %v2809
        %v2811 = vpop.xlane.xlu0 %2810
        %v2812 = vsel %vm2796, %v844, 0.0
        %2813 = vadd.xlane.f32.xlu0 %v2812
        %v2814 = vpop.xlane.xlu0 %2813
        %v2815 = vsel %vm2796, %v845, 0.0
        %2816 = vadd.xlane.f32.xlu0 %v2815
        %v2817 = vpop.xlane.xlu0 %2816
        %v2818 = vsel %vm2796, %v846, 0.0
        %2819 = vadd.xlane.f32.xlu0 %v2818
        %v2820 = vpop.xlane.xlu0 %2819
        %v2821 = vrcp.pop 64.0
        %v2822 = vmul.f32 64.0, %v2821
        %v2823 = vsub.f32 1.0, %v2822
        %v2824 = vmul.f32 %v2821, %v2823
        %v2825 = vadd.f32 %v2821, %v2824
        %vm2826 = vweird.f32 %v2821
        %v2827 = vsel %vm2826, %v2821, %v2825
        %v2828 = vmul.f32 %v2799, %v2827
        %v2829 = vmul.f32 %v2802, %v2827
        %v2830 = vmul.f32 %v2805, %v2827
        %v2831 = vmul.f32 %v2808, %v2827
        %v2832 = vmul.f32 %v2811, %v2827
        %v2833 = vmul.f32 %v2814, %v2827
        %v2834 = vmul.f32 %v2817, %v2827
        %v2835 = vmul.f32 %v2820, %v2827
        %v2836 = vsub.f32 %v839, %v2828
        %v2837 = vsub.f32 %v840, %v2829
        %v2838 = vsub.f32 %v841, %v2830
        %v2839 = vsub.f32 %v842, %v2831
        %v2840 = vsub.f32 %v843, %v2832
        %v2841 = vsub.f32 %v844, %v2833
        %v2842 = vsub.f32 %v845, %v2834
        %v2843 = vsub.f32 %v846, %v2835
        %v2844 = vmul.f32 %v2836, %v2836
        %v2845 = vmul.f32 %v2837, %v2837
        %v2846 = vmul.f32 %v2838, %v2838
        %v2847 = vmul.f32 %v2839, %v2839
        %v2848 = vmul.f32 %v2840, %v2840
        %v2849 = vmul.f32 %v2841, %v2841
        %v2850 = vmul.f32 %v2842, %v2842
        %v2851 = vmul.f32 %v2843, %v2843
        %v2852 = vsel %vm2796, %v2844, 0.0
        %2853 = vadd.xlane.f32.xlu0 %v2852
        %v2854 = vpop.xlane.xlu0 %2853
        %v2855 = vsel %vm2796, %v2845, 0.0
        %2856 = vadd.xlane.f32.xlu0 %v2855
        %v2857 = vpop.xlane.xlu0 %2856
        %v2858 = vsel %vm2796, %v2846, 0.0
        %2859 = vadd.xlane.f32.xlu0 %v2858
        %v2860 = vpop.xlane.xlu0 %2859
        %v2861 = vsel %vm2796, %v2847, 0.0
        %2862 = vadd.xlane.f32.xlu0 %v2861
        %v2863 = vpop.xlane.xlu0 %2862
        %v2864 = vsel %vm2796, %v2848, 0.0
        %2865 = vadd.xlane.f32.xlu0 %v2864
        %v2866 = vpop.xlane.xlu0 %2865
        %v2867 = vsel %vm2796, %v2849, 0.0
        %2868 = vadd.xlane.f32.xlu0 %v2867
        %v2869 = vpop.xlane.xlu0 %2868
        %v2870 = vsel %vm2796, %v2850, 0.0
        %2871 = vadd.xlane.f32.xlu0 %v2870
        %v2872 = vpop.xlane.xlu0 %2871
        %v2873 = vsel %vm2796, %v2851, 0.0
        %2874 = vadd.xlane.f32.xlu0 %v2873
        %v2875 = vpop.xlane.xlu0 %2874
        %v2876 = vmul.f32 %v2854, %v2827
        %v2877 = vmul.f32 %v2857, %v2827
        %v2878 = vmul.f32 %v2860, %v2827
        %v2879 = vmul.f32 %v2863, %v2827
        %v2880 = vmul.f32 %v2866, %v2827
        %v2881 = vmul.f32 %v2869, %v2827
        %v2882 = vmul.f32 %v2872, %v2827
        %v2883 = vmul.f32 %v2875, %v2827
        %v2884 = vadd.f32 %v2876, 1e-05
        %v2885 = vadd.f32 %v2877, 1e-05
        %v2886 = vadd.f32 %v2878, 1e-05
        %v2887 = vadd.f32 %v2879, 1e-05
        %v2888 = vadd.f32 %v2880, 1e-05
        %v2889 = vadd.f32 %v2881, 1e-05
        %v2890 = vadd.f32 %v2882, 1e-05
        %v2891 = vadd.f32 %v2883, 1e-05
        %v2892 = vrsqrt.pop %v2884
        %v2893 = vmul.f32 %v2892, %v2884
        %v2894 = vmul.f32 %v2893, %v2892
        %v2895 = vmul.f32 0.5, %v2894
        %v2896 = vsub.f32 1.5, %v2895
        %v2897 = vmul.f32 %v2892, %v2896
        %vm2898 = vweird.f32 %v2884
        %vm2899 = vweird.f32 %v2892
        %vm2900 = vmor %vm2898, %vm2899
        %v2901 = vsel %vm2900, %v2892, %v2897
        %v2902 = vrsqrt.pop %v2885
        %v2903 = vmul.f32 %v2902, %v2885
        %v2904 = vmul.f32 %v2903, %v2902
        %v2905 = vmul.f32 0.5, %v2904
        %v2906 = vsub.f32 1.5, %v2905
        %v2907 = vmul.f32 %v2902, %v2906
        %vm2908 = vweird.f32 %v2885
        %vm2909 = vweird.f32 %v2902
        %vm2910 = vmor %vm2908, %vm2909
        %v2911 = vsel %vm2910, %v2902, %v2907
        %v2912 = vrsqrt.pop %v2886
        %v2913 = vmul.f32 %v2912, %v2886
        %v2914 = vmul.f32 %v2913, %v2912
        %v2915 = vmul.f32 0.5, %v2914
        %v2916 = vsub.f32 1.5, %v2915
        %v2917 = vmul.f32 %v2912, %v2916
        %vm2918 = vweird.f32 %v2886
        %vm2919 = vweird.f32 %v2912
        %vm2920 = vmor %vm2918, %vm2919
        %v2921 = vsel %vm2920, %v2912, %v2917
        %v2922 = vrsqrt.pop %v2887
        %v2923 = vmul.f32 %v2922, %v2887
        %v2924 = vmul.f32 %v2923, %v2922
        %v2925 = vmul.f32 0.5, %v2924
        %v2926 = vsub.f32 1.5, %v2925
        %v2927 = vmul.f32 %v2922, %v2926
        %vm2928 = vweird.f32 %v2887
        %vm2929 = vweird.f32 %v2922
        %vm2930 = vmor %vm2928, %vm2929
        %v2931 = vsel %vm2930, %v2922, %v2927
        %v2932 = vrsqrt.pop %v2888
        %v2933 = vmul.f32 %v2932, %v2888
        %v2934 = vmul.f32 %v2933, %v2932
        %v2935 = vmul.f32 0.5, %v2934
        %v2936 = vsub.f32 1.5, %v2935
        %v2937 = vmul.f32 %v2932, %v2936
        %vm2938 = vweird.f32 %v2888
        %vm2939 = vweird.f32 %v2932
        %vm2940 = vmor %vm2938, %vm2939
        %v2941 = vsel %vm2940, %v2932, %v2937
        %v2942 = vrsqrt.pop %v2889
        %v2943 = vmul.f32 %v2942, %v2889
        %v2944 = vmul.f32 %v2943, %v2942
        %v2945 = vmul.f32 0.5, %v2944
        %v2946 = vsub.f32 1.5, %v2945
        %v2947 = vmul.f32 %v2942, %v2946
        %vm2948 = vweird.f32 %v2889
        %vm2949 = vweird.f32 %v2942
        %vm2950 = vmor %vm2948, %vm2949
        %v2951 = vsel %vm2950, %v2942, %v2947
        %v2952 = vrsqrt.pop %v2890
        %v2953 = vmul.f32 %v2952, %v2890
        %v2954 = vmul.f32 %v2953, %v2952
        %v2955 = vmul.f32 0.5, %v2954
        %v2956 = vsub.f32 1.5, %v2955
        %v2957 = vmul.f32 %v2952, %v2956
        %vm2958 = vweird.f32 %v2890
        %vm2959 = vweird.f32 %v2952
        %vm2960 = vmor %vm2958, %vm2959
        %v2961 = vsel %vm2960, %v2952, %v2957
        %v2962 = vrsqrt.pop %v2891
        %v2963 = vmul.f32 %v2962, %v2891
        %v2964 = vmul.f32 %v2963, %v2962
        %v2965 = vmul.f32 0.5, %v2964
        %v2966 = vsub.f32 1.5, %v2965
        %v2967 = vmul.f32 %v2962, %v2966
        %vm2968 = vweird.f32 %v2891
        %vm2969 = vweird.f32 %v2962
        %vm2970 = vmor %vm2968, %vm2969
        %v2971 = vsel %vm2970, %v2962, %v2967
        %v2972 = vmul.f32 %v2836, %v2901
        %v2973 = vmul.f32 %v2837, %v2911
        %v2974 = vmul.f32 %v2838, %v2921
        %v2975 = vmul.f32 %v2839, %v2931
        %v2976 = vmul.f32 %v2840, %v2941
        %v2977 = vmul.f32 %v2841, %v2951
        %v2978 = vmul.f32 %v2842, %v2961
        %v2979 = vmul.f32 %v2843, %v2971
        %v2981 = vperm.slane %v2794, 0
        %v2983 = vmul.f32 %v2972, %v2981
        %v2984 = vmul.f32 %v2973, %v2981
        %v2985 = vmul.f32 %v2974, %v2981
        %v2986 = vmul.f32 %v2975, %v2981
        %v2987 = vmul.f32 %v2976, %v2981
        %v2988 = vmul.f32 %v2977, %v2981
        %v2989 = vmul.f32 %v2978, %v2981
        %v2990 = vmul.f32 %v2979, %v2981
        %v2992 = vperm.slane %v2795, 0
        %v2994 = vadd.f32 %v2983, %v2992
        %v2995 = vadd.f32 %v2984, %v2992
        %v2996 = vadd.f32 %v2985, %v2992
        %v2997 = vadd.f32 %v2986, %v2992
        %v2998 = vadd.f32 %v2987, %v2992
        %v2999 = vadd.f32 %v2988, %v2992
        %v3000 = vadd.f32 %v2989, %v2992
        %v3001 = vadd.f32 %v2990, %v2992
        %v3002 = vld [vmem:[%s809] sm:$0xff]
        %v3003 = vld [vmem:[%s809 + $0x8] sm:$0xff]
        %v3004 = vld [vmem:[%s809 + $0x10] sm:$0xff]
        %v3005 = vld [vmem:[%s809 + $0x18] sm:$0xff]
        %v3006 = vld [vmem:[%s809 + $0x20] sm:$0xff]
        %v3007 = vld [vmem:[%s809 + $0x28] sm:$0xff]
        %v3008 = vld [vmem:[%s809 + $0x30] sm:$0xff]
        %v3009 = vld [vmem:[%s809 + $0x38] sm:$0xff]
        %v3010 = vadd.f32 %v2994, %v3002
        %v3011 = vadd.f32 %v2995, %v3003
        %v3012 = vadd.f32 %v2996, %v3004
        %v3013 = vadd.f32 %v2997, %v3005
        %v3014 = vadd.f32 %v2998, %v3006
        %v3015 = vadd.f32 %v2999, %v3007
        %v3016 = vadd.f32 %v3000, %v3008
        %v3017 = vadd.f32 %v3001, %v3009
        %v3018 = vpack.c.bf16 %v3011, %v3010
        %v3019 = vpack.c.bf16 %v3013, %v3012
        %v3020 = vpack.c.bf16 %v3015, %v3014
        %v3021 = vpack.c.bf16 %v3017, %v3016
        %v3022 = vld [vmem:[%s7] sm:$0xf]
        %v3023 = vld [vmem:[%s7 + $0x4] sm:$0xf]
        %v3024 = vld [vmem:[%s7 + $0x8] sm:$0xf]
        %v3025 = vld [vmem:[%s7 + $0xc] sm:$0xf]
        %v3026 = vld [vmem:[%s7 + $0x10] sm:$0xf]
        %v3027 = vld [vmem:[%s7 + $0x14] sm:$0xf]
        %v3028 = vld [vmem:[%s7 + $0x18] sm:$0xf]
        %v3029 = vld [vmem:[%s7 + $0x1c] sm:$0xf]
        %v3030 = vld [vmem:[%s8] sm:$0x1]
        %v3032 = vperm.slane %v3030, 0
        %v3042 = vunpack.c.l.b16 %v3022
        %v3043 = vunpack.c.l.b16 %v3023
        %v3044 = vunpack.c.l.b16 %v3024
        %v3045 = vunpack.c.l.b16 %v3025
        %v3046 = vunpack.c.l.b16 %v3026
        %v3047 = vunpack.c.l.b16 %v3027
        %v3048 = vunpack.c.l.b16 %v3028
        %v3049 = vunpack.c.l.b16 %v3029
        %v3050 = vpack.c.b16 %v3043, %v3042
        %v3051 = vpack.c.b16 %v3045, %v3044
        %v3052 = vpack.c.b16 %v3047, %v3046
        %v3053 = vpack.c.b16 %v3049, %v3048
        %v3059 = vsel %vm2796, %v3018, 0
        %v3062 = vsel %vm2796, %v3019, 0
        %v3065 = vsel %vm2796, %v3020, 0
        %v3068 = vsel %vm2796, %v3021, 0
        %3070 = vmatpush.bf16.msra.mxu0 0
        %3071 = vmatpush.bf16.msra.mxu0 0
        %3072 = vmatpush.bf16.msra.mxu0 0
        %3073 = vmatpush.bf16.msra.mxu0 0
        %3074 = vmatpush.bf16.msra.mxu0 %v3053
        %3075 = vmatpush.bf16.msra.mxu0 %v3052
        %3076 = vmatpush.bf16.msra.mxu0 %v3051
        %3077 = vmatpush.bf16.msra.mxu0 %v3050
        %3078 = vmatmul.bf16.gmra.mxu0 %v3059
        %v3079 = vpop.f32.mrf.mxu0
        %v3080 = vadd.f32 %v3032, %v3079
        %v3081 = vpop.f32.mrf.mxu0
        %v3082 = vadd.f32 %v3032, %v3081
        %3083 = vmatmul.bf16.gmra.mxu0 %v3062
        %v3084 = vpop.f32.mrf.mxu0
        %v3085 = vadd.f32 %v3032, %v3084
        %v3086 = vpop.f32.mrf.mxu0
        %v3087 = vadd.f32 %v3032, %v3086
        %3088 = vmatmul.bf16.gmra.mxu0 %v3065
        %v3089 = vpop.f32.mrf.mxu0
        %v3090 = vadd.f32 %v3032, %v3089
        %v3091 = vpop.f32.mrf.mxu0
        %v3092 = vadd.f32 %v3032, %v3091
        %3093 = vmatmul.bf16.gmra.mxu0 %v3068
        %v3094 = vpop.f32.mrf.mxu0
        %v3095 = vadd.f32 %v3032, %v3094
        %v3096 = vpop.f32.mrf.mxu0
        %v3097 = vadd.f32 %v3032, %v3096
        %3098 = vdwg.mxu0
        %v3107 = vrot.slane %v3080, 1
        %v3108 = vrot.slane %v3080, 2
        %v3109 = vrot.slane %v3080, 3
        %v3110 = vrot.slane %v3080, 4
        %v3111 = vrot.slane %v3080, 5
        %v3112 = vrot.slane %v3080, 6
        %v3113 = vrot.slane %v3080, 7
        %v3114 = vrot.slane %v3082, 1
        %v3115 = vrot.slane %v3082, 2
        %v3116 = vrot.slane %v3082, 3
        %v3117 = vrot.slane %v3082, 4
        %v3118 = vrot.slane %v3082, 5
        %v3119 = vrot.slane %v3082, 6
        %v3120 = vrot.slane %v3082, 7
        %v3121 = vrot.slane %v3085, 1
        %v3122 = vrot.slane %v3085, 2
        %v3123 = vrot.slane %v3085, 3
        %v3124 = vrot.slane %v3085, 4
        %v3125 = vrot.slane %v3085, 5
        %v3126 = vrot.slane %v3085, 6
        %v3127 = vrot.slane %v3085, 7
        %v3128 = vrot.slane %v3087, 1
        %v3129 = vrot.slane %v3087, 2
        %v3130 = vrot.slane %v3087, 3
        %v3131 = vrot.slane %v3087, 4
        %v3132 = vrot.slane %v3087, 5
        %v3133 = vrot.slane %v3087, 6
        %v3134 = vrot.slane %v3087, 7
        %v3135 = vrot.slane %v3090, 1
        %v3136 = vrot.slane %v3090, 2
        %v3137 = vrot.slane %v3090, 3
        %v3138 = vrot.slane %v3090, 4
        %v3139 = vrot.slane %v3090, 5
        %v3140 = vrot.slane %v3090, 6
        %v3141 = vrot.slane %v3090, 7
        %v3142 = vrot.slane %v3092, 1
        %v3143 = vrot.slane %v3092, 2
        %v3144 = vrot.slane %v3092, 3
        %v3145 = vrot.slane %v3092, 4
        %v3146 = vrot.slane %v3092, 5
        %v3147 = vrot.slane %v3092, 6
        %v3148 = vrot.slane %v3092, 7
        %v3149 = vrot.slane %v3095, 1
        %v3150 = vrot.slane %v3095, 2
        %v3151 = vrot.slane %v3095, 3
        %v3152 = vrot.slane %v3095, 4
        %v3153 = vrot.slane %v3095, 5
        %v3154 = vrot.slane %v3095, 6
        %v3155 = vrot.slane %v3095, 7
        %v3156 = vrot.slane %v3097, 1
        %v3157 = vrot.slane %v3097, 2
        %v3158 = vrot.slane %v3097, 3
        %v3159 = vrot.slane %v3097, 4
        %v3160 = vrot.slane %v3097, 5
        %v3161 = vrot.slane %v3097, 6
        %v3162 = vrot.slane %v3097, 7
        %v3163 = vperm.slane %v3080, 0
        %v3164 = vperm.slane %v3107, 0
        %v3165 = vperm.slane %v3108, 0
        %v3166 = vperm.slane %v3109, 0
        %v3167 = vperm.slane %v3110, 0
        %v3168 = vperm.slane %v3111, 0
        %v3169 = vperm.slane %v3112, 0
        %v3170 = vperm.slane %v3113, 0
        %v3171 = vperm.slane %v3082, 0
        %v3172 = vperm.slane %v3114, 0
        %v3173 = vperm.slane %v3115, 0
        %v3174 = vperm.slane %v3116, 0
        %v3175 = vperm.slane %v3117, 0
        %v3176 = vperm.slane %v3118, 0
        %v3177 = vperm.slane %v3119, 0
        %v3178 = vperm.slane %v3120, 0
        %v3179 = vperm.slane %v3085, 0
        %v3180 = vperm.slane %v3121, 0
        %v3181 = vperm.slane %v3122, 0
        %v3182 = vperm.slane %v3123, 0
        %v3183 = vperm.slane %v3124, 0
        %v3184 = vperm.slane %v3125, 0
        %v3185 = vperm.slane %v3126, 0
        %v3186 = vperm.slane %v3127, 0
        %v3187 = vperm.slane %v3087, 0
        %v3188 = vperm.slane %v3128, 0
        %v3189 = vperm.slane %v3129, 0
        %v3190 = vperm.slane %v3130, 0
        %v3191 = vperm.slane %v3131, 0
        %v3192 = vperm.slane %v3132, 0
        %v3193 = vperm.slane %v3133, 0
        %v3194 = vperm.slane %v3134, 0
        %v3195 = vperm.slane %v3090, 0
        %v3196 = vperm.slane %v3135, 0
        %v3197 = vperm.slane %v3136, 0
        %v3198 = vperm.slane %v3137, 0
        %v3199 = vperm.slane %v3138, 0
        %v3200 = vperm.slane %v3139, 0
        %v3201 = vperm.slane %v3140, 0
        %v3202 = vperm.slane %v3141, 0
        %v3203 = vperm.slane %v3092, 0
        %v3204 = vperm.slane %v3142, 0
        %v3205 = vperm.slane %v3143, 0
        %v3206 = vperm.slane %v3144, 0
        %v3207 = vperm.slane %v3145, 0
        %v3208 = vperm.slane %v3146, 0
        %v3209 = vperm.slane %v3147, 0
        %v3210 = vperm.slane %v3148, 0
        %v3211 = vperm.slane %v3095, 0
        %v3212 = vperm.slane %v3149, 0
        %v3213 = vperm.slane %v3150, 0
        %v3214 = vperm.slane %v3151, 0
        %v3215 = vperm.slane %v3152, 0
        %v3216 = vperm.slane %v3153, 0
        %v3217 = vperm.slane %v3154, 0
        %v3218 = vperm.slane %v3155, 0
        %v3219 = vperm.slane %v3097, 0
        %v3220 = vperm.slane %v3156, 0
        %v3221 = vperm.slane %v3157, 0
        %v3222 = vperm.slane %v3158, 0
        %v3223 = vperm.slane %v3159, 0
        %v3224 = vperm.slane %v3160, 0
        %v3225 = vperm.slane %v3161, 0
        %v3226 = vperm.slane %v3162, 0
        %v3291 = vmul.f32 %v3163, %v1565
        %v3292 = vmul.f32 %v3163, %v1567
        %v3293 = vmul.f32 %v3164, %v1570
        %v3294 = vmul.f32 %v3164, %v1572
        %v3295 = vmul.f32 %v3165, %v1575
        %v3296 = vmul.f32 %v3165, %v1577
        %v3297 = vmul.f32 %v3166, %v1580
        %v3298 = vmul.f32 %v3166, %v1582
        %v3299 = vmul.f32 %v3167, %v1585
        %v3300 = vmul.f32 %v3167, %v1587
        %v3301 = vmul.f32 %v3168, %v1590
        %v3302 = vmul.f32 %v3168, %v1592
        %v3303 = vmul.f32 %v3169, %v1595
        %v3304 = vmul.f32 %v3169, %v1597
        %v3305 = vmul.f32 %v3170, %v1600
        %v3306 = vmul.f32 %v3170, %v1602
        %v3307 = vmul.f32 %v3171, %v1605
        %v3308 = vmul.f32 %v3171, %v1607
        %v3309 = vmul.f32 %v3172, %v1610
        %v3310 = vmul.f32 %v3172, %v1612
        %v3311 = vmul.f32 %v3173, %v1615
        %v3312 = vmul.f32 %v3173, %v1617
        %v3313 = vmul.f32 %v3174, %v1620
        %v3314 = vmul.f32 %v3174, %v1622
        %v3315 = vmul.f32 %v3175, %v1625
        %v3316 = vmul.f32 %v3175, %v1627
        %v3317 = vmul.f32 %v3176, %v1630
        %v3318 = vmul.f32 %v3176, %v1632
        %v3319 = vmul.f32 %v3177, %v1635
        %v3320 = vmul.f32 %v3177, %v1637
        %v3321 = vmul.f32 %v3178, %v1640
        %v3322 = vmul.f32 %v3178, %v1642
        %v3323 = vmul.f32 %v3179, %v1645
        %v3324 = vmul.f32 %v3179, %v1647
        %v3325 = vmul.f32 %v3180, %v1650
        %v3326 = vmul.f32 %v3180, %v1652
        %v3327 = vmul.f32 %v3181, %v1655
        %v3328 = vmul.f32 %v3181, %v1657
        %v3329 = vmul.f32 %v3182, %v1660
        %v3330 = vmul.f32 %v3182, %v1662
        %v3331 = vmul.f32 %v3183, %v1665
        %v3332 = vmul.f32 %v3183, %v1667
        %v3333 = vmul.f32 %v3184, %v1670
        %v3334 = vmul.f32 %v3184, %v1672
        %v3335 = vmul.f32 %v3185, %v1675
        %v3336 = vmul.f32 %v3185, %v1677
        %v3337 = vmul.f32 %v3186, %v1680
        %v3338 = vmul.f32 %v3186, %v1682
        %v3339 = vmul.f32 %v3187, %v1685
        %v3340 = vmul.f32 %v3187, %v1687
        %v3341 = vmul.f32 %v3188, %v1690
        %v3342 = vmul.f32 %v3188, %v1692
        %v3343 = vmul.f32 %v3189, %v1695
        %v3344 = vmul.f32 %v3189, %v1697
        %v3345 = vmul.f32 %v3190, %v1700
        %v3346 = vmul.f32 %v3190, %v1702
        %v3347 = vmul.f32 %v3191, %v1705
        %v3348 = vmul.f32 %v3191, %v1707
        %v3349 = vmul.f32 %v3192, %v1710
        %v3350 = vmul.f32 %v3192, %v1712
        %v3351 = vmul.f32 %v3193, %v1715
        %v3352 = vmul.f32 %v3193, %v1717
        %v3353 = vmul.f32 %v3194, %v1720
        %v3354 = vmul.f32 %v3194, %v1722
        %v3355 = vmul.f32 %v3195, %v1725
        %v3356 = vmul.f32 %v3195, %v1727
        %v3357 = vmul.f32 %v3196, %v1730
        %v3358 = vmul.f32 %v3196, %v1732
        %v3359 = vmul.f32 %v3197, %v1735
        %v3360 = vmul.f32 %v3197, %v1737
        %v3361 = vmul.f32 %v3198, %v1740
        %v3362 = vmul.f32 %v3198, %v1742
        %v3363 = vmul.f32 %v3199, %v1745
        %v3364 = vmul.f32 %v3199, %v1747
        %v3365 = vmul.f32 %v3200, %v1750
        %v3366 = vmul.f32 %v3200, %v1752
        %v3367 = vmul.f32 %v3201, %v1755
        %v3368 = vmul.f32 %v3201, %v1757
        %v3369 = vmul.f32 %v3202, %v1760
        %v3370 = vmul.f32 %v3202, %v1762
        %v3371 = vmul.f32 %v3203, %v1765
        %v3372 = vmul.f32 %v3203, %v1767
        %v3373 = vmul.f32 %v3204, %v1770
        %v3374 = vmul.f32 %v3204, %v1772
        %v3375 = vmul.f32 %v3205, %v1775
        %v3376 = vmul.f32 %v3205, %v1777
        %v3377 = vmul.f32 %v3206, %v1780
        %v3378 = vmul.f32 %v3206, %v1782
        %v3379 = vmul.f32 %v3207, %v1785
        %v3380 = vmul.f32 %v3207, %v1787
        %v3381 = vmul.f32 %v3208, %v1790
        %v3382 = vmul.f32 %v3208, %v1792
        %v3383 = vmul.f32 %v3209, %v1795
        %v3384 = vmul.f32 %v3209, %v1797
        %v3385 = vmul.f32 %v3210, %v1800
        %v3386 = vmul.f32 %v3210, %v1802
        %v3387 = vmul.f32 %v3211, %v1805
        %v3388 = vmul.f32 %v3211, %v1807
        %v3389 = vmul.f32 %v3212, %v1810
        %v3390 = vmul.f32 %v3212, %v1812
        %v3391 = vmul.f32 %v3213, %v1815
        %v3392 = vmul.f32 %v3213, %v1817
        %v3393 = vmul.f32 %v3214, %v1820
        %v3394 = vmul.f32 %v3214, %v1822
        %v3395 = vmul.f32 %v3215, %v1825
        %v3396 = vmul.f32 %v3215, %v1827
        %v3397 = vmul.f32 %v3216, %v1830
        %v3398 = vmul.f32 %v3216, %v1832
        %v3399 = vmul.f32 %v3217, %v1835
        %v3400 = vmul.f32 %v3217, %v1837
        %v3401 = vmul.f32 %v3218, %v1840
        %v3402 = vmul.f32 %v3218, %v1842
        %v3403 = vmul.f32 %v3219, %v1845
        %v3404 = vmul.f32 %v3219, %v1847
        %v3405 = vmul.f32 %v3220, %v1850
        %v3406 = vmul.f32 %v3220, %v1852
        %v3407 = vmul.f32 %v3221, %v1855
        %v3408 = vmul.f32 %v3221, %v1857
        %v3409 = vmul.f32 %v3222, %v1860
        %v3410 = vmul.f32 %v3222, %v1862
        %v3411 = vmul.f32 %v3223, %v1865
        %v3412 = vmul.f32 %v3223, %v1867
        %v3413 = vmul.f32 %v3224, %v1870
        %v3414 = vmul.f32 %v3224, %v1872
        %v3415 = vmul.f32 %v3225, %v1875
        %v3416 = vmul.f32 %v3225, %v1877
        %v3417 = vmul.f32 %v3226, %v1880
        %v3418 = vmul.f32 %v3226, %v1882
        %v3419 = vld [vmem:[%s3] sm:$0xff]
        %v3420 = vld [vmem:[%s3 + $0x8] sm:$0xff]
        %v3421 = vld [vmem:[%s3 + $0x10] sm:$0xff]
        %v3422 = vld [vmem:[%s3 + $0x18] sm:$0xff]
        %v3423 = vld [vmem:[%s3 + $0x20] sm:$0xff]
        %v3424 = vld [vmem:[%s3 + $0x28] sm:$0xff]
        %v3425 = vld [vmem:[%s3 + $0x30] sm:$0xff]
        %v3426 = vld [vmem:[%s3 + $0x38] sm:$0xff]
        %v3428 = vsel %vm2796, %v3291, 0
        %v3431 = vsel %vm2796, %v3292, 0
        %v3434 = vsel %vm2796, %v3293, 0
        %v3437 = vsel %vm2796, %v3294, 0
        %v3440 = vsel %vm2796, %v3295, 0
        %v3443 = vsel %vm2796, %v3296, 0
        %v3446 = vsel %vm2796, %v3297, 0
        %v3449 = vsel %vm2796, %v3298, 0
        %v3452 = vsel %vm2796, %v3299, 0
        %v3455 = vsel %vm2796, %v3300, 0
        %v3458 = vsel %vm2796, %v3301, 0
        %v3461 = vsel %vm2796, %v3302, 0
        %v3464 = vsel %vm2796, %v3303, 0
        %v3467 = vsel %vm2796, %v3304, 0
        %v3470 = vsel %vm2796, %v3305, 0
        %v3473 = vsel %vm2796, %v3306, 0
        %v3476 = vsel %vm2796, %v3307, 0
        %v3479 = vsel %vm2796, %v3308, 0
        %v3482 = vsel %vm2796, %v3309, 0
        %v3485 = vsel %vm2796, %v3310, 0
        %v3488 = vsel %vm2796, %v3311, 0
        %v3491 = vsel %vm2796, %v3312, 0
        %v3494 = vsel %vm2796, %v3313, 0
        %v3497 = vsel %vm2796, %v3314, 0
        %v3500 = vsel %vm2796, %v3315, 0
        %v3503 = vsel %vm2796, %v3316, 0
        %v3506 = vsel %vm2796, %v3317, 0
        %v3509 = vsel %vm2796, %v3318, 0
        %v3512 = vsel %vm2796, %v3319, 0
        %v3515 = vsel %vm2796, %v3320, 0
        %v3518 = vsel %vm2796, %v3321, 0
        %v3521 = vsel %vm2796, %v3322, 0
        %v3524 = vsel %vm2796, %v3323, 0
        %v3527 = vsel %vm2796, %v3324, 0
        %v3530 = vsel %vm2796, %v3325, 0
        %v3533 = vsel %vm2796, %v3326, 0
        %v3536 = vsel %vm2796, %v3327, 0
        %v3539 = vsel %vm2796, %v3328, 0
        %v3542 = vsel %vm2796, %v3329, 0
        %v3545 = vsel %vm2796, %v3330, 0
        %v3548 = vsel %vm2796, %v3331, 0
        %v3551 = vsel %vm2796, %v3332, 0
        %v3554 = vsel %vm2796, %v3333, 0
        %v3557 = vsel %vm2796, %v3334, 0
        %v3560 = vsel %vm2796, %v3335, 0
        %v3563 = vsel %vm2796, %v3336, 0
        %v3566 = vsel %vm2796, %v3337, 0
        %v3569 = vsel %vm2796, %v3338, 0
        %v3572 = vsel %vm2796, %v3339, 0
        %v3575 = vsel %vm2796, %v3340, 0
        %v3578 = vsel %vm2796, %v3341, 0
        %v3581 = vsel %vm2796, %v3342, 0
        %v3584 = vsel %vm2796, %v3343, 0
        %v3587 = vsel %vm2796, %v3344, 0
        %v3590 = vsel %vm2796, %v3345, 0
        %v3593 = vsel %vm2796, %v3346, 0
        %v3596 = vsel %vm2796, %v3347, 0
        %v3599 = vsel %vm2796, %v3348, 0
        %v3602 = vsel %vm2796, %v3349, 0
        %v3605 = vsel %vm2796, %v3350, 0
        %v3608 = vsel %vm2796, %v3351, 0
        %v3611 = vsel %vm2796, %v3352, 0
        %v3614 = vsel %vm2796, %v3353, 0
        %v3617 = vsel %vm2796, %v3354, 0
        %v3620 = vsel %vm2796, %v3355, 0
        %v3623 = vsel %vm2796, %v3356, 0
        %v3626 = vsel %vm2796, %v3357, 0
        %v3629 = vsel %vm2796, %v3358, 0
        %v3632 = vsel %vm2796, %v3359, 0
        %v3635 = vsel %vm2796, %v3360, 0
        %v3638 = vsel %vm2796, %v3361, 0
        %v3641 = vsel %vm2796, %v3362, 0
        %v3644 = vsel %vm2796, %v3363, 0
        %v3647 = vsel %vm2796, %v3364, 0
        %v3650 = vsel %vm2796, %v3365, 0
        %v3653 = vsel %vm2796, %v3366, 0
        %v3656 = vsel %vm2796, %v3367, 0
        %v3659 = vsel %vm2796, %v3368, 0
        %v3662 = vsel %vm2796, %v3369, 0
        %v3665 = vsel %vm2796, %v3370, 0
        %v3668 = vsel %vm2796, %v3371, 0
        %v3671 = vsel %vm2796, %v3372, 0
        %v3674 = vsel %vm2796, %v3373, 0
        %v3677 = vsel %vm2796, %v3374, 0
        %v3680 = vsel %vm2796, %v3375, 0
        %v3683 = vsel %vm2796, %v3376, 0
        %v3686 = vsel %vm2796, %v3377, 0
        %v3689 = vsel %vm2796, %v3378, 0
        %v3692 = vsel %vm2796, %v3379, 0
        %v3695 = vsel %vm2796, %v3380, 0
        %v3698 = vsel %vm2796, %v3381, 0
        %v3701 = vsel %vm2796, %v3382, 0
        %v3704 = vsel %vm2796, %v3383, 0
        %v3707 = vsel %vm2796, %v3384, 0
        %v3710 = vsel %vm2796, %v3385, 0
        %v3713 = vsel %vm2796, %v3386, 0
        %v3716 = vsel %vm2796, %v3387, 0
        %v3719 = vsel %vm2796, %v3388, 0
        %v3722 = vsel %vm2796, %v3389, 0
        %v3725 = vsel %vm2796, %v3390, 0
        %v3728 = vsel %vm2796, %v3391, 0
        %v3731 = vsel %vm2796, %v3392, 0
        %v3734 = vsel %vm2796, %v3393, 0
        %v3737 = vsel %vm2796, %v3394, 0
        %v3740 = vsel %vm2796, %v3395, 0
        %v3743 = vsel %vm2796, %v3396, 0
        %v3746 = vsel %vm2796, %v3397, 0
        %v3749 = vsel %vm2796, %v3398, 0
        %v3752 = vsel %vm2796, %v3399, 0
        %v3755 = vsel %vm2796, %v3400, 0
        %v3758 = vsel %vm2796, %v3401, 0
        %v3761 = vsel %vm2796, %v3402, 0
        %v3764 = vsel %vm2796, %v3403, 0
        %v3767 = vsel %vm2796, %v3404, 0
        %v3770 = vsel %vm2796, %v3405, 0
        %v3773 = vsel %vm2796, %v3406, 0
        %v3776 = vsel %vm2796, %v3407, 0
        %v3779 = vsel %vm2796, %v3408, 0
        %v3782 = vsel %vm2796, %v3409, 0
        %v3785 = vsel %vm2796, %v3410, 0
        %v3788 = vsel %vm2796, %v3411, 0
        %v3791 = vsel %vm2796, %v3412, 0
        %v3794 = vsel %vm2796, %v3413, 0
        %v3797 = vsel %vm2796, %v3414, 0
        %v3800 = vsel %vm2796, %v3415, 0
        %v3803 = vsel %vm2796, %v3416, 0
        %v3806 = vsel %vm2796, %v3417, 0
        %v3809 = vsel %vm2796, %v3418, 0
        %3811 = vmatpush.msra.mxu0 0.0
        %3812 = vmatpush.msra.mxu0 0.0
        %3813 = vmatpush.msra.mxu0 0.0
        %3814 = vmatpush.msra.mxu0 0.0
        %3815 = vmatpush.msra.mxu0 0.0
        %3816 = vmatpush.msra.mxu0 0.0
        %3817 = vmatpush.msra.mxu0 0.0
        %3818 = vmatpush.msra.mxu0 0.0
        %3819 = vmatpush.msra.mxu0 %v3426
        %3820 = vmatpush.msra.mxu0 %v3425
        %3821 = vmatpush.msra.mxu0 %v3424
        %3822 = vmatpush.msra.mxu0 %v3423
        %3823 = vmatpush.msra.mxu0 %v3422
        %3824 = vmatpush.msra.mxu0 %v3421
        %3825 = vmatpush.msra.mxu0 %v3420
        %3826 = vmatpush.msra.mxu0 %v3419
        %3827 = vmatmul.f32.gmra.mxu0 %v3428
        %v3828 = vpop.f32.mrf.mxu0
        %v3829 = vadd.f32 0.0, %v3828
        %3830 = vmatmul.f32.gmra.mxu0 %v3431
        %v3831 = vpop.f32.mrf.mxu0
        %v3832 = vadd.f32 0.0, %v3831
        %3833 = vmatmul.f32.gmra.mxu0 %v3434
        %v3834 = vpop.f32.mrf.mxu0
        %v3835 = vadd.f32 0.0, %v3834
        %3836 = vmatmul.f32.gmra.mxu0 %v3437
        %v3837 = vpop.f32.mrf.mxu0
        %v3838 = vadd.f32 0.0, %v3837
        %3839 = vmatmul.f32.gmra.mxu0 %v3440
        %v3840 = vpop.f32.mrf.mxu0
        %v3841 = vadd.f32 0.0, %v3840
        %3842 = vmatmul.f32.gmra.mxu0 %v3443
        %v3843 = vpop.f32.mrf.mxu0
        %v3844 = vadd.f32 0.0, %v3843
        %3845 = vmatmul.f32.gmra.mxu0 %v3446
        %v3846 = vpop.f32.mrf.mxu0
        %v3847 = vadd.f32 0.0, %v3846
        %3848 = vmatmul.f32.gmra.mxu0 %v3449
        %v3849 = vpop.f32.mrf.mxu0
        %v3850 = vadd.f32 0.0, %v3849
        %3851 = vmatmul.f32.gmra.mxu0 %v3452
        %v3852 = vpop.f32.mrf.mxu0
        %v3853 = vadd.f32 0.0, %v3852
        %3854 = vmatmul.f32.gmra.mxu0 %v3455
        %v3855 = vpop.f32.mrf.mxu0
        %v3856 = vadd.f32 0.0, %v3855
        %3857 = vmatmul.f32.gmra.mxu0 %v3458
        %v3858 = vpop.f32.mrf.mxu0
        %v3859 = vadd.f32 0.0, %v3858
        %3860 = vmatmul.f32.gmra.mxu0 %v3461
        %v3861 = vpop.f32.mrf.mxu0
        %v3862 = vadd.f32 0.0, %v3861
        %3863 = vmatmul.f32.gmra.mxu0 %v3464
        %v3864 = vpop.f32.mrf.mxu0
        %v3865 = vadd.f32 0.0, %v3864
        %3866 = vmatmul.f32.gmra.mxu0 %v3467
        %v3867 = vpop.f32.mrf.mxu0
        %v3868 = vadd.f32 0.0, %v3867
        %3869 = vmatmul.f32.gmra.mxu0 %v3470
        %v3870 = vpop.f32.mrf.mxu0
        %v3871 = vadd.f32 0.0, %v3870
        %3872 = vmatmul.f32.gmra.mxu0 %v3473
        %v3873 = vpop.f32.mrf.mxu0
        %v3874 = vadd.f32 0.0, %v3873
        %3875 = vmatmul.f32.gmra.mxu0 %v3476
        %v3876 = vpop.f32.mrf.mxu0
        %v3877 = vadd.f32 0.0, %v3876
        %3878 = vmatmul.f32.gmra.mxu0 %v3479
        %v3879 = vpop.f32.mrf.mxu0
        %v3880 = vadd.f32 0.0, %v3879
        %3881 = vmatmul.f32.gmra.mxu0 %v3482
        %v3882 = vpop.f32.mrf.mxu0
        %v3883 = vadd.f32 0.0, %v3882
        %3884 = vmatmul.f32.gmra.mxu0 %v3485
        %v3885 = vpop.f32.mrf.mxu0
        %v3886 = vadd.f32 0.0, %v3885
        %3887 = vmatmul.f32.gmra.mxu0 %v3488
        %v3888 = vpop.f32.mrf.mxu0
        %v3889 = vadd.f32 0.0, %v3888
        %3890 = vmatmul.f32.gmra.mxu0 %v3491
        %v3891 = vpop.f32.mrf.mxu0
        %v3892 = vadd.f32 0.0, %v3891
        %3893 = vmatmul.f32.gmra.mxu0 %v3494
        %v3894 = vpop.f32.mrf.mxu0
        %v3895 = vadd.f32 0.0, %v3894
        %3896 = vmatmul.f32.gmra.mxu0 %v3497
        %v3897 = vpop.f32.mrf.mxu0
        %v3898 = vadd.f32 0.0, %v3897
        %3899 = vmatmul.f32.gmra.mxu0 %v3500
        %v3900 = vpop.f32.mrf.mxu0
        %v3901 = vadd.f32 0.0, %v3900
        %3902 = vmatmul.f32.gmra.mxu0 %v3503
        %v3903 = vpop.f32.mrf.mxu0
        %v3904 = vadd.f32 0.0, %v3903
        %3905 = vmatmul.f32.gmra.mxu0 %v3506
        %v3906 = vpop.f32.mrf.mxu0
        %v3907 = vadd.f32 0.0, %v3906
        %3908 = vmatmul.f32.gmra.mxu0 %v3509
        %v3909 = vpop.f32.mrf.mxu0
        %v3910 = vadd.f32 0.0, %v3909
        %3911 = vmatmul.f32.gmra.mxu0 %v3512
        %v3912 = vpop.f32.mrf.mxu0
        %v3913 = vadd.f32 0.0, %v3912
        %3914 = vmatmul.f32.gmra.mxu0 %v3515
        %v3915 = vpop.f32.mrf.mxu0
        %v3916 = vadd.f32 0.0, %v3915
        %3917 = vmatmul.f32.gmra.mxu0 %v3518
        %v3918 = vpop.f32.mrf.mxu0
        %v3919 = vadd.f32 0.0, %v3918
        %3920 = vmatmul.f32.gmra.mxu0 %v3521
        %v3921 = vpop.f32.mrf.mxu0
        %v3922 = vadd.f32 0.0, %v3921
        %3923 = vmatmul.f32.gmra.mxu0 %v3524
        %v3924 = vpop.f32.mrf.mxu0
        %v3925 = vadd.f32 0.0, %v3924
        %3926 = vmatmul.f32.gmra.mxu0 %v3527
        %v3927 = vpop.f32.mrf.mxu0
        %v3928 = vadd.f32 0.0, %v3927
        %3929 = vmatmul.f32.gmra.mxu0 %v3530
        %v3930 = vpop.f32.mrf.mxu0
        %v3931 = vadd.f32 0.0, %v3930
        %3932 = vmatmul.f32.gmra.mxu0 %v3533
        %v3933 = vpop.f32.mrf.mxu0
        %v3934 = vadd.f32 0.0, %v3933
        %3935 = vmatmul.f32.gmra.mxu0 %v3536
        %v3936 = vpop.f32.mrf.mxu0
        %v3937 = vadd.f32 0.0, %v3936
        %3938 = vmatmul.f32.gmra.mxu0 %v3539
        %v3939 = vpop.f32.mrf.mxu0
        %v3940 = vadd.f32 0.0, %v3939
        %3941 = vmatmul.f32.gmra.mxu0 %v3542
        %v3942 = vpop.f32.mrf.mxu0
        %v3943 = vadd.f32 0.0, %v3942
        %3944 = vmatmul.f32.gmra.mxu0 %v3545
        %v3945 = vpop.f32.mrf.mxu0
        %v3946 = vadd.f32 0.0, %v3945
        %3947 = vmatmul.f32.gmra.mxu0 %v3548
        %v3948 = vpop.f32.mrf.mxu0
        %v3949 = vadd.f32 0.0, %v3948
        %3950 = vmatmul.f32.gmra.mxu0 %v3551
        %v3951 = vpop.f32.mrf.mxu0
        %v3952 = vadd.f32 0.0, %v3951
        %3953 = vmatmul.f32.gmra.mxu0 %v3554
        %v3954 = vpop.f32.mrf.mxu0
        %v3955 = vadd.f32 0.0, %v3954
        %3956 = vmatmul.f32.gmra.mxu0 %v3557
        %v3957 = vpop.f32.mrf.mxu0
        %v3958 = vadd.f32 0.0, %v3957
        %3959 = vmatmul.f32.gmra.mxu0 %v3560
        %v3960 = vpop.f32.mrf.mxu0
        %v3961 = vadd.f32 0.0, %v3960
        %3962 = vmatmul.f32.gmra.mxu0 %v3563
        %v3963 = vpop.f32.mrf.mxu0
        %v3964 = vadd.f32 0.0, %v3963
        %3965 = vmatmul.f32.gmra.mxu0 %v3566
        %v3966 = vpop.f32.mrf.mxu0
        %v3967 = vadd.f32 0.0, %v3966
        %3968 = vmatmul.f32.gmra.mxu0 %v3569
        %v3969 = vpop.f32.mrf.mxu0
        %v3970 = vadd.f32 0.0, %v3969
        %3971 = vmatmul.f32.gmra.mxu0 %v3572
        %v3972 = vpop.f32.mrf.mxu0
        %v3973 = vadd.f32 0.0, %v3972
        %3974 = vmatmul.f32.gmra.mxu0 %v3575
        %v3975 = vpop.f32.mrf.mxu0
        %v3976 = vadd.f32 0.0, %v3975
        %3977 = vmatmul.f32.gmra.mxu0 %v3578
        %v3978 = vpop.f32.mrf.mxu0
        %v3979 = vadd.f32 0.0, %v3978
        %3980 = vmatmul.f32.gmra.mxu0 %v3581
        %v3981 = vpop.f32.mrf.mxu0
        %v3982 = vadd.f32 0.0, %v3981
        %3983 = vmatmul.f32.gmra.mxu0 %v3584
        %v3984 = vpop.f32.mrf.mxu0
        %v3985 = vadd.f32 0.0, %v3984
        %3986 = vmatmul.f32.gmra.mxu0 %v3587
        %v3987 = vpop.f32.mrf.mxu0
        %v3988 = vadd.f32 0.0, %v3987
        %3989 = vmatmul.f32.gmra.mxu0 %v3590
        %v3990 = vpop.f32.mrf.mxu0
        %v3991 = vadd.f32 0.0, %v3990
        %3992 = vmatmul.f32.gmra.mxu0 %v3593
        %v3993 = vpop.f32.mrf.mxu0
        %v3994 = vadd.f32 0.0, %v3993
        %3995 = vmatmul.f32.gmra.mxu0 %v3596
        %v3996 = vpop.f32.mrf.mxu0
        %v3997 = vadd.f32 0.0, %v3996
        %3998 = vmatmul.f32.gmra.mxu0 %v3599
        %v3999 = vpop.f32.mrf.mxu0
        %v4000 = vadd.f32 0.0, %v3999
        %4001 = vmatmul.f32.gmra.mxu0 %v3602
        %v4002 = vpop.f32.mrf.mxu0
        %v4003 = vadd.f32 0.0, %v4002
        %4004 = vmatmul.f32.gmra.mxu0 %v3605
        %v4005 = vpop.f32.mrf.mxu0
        %v4006 = vadd.f32 0.0, %v4005
        %4007 = vmatmul.f32.gmra.mxu0 %v3608
        %v4008 = vpop.f32.mrf.mxu0
        %v4009 = vadd.f32 0.0, %v4008
        %4010 = vmatmul.f32.gmra.mxu0 %v3611
        %v4011 = vpop.f32.mrf.mxu0
        %v4012 = vadd.f32 0.0, %v4011
        %4013 = vmatmul.f32.gmra.mxu0 %v3614
        %v4014 = vpop.f32.mrf.mxu0
        %v4015 = vadd.f32 0.0, %v4014
        %4016 = vmatmul.f32.gmra.mxu0 %v3617
        %v4017 = vpop.f32.mrf.mxu0
        %v4018 = vadd.f32 0.0, %v4017
        %4019 = vmatmul.f32.gmra.mxu0 %v3620
        %v4020 = vpop.f32.mrf.mxu0
        %v4021 = vadd.f32 0.0, %v4020
        %4022 = vmatmul.f32.gmra.mxu0 %v3623
        %v4023 = vpop.f32.mrf.mxu0
        %v4024 = vadd.f32 0.0, %v4023
        %4025 = vmatmul.f32.gmra.mxu0 %v3626
        %v4026 = vpop.f32.mrf.mxu0
        %v4027 = vadd.f32 0.0, %v4026
        %4028 = vmatmul.f32.gmra.mxu0 %v3629
        %v4029 = vpop.f32.mrf.mxu0
        %v4030 = vadd.f32 0.0, %v4029
        %4031 = vmatmul.f32.gmra.mxu0 %v3632
        %v4032 = vpop.f32.mrf.mxu0
        %v4033 = vadd.f32 0.0, %v4032
        %4034 = vmatmul.f32.gmra.mxu0 %v3635
        %v4035 = vpop.f32.mrf.mxu0
        %v4036 = vadd.f32 0.0, %v4035
        %4037 = vmatmul.f32.gmra.mxu0 %v3638
        %v4038 = vpop.f32.mrf.mxu0
        %v4039 = vadd.f32 0.0, %v4038
        %4040 = vmatmul.f32.gmra.mxu0 %v3641
        %v4041 = vpop.f32.mrf.mxu0
        %v4042 = vadd.f32 0.0, %v4041
        %4043 = vmatmul.f32.gmra.mxu0 %v3644
        %v4044 = vpop.f32.mrf.mxu0
        %v4045 = vadd.f32 0.0, %v4044
        %4046 = vmatmul.f32.gmra.mxu0 %v3647
        %v4047 = vpop.f32.mrf.mxu0
        %v4048 = vadd.f32 0.0, %v4047
        %4049 = vmatmul.f32.gmra.mxu0 %v3650
        %v4050 = vpop.f32.mrf.mxu0
        %v4051 = vadd.f32 0.0, %v4050
        %4052 = vmatmul.f32.gmra.mxu0 %v3653
        %v4053 = vpop.f32.mrf.mxu0
        %v4054 = vadd.f32 0.0, %v4053
        %4055 = vmatmul.f32.gmra.mxu0 %v3656
        %v4056 = vpop.f32.mrf.mxu0
        %v4057 = vadd.f32 0.0, %v4056
        %4058 = vmatmul.f32.gmra.mxu0 %v3659
        %v4059 = vpop.f32.mrf.mxu0
        %v4060 = vadd.f32 0.0, %v4059
        %4061 = vmatmul.f32.gmra.mxu0 %v3662
        %v4062 = vpop.f32.mrf.mxu0
        %v4063 = vadd.f32 0.0, %v4062
        %4064 = vmatmul.f32.gmra.mxu0 %v3665
        %v4065 = vpop.f32.mrf.mxu0
        %v4066 = vadd.f32 0.0, %v4065
        %4067 = vmatmul.f32.gmra.mxu0 %v3668
        %v4068 = vpop.f32.mrf.mxu0
        %v4069 = vadd.f32 0.0, %v4068
        %4070 = vmatmul.f32.gmra.mxu0 %v3671
        %v4071 = vpop.f32.mrf.mxu0
        %v4072 = vadd.f32 0.0, %v4071
        %4073 = vmatmul.f32.gmra.mxu0 %v3674
        %v4074 = vpop.f32.mrf.mxu0
        %v4075 = vadd.f32 0.0, %v4074
        %4076 = vmatmul.f32.gmra.mxu0 %v3677
        %v4077 = vpop.f32.mrf.mxu0
        %v4078 = vadd.f32 0.0, %v4077
        %4079 = vmatmul.f32.gmra.mxu0 %v3680
        %v4080 = vpop.f32.mrf.mxu0
        %v4081 = vadd.f32 0.0, %v4080
        %4082 = vmatmul.f32.gmra.mxu0 %v3683
        %v4083 = vpop.f32.mrf.mxu0
        %v4084 = vadd.f32 0.0, %v4083
        %4085 = vmatmul.f32.gmra.mxu0 %v3686
        %v4086 = vpop.f32.mrf.mxu0
        %v4087 = vadd.f32 0.0, %v4086
        %4088 = vmatmul.f32.gmra.mxu0 %v3689
        %v4089 = vpop.f32.mrf.mxu0
        %v4090 = vadd.f32 0.0, %v4089
        %4091 = vmatmul.f32.gmra.mxu0 %v3692
        %v4092 = vpop.f32.mrf.mxu0
        %v4093 = vadd.f32 0.0, %v4092
        %4094 = vmatmul.f32.gmra.mxu0 %v3695
        %v4095 = vpop.f32.mrf.mxu0
        %v4096 = vadd.f32 0.0, %v4095
        %4097 = vmatmul.f32.gmra.mxu0 %v3698
        %v4098 = vpop.f32.mrf.mxu0
        %v4099 = vadd.f32 0.0, %v4098
        %4100 = vmatmul.f32.gmra.mxu0 %v3701
        %v4101 = vpop.f32.mrf.mxu0
        %v4102 = vadd.f32 0.0, %v4101
        %4103 = vmatmul.f32.gmra.mxu0 %v3704
        %v4104 = vpop.f32.mrf.mxu0
        %v4105 = vadd.f32 0.0, %v4104
        %4106 = vmatmul.f32.gmra.mxu0 %v3707
        %v4107 = vpop.f32.mrf.mxu0
        %v4108 = vadd.f32 0.0, %v4107
        %4109 = vmatmul.f32.gmra.mxu0 %v3710
        %v4110 = vpop.f32.mrf.mxu0
        %v4111 = vadd.f32 0.0, %v4110
        %4112 = vmatmul.f32.gmra.mxu0 %v3713
        %v4113 = vpop.f32.mrf.mxu0
        %v4114 = vadd.f32 0.0, %v4113
        %4115 = vmatmul.f32.gmra.mxu0 %v3716
        %v4116 = vpop.f32.mrf.mxu0
        %v4117 = vadd.f32 0.0, %v4116
        %4118 = vmatmul.f32.gmra.mxu0 %v3719
        %v4119 = vpop.f32.mrf.mxu0
        %v4120 = vadd.f32 0.0, %v4119
        %4121 = vmatmul.f32.gmra.mxu0 %v3722
        %v4122 = vpop.f32.mrf.mxu0
        %v4123 = vadd.f32 0.0, %v4122
        %4124 = vmatmul.f32.gmra.mxu0 %v3725
        %v4125 = vpop.f32.mrf.mxu0
        %v4126 = vadd.f32 0.0, %v4125
        %4127 = vmatmul.f32.gmra.mxu0 %v3728
        %v4128 = vpop.f32.mrf.mxu0
        %v4129 = vadd.f32 0.0, %v4128
        %4130 = vmatmul.f32.gmra.mxu0 %v3731
        %v4131 = vpop.f32.mrf.mxu0
        %v4132 = vadd.f32 0.0, %v4131
        %4133 = vmatmul.f32.gmra.mxu0 %v3734
        %v4134 = vpop.f32.mrf.mxu0
        %v4135 = vadd.f32 0.0, %v4134
        %4136 = vmatmul.f32.gmra.mxu0 %v3737
        %v4137 = vpop.f32.mrf.mxu0
        %v4138 = vadd.f32 0.0, %v4137
        %4139 = vmatmul.f32.gmra.mxu0 %v3740
        %v4140 = vpop.f32.mrf.mxu0
        %v4141 = vadd.f32 0.0, %v4140
        %4142 = vmatmul.f32.gmra.mxu0 %v3743
        %v4143 = vpop.f32.mrf.mxu0
        %v4144 = vadd.f32 0.0, %v4143
        %4145 = vmatmul.f32.gmra.mxu0 %v3746
        %v4146 = vpop.f32.mrf.mxu0
        %v4147 = vadd.f32 0.0, %v4146
        %4148 = vmatmul.f32.gmra.mxu0 %v3749
        %v4149 = vpop.f32.mrf.mxu0
        %v4150 = vadd.f32 0.0, %v4149
        %4151 = vmatmul.f32.gmra.mxu0 %v3752
        %v4152 = vpop.f32.mrf.mxu0
        %v4153 = vadd.f32 0.0, %v4152
        %4154 = vmatmul.f32.gmra.mxu0 %v3755
        %v4155 = vpop.f32.mrf.mxu0
        %v4156 = vadd.f32 0.0, %v4155
        %4157 = vmatmul.f32.gmra.mxu0 %v3758
        %v4158 = vpop.f32.mrf.mxu0
        %v4159 = vadd.f32 0.0, %v4158
        %4160 = vmatmul.f32.gmra.mxu0 %v3761
        %v4161 = vpop.f32.mrf.mxu0
        %v4162 = vadd.f32 0.0, %v4161
        %4163 = vmatmul.f32.gmra.mxu0 %v3764
        %v4164 = vpop.f32.mrf.mxu0
        %v4165 = vadd.f32 0.0, %v4164
        %4166 = vmatmul.f32.gmra.mxu0 %v3767
        %v4167 = vpop.f32.mrf.mxu0
        %v4168 = vadd.f32 0.0, %v4167
        %4169 = vmatmul.f32.gmra.mxu0 %v3770
        %v4170 = vpop.f32.mrf.mxu0
        %v4171 = vadd.f32 0.0, %v4170
        %4172 = vmatmul.f32.gmra.mxu0 %v3773
        %v4173 = vpop.f32.mrf.mxu0
        %v4174 = vadd.f32 0.0, %v4173
        %4175 = vmatmul.f32.gmra.mxu0 %v3776
        %v4176 = vpop.f32.mrf.mxu0
        %v4177 = vadd.f32 0.0, %v4176
        %4178 = vmatmul.f32.gmra.mxu0 %v3779
        %v4179 = vpop.f32.mrf.mxu0
        %v4180 = vadd.f32 0.0, %v4179
        %4181 = vmatmul.f32.gmra.mxu0 %v3782
        %v4182 = vpop.f32.mrf.mxu0
        %v4183 = vadd.f32 0.0, %v4182
        %4184 = vmatmul.f32.gmra.mxu0 %v3785
        %v4185 = vpop.f32.mrf.mxu0
        %v4186 = vadd.f32 0.0, %v4185
        %4187 = vmatmul.f32.gmra.mxu0 %v3788
        %v4188 = vpop.f32.mrf.mxu0
        %v4189 = vadd.f32 0.0, %v4188
        %4190 = vmatmul.f32.gmra.mxu0 %v3791
        %v4191 = vpop.f32.mrf.mxu0
        %v4192 = vadd.f32 0.0, %v4191
        %4193 = vmatmul.f32.gmra.mxu0 %v3794
        %v4194 = vpop.f32.mrf.mxu0
        %v4195 = vadd.f32 0.0, %v4194
        %4196 = vmatmul.f32.gmra.mxu0 %v3797
        %v4197 = vpop.f32.mrf.mxu0
        %v4198 = vadd.f32 0.0, %v4197
        %4199 = vmatmul.f32.gmra.mxu0 %v3800
        %v4200 = vpop.f32.mrf.mxu0
        %v4201 = vadd.f32 0.0, %v4200
        %4202 = vmatmul.f32.gmra.mxu0 %v3803
        %v4203 = vpop.f32.mrf.mxu0
        %v4204 = vadd.f32 0.0, %v4203
        %4205 = vmatmul.f32.gmra.mxu0 %v3806
        %v4206 = vpop.f32.mrf.mxu0
        %v4207 = vadd.f32 0.0, %v4206
        %4208 = vmatmul.f32.gmra.mxu0 %v3809
        %v4209 = vpop.f32.mrf.mxu0
        %v4210 = vadd.f32 0.0, %v4209
        %4211 = vdwg.mxu0
        %v4212 = vmul.f32 %v3829, 0.35355338
        %v4213 = vmul.f32 %v3832, 0.35355338
        %v4214 = vmul.f32 %v3835, 0.35355338
        %v4215 = vmul.f32 %v3838, 0.35355338
        %v4216 = vmul.f32 %v3841, 0.35355338
        %v4217 = vmul.f32 %v3844, 0.35355338
        %v4218 = vmul.f32 %v3847, 0.35355338
        %v4219 = vmul.f32 %v3850, 0.35355338
        %v4220 = vmul.f32 %v3853, 0.35355338
        %v4221 = vmul.f32 %v3856, 0.35355338
        %v4222 = vmul.f32 %v3859, 0.35355338
        %v4223 = vmul.f32 %v3862, 0.35355338
        %v4224 = vmul.f32 %v3865, 0.35355338
        %v4225 = vmul.f32 %v3868, 0.35355338
        %v4226 = vmul.f32 %v3871, 0.35355338
        %v4227 = vmul.f32 %v3874, 0.35355338
        %v4228 = vmul.f32 %v3877, 0.35355338
        %v4229 = vmul.f32 %v3880, 0.35355338
        %v4230 = vmul.f32 %v3883, 0.35355338
        %v4231 = vmul.f32 %v3886, 0.35355338
        %v4232 = vmul.f32 %v3889, 0.35355338
        %v4233 = vmul.f32 %v3892, 0.35355338
        %v4234 = vmul.f32 %v3895, 0.35355338
        %v4235 = vmul.f32 %v3898, 0.35355338
        %v4236 = vmul.f32 %v3901, 0.35355338
        %v4237 = vmul.f32 %v3904, 0.35355338
        %v4238 = vmul.f32 %v3907, 0.35355338
        %v4239 = vmul.f32 %v3910, 0.35355338
        %v4240 = vmul.f32 %v3913, 0.35355338
        %v4241 = vmul.f32 %v3916, 0.35355338
        %v4242 = vmul.f32 %v3919, 0.35355338
        %v4243 = vmul.f32 %v3922, 0.35355338
        %v4244 = vmul.f32 %v3925, 0.35355338
        %v4245 = vmul.f32 %v3928, 0.35355338
        %v4246 = vmul.f32 %v3931, 0.35355338
        %v4247 = vmul.f32 %v3934, 0.35355338
        %v4248 = vmul.f32 %v3937, 0.35355338
        %v4249 = vmul.f32 %v3940, 0.35355338
        %v4250 = vmul.f32 %v3943, 0.35355338
        %v4251 = vmul.f32 %v3946, 0.35355338
        %v4252 = vmul.f32 %v3949, 0.35355338
        %v4253 = vmul.f32 %v3952, 0.35355338
        %v4254 = vmul.f32 %v3955, 0.35355338
        %v4255 = vmul.f32 %v3958, 0.35355338
        %v4256 = vmul.f32 %v3961, 0.35355338
        %v4257 = vmul.f32 %v3964, 0.35355338
        %v4258 = vmul.f32 %v3967, 0.35355338
        %v4259 = vmul.f32 %v3970, 0.35355338
        %v4260 = vmul.f32 %v3973, 0.35355338
        %v4261 = vmul.f32 %v3976, 0.35355338
        %v4262 = vmul.f32 %v3979, 0.35355338
        %v4263 = vmul.f32 %v3982, 0.35355338
        %v4264 = vmul.f32 %v3985, 0.35355338
        %v4265 = vmul.f32 %v3988, 0.35355338
        %v4266 = vmul.f32 %v3991, 0.35355338
        %v4267 = vmul.f32 %v3994, 0.35355338
        %v4268 = vmul.f32 %v3997, 0.35355338
        %v4269 = vmul.f32 %v4000, 0.35355338
        %v4270 = vmul.f32 %v4003, 0.35355338
        %v4271 = vmul.f32 %v4006, 0.35355338
        %v4272 = vmul.f32 %v4009, 0.35355338
        %v4273 = vmul.f32 %v4012, 0.35355338
        %v4274 = vmul.f32 %v4015, 0.35355338
        %v4275 = vmul.f32 %v4018, 0.35355338
        %v4276 = vmul.f32 %v4021, 0.35355338
        %v4277 = vmul.f32 %v4024, 0.35355338
        %v4278 = vmul.f32 %v4027, 0.35355338
        %v4279 = vmul.f32 %v4030, 0.35355338
        %v4280 = vmul.f32 %v4033, 0.35355338
        %v4281 = vmul.f32 %v4036, 0.35355338
        %v4282 = vmul.f32 %v4039, 0.35355338
        %v4283 = vmul.f32 %v4042, 0.35355338
        %v4284 = vmul.f32 %v4045, 0.35355338
        %v4285 = vmul.f32 %v4048, 0.35355338
        %v4286 = vmul.f32 %v4051, 0.35355338
        %v4287 = vmul.f32 %v4054, 0.35355338
        %v4288 = vmul.f32 %v4057, 0.35355338
        %v4289 = vmul.f32 %v4060, 0.35355338
        %v4290 = vmul.f32 %v4063, 0.35355338
        %v4291 = vmul.f32 %v4066, 0.35355338
        %v4292 = vmul.f32 %v4069, 0.35355338
        %v4293 = vmul.f32 %v4072, 0.35355338
        %v4294 = vmul.f32 %v4075, 0.35355338
        %v4295 = vmul.f32 %v4078, 0.35355338
        %v4296 = vmul.f32 %v4081, 0.35355338
        %v4297 = vmul.f32 %v4084, 0.35355338
        %v4298 = vmul.f32 %v4087, 0.35355338
        %v4299 = vmul.f32 %v4090, 0.35355338
        %v4300 = vmul.f32 %v4093, 0.35355338
        %v4301 = vmul.f32 %v4096, 0.35355338
        %v4302 = vmul.f32 %v4099, 0.35355338
        %v4303 = vmul.f32 %v4102, 0.35355338
        %v4304 = vmul.f32 %v4105, 0.35355338
        %v4305 = vmul.f32 %v4108, 0.35355338
        %v4306 = vmul.f32 %v4111, 0.35355338
        %v4307 = vmul.f32 %v4114, 0.35355338
        %v4308 = vmul.f32 %v4117, 0.35355338
        %v4309 = vmul.f32 %v4120, 0.35355338
        %v4310 = vmul.f32 %v4123, 0.35355338
        %v4311 = vmul.f32 %v4126, 0.35355338
        %v4312 = vmul.f32 %v4129, 0.35355338
        %v4313 = vmul.f32 %v4132, 0.35355338
        %v4314 = vmul.f32 %v4135, 0.35355338
        %v4315 = vmul.f32 %v4138, 0.35355338
        %v4316 = vmul.f32 %v4141, 0.35355338
        %v4317 = vmul.f32 %v4144, 0.35355338
        %v4318 = vmul.f32 %v4147, 0.35355338
        %v4319 = vmul.f32 %v4150, 0.35355338
        %v4320 = vmul.f32 %v4153, 0.35355338
        %v4321 = vmul.f32 %v4156, 0.35355338
        %v4322 = vmul.f32 %v4159, 0.35355338
        %v4323 = vmul.f32 %v4162, 0.35355338
        %v4324 = vmul.f32 %v4165, 0.35355338
        %v4325 = vmul.f32 %v4168, 0.35355338
        %v4326 = vmul.f32 %v4171, 0.35355338
        %v4327 = vmul.f32 %v4174, 0.35355338
        %v4328 = vmul.f32 %v4177, 0.35355338
        %v4329 = vmul.f32 %v4180, 0.35355338
        %v4330 = vmul.f32 %v4183, 0.35355338
        %v4331 = vmul.f32 %v4186, 0.35355338
        %v4332 = vmul.f32 %v4189, 0.35355338
        %v4333 = vmul.f32 %v4192, 0.35355338
        %v4334 = vmul.f32 %v4195, 0.35355338
        %v4335 = vmul.f32 %v4198, 0.35355338
        %v4336 = vmul.f32 %v4201, 0.35355338
        %v4337 = vmul.f32 %v4204, 0.35355338
        %v4338 = vmul.f32 %v4207, 0.35355338
        %v4339 = vmul.f32 %v4210, 0.35355338
        %vm4340 = vcmask 64512
        %v4341 = vsel %vm4340, %v4212, -inf
        %v4342 = vsel %vm4340, %v4213, -inf
        %v4343 = vmax.f32 %v4341, %v4342
        %v4344 = vrot.slane %v4343, 4
        %v4345 = vmax.f32 %v4343, %v4344
        %v4346 = vrot.slane %v4345, 2
        %v4347 = vmax.f32 %v4345, %v4346
        %v4348 = vrot.slane %v4347, 1
        %v4349 = vmax.f32 %v4347, %v4348
        %v4350 = vsel %vm4340, %v4214, -inf
        %v4351 = vsel %vm4340, %v4215, -inf
        %v4352 = vmax.f32 %v4350, %v4351
        %v4353 = vrot.slane %v4352, 4
        %v4354 = vmax.f32 %v4352, %v4353
        %v4355 = vrot.slane %v4354, 2
        %v4356 = vmax.f32 %v4354, %v4355
        %v4357 = vrot.slane %v4356, 1
        %v4358 = vmax.f32 %v4356, %v4357
        %v4359 = vsel %vm4340, %v4216, -inf
        %v4360 = vsel %vm4340, %v4217, -inf
        %v4361 = vmax.f32 %v4359, %v4360
        %v4362 = vrot.slane %v4361, 4
        %v4363 = vmax.f32 %v4361, %v4362
        %v4364 = vrot.slane %v4363, 2
        %v4365 = vmax.f32 %v4363, %v4364
        %v4366 = vrot.slane %v4365, 1
        %v4367 = vmax.f32 %v4365, %v4366
        %v4368 = vsel %vm4340, %v4218, -inf
        %v4369 = vsel %vm4340, %v4219, -inf
        %v4370 = vmax.f32 %v4368, %v4369
        %v4371 = vrot.slane %v4370, 4
        %v4372 = vmax.f32 %v4370, %v4371
        %v4373 = vrot.slane %v4372, 2
        %v4374 = vmax.f32 %v4372, %v4373
        %v4375 = vrot.slane %v4374, 1
        %v4376 = vmax.f32 %v4374, %v4375
        %v4377 = vsel %vm4340, %v4220, -inf
        %v4378 = vsel %vm4340, %v4221, -inf
        %v4379 = vmax.f32 %v4377, %v4378
        %v4380 = vrot.slane %v4379, 4
        %v4381 = vmax.f32 %v4379, %v4380
        %v4382 = vrot.slane %v4381, 2
        %v4383 = vmax.f32 %v4381, %v4382
        %v4384 = vrot.slane %v4383, 1
        %v4385 = vmax.f32 %v4383, %v4384
        %v4386 = vsel %vm4340, %v4222, -inf
        %v4387 = vsel %vm4340, %v4223, -inf
        %v4388 = vmax.f32 %v4386, %v4387
        %v4389 = vrot.slane %v4388, 4
        %v4390 = vmax.f32 %v4388, %v4389
        %v4391 = vrot.slane %v4390, 2
        %v4392 = vmax.f32 %v4390, %v4391
        %v4393 = vrot.slane %v4392, 1
        %v4394 = vmax.f32 %v4392, %v4393
        %v4395 = vsel %vm4340, %v4224, -inf
        %v4396 = vsel %vm4340, %v4225, -inf
        %v4397 = vmax.f32 %v4395, %v4396
        %v4398 = vrot.slane %v4397, 4
        %v4399 = vmax.f32 %v4397, %v4398
        %v4400 = vrot.slane %v4399, 2
        %v4401 = vmax.f32 %v4399, %v4400
        %v4402 = vrot.slane %v4401, 1
        %v4403 = vmax.f32 %v4401, %v4402
        %v4404 = vsel %vm4340, %v4226, -inf
        %v4405 = vsel %vm4340, %v4227, -inf
        %v4406 = vmax.f32 %v4404, %v4405
        %v4407 = vrot.slane %v4406, 4
        %v4408 = vmax.f32 %v4406, %v4407
        %v4409 = vrot.slane %v4408, 2
        %v4410 = vmax.f32 %v4408, %v4409
        %v4411 = vrot.slane %v4410, 1
        %v4412 = vmax.f32 %v4410, %v4411
        %v4413 = vsel %vm4340, %v4228, -inf
        %v4414 = vsel %vm4340, %v4229, -inf
        %v4415 = vmax.f32 %v4413, %v4414
        %v4416 = vrot.slane %v4415, 4
        %v4417 = vmax.f32 %v4415, %v4416
        %v4418 = vrot.slane %v4417, 2
        %v4419 = vmax.f32 %v4417, %v4418
        %v4420 = vrot.slane %v4419, 1
        %v4421 = vmax.f32 %v4419, %v4420
        %v4422 = vsel %vm4340, %v4230, -inf
        %v4423 = vsel %vm4340, %v4231, -inf
        %v4424 = vmax.f32 %v4422, %v4423
        %v4425 = vrot.slane %v4424, 4
        %v4426 = vmax.f32 %v4424, %v4425
        %v4427 = vrot.slane %v4426, 2
        %v4428 = vmax.f32 %v4426, %v4427
        %v4429 = vrot.slane %v4428, 1
        %v4430 = vmax.f32 %v4428, %v4429
        %v4431 = vsel %vm4340, %v4232, -inf
        %v4432 = vsel %vm4340, %v4233, -inf
        %v4433 = vmax.f32 %v4431, %v4432
        %v4434 = vrot.slane %v4433, 4
        %v4435 = vmax.f32 %v4433, %v4434
        %v4436 = vrot.slane %v4435, 2
        %v4437 = vmax.f32 %v4435, %v4436
        %v4438 = vrot.slane %v4437, 1
        %v4439 = vmax.f32 %v4437, %v4438
        %v4440 = vsel %vm4340, %v4234, -inf
        %v4441 = vsel %vm4340, %v4235, -inf
        %v4442 = vmax.f32 %v4440, %v4441
        %v4443 = vrot.slane %v4442, 4
        %v4444 = vmax.f32 %v4442, %v4443
        %v4445 = vrot.slane %v4444, 2
        %v4446 = vmax.f32 %v4444, %v4445
        %v4447 = vrot.slane %v4446, 1
        %v4448 = vmax.f32 %v4446, %v4447
        %v4449 = vsel %vm4340, %v4236, -inf
        %v4450 = vsel %vm4340, %v4237, -inf
        %v4451 = vmax.f32 %v4449, %v4450
        %v4452 = vrot.slane %v4451, 4
        %v4453 = vmax.f32 %v4451, %v4452
        %v4454 = vrot.slane %v4453, 2
        %v4455 = vmax.f32 %v4453, %v4454
        %v4456 = vrot.slane %v4455, 1
        %v4457 = vmax.f32 %v4455, %v4456
        %v4458 = vsel %vm4340, %v4238, -inf
        %v4459 = vsel %vm4340, %v4239, -inf
        %v4460 = vmax.f32 %v4458, %v4459
        %v4461 = vrot.slane %v4460, 4
        %v4462 = vmax.f32 %v4460, %v4461
        %v4463 = vrot.slane %v4462, 2
        %v4464 = vmax.f32 %v4462, %v4463
        %v4465 = vrot.slane %v4464, 1
        %v4466 = vmax.f32 %v4464, %v4465
        %v4467 = vsel %vm4340, %v4240, -inf
        %v4468 = vsel %vm4340, %v4241, -inf
        %v4469 = vmax.f32 %v4467, %v4468
        %v4470 = vrot.slane %v4469, 4
        %v4471 = vmax.f32 %v4469, %v4470
        %v4472 = vrot.slane %v4471, 2
        %v4473 = vmax.f32 %v4471, %v4472
        %v4474 = vrot.slane %v4473, 1
        %v4475 = vmax.f32 %v4473, %v4474
        %v4476 = vsel %vm4340, %v4242, -inf
        %v4477 = vsel %vm4340, %v4243, -inf
        %v4478 = vmax.f32 %v4476, %v4477
        %v4479 = vrot.slane %v4478, 4
        %v4480 = vmax.f32 %v4478, %v4479
        %v4481 = vrot.slane %v4480, 2
        %v4482 = vmax.f32 %v4480, %v4481
        %v4483 = vrot.slane %v4482, 1
        %v4484 = vmax.f32 %v4482, %v4483
        %v4485 = vsel %vm4340, %v4244, -inf
        %v4486 = vsel %vm4340, %v4245, -inf
        %v4487 = vmax.f32 %v4485, %v4486
        %v4488 = vrot.slane %v4487, 4
        %v4489 = vmax.f32 %v4487, %v4488
        %v4490 = vrot.slane %v4489, 2
        %v4491 = vmax.f32 %v4489, %v4490
        %v4492 = vrot.slane %v4491, 1
        %v4493 = vmax.f32 %v4491, %v4492
        %v4494 = vsel %vm4340, %v4246, -inf
        %v4495 = vsel %vm4340, %v4247, -inf
        %v4496 = vmax.f32 %v4494, %v4495
        %v4497 = vrot.slane %v4496, 4
        %v4498 = vmax.f32 %v4496, %v4497
        %v4499 = vrot.slane %v4498, 2
        %v4500 = vmax.f32 %v4498, %v4499
        %v4501 = vrot.slane %v4500, 1
        %v4502 = vmax.f32 %v4500, %v4501
        %v4503 = vsel %vm4340, %v4248, -inf
        %v4504 = vsel %vm4340, %v4249, -inf
        %v4505 = vmax.f32 %v4503, %v4504
        %v4506 = vrot.slane %v4505, 4
        %v4507 = vmax.f32 %v4505, %v4506
        %v4508 = vrot.slane %v4507, 2
        %v4509 = vmax.f32 %v4507, %v4508
        %v4510 = vrot.slane %v4509, 1
        %v4511 = vmax.f32 %v4509, %v4510
        %v4512 = vsel %vm4340, %v4250, -inf
        %v4513 = vsel %vm4340, %v4251, -inf
        %v4514 = vmax.f32 %v4512, %v4513
        %v4515 = vrot.slane %v4514, 4
        %v4516 = vmax.f32 %v4514, %v4515
        %v4517 = vrot.slane %v4516, 2
        %v4518 = vmax.f32 %v4516, %v4517
        %v4519 = vrot.slane %v4518, 1
        %v4520 = vmax.f32 %v4518, %v4519
        %v4521 = vsel %vm4340, %v4252, -inf
        %v4522 = vsel %vm4340, %v4253, -inf
        %v4523 = vmax.f32 %v4521, %v4522
        %v4524 = vrot.slane %v4523, 4
        %v4525 = vmax.f32 %v4523, %v4524
        %v4526 = vrot.slane %v4525, 2
        %v4527 = vmax.f32 %v4525, %v4526
        %v4528 = vrot.slane %v4527, 1
        %v4529 = vmax.f32 %v4527, %v4528
        %v4530 = vsel %vm4340, %v4254, -inf
        %v4531 = vsel %vm4340, %v4255, -inf
        %v4532 = vmax.f32 %v4530, %v4531
        %v4533 = vrot.slane %v4532, 4
        %v4534 = vmax.f32 %v4532, %v4533
        %v4535 = vrot.slane %v4534, 2
        %v4536 = vmax.f32 %v4534, %v4535
        %v4537 = vrot.slane %v4536, 1
        %v4538 = vmax.f32 %v4536, %v4537
        %v4539 = vsel %vm4340, %v4256, -inf
        %v4540 = vsel %vm4340, %v4257, -inf
        %v4541 = vmax.f32 %v4539, %v4540
        %v4542 = vrot.slane %v4541, 4
        %v4543 = vmax.f32 %v4541, %v4542
        %v4544 = vrot.slane %v4543, 2
        %v4545 = vmax.f32 %v4543, %v4544
        %v4546 = vrot.slane %v4545, 1
        %v4547 = vmax.f32 %v4545, %v4546
        %v4548 = vsel %vm4340, %v4258, -inf
        %v4549 = vsel %vm4340, %v4259, -inf
        %v4550 = vmax.f32 %v4548, %v4549
        %v4551 = vrot.slane %v4550, 4
        %v4552 = vmax.f32 %v4550, %v4551
        %v4553 = vrot.slane %v4552, 2
        %v4554 = vmax.f32 %v4552, %v4553
        %v4555 = vrot.slane %v4554, 1
        %v4556 = vmax.f32 %v4554, %v4555
        %v4557 = vsel %vm4340, %v4260, -inf
        %v4558 = vsel %vm4340, %v4261, -inf
        %v4559 = vmax.f32 %v4557, %v4558
        %v4560 = vrot.slane %v4559, 4
        %v4561 = vmax.f32 %v4559, %v4560
        %v4562 = vrot.slane %v4561, 2
        %v4563 = vmax.f32 %v4561, %v4562
        %v4564 = vrot.slane %v4563, 1
        %v4565 = vmax.f32 %v4563, %v4564
        %v4566 = vsel %vm4340, %v4262, -inf
        %v4567 = vsel %vm4340, %v4263, -inf
        %v4568 = vmax.f32 %v4566, %v4567
        %v4569 = vrot.slane %v4568, 4
        %v4570 = vmax.f32 %v4568, %v4569
        %v4571 = vrot.slane %v4570, 2
        %v4572 = vmax.f32 %v4570, %v4571
        %v4573 = vrot.slane %v4572, 1
        %v4574 = vmax.f32 %v4572, %v4573
        %v4575 = vsel %vm4340, %v4264, -inf
        %v4576 = vsel %vm4340, %v4265, -inf
        %v4577 = vmax.f32 %v4575, %v4576
        %v4578 = vrot.slane %v4577, 4
        %v4579 = vmax.f32 %v4577, %v4578
        %v4580 = vrot.slane %v4579, 2
        %v4581 = vmax.f32 %v4579, %v4580
        %v4582 = vrot.slane %v4581, 1
        %v4583 = vmax.f32 %v4581, %v4582
        %v4584 = vsel %vm4340, %v4266, -inf
        %v4585 = vsel %vm4340, %v4267, -inf
        %v4586 = vmax.f32 %v4584, %v4585
        %v4587 = vrot.slane %v4586, 4
        %v4588 = vmax.f32 %v4586, %v4587
        %v4589 = vrot.slane %v4588, 2
        %v4590 = vmax.f32 %v4588, %v4589
        %v4591 = vrot.slane %v4590, 1
        %v4592 = vmax.f32 %v4590, %v4591
        %v4593 = vsel %vm4340, %v4268, -inf
        %v4594 = vsel %vm4340, %v4269, -inf
        %v4595 = vmax.f32 %v4593, %v4594
        %v4596 = vrot.slane %v4595, 4
        %v4597 = vmax.f32 %v4595, %v4596
        %v4598 = vrot.slane %v4597, 2
        %v4599 = vmax.f32 %v4597, %v4598
        %v4600 = vrot.slane %v4599, 1
        %v4601 = vmax.f32 %v4599, %v4600
        %v4602 = vsel %vm4340, %v4270, -inf
        %v4603 = vsel %vm4340, %v4271, -inf
        %v4604 = vmax.f32 %v4602, %v4603
        %v4605 = vrot.slane %v4604, 4
        %v4606 = vmax.f32 %v4604, %v4605
        %v4607 = vrot.slane %v4606, 2
        %v4608 = vmax.f32 %v4606, %v4607
        %v4609 = vrot.slane %v4608, 1
        %v4610 = vmax.f32 %v4608, %v4609
        %v4611 = vsel %vm4340, %v4272, -inf
        %v4612 = vsel %vm4340, %v4273, -inf
        %v4613 = vmax.f32 %v4611, %v4612
        %v4614 = vrot.slane %v4613, 4
        %v4615 = vmax.f32 %v4613, %v4614
        %v4616 = vrot.slane %v4615, 2
        %v4617 = vmax.f32 %v4615, %v4616
        %v4618 = vrot.slane %v4617, 1
        %v4619 = vmax.f32 %v4617, %v4618
        %v4620 = vsel %vm4340, %v4274, -inf
        %v4621 = vsel %vm4340, %v4275, -inf
        %v4622 = vmax.f32 %v4620, %v4621
        %v4623 = vrot.slane %v4622, 4
        %v4624 = vmax.f32 %v4622, %v4623
        %v4625 = vrot.slane %v4624, 2
        %v4626 = vmax.f32 %v4624, %v4625
        %v4627 = vrot.slane %v4626, 1
        %v4628 = vmax.f32 %v4626, %v4627
        %v4629 = vsel %vm4340, %v4276, -inf
        %v4630 = vsel %vm4340, %v4277, -inf
        %v4631 = vmax.f32 %v4629, %v4630
        %v4632 = vrot.slane %v4631, 4
        %v4633 = vmax.f32 %v4631, %v4632
        %v4634 = vrot.slane %v4633, 2
        %v4635 = vmax.f32 %v4633, %v4634
        %v4636 = vrot.slane %v4635, 1
        %v4637 = vmax.f32 %v4635, %v4636
        %v4638 = vsel %vm4340, %v4278, -inf
        %v4639 = vsel %vm4340, %v4279, -inf
        %v4640 = vmax.f32 %v4638, %v4639
        %v4641 = vrot.slane %v4640, 4
        %v4642 = vmax.f32 %v4640, %v4641
        %v4643 = vrot.slane %v4642, 2
        %v4644 = vmax.f32 %v4642, %v4643
        %v4645 = vrot.slane %v4644, 1
        %v4646 = vmax.f32 %v4644, %v4645
        %v4647 = vsel %vm4340, %v4280, -inf
        %v4648 = vsel %vm4340, %v4281, -inf
        %v4649 = vmax.f32 %v4647, %v4648
        %v4650 = vrot.slane %v4649, 4
        %v4651 = vmax.f32 %v4649, %v4650
        %v4652 = vrot.slane %v4651, 2
        %v4653 = vmax.f32 %v4651, %v4652
        %v4654 = vrot.slane %v4653, 1
        %v4655 = vmax.f32 %v4653, %v4654
        %v4656 = vsel %vm4340, %v4282, -inf
        %v4657 = vsel %vm4340, %v4283, -inf
        %v4658 = vmax.f32 %v4656, %v4657
        %v4659 = vrot.slane %v4658, 4
        %v4660 = vmax.f32 %v4658, %v4659
        %v4661 = vrot.slane %v4660, 2
        %v4662 = vmax.f32 %v4660, %v4661
        %v4663 = vrot.slane %v4662, 1
        %v4664 = vmax.f32 %v4662, %v4663
        %v4665 = vsel %vm4340, %v4284, -inf
        %v4666 = vsel %vm4340, %v4285, -inf
        %v4667 = vmax.f32 %v4665, %v4666
        %v4668 = vrot.slane %v4667, 4
        %v4669 = vmax.f32 %v4667, %v4668
        %v4670 = vrot.slane %v4669, 2
        %v4671 = vmax.f32 %v4669, %v4670
        %v4672 = vrot.slane %v4671, 1
        %v4673 = vmax.f32 %v4671, %v4672
        %v4674 = vsel %vm4340, %v4286, -inf
        %v4675 = vsel %vm4340, %v4287, -inf
        %v4676 = vmax.f32 %v4674, %v4675
        %v4677 = vrot.slane %v4676, 4
        %v4678 = vmax.f32 %v4676, %v4677
        %v4679 = vrot.slane %v4678, 2
        %v4680 = vmax.f32 %v4678, %v4679
        %v4681 = vrot.slane %v4680, 1
        %v4682 = vmax.f32 %v4680, %v4681
        %v4683 = vsel %vm4340, %v4288, -inf
        %v4684 = vsel %vm4340, %v4289, -inf
        %v4685 = vmax.f32 %v4683, %v4684
        %v4686 = vrot.slane %v4685, 4
        %v4687 = vmax.f32 %v4685, %v4686
        %v4688 = vrot.slane %v4687, 2
        %v4689 = vmax.f32 %v4687, %v4688
        %v4690 = vrot.slane %v4689, 1
        %v4691 = vmax.f32 %v4689, %v4690
        %v4692 = vsel %vm4340, %v4290, -inf
        %v4693 = vsel %vm4340, %v4291, -inf
        %v4694 = vmax.f32 %v4692, %v4693
        %v4695 = vrot.slane %v4694, 4
        %v4696 = vmax.f32 %v4694, %v4695
        %v4697 = vrot.slane %v4696, 2
        %v4698 = vmax.f32 %v4696, %v4697
        %v4699 = vrot.slane %v4698, 1
        %v4700 = vmax.f32 %v4698, %v4699
        %v4701 = vsel %vm4340, %v4292, -inf
        %v4702 = vsel %vm4340, %v4293, -inf
        %v4703 = vmax.f32 %v4701, %v4702
        %v4704 = vrot.slane %v4703, 4
        %v4705 = vmax.f32 %v4703, %v4704
        %v4706 = vrot.slane %v4705, 2
        %v4707 = vmax.f32 %v4705, %v4706
        %v4708 = vrot.slane %v4707, 1
        %v4709 = vmax.f32 %v4707, %v4708
        %v4710 = vsel %vm4340, %v4294, -inf
        %v4711 = vsel %vm4340, %v4295, -inf
        %v4712 = vmax.f32 %v4710, %v4711
        %v4713 = vrot.slane %v4712, 4
        %v4714 = vmax.f32 %v4712, %v4713
        %v4715 = vrot.slane %v4714, 2
        %v4716 = vmax.f32 %v4714, %v4715
        %v4717 = vrot.slane %v4716, 1
        %v4718 = vmax.f32 %v4716, %v4717
        %v4719 = vsel %vm4340, %v4296, -inf
        %v4720 = vsel %vm4340, %v4297, -inf
        %v4721 = vmax.f32 %v4719, %v4720
        %v4722 = vrot.slane %v4721, 4
        %v4723 = vmax.f32 %v4721, %v4722
        %v4724 = vrot.slane %v4723, 2
        %v4725 = vmax.f32 %v4723, %v4724
        %v4726 = vrot.slane %v4725, 1
        %v4727 = vmax.f32 %v4725, %v4726
        %v4728 = vsel %vm4340, %v4298, -inf
        %v4729 = vsel %vm4340, %v4299, -inf
        %v4730 = vmax.f32 %v4728, %v4729
        %v4731 = vrot.slane %v4730, 4
        %v4732 = vmax.f32 %v4730, %v4731
        %v4733 = vrot.slane %v4732, 2
        %v4734 = vmax.f32 %v4732, %v4733
        %v4735 = vrot.slane %v4734, 1
        %v4736 = vmax.f32 %v4734, %v4735
        %v4737 = vsel %vm4340, %v4300, -inf
        %v4738 = vsel %vm4340, %v4301, -inf
        %v4739 = vmax.f32 %v4737, %v4738
        %v4740 = vrot.slane %v4739, 4
        %v4741 = vmax.f32 %v4739, %v4740
        %v4742 = vrot.slane %v4741, 2
        %v4743 = vmax.f32 %v4741, %v4742
        %v4744 = vrot.slane %v4743, 1
        %v4745 = vmax.f32 %v4743, %v4744
        %v4746 = vsel %vm4340, %v4302, -inf
        %v4747 = vsel %vm4340, %v4303, -inf
        %v4748 = vmax.f32 %v4746, %v4747
        %v4749 = vrot.slane %v4748, 4
        %v4750 = vmax.f32 %v4748, %v4749
        %v4751 = vrot.slane %v4750, 2
        %v4752 = vmax.f32 %v4750, %v4751
        %v4753 = vrot.slane %v4752, 1
        %v4754 = vmax.f32 %v4752, %v4753
        %v4755 = vsel %vm4340, %v4304, -inf
        %v4756 = vsel %vm4340, %v4305, -inf
        %v4757 = vmax.f32 %v4755, %v4756
        %v4758 = vrot.slane %v4757, 4
        %v4759 = vmax.f32 %v4757, %v4758
        %v4760 = vrot.slane %v4759, 2
        %v4761 = vmax.f32 %v4759, %v4760
        %v4762 = vrot.slane %v4761, 1
        %v4763 = vmax.f32 %v4761, %v4762
        %v4764 = vsel %vm4340, %v4306, -inf
        %v4765 = vsel %vm4340, %v4307, -inf
        %v4766 = vmax.f32 %v4764, %v4765
        %v4767 = vrot.slane %v4766, 4
        %v4768 = vmax.f32 %v4766, %v4767
        %v4769 = vrot.slane %v4768, 2
        %v4770 = vmax.f32 %v4768, %v4769
        %v4771 = vrot.slane %v4770, 1
        %v4772 = vmax.f32 %v4770, %v4771
        %v4773 = vsel %vm4340, %v4308, -inf
        %v4774 = vsel %vm4340, %v4309, -inf
        %v4775 = vmax.f32 %v4773, %v4774
        %v4776 = vrot.slane %v4775, 4
        %v4777 = vmax.f32 %v4775, %v4776
        %v4778 = vrot.slane %v4777, 2
        %v4779 = vmax.f32 %v4777, %v4778
        %v4780 = vrot.slane %v4779, 1
        %v4781 = vmax.f32 %v4779, %v4780
        %v4782 = vsel %vm4340, %v4310, -inf
        %v4783 = vsel %vm4340, %v4311, -inf
        %v4784 = vmax.f32 %v4782, %v4783
        %v4785 = vrot.slane %v4784, 4
        %v4786 = vmax.f32 %v4784, %v4785
        %v4787 = vrot.slane %v4786, 2
        %v4788 = vmax.f32 %v4786, %v4787
        %v4789 = vrot.slane %v4788, 1
        %v4790 = vmax.f32 %v4788, %v4789
        %v4791 = vsel %vm4340, %v4312, -inf
        %v4792 = vsel %vm4340, %v4313, -inf
        %v4793 = vmax.f32 %v4791, %v4792
        %v4794 = vrot.slane %v4793, 4
        %v4795 = vmax.f32 %v4793, %v4794
        %v4796 = vrot.slane %v4795, 2
        %v4797 = vmax.f32 %v4795, %v4796
        %v4798 = vrot.slane %v4797, 1
        %v4799 = vmax.f32 %v4797, %v4798
        %v4800 = vsel %vm4340, %v4314, -inf
        %v4801 = vsel %vm4340, %v4315, -inf
        %v4802 = vmax.f32 %v4800, %v4801
        %v4803 = vrot.slane %v4802, 4
        %v4804 = vmax.f32 %v4802, %v4803
        %v4805 = vrot.slane %v4804, 2
        %v4806 = vmax.f32 %v4804, %v4805
        %v4807 = vrot.slane %v4806, 1
        %v4808 = vmax.f32 %v4806, %v4807
        %v4809 = vsel %vm4340, %v4316, -inf
        %v4810 = vsel %vm4340, %v4317, -inf
        %v4811 = vmax.f32 %v4809, %v4810
        %v4812 = vrot.slane %v4811, 4
        %v4813 = vmax.f32 %v4811, %v4812
        %v4814 = vrot.slane %v4813, 2
        %v4815 = vmax.f32 %v4813, %v4814
        %v4816 = vrot.slane %v4815, 1
        %v4817 = vmax.f32 %v4815, %v4816
        %v4818 = vsel %vm4340, %v4318, -inf
        %v4819 = vsel %vm4340, %v4319, -inf
        %v4820 = vmax.f32 %v4818, %v4819
        %v4821 = vrot.slane %v4820, 4
        %v4822 = vmax.f32 %v4820, %v4821
        %v4823 = vrot.slane %v4822, 2
        %v4824 = vmax.f32 %v4822, %v4823
        %v4825 = vrot.slane %v4824, 1
        %v4826 = vmax.f32 %v4824, %v4825
        %v4827 = vsel %vm4340, %v4320, -inf
        %v4828 = vsel %vm4340, %v4321, -inf
        %v4829 = vmax.f32 %v4827, %v4828
        %v4830 = vrot.slane %v4829, 4
        %v4831 = vmax.f32 %v4829, %v4830
        %v4832 = vrot.slane %v4831, 2
        %v4833 = vmax.f32 %v4831, %v4832
        %v4834 = vrot.slane %v4833, 1
        %v4835 = vmax.f32 %v4833, %v4834
        %v4836 = vsel %vm4340, %v4322, -inf
        %v4837 = vsel %vm4340, %v4323, -inf
        %v4838 = vmax.f32 %v4836, %v4837
        %v4839 = vrot.slane %v4838, 4
        %v4840 = vmax.f32 %v4838, %v4839
        %v4841 = vrot.slane %v4840, 2
        %v4842 = vmax.f32 %v4840, %v4841
        %v4843 = vrot.slane %v4842, 1
        %v4844 = vmax.f32 %v4842, %v4843
        %v4845 = vsel %vm4340, %v4324, -inf
        %v4846 = vsel %vm4340, %v4325, -inf
        %v4847 = vmax.f32 %v4845, %v4846
        %v4848 = vrot.slane %v4847, 4
        %v4849 = vmax.f32 %v4847, %v4848
        %v4850 = vrot.slane %v4849, 2
        %v4851 = vmax.f32 %v4849, %v4850
        %v4852 = vrot.slane %v4851, 1
        %v4853 = vmax.f32 %v4851, %v4852
        %v4854 = vsel %vm4340, %v4326, -inf
        %v4855 = vsel %vm4340, %v4327, -inf
        %v4856 = vmax.f32 %v4854, %v4855
        %v4857 = vrot.slane %v4856, 4
        %v4858 = vmax.f32 %v4856, %v4857
        %v4859 = vrot.slane %v4858, 2
        %v4860 = vmax.f32 %v4858, %v4859
        %v4861 = vrot.slane %v4860, 1
        %v4862 = vmax.f32 %v4860, %v4861
        %v4863 = vsel %vm4340, %v4328, -inf
        %v4864 = vsel %vm4340, %v4329, -inf
        %v4865 = vmax.f32 %v4863, %v4864
        %v4866 = vrot.slane %v4865, 4
        %v4867 = vmax.f32 %v4865, %v4866
        %v4868 = vrot.slane %v4867, 2
        %v4869 = vmax.f32 %v4867, %v4868
        %v4870 = vrot.slane %v4869, 1
        %v4871 = vmax.f32 %v4869, %v4870
        %v4872 = vsel %vm4340, %v4330, -inf
        %v4873 = vsel %vm4340, %v4331, -inf
        %v4874 = vmax.f32 %v4872, %v4873
        %v4875 = vrot.slane %v4874, 4
        %v4876 = vmax.f32 %v4874, %v4875
        %v4877 = vrot.slane %v4876, 2
        %v4878 = vmax.f32 %v4876, %v4877
        %v4879 = vrot.slane %v4878, 1
        %v4880 = vmax.f32 %v4878, %v4879
        %v4881 = vsel %vm4340, %v4332, -inf
        %v4882 = vsel %vm4340, %v4333, -inf
        %v4883 = vmax.f32 %v4881, %v4882
        %v4884 = vrot.slane %v4883, 4
        %v4885 = vmax.f32 %v4883, %v4884
        %v4886 = vrot.slane %v4885, 2
        %v4887 = vmax.f32 %v4885, %v4886
        %v4888 = vrot.slane %v4887, 1
        %v4889 = vmax.f32 %v4887, %v4888
        %v4890 = vsel %vm4340, %v4334, -inf
        %v4891 = vsel %vm4340, %v4335, -inf
        %v4892 = vmax.f32 %v4890, %v4891
        %v4893 = vrot.slane %v4892, 4
        %v4894 = vmax.f32 %v4892, %v4893
        %v4895 = vrot.slane %v4894, 2
        %v4896 = vmax.f32 %v4894, %v4895
        %v4897 = vrot.slane %v4896, 1
        %v4898 = vmax.f32 %v4896, %v4897
        %v4899 = vsel %vm4340, %v4336, -inf
        %v4900 = vsel %vm4340, %v4337, -inf
        %v4901 = vmax.f32 %v4899, %v4900
        %v4902 = vrot.slane %v4901, 4
        %v4903 = vmax.f32 %v4901, %v4902
        %v4904 = vrot.slane %v4903, 2
        %v4905 = vmax.f32 %v4903, %v4904
        %v4906 = vrot.slane %v4905, 1
        %v4907 = vmax.f32 %v4905, %v4906
        %v4908 = vsel %vm4340, %v4338, -inf
        %v4909 = vsel %vm4340, %v4339, -inf
        %v4910 = vmax.f32 %v4908, %v4909
        %v4911 = vrot.slane %v4910, 4
        %v4912 = vmax.f32 %v4910, %v4911
        %v4913 = vrot.slane %v4912, 2
        %v4914 = vmax.f32 %v4912, %v4913
        %v4915 = vrot.slane %v4914, 1
        %v4916 = vmax.f32 %v4914, %v4915
        %v4917 = vsub.f32 %v4212, %v4349
        %v4918 = vsub.f32 %v4213, %v4349
        %v4919 = vsub.f32 %v4214, %v4358
        %v4920 = vsub.f32 %v4215, %v4358
        %v4921 = vsub.f32 %v4216, %v4367
        %v4922 = vsub.f32 %v4217, %v4367
        %v4923 = vsub.f32 %v4218, %v4376
        %v4924 = vsub.f32 %v4219, %v4376
        %v4925 = vsub.f32 %v4220, %v4385
        %v4926 = vsub.f32 %v4221, %v4385
        %v4927 = vsub.f32 %v4222, %v4394
        %v4928 = vsub.f32 %v4223, %v4394
        %v4929 = vsub.f32 %v4224, %v4403
        %v4930 = vsub.f32 %v4225, %v4403
        %v4931 = vsub.f32 %v4226, %v4412
        %v4932 = vsub.f32 %v4227, %v4412
        %v4933 = vsub.f32 %v4228, %v4421
        %v4934 = vsub.f32 %v4229, %v4421
        %v4935 = vsub.f32 %v4230, %v4430
        %v4936 = vsub.f32 %v4231, %v4430
        %v4937 = vsub.f32 %v4232, %v4439
        %v4938 = vsub.f32 %v4233, %v4439
        %v4939 = vsub.f32 %v4234, %v4448
        %v4940 = vsub.f32 %v4235, %v4448
        %v4941 = vsub.f32 %v4236, %v4457
        %v4942 = vsub.f32 %v4237, %v4457
        %v4943 = vsub.f32 %v4238, %v4466
        %v4944 = vsub.f32 %v4239, %v4466
        %v4945 = vsub.f32 %v4240, %v4475
        %v4946 = vsub.f32 %v4241, %v4475
        %v4947 = vsub.f32 %v4242, %v4484
        %v4948 = vsub.f32 %v4243, %v4484
        %v4949 = vsub.f32 %v4244, %v4493
        %v4950 = vsub.f32 %v4245, %v4493
        %v4951 = vsub.f32 %v4246, %v4502
        %v4952 = vsub.f32 %v4247, %v4502
        %v4953 = vsub.f32 %v4248, %v4511
        %v4954 = vsub.f32 %v4249, %v4511
        %v4955 = vsub.f32 %v4250, %v4520
        %v4956 = vsub.f32 %v4251, %v4520
        %v4957 = vsub.f32 %v4252, %v4529
        %v4958 = vsub.f32 %v4253, %v4529
        %v4959 = vsub.f32 %v4254, %v4538
        %v4960 = vsub.f32 %v4255, %v4538
        %v4961 = vsub.f32 %v4256, %v4547
        %v4962 = vsub.f32 %v4257, %v4547
        %v4963 = vsub.f32 %v4258, %v4556
        %v4964 = vsub.f32 %v4259, %v4556
        %v4965 = vsub.f32 %v4260, %v4565
        %v4966 = vsub.f32 %v4261, %v4565
        %v4967 = vsub.f32 %v4262, %v4574
        %v4968 = vsub.f32 %v4263, %v4574
        %v4969 = vsub.f32 %v4264, %v4583
        %v4970 = vsub.f32 %v4265, %v4583
        %v4971 = vsub.f32 %v4266, %v4592
        %v4972 = vsub.f32 %v4267, %v4592
        %v4973 = vsub.f32 %v4268, %v4601
        %v4974 = vsub.f32 %v4269, %v4601
        %v4975 = vsub.f32 %v4270, %v4610
        %v4976 = vsub.f32 %v4271, %v4610
        %v4977 = vsub.f32 %v4272, %v4619
        %v4978 = vsub.f32 %v4273, %v4619
        %v4979 = vsub.f32 %v4274, %v4628
        %v4980 = vsub.f32 %v4275, %v4628
        %v4981 = vsub.f32 %v4276, %v4637
        %v4982 = vsub.f32 %v4277, %v4637
        %v4983 = vsub.f32 %v4278, %v4646
        %v4984 = vsub.f32 %v4279, %v4646
        %v4985 = vsub.f32 %v4280, %v4655
        %v4986 = vsub.f32 %v4281, %v4655
        %v4987 = vsub.f32 %v4282, %v4664
        %v4988 = vsub.f32 %v4283, %v4664
        %v4989 = vsub.f32 %v4284, %v4673
        %v4990 = vsub.f32 %v4285, %v4673
        %v4991 = vsub.f32 %v4286, %v4682
        %v4992 = vsub.f32 %v4287, %v4682
        %v4993 = vsub.f32 %v4288, %v4691
        %v4994 = vsub.f32 %v4289, %v4691
        %v4995 = vsub.f32 %v4290, %v4700
        %v4996 = vsub.f32 %v4291, %v4700
        %v4997 = vsub.f32 %v4292, %v4709
        %v4998 = vsub.f32 %v4293, %v4709
        %v4999 = vsub.f32 %v4294, %v4718
        %v5000 = vsub.f32 %v4295, %v4718
        %v5001 = vsub.f32 %v4296, %v4727
        %v5002 = vsub.f32 %v4297, %v4727
        %v5003 = vsub.f32 %v4298, %v4736
        %v5004 = vsub.f32 %v4299, %v4736
        %v5005 = vsub.f32 %v4300, %v4745
        %v5006 = vsub.f32 %v4301, %v4745
        %v5007 = vsub.f32 %v4302, %v4754
        %v5008 = vsub.f32 %v4303, %v4754
        %v5009 = vsub.f32 %v4304, %v4763
        %v5010 = vsub.f32 %v4305, %v4763
        %v5011 = vsub.f32 %v4306, %v4772
        %v5012 = vsub.f32 %v4307, %v4772
        %v5013 = vsub.f32 %v4308, %v4781
        %v5014 = vsub.f32 %v4309, %v4781
        %v5015 = vsub.f32 %v4310, %v4790
        %v5016 = vsub.f32 %v4311, %v4790
        %v5017 = vsub.f32 %v4312, %v4799
        %v5018 = vsub.f32 %v4313, %v4799
        %v5019 = vsub.f32 %v4314, %v4808
        %v5020 = vsub.f32 %v4315, %v4808
        %v5021 = vsub.f32 %v4316, %v4817
        %v5022 = vsub.f32 %v4317, %v4817
        %v5023 = vsub.f32 %v4318, %v4826
        %v5024 = vsub.f32 %v4319, %v4826
        %v5025 = vsub.f32 %v4320, %v4835
        %v5026 = vsub.f32 %v4321, %v4835
        %v5027 = vsub.f32 %v4322, %v4844
        %v5028 = vsub.f32 %v4323, %v4844
        %v5029 = vsub.f32 %v4324, %v4853
        %v5030 = vsub.f32 %v4325, %v4853
        %v5031 = vsub.f32 %v4326, %v4862
        %v5032 = vsub.f32 %v4327, %v4862
        %v5033 = vsub.f32 %v4328, %v4871
        %v5034 = vsub.f32 %v4329, %v4871
        %v5035 = vsub.f32 %v4330, %v4880
        %v5036 = vsub.f32 %v4331, %v4880
        %v5037 = vsub.f32 %v4332, %v4889
        %v5038 = vsub.f32 %v4333, %v4889
        %v5039 = vsub.f32 %v4334, %v4898
        %v5040 = vsub.f32 %v4335, %v4898
        %v5041 = vsub.f32 %v4336, %v4907
        %v5042 = vsub.f32 %v4337, %v4907
        %v5043 = vsub.f32 %v4338, %v4916
        %v5044 = vsub.f32 %v4339, %v4916
        %v5045 = vmul.f32 %v4917, 1.442695
        %v5046 = vpow.pop %v5045
        %v5047 = vmul.f32 %v4918, 1.442695
        %v5048 = vpow.pop %v5047
        %v5049 = vmul.f32 %v4919, 1.442695
        %v5050 = vpow.pop %v5049
        %v5051 = vmul.f32 %v4920, 1.442695
        %v5052 = vpow.pop %v5051
        %v5053 = vmul.f32 %v4921, 1.442695
        %v5054 = vpow.pop %v5053
        %v5055 = vmul.f32 %v4922, 1.442695
        %v5056 = vpow.pop %v5055
        %v5057 = vmul.f32 %v4923, 1.442695
        %v5058 = vpow.pop %v5057
        %v5059 = vmul.f32 %v4924, 1.442695
        %v5060 = vpow.pop %v5059
        %v5061 = vmul.f32 %v4925, 1.442695
        %v5062 = vpow.pop %v5061
        %v5063 = vmul.f32 %v4926, 1.442695
        %v5064 = vpow.pop %v5063
        %v5065 = vmul.f32 %v4927, 1.442695
        %v5066 = vpow.pop %v5065
        %v5067 = vmul.f32 %v4928, 1.442695
        %v5068 = vpow.pop %v5067
        %v5069 = vmul.f32 %v4929, 1.442695
        %v5070 = vpow.pop %v5069
        %v5071 = vmul.f32 %v4930, 1.442695
        %v5072 = vpow.pop %v5071
        %v5073 = vmul.f32 %v4931, 1.442695
        %v5074 = vpow.pop %v5073
        %v5075 = vmul.f32 %v4932, 1.442695
        %v5076 = vpow.pop %v5075
        %v5077 = vmul.f32 %v4933, 1.442695
        %v5078 = vpow.pop %v5077
        %v5079 = vmul.f32 %v4934, 1.442695
        %v5080 = vpow.pop %v5079
        %v5081 = vmul.f32 %v4935, 1.442695
        %v5082 = vpow.pop %v5081
        %v5083 = vmul.f32 %v4936, 1.442695
        %v5084 = vpow.pop %v5083
        %v5085 = vmul.f32 %v4937, 1.442695
        %v5086 = vpow.pop %v5085
        %v5087 = vmul.f32 %v4938, 1.442695
        %v5088 = vpow.pop %v5087
        %v5089 = vmul.f32 %v4939, 1.442695
        %v5090 = vpow.pop %v5089
        %v5091 = vmul.f32 %v4940, 1.442695
        %v5092 = vpow.pop %v5091
        %v5093 = vmul.f32 %v4941, 1.442695
        %v5094 = vpow.pop %v5093
        %v5095 = vmul.f32 %v4942, 1.442695
        %v5096 = vpow.pop %v5095
        %v5097 = vmul.f32 %v4943, 1.442695
        %v5098 = vpow.pop %v5097
        %v5099 = vmul.f32 %v4944, 1.442695
        %v5100 = vpow.pop %v5099
        %v5101 = vmul.f32 %v4945, 1.442695
        %v5102 = vpow.pop %v5101
        %v5103 = vmul.f32 %v4946, 1.442695
        %v5104 = vpow.pop %v5103
        %v5105 = vmul.f32 %v4947, 1.442695
        %v5106 = vpow.pop %v5105
        %v5107 = vmul.f32 %v4948, 1.442695
        %v5108 = vpow.pop %v5107
        %v5109 = vmul.f32 %v4949, 1.442695
        %v5110 = vpow.pop %v5109
        %v5111 = vmul.f32 %v4950, 1.442695
        %v5112 = vpow.pop %v5111
        %v5113 = vmul.f32 %v4951, 1.442695
        %v5114 = vpow.pop %v5113
        %v5115 = vmul.f32 %v4952, 1.442695
        %v5116 = vpow.pop %v5115
        %v5117 = vmul.f32 %v4953, 1.442695
        %v5118 = vpow.pop %v5117
        %v5119 = vmul.f32 %v4954, 1.442695
        %v5120 = vpow.pop %v5119
        %v5121 = vmul.f32 %v4955, 1.442695
        %v5122 = vpow.pop %v5121
        %v5123 = vmul.f32 %v4956, 1.442695
        %v5124 = vpow.pop %v5123
        %v5125 = vmul.f32 %v4957, 1.442695
        %v5126 = vpow.pop %v5125
        %v5127 = vmul.f32 %v4958, 1.442695
        %v5128 = vpow.pop %v5127
        %v5129 = vmul.f32 %v4959, 1.442695
        %v5130 = vpow.pop %v5129
        %v5131 = vmul.f32 %v4960, 1.442695
        %v5132 = vpow.pop %v5131
        %v5133 = vmul.f32 %v4961, 1.442695
        %v5134 = vpow.pop %v5133
        %v5135 = vmul.f32 %v4962, 1.442695
        %v5136 = vpow.pop %v5135
        %v5137 = vmul.f32 %v4963, 1.442695
        %v5138 = vpow.pop %v5137
        %v5139 = vmul.f32 %v4964, 1.442695
        %v5140 = vpow.pop %v5139
        %v5141 = vmul.f32 %v4965, 1.442695
        %v5142 = vpow.pop %v5141
        %v5143 = vmul.f32 %v4966, 1.442695
        %v5144 = vpow.pop %v5143
        %v5145 = vmul.f32 %v4967, 1.442695
        %v5146 = vpow.pop %v5145
        %v5147 = vmul.f32 %v4968, 1.442695
        %v5148 = vpow.pop %v5147
        %v5149 = vmul.f32 %v4969, 1.442695
        %v5150 = vpow.pop %v5149
        %v5151 = vmul.f32 %v4970, 1.442695
        %v5152 = vpow.pop %v5151
        %v5153 = vmul.f32 %v4971, 1.442695
        %v5154 = vpow.pop %v5153
        %v5155 = vmul.f32 %v4972, 1.442695
        %v5156 = vpow.pop %v5155
        %v5157 = vmul.f32 %v4973, 1.442695
        %v5158 = vpow.pop %v5157
        %v5159 = vmul.f32 %v4974, 1.442695
        %v5160 = vpow.pop %v5159
        %v5161 = vmul.f32 %v4975, 1.442695
        %v5162 = vpow.pop %v5161
        %v5163 = vmul.f32 %v4976, 1.442695
        %v5164 = vpow.pop %v5163
        %v5165 = vmul.f32 %v4977, 1.442695
        %v5166 = vpow.pop %v5165
        %v5167 = vmul.f32 %v4978, 1.442695
        %v5168 = vpow.pop %v5167
        %v5169 = vmul.f32 %v4979, 1.442695
        %v5170 = vpow.pop %v5169
        %v5171 = vmul.f32 %v4980, 1.442695
        %v5172 = vpow.pop %v5171
        %v5173 = vmul.f32 %v4981, 1.442695
        %v5174 = vpow.pop %v5173
        %v5175 = vmul.f32 %v4982, 1.442695
        %v5176 = vpow.pop %v5175
        %v5177 = vmul.f32 %v4983, 1.442695
        %v5178 = vpow.pop %v5177
        %v5179 = vmul.f32 %v4984, 1.442695
        %v5180 = vpow.pop %v5179
        %v5181 = vmul.f32 %v4985, 1.442695
        %v5182 = vpow.pop %v5181
        %v5183 = vmul.f32 %v4986, 1.442695
        %v5184 = vpow.pop %v5183
        %v5185 = vmul.f32 %v4987, 1.442695
        %v5186 = vpow.pop %v5185
        %v5187 = vmul.f32 %v4988, 1.442695
        %v5188 = vpow.pop %v5187
        %v5189 = vmul.f32 %v4989, 1.442695
        %v5190 = vpow.pop %v5189
        %v5191 = vmul.f32 %v4990, 1.442695
        %v5192 = vpow.pop %v5191
        %v5193 = vmul.f32 %v4991, 1.442695
        %v5194 = vpow.pop %v5193
        %v5195 = vmul.f32 %v4992, 1.442695
        %v5196 = vpow.pop %v5195
        %v5197 = vmul.f32 %v4993, 1.442695
        %v5198 = vpow.pop %v5197
        %v5199 = vmul.f32 %v4994, 1.442695
        %v5200 = vpow.pop %v5199
        %v5201 = vmul.f32 %v4995, 1.442695
        %v5202 = vpow.pop %v5201
        %v5203 = vmul.f32 %v4996, 1.442695
        %v5204 = vpow.pop %v5203
        %v5205 = vmul.f32 %v4997, 1.442695
        %v5206 = vpow.pop %v5205
        %v5207 = vmul.f32 %v4998, 1.442695
        %v5208 = vpow.pop %v5207
        %v5209 = vmul.f32 %v4999, 1.442695
        %v5210 = vpow.pop %v5209
        %v5211 = vmul.f32 %v5000, 1.442695
        %v5212 = vpow.pop %v5211
        %v5213 = vmul.f32 %v5001, 1.442695
        %v5214 = vpow.pop %v5213
        %v5215 = vmul.f32 %v5002, 1.442695
        %v5216 = vpow.pop %v5215
        %v5217 = vmul.f32 %v5003, 1.442695
        %v5218 = vpow.pop %v5217
        %v5219 = vmul.f32 %v5004, 1.442695
        %v5220 = vpow.pop %v5219
        %v5221 = vmul.f32 %v5005, 1.442695
        %v5222 = vpow.pop %v5221
        %v5223 = vmul.f32 %v5006, 1.442695
        %v5224 = vpow.pop %v5223
        %v5225 = vmul.f32 %v5007, 1.442695
        %v5226 = vpow.pop %v5225
        %v5227 = vmul.f32 %v5008, 1.442695
        %v5228 = vpow.pop %v5227
        %v5229 = vmul.f32 %v5009, 1.442695
        %v5230 = vpow.pop %v5229
        %v5231 = vmul.f32 %v5010, 1.442695
        %v5232 = vpow.pop %v5231
        %v5233 = vmul.f32 %v5011, 1.442695
        %v5234 = vpow.pop %v5233
        %v5235 = vmul.f32 %v5012, 1.442695
        %v5236 = vpow.pop %v5235
        %v5237 = vmul.f32 %v5013, 1.442695
        %v5238 = vpow.pop %v5237
        %v5239 = vmul.f32 %v5014, 1.442695
        %v5240 = vpow.pop %v5239
        %v5241 = vmul.f32 %v5015, 1.442695
        %v5242 = vpow.pop %v5241
        %v5243 = vmul.f32 %v5016, 1.442695
        %v5244 = vpow.pop %v5243
        %v5245 = vmul.f32 %v5017, 1.442695
        %v5246 = vpow.pop %v5245
        %v5247 = vmul.f32 %v5018, 1.442695
        %v5248 = vpow.pop %v5247
        %v5249 = vmul.f32 %v5019, 1.442695
        %v5250 = vpow.pop %v5249
        %v5251 = vmul.f32 %v5020, 1.442695
        %v5252 = vpow.pop %v5251
        %v5253 = vmul.f32 %v5021, 1.442695
        %v5254 = vpow.pop %v5253
        %v5255 = vmul.f32 %v5022, 1.442695
        %v5256 = vpow.pop %v5255
        %v5257 = vmul.f32 %v5023, 1.442695
        %v5258 = vpow.pop %v5257
        %v5259 = vmul.f32 %v5024, 1.442695
        %v5260 = vpow.pop %v5259
        %v5261 = vmul.f32 %v5025, 1.442695
        %v5262 = vpow.pop %v5261
        %v5263 = vmul.f32 %v5026, 1.442695
        %v5264 = vpow.pop %v5263
        %v5265 = vmul.f32 %v5027, 1.442695
        %v5266 = vpow.pop %v5265
        %v5267 = vmul.f32 %v5028, 1.442695
        %v5268 = vpow.pop %v5267
        %v5269 = vmul.f32 %v5029, 1.442695
        %v5270 = vpow.pop %v5269
        %v5271 = vmul.f32 %v5030, 1.442695
        %v5272 = vpow.pop %v5271
        %v5273 = vmul.f32 %v5031, 1.442695
        %v5274 = vpow.pop %v5273
        %v5275 = vmul.f32 %v5032, 1.442695
        %v5276 = vpow.pop %v5275
        %v5277 = vmul.f32 %v5033, 1.442695
        %v5278 = vpow.pop %v5277
        %v5279 = vmul.f32 %v5034, 1.442695
        %v5280 = vpow.pop %v5279
        %v5281 = vmul.f32 %v5035, 1.442695
        %v5282 = vpow.pop %v5281
        %v5283 = vmul.f32 %v5036, 1.442695
        %v5284 = vpow.pop %v5283
        %v5285 = vmul.f32 %v5037, 1.442695
        %v5286 = vpow.pop %v5285
        %v5287 = vmul.f32 %v5038, 1.442695
        %v5288 = vpow.pop %v5287
        %v5289 = vmul.f32 %v5039, 1.442695
        %v5290 = vpow.pop %v5289
        %v5291 = vmul.f32 %v5040, 1.442695
        %v5292 = vpow.pop %v5291
        %v5293 = vmul.f32 %v5041, 1.442695
        %v5294 = vpow.pop %v5293
        %v5295 = vmul.f32 %v5042, 1.442695
        %v5296 = vpow.pop %v5295
        %v5297 = vmul.f32 %v5043, 1.442695
        %v5298 = vpow.pop %v5297
        %v5299 = vmul.f32 %v5044, 1.442695
        %v5300 = vpow.pop %v5299
        %v5301 = vsel %vm4340, %v5046, 0.0
        %v5302 = vsel %vm4340, %v5048, 0.0
        %v5303 = vadd.f32 %v5301, %v5302
        %v5304 = vrot.slane %v5303, 4
        %v5305 = vadd.f32 %v5303, %v5304
        %v5306 = vrot.slane %v5305, 2
        %v5307 = vadd.f32 %v5305, %v5306
        %v5308 = vrot.slane %v5307, 1
        %v5309 = vadd.f32 %v5307, %v5308
        %v5310 = vsel %vm4340, %v5050, 0.0
        %v5311 = vsel %vm4340, %v5052, 0.0
        %v5312 = vadd.f32 %v5310, %v5311
        %v5313 = vrot.slane %v5312, 4
        %v5314 = vadd.f32 %v5312, %v5313
        %v5315 = vrot.slane %v5314, 2
        %v5316 = vadd.f32 %v5314, %v5315
        %v5317 = vrot.slane %v5316, 1
        %v5318 = vadd.f32 %v5316, %v5317
        %v5319 = vsel %vm4340, %v5054, 0.0
        %v5320 = vsel %vm4340, %v5056, 0.0
        %v5321 = vadd.f32 %v5319, %v5320
        %v5322 = vrot.slane %v5321, 4
        %v5323 = vadd.f32 %v5321, %v5322
        %v5324 = vrot.slane %v5323, 2
        %v5325 = vadd.f32 %v5323, %v5324
        %v5326 = vrot.slane %v5325, 1
        %v5327 = vadd.f32 %v5325, %v5326
        %v5328 = vsel %vm4340, %v5058, 0.0
        %v5329 = vsel %vm4340, %v5060, 0.0
        %v5330 = vadd.f32 %v5328, %v5329
        %v5331 = vrot.slane %v5330, 4
        %v5332 = vadd.f32 %v5330, %v5331
        %v5333 = vrot.slane %v5332, 2
        %v5334 = vadd.f32 %v5332, %v5333
        %v5335 = vrot.slane %v5334, 1
        %v5336 = vadd.f32 %v5334, %v5335
        %v5337 = vsel %vm4340, %v5062, 0.0
        %v5338 = vsel %vm4340, %v5064, 0.0
        %v5339 = vadd.f32 %v5337, %v5338
        %v5340 = vrot.slane %v5339, 4
        %v5341 = vadd.f32 %v5339, %v5340
        %v5342 = vrot.slane %v5341, 2
        %v5343 = vadd.f32 %v5341, %v5342
        %v5344 = vrot.slane %v5343, 1
        %v5345 = vadd.f32 %v5343, %v5344
        %v5346 = vsel %vm4340, %v5066, 0.0
        %v5347 = vsel %vm4340, %v5068, 0.0
        %v5348 = vadd.f32 %v5346, %v5347
        %v5349 = vrot.slane %v5348, 4
        %v5350 = vadd.f32 %v5348, %v5349
        %v5351 = vrot.slane %v5350, 2
        %v5352 = vadd.f32 %v5350, %v5351
        %v5353 = vrot.slane %v5352, 1
        %v5354 = vadd.f32 %v5352, %v5353
        %v5355 = vsel %vm4340, %v5070, 0.0
        %v5356 = vsel %vm4340, %v5072, 0.0
        %v5357 = vadd.f32 %v5355, %v5356
        %v5358 = vrot.slane %v5357, 4
        %v5359 = vadd.f32 %v5357, %v5358
        %v5360 = vrot.slane %v5359, 2
        %v5361 = vadd.f32 %v5359, %v5360
        %v5362 = vrot.slane %v5361, 1
        %v5363 = vadd.f32 %v5361, %v5362
        %v5364 = vsel %vm4340, %v5074, 0.0
        %v5365 = vsel %vm4340, %v5076, 0.0
        %v5366 = vadd.f32 %v5364, %v5365
        %v5367 = vrot.slane %v5366, 4
        %v5368 = vadd.f32 %v5366, %v5367
        %v5369 = vrot.slane %v5368, 2
        %v5370 = vadd.f32 %v5368, %v5369
        %v5371 = vrot.slane %v5370, 1
        %v5372 = vadd.f32 %v5370, %v5371
        %v5373 = vsel %vm4340, %v5078, 0.0
        %v5374 = vsel %vm4340, %v5080, 0.0
        %v5375 = vadd.f32 %v5373, %v5374
        %v5376 = vrot.slane %v5375, 4
        %v5377 = vadd.f32 %v5375, %v5376
        %v5378 = vrot.slane %v5377, 2
        %v5379 = vadd.f32 %v5377, %v5378
        %v5380 = vrot.slane %v5379, 1
        %v5381 = vadd.f32 %v5379, %v5380
        %v5382 = vsel %vm4340, %v5082, 0.0
        %v5383 = vsel %vm4340, %v5084, 0.0
        %v5384 = vadd.f32 %v5382, %v5383
        %v5385 = vrot.slane %v5384, 4
        %v5386 = vadd.f32 %v5384, %v5385
        %v5387 = vrot.slane %v5386, 2
        %v5388 = vadd.f32 %v5386, %v5387
        %v5389 = vrot.slane %v5388, 1
        %v5390 = vadd.f32 %v5388, %v5389
        %v5391 = vsel %vm4340, %v5086, 0.0
        %v5392 = vsel %vm4340, %v5088, 0.0
        %v5393 = vadd.f32 %v5391, %v5392
        %v5394 = vrot.slane %v5393, 4
        %v5395 = vadd.f32 %v5393, %v5394
        %v5396 = vrot.slane %v5395, 2
        %v5397 = vadd.f32 %v5395, %v5396
        %v5398 = vrot.slane %v5397, 1
        %v5399 = vadd.f32 %v5397, %v5398
        %v5400 = vsel %vm4340, %v5090, 0.0
        %v5401 = vsel %vm4340, %v5092, 0.0
        %v5402 = vadd.f32 %v5400, %v5401
        %v5403 = vrot.slane %v5402, 4
        %v5404 = vadd.f32 %v5402, %v5403
        %v5405 = vrot.slane %v5404, 2
        %v5406 = vadd.f32 %v5404, %v5405
        %v5407 = vrot.slane %v5406, 1
        %v5408 = vadd.f32 %v5406, %v5407
        %v5409 = vsel %vm4340, %v5094, 0.0
        %v5410 = vsel %vm4340, %v5096, 0.0
        %v5411 = vadd.f32 %v5409, %v5410
        %v5412 = vrot.slane %v5411, 4
        %v5413 = vadd.f32 %v5411, %v5412
        %v5414 = vrot.slane %v5413, 2
        %v5415 = vadd.f32 %v5413, %v5414
        %v5416 = vrot.slane %v5415, 1
        %v5417 = vadd.f32 %v5415, %v5416
        %v5418 = vsel %vm4340, %v5098, 0.0
        %v5419 = vsel %vm4340, %v5100, 0.0
        %v5420 = vadd.f32 %v5418, %v5419
        %v5421 = vrot.slane %v5420, 4
        %v5422 = vadd.f32 %v5420, %v5421
        %v5423 = vrot.slane %v5422, 2
        %v5424 = vadd.f32 %v5422, %v5423
        %v5425 = vrot.slane %v5424, 1
        %v5426 = vadd.f32 %v5424, %v5425
        %v5427 = vsel %vm4340, %v5102, 0.0
        %v5428 = vsel %vm4340, %v5104, 0.0
        %v5429 = vadd.f32 %v5427, %v5428
        %v5430 = vrot.slane %v5429, 4
        %v5431 = vadd.f32 %v5429, %v5430
        %v5432 = vrot.slane %v5431, 2
        %v5433 = vadd.f32 %v5431, %v5432
        %v5434 = vrot.slane %v5433, 1
        %v5435 = vadd.f32 %v5433, %v5434
        %v5436 = vsel %vm4340, %v5106, 0.0
        %v5437 = vsel %vm4340, %v5108, 0.0
        %v5438 = vadd.f32 %v5436, %v5437
        %v5439 = vrot.slane %v5438, 4
        %v5440 = vadd.f32 %v5438, %v5439
        %v5441 = vrot.slane %v5440, 2
        %v5442 = vadd.f32 %v5440, %v5441
        %v5443 = vrot.slane %v5442, 1
        %v5444 = vadd.f32 %v5442, %v5443
        %v5445 = vsel %vm4340, %v5110, 0.0
        %v5446 = vsel %vm4340, %v5112, 0.0
        %v5447 = vadd.f32 %v5445, %v5446
        %v5448 = vrot.slane %v5447, 4
        %v5449 = vadd.f32 %v5447, %v5448
        %v5450 = vrot.slane %v5449, 2
        %v5451 = vadd.f32 %v5449, %v5450
        %v5452 = vrot.slane %v5451, 1
        %v5453 = vadd.f32 %v5451, %v5452
        %v5454 = vsel %vm4340, %v5114, 0.0
        %v5455 = vsel %vm4340, %v5116, 0.0
        %v5456 = vadd.f32 %v5454, %v5455
        %v5457 = vrot.slane %v5456, 4
        %v5458 = vadd.f32 %v5456, %v5457
        %v5459 = vrot.slane %v5458, 2
        %v5460 = vadd.f32 %v5458, %v5459
        %v5461 = vrot.slane %v5460, 1
        %v5462 = vadd.f32 %v5460, %v5461
        %v5463 = vsel %vm4340, %v5118, 0.0
        %v5464 = vsel %vm4340, %v5120, 0.0
        %v5465 = vadd.f32 %v5463, %v5464
        %v5466 = vrot.slane %v5465, 4
        %v5467 = vadd.f32 %v5465, %v5466
        %v5468 = vrot.slane %v5467, 2
        %v5469 = vadd.f32 %v5467, %v5468
        %v5470 = vrot.slane %v5469, 1
        %v5471 = vadd.f32 %v5469, %v5470
        %v5472 = vsel %vm4340, %v5122, 0.0
        %v5473 = vsel %vm4340, %v5124, 0.0
        %v5474 = vadd.f32 %v5472, %v5473
        %v5475 = vrot.slane %v5474, 4
        %v5476 = vadd.f32 %v5474, %v5475
        %v5477 = vrot.slane %v5476, 2
        %v5478 = vadd.f32 %v5476, %v5477
        %v5479 = vrot.slane %v5478, 1
        %v5480 = vadd.f32 %v5478, %v5479
        %v5481 = vsel %vm4340, %v5126, 0.0
        %v5482 = vsel %vm4340, %v5128, 0.0
        %v5483 = vadd.f32 %v5481, %v5482
        %v5484 = vrot.slane %v5483, 4
        %v5485 = vadd.f32 %v5483, %v5484
        %v5486 = vrot.slane %v5485, 2
        %v5487 = vadd.f32 %v5485, %v5486
        %v5488 = vrot.slane %v5487, 1
        %v5489 = vadd.f32 %v5487, %v5488
        %v5490 = vsel %vm4340, %v5130, 0.0
        %v5491 = vsel %vm4340, %v5132, 0.0
        %v5492 = vadd.f32 %v5490, %v5491
        %v5493 = vrot.slane %v5492, 4
        %v5494 = vadd.f32 %v5492, %v5493
        %v5495 = vrot.slane %v5494, 2
        %v5496 = vadd.f32 %v5494, %v5495
        %v5497 = vrot.slane %v5496, 1
        %v5498 = vadd.f32 %v5496, %v5497
        %v5499 = vsel %vm4340, %v5134, 0.0
        %v5500 = vsel %vm4340, %v5136, 0.0
        %v5501 = vadd.f32 %v5499, %v5500
        %v5502 = vrot.slane %v5501, 4
        %v5503 = vadd.f32 %v5501, %v5502
        %v5504 = vrot.slane %v5503, 2
        %v5505 = vadd.f32 %v5503, %v5504
        %v5506 = vrot.slane %v5505, 1
        %v5507 = vadd.f32 %v5505, %v5506
        %v5508 = vsel %vm4340, %v5138, 0.0
        %v5509 = vsel %vm4340, %v5140, 0.0
        %v5510 = vadd.f32 %v5508, %v5509
        %v5511 = vrot.slane %v5510, 4
        %v5512 = vadd.f32 %v5510, %v5511
        %v5513 = vrot.slane %v5512, 2
        %v5514 = vadd.f32 %v5512, %v5513
        %v5515 = vrot.slane %v5514, 1
        %v5516 = vadd.f32 %v5514, %v5515
        %v5517 = vsel %vm4340, %v5142, 0.0
        %v5518 = vsel %vm4340, %v5144, 0.0
        %v5519 = vadd.f32 %v5517, %v5518
        %v5520 = vrot.slane %v5519, 4
        %v5521 = vadd.f32 %v5519, %v5520
        %v5522 = vrot.slane %v5521, 2
        %v5523 = vadd.f32 %v5521, %v5522
        %v5524 = vrot.slane %v5523, 1
        %v5525 = vadd.f32 %v5523, %v5524
        %v5526 = vsel %vm4340, %v5146, 0.0
        %v5527 = vsel %vm4340, %v5148, 0.0
        %v5528 = vadd.f32 %v5526, %v5527
        %v5529 = vrot.slane %v5528, 4
        %v5530 = vadd.f32 %v5528, %v5529
        %v5531 = vrot.slane %v5530, 2
        %v5532 = vadd.f32 %v5530, %v5531
        %v5533 = vrot.slane %v5532, 1
        %v5534 = vadd.f32 %v5532, %v5533
        %v5535 = vsel %vm4340, %v5150, 0.0
        %v5536 = vsel %vm4340, %v5152, 0.0
        %v5537 = vadd.f32 %v5535, %v5536
        %v5538 = vrot.slane %v5537, 4
        %v5539 = vadd.f32 %v5537, %v5538
        %v5540 = vrot.slane %v5539, 2
        %v5541 = vadd.f32 %v5539, %v5540
        %v5542 = vrot.slane %v5541, 1
        %v5543 = vadd.f32 %v5541, %v5542
        %v5544 = vsel %vm4340, %v5154, 0.0
        %v5545 = vsel %vm4340, %v5156, 0.0
        %v5546 = vadd.f32 %v5544, %v5545
        %v5547 = vrot.slane %v5546, 4
        %v5548 = vadd.f32 %v5546, %v5547
        %v5549 = vrot.slane %v5548, 2
        %v5550 = vadd.f32 %v5548, %v5549
        %v5551 = vrot.slane %v5550, 1
        %v5552 = vadd.f32 %v5550, %v5551
        %v5553 = vsel %vm4340, %v5158, 0.0
        %v5554 = vsel %vm4340, %v5160, 0.0
        %v5555 = vadd.f32 %v5553, %v5554
        %v5556 = vrot.slane %v5555, 4
        %v5557 = vadd.f32 %v5555, %v5556
        %v5558 = vrot.slane %v5557, 2
        %v5559 = vadd.f32 %v5557, %v5558
        %v5560 = vrot.slane %v5559, 1
        %v5561 = vadd.f32 %v5559, %v5560
        %v5562 = vsel %vm4340, %v5162, 0.0
        %v5563 = vsel %vm4340, %v5164, 0.0
        %v5564 = vadd.f32 %v5562, %v5563
        %v5565 = vrot.slane %v5564, 4
        %v5566 = vadd.f32 %v5564, %v5565
        %v5567 = vrot.slane %v5566, 2
        %v5568 = vadd.f32 %v5566, %v5567
        %v5569 = vrot.slane %v5568, 1
        %v5570 = vadd.f32 %v5568, %v5569
        %v5571 = vsel %vm4340, %v5166, 0.0
        %v5572 = vsel %vm4340, %v5168, 0.0
        %v5573 = vadd.f32 %v5571, %v5572
        %v5574 = vrot.slane %v5573, 4
        %v5575 = vadd.f32 %v5573, %v5574
        %v5576 = vrot.slane %v5575, 2
        %v5577 = vadd.f32 %v5575, %v5576
        %v5578 = vrot.slane %v5577, 1
        %v5579 = vadd.f32 %v5577, %v5578
        %v5580 = vsel %vm4340, %v5170, 0.0
        %v5581 = vsel %vm4340, %v5172, 0.0
        %v5582 = vadd.f32 %v5580, %v5581
        %v5583 = vrot.slane %v5582, 4
        %v5584 = vadd.f32 %v5582, %v5583
        %v5585 = vrot.slane %v5584, 2
        %v5586 = vadd.f32 %v5584, %v5585
        %v5587 = vrot.slane %v5586, 1
        %v5588 = vadd.f32 %v5586, %v5587
        %v5589 = vsel %vm4340, %v5174, 0.0
        %v5590 = vsel %vm4340, %v5176, 0.0
        %v5591 = vadd.f32 %v5589, %v5590
        %v5592 = vrot.slane %v5591, 4
        %v5593 = vadd.f32 %v5591, %v5592
        %v5594 = vrot.slane %v5593, 2
        %v5595 = vadd.f32 %v5593, %v5594
        %v5596 = vrot.slane %v5595, 1
        %v5597 = vadd.f32 %v5595, %v5596
        %v5598 = vsel %vm4340, %v5178, 0.0
        %v5599 = vsel %vm4340, %v5180, 0.0
        %v5600 = vadd.f32 %v5598, %v5599
        %v5601 = vrot.slane %v5600, 4
        %v5602 = vadd.f32 %v5600, %v5601
        %v5603 = vrot.slane %v5602, 2
        %v5604 = vadd.f32 %v5602, %v5603
        %v5605 = vrot.slane %v5604, 1
        %v5606 = vadd.f32 %v5604, %v5605
        %v5607 = vsel %vm4340, %v5182, 0.0
        %v5608 = vsel %vm4340, %v5184, 0.0
        %v5609 = vadd.f32 %v5607, %v5608
        %v5610 = vrot.slane %v5609, 4
        %v5611 = vadd.f32 %v5609, %v5610
        %v5612 = vrot.slane %v5611, 2
        %v5613 = vadd.f32 %v5611, %v5612
        %v5614 = vrot.slane %v5613, 1
        %v5615 = vadd.f32 %v5613, %v5614
        %v5616 = vsel %vm4340, %v5186, 0.0
        %v5617 = vsel %vm4340, %v5188, 0.0
        %v5618 = vadd.f32 %v5616, %v5617
        %v5619 = vrot.slane %v5618, 4
        %v5620 = vadd.f32 %v5618, %v5619
        %v5621 = vrot.slane %v5620, 2
        %v5622 = vadd.f32 %v5620, %v5621
        %v5623 = vrot.slane %v5622, 1
        %v5624 = vadd.f32 %v5622, %v5623
        %v5625 = vsel %vm4340, %v5190, 0.0
        %v5626 = vsel %vm4340, %v5192, 0.0
        %v5627 = vadd.f32 %v5625, %v5626
        %v5628 = vrot.slane %v5627, 4
        %v5629 = vadd.f32 %v5627, %v5628
        %v5630 = vrot.slane %v5629, 2
        %v5631 = vadd.f32 %v5629, %v5630
        %v5632 = vrot.slane %v5631, 1
        %v5633 = vadd.f32 %v5631, %v5632
        %v5634 = vsel %vm4340, %v5194, 0.0
        %v5635 = vsel %vm4340, %v5196, 0.0
        %v5636 = vadd.f32 %v5634, %v5635
        %v5637 = vrot.slane %v5636, 4
        %v5638 = vadd.f32 %v5636, %v5637
        %v5639 = vrot.slane %v5638, 2
        %v5640 = vadd.f32 %v5638, %v5639
        %v5641 = vrot.slane %v5640, 1
        %v5642 = vadd.f32 %v5640, %v5641
        %v5643 = vsel %vm4340, %v5198, 0.0
        %v5644 = vsel %vm4340, %v5200, 0.0
        %v5645 = vadd.f32 %v5643, %v5644
        %v5646 = vrot.slane %v5645, 4
        %v5647 = vadd.f32 %v5645, %v5646
        %v5648 = vrot.slane %v5647, 2
        %v5649 = vadd.f32 %v5647, %v5648
        %v5650 = vrot.slane %v5649, 1
        %v5651 = vadd.f32 %v5649, %v5650
        %v5652 = vsel %vm4340, %v5202, 0.0
        %v5653 = vsel %vm4340, %v5204, 0.0
        %v5654 = vadd.f32 %v5652, %v5653
        %v5655 = vrot.slane %v5654, 4
        %v5656 = vadd.f32 %v5654, %v5655
        %v5657 = vrot.slane %v5656, 2
        %v5658 = vadd.f32 %v5656, %v5657
        %v5659 = vrot.slane %v5658, 1
        %v5660 = vadd.f32 %v5658, %v5659
        %v5661 = vsel %vm4340, %v5206, 0.0
        %v5662 = vsel %vm4340, %v5208, 0.0
        %v5663 = vadd.f32 %v5661, %v5662
        %v5664 = vrot.slane %v5663, 4
        %v5665 = vadd.f32 %v5663, %v5664
        %v5666 = vrot.slane %v5665, 2
        %v5667 = vadd.f32 %v5665, %v5666
        %v5668 = vrot.slane %v5667, 1
        %v5669 = vadd.f32 %v5667, %v5668
        %v5670 = vsel %vm4340, %v5210, 0.0
        %v5671 = vsel %vm4340, %v5212, 0.0
        %v5672 = vadd.f32 %v5670, %v5671
        %v5673 = vrot.slane %v5672, 4
        %v5674 = vadd.f32 %v5672, %v5673
        %v5675 = vrot.slane %v5674, 2
        %v5676 = vadd.f32 %v5674, %v5675
        %v5677 = vrot.slane %v5676, 1
        %v5678 = vadd.f32 %v5676, %v5677
        %v5679 = vsel %vm4340, %v5214, 0.0
        %v5680 = vsel %vm4340, %v5216, 0.0
        %v5681 = vadd.f32 %v5679, %v5680
        %v5682 = vrot.slane %v5681, 4
        %v5683 = vadd.f32 %v5681, %v5682
        %v5684 = vrot.slane %v5683, 2
        %v5685 = vadd.f32 %v5683, %v5684
        %v5686 = vrot.slane %v5685, 1
        %v5687 = vadd.f32 %v5685, %v5686
        %v5688 = vsel %vm4340, %v5218, 0.0
        %v5689 = vsel %vm4340, %v5220, 0.0
        %v5690 = vadd.f32 %v5688, %v5689
        %v5691 = vrot.slane %v5690, 4
        %v5692 = vadd.f32 %v5690, %v5691
        %v5693 = vrot.slane %v5692, 2
        %v5694 = vadd.f32 %v5692, %v5693
        %v5695 = vrot.slane %v5694, 1
        %v5696 = vadd.f32 %v5694, %v5695
        %v5697 = vsel %vm4340, %v5222, 0.0
        %v5698 = vsel %vm4340, %v5224, 0.0
        %v5699 = vadd.f32 %v5697, %v5698
        %v5700 = vrot.slane %v5699, 4
        %v5701 = vadd.f32 %v5699, %v5700
        %v5702 = vrot.slane %v5701, 2
        %v5703 = vadd.f32 %v5701, %v5702
        %v5704 = vrot.slane %v5703, 1
        %v5705 = vadd.f32 %v5703, %v5704
        %v5706 = vsel %vm4340, %v5226, 0.0
        %v5707 = vsel %vm4340, %v5228, 0.0
        %v5708 = vadd.f32 %v5706, %v5707
        %v5709 = vrot.slane %v5708, 4
        %v5710 = vadd.f32 %v5708, %v5709
        %v5711 = vrot.slane %v5710, 2
        %v5712 = vadd.f32 %v5710, %v5711
        %v5713 = vrot.slane %v5712, 1
        %v5714 = vadd.f32 %v5712, %v5713
        %v5715 = vsel %vm4340, %v5230, 0.0
        %v5716 = vsel %vm4340, %v5232, 0.0
        %v5717 = vadd.f32 %v5715, %v5716
        %v5718 = vrot.slane %v5717, 4
        %v5719 = vadd.f32 %v5717, %v5718
        %v5720 = vrot.slane %v5719, 2
        %v5721 = vadd.f32 %v5719, %v5720
        %v5722 = vrot.slane %v5721, 1
        %v5723 = vadd.f32 %v5721, %v5722
        %v5724 = vsel %vm4340, %v5234, 0.0
        %v5725 = vsel %vm4340, %v5236, 0.0
        %v5726 = vadd.f32 %v5724, %v5725
        %v5727 = vrot.slane %v5726, 4
        %v5728 = vadd.f32 %v5726, %v5727
        %v5729 = vrot.slane %v5728, 2
        %v5730 = vadd.f32 %v5728, %v5729
        %v5731 = vrot.slane %v5730, 1
        %v5732 = vadd.f32 %v5730, %v5731
        %v5733 = vsel %vm4340, %v5238, 0.0
        %v5734 = vsel %vm4340, %v5240, 0.0
        %v5735 = vadd.f32 %v5733, %v5734
        %v5736 = vrot.slane %v5735, 4
        %v5737 = vadd.f32 %v5735, %v5736
        %v5738 = vrot.slane %v5737, 2
        %v5739 = vadd.f32 %v5737, %v5738
        %v5740 = vrot.slane %v5739, 1
        %v5741 = vadd.f32 %v5739, %v5740
        %v5742 = vsel %vm4340, %v5242, 0.0
        %v5743 = vsel %vm4340, %v5244, 0.0
        %v5744 = vadd.f32 %v5742, %v5743
        %v5745 = vrot.slane %v5744, 4
        %v5746 = vadd.f32 %v5744, %v5745
        %v5747 = vrot.slane %v5746, 2
        %v5748 = vadd.f32 %v5746, %v5747
        %v5749 = vrot.slane %v5748, 1
        %v5750 = vadd.f32 %v5748, %v5749
        %v5751 = vsel %vm4340, %v5246, 0.0
        %v5752 = vsel %vm4340, %v5248, 0.0
        %v5753 = vadd.f32 %v5751, %v5752
        %v5754 = vrot.slane %v5753, 4
        %v5755 = vadd.f32 %v5753, %v5754
        %v5756 = vrot.slane %v5755, 2
        %v5757 = vadd.f32 %v5755, %v5756
        %v5758 = vrot.slane %v5757, 1
        %v5759 = vadd.f32 %v5757, %v5758
        %v5760 = vsel %vm4340, %v5250, 0.0
        %v5761 = vsel %vm4340, %v5252, 0.0
        %v5762 = vadd.f32 %v5760, %v5761
        %v5763 = vrot.slane %v5762, 4
        %v5764 = vadd.f32 %v5762, %v5763
        %v5765 = vrot.slane %v5764, 2
        %v5766 = vadd.f32 %v5764, %v5765
        %v5767 = vrot.slane %v5766, 1
        %v5768 = vadd.f32 %v5766, %v5767
        %v5769 = vsel %vm4340, %v5254, 0.0
        %v5770 = vsel %vm4340, %v5256, 0.0
        %v5771 = vadd.f32 %v5769, %v5770
        %v5772 = vrot.slane %v5771, 4
        %v5773 = vadd.f32 %v5771, %v5772
        %v5774 = vrot.slane %v5773, 2
        %v5775 = vadd.f32 %v5773, %v5774
        %v5776 = vrot.slane %v5775, 1
        %v5777 = vadd.f32 %v5775, %v5776
        %v5778 = vsel %vm4340, %v5258, 0.0
        %v5779 = vsel %vm4340, %v5260, 0.0
        %v5780 = vadd.f32 %v5778, %v5779
        %v5781 = vrot.slane %v5780, 4
        %v5782 = vadd.f32 %v5780, %v5781
        %v5783 = vrot.slane %v5782, 2
        %v5784 = vadd.f32 %v5782, %v5783
        %v5785 = vrot.slane %v5784, 1
        %v5786 = vadd.f32 %v5784, %v5785
        %v5787 = vsel %vm4340, %v5262, 0.0
        %v5788 = vsel %vm4340, %v5264, 0.0
        %v5789 = vadd.f32 %v5787, %v5788
        %v5790 = vrot.slane %v5789, 4
        %v5791 = vadd.f32 %v5789, %v5790
        %v5792 = vrot.slane %v5791, 2
        %v5793 = vadd.f32 %v5791, %v5792
        %v5794 = vrot.slane %v5793, 1
        %v5795 = vadd.f32 %v5793, %v5794
        %v5796 = vsel %vm4340, %v5266, 0.0
        %v5797 = vsel %vm4340, %v5268, 0.0
        %v5798 = vadd.f32 %v5796, %v5797
        %v5799 = vrot.slane %v5798, 4
        %v5800 = vadd.f32 %v5798, %v5799
        %v5801 = vrot.slane %v5800, 2
        %v5802 = vadd.f32 %v5800, %v5801
        %v5803 = vrot.slane %v5802, 1
        %v5804 = vadd.f32 %v5802, %v5803
        %v5805 = vsel %vm4340, %v5270, 0.0
        %v5806 = vsel %vm4340, %v5272, 0.0
        %v5807 = vadd.f32 %v5805, %v5806
        %v5808 = vrot.slane %v5807, 4
        %v5809 = vadd.f32 %v5807, %v5808
        %v5810 = vrot.slane %v5809, 2
        %v5811 = vadd.f32 %v5809, %v5810
        %v5812 = vrot.slane %v5811, 1
        %v5813 = vadd.f32 %v5811, %v5812
        %v5814 = vsel %vm4340, %v5274, 0.0
        %v5815 = vsel %vm4340, %v5276, 0.0
        %v5816 = vadd.f32 %v5814, %v5815
        %v5817 = vrot.slane %v5816, 4
        %v5818 = vadd.f32 %v5816, %v5817
        %v5819 = vrot.slane %v5818, 2
        %v5820 = vadd.f32 %v5818, %v5819
        %v5821 = vrot.slane %v5820, 1
        %v5822 = vadd.f32 %v5820, %v5821
        %v5823 = vsel %vm4340, %v5278, 0.0
        %v5824 = vsel %vm4340, %v5280, 0.0
        %v5825 = vadd.f32 %v5823, %v5824
        %v5826 = vrot.slane %v5825, 4
        %v5827 = vadd.f32 %v5825, %v5826
        %v5828 = vrot.slane %v5827, 2
        %v5829 = vadd.f32 %v5827, %v5828
        %v5830 = vrot.slane %v5829, 1
        %v5831 = vadd.f32 %v5829, %v5830
        %v5832 = vsel %vm4340, %v5282, 0.0
        %v5833 = vsel %vm4340, %v5284, 0.0
        %v5834 = vadd.f32 %v5832, %v5833
        %v5835 = vrot.slane %v5834, 4
        %v5836 = vadd.f32 %v5834, %v5835
        %v5837 = vrot.slane %v5836, 2
        %v5838 = vadd.f32 %v5836, %v5837
        %v5839 = vrot.slane %v5838, 1
        %v5840 = vadd.f32 %v5838, %v5839
        %v5841 = vsel %vm4340, %v5286, 0.0
        %v5842 = vsel %vm4340, %v5288, 0.0
        %v5843 = vadd.f32 %v5841, %v5842
        %v5844 = vrot.slane %v5843, 4
        %v5845 = vadd.f32 %v5843, %v5844
        %v5846 = vrot.slane %v5845, 2
        %v5847 = vadd.f32 %v5845, %v5846
        %v5848 = vrot.slane %v5847, 1
        %v5849 = vadd.f32 %v5847, %v5848
        %v5850 = vsel %vm4340, %v5290, 0.0
        %v5851 = vsel %vm4340, %v5292, 0.0
        %v5852 = vadd.f32 %v5850, %v5851
        %v5853 = vrot.slane %v5852, 4
        %v5854 = vadd.f32 %v5852, %v5853
        %v5855 = vrot.slane %v5854, 2
        %v5856 = vadd.f32 %v5854, %v5855
        %v5857 = vrot.slane %v5856, 1
        %v5858 = vadd.f32 %v5856, %v5857
        %v5859 = vsel %vm4340, %v5294, 0.0
        %v5860 = vsel %vm4340, %v5296, 0.0
        %v5861 = vadd.f32 %v5859, %v5860
        %v5862 = vrot.slane %v5861, 4
        %v5863 = vadd.f32 %v5861, %v5862
        %v5864 = vrot.slane %v5863, 2
        %v5865 = vadd.f32 %v5863, %v5864
        %v5866 = vrot.slane %v5865, 1
        %v5867 = vadd.f32 %v5865, %v5866
        %v5868 = vsel %vm4340, %v5298, 0.0
        %v5869 = vsel %vm4340, %v5300, 0.0
        %v5870 = vadd.f32 %v5868, %v5869
        %v5871 = vrot.slane %v5870, 4
        %v5872 = vadd.f32 %v5870, %v5871
        %v5873 = vrot.slane %v5872, 2
        %v5874 = vadd.f32 %v5872, %v5873
        %v5875 = vrot.slane %v5874, 1
        %v5876 = vadd.f32 %v5874, %v5875
        %v5877 = vrcp.pop %v5309
        %v5878 = vrcp.pop %v5318
        %v5879 = vrcp.pop %v5327
        %v5880 = vrcp.pop %v5336
        %v5881 = vrcp.pop %v5345
        %v5882 = vrcp.pop %v5354
        %v5883 = vrcp.pop %v5363
        %v5884 = vrcp.pop %v5372
        %v5885 = vrcp.pop %v5381
        %v5886 = vrcp.pop %v5390
        %v5887 = vrcp.pop %v5399
        %v5888 = vrcp.pop %v5408
        %v5889 = vrcp.pop %v5417
        %v5890 = vrcp.pop %v5426
        %v5891 = vrcp.pop %v5435
        %v5892 = vrcp.pop %v5444
        %v5893 = vrcp.pop %v5453
        %v5894 = vrcp.pop %v5462
        %v5895 = vrcp.pop %v5471
        %v5896 = vrcp.pop %v5480
        %v5897 = vrcp.pop %v5489
        %v5898 = vrcp.pop %v5498
        %v5899 = vrcp.pop %v5507
        %v5900 = vrcp.pop %v5516
        %v5901 = vrcp.pop %v5525
        %v5902 = vrcp.pop %v5534
        %v5903 = vrcp.pop %v5543
        %v5904 = vrcp.pop %v5552
        %v5905 = vrcp.pop %v5561
        %v5906 = vrcp.pop %v5570
        %v5907 = vrcp.pop %v5579
        %v5908 = vrcp.pop %v5588
        %v5909 = vrcp.pop %v5597
        %v5910 = vrcp.pop %v5606
        %v5911 = vrcp.pop %v5615
        %v5912 = vrcp.pop %v5624
        %v5913 = vrcp.pop %v5633
        %v5914 = vrcp.pop %v5642
        %v5915 = vrcp.pop %v5651
        %v5916 = vrcp.pop %v5660
        %v5917 = vrcp.pop %v5669
        %v5918 = vrcp.pop %v5678
        %v5919 = vrcp.pop %v5687
        %v5920 = vrcp.pop %v5696
        %v5921 = vrcp.pop %v5705
        %v5922 = vrcp.pop %v5714
        %v5923 = vrcp.pop %v5723
        %v5924 = vrcp.pop %v5732
        %v5925 = vrcp.pop %v5741
        %v5926 = vrcp.pop %v5750
        %v5927 = vrcp.pop %v5759
        %v5928 = vrcp.pop %v5768
        %v5929 = vrcp.pop %v5777
        %v5930 = vrcp.pop %v5786
        %v5931 = vrcp.pop %v5795
        %v5932 = vrcp.pop %v5804
        %v5933 = vrcp.pop %v5813
        %v5934 = vrcp.pop %v5822
        %v5935 = vrcp.pop %v5831
        %v5936 = vrcp.pop %v5840
        %v5937 = vrcp.pop %v5849
        %v5938 = vrcp.pop %v5858
        %v5939 = vrcp.pop %v5867
        %v5940 = vrcp.pop %v5876
        %v5941 = vmul.f32 %v5046, %v5877
        %v5942 = vmul.f32 %v5048, %v5877
        %v5943 = vmul.f32 %v5050, %v5878
        %v5944 = vmul.f32 %v5052, %v5878
        %v5945 = vmul.f32 %v5054, %v5879
        %v5946 = vmul.f32 %v5056, %v5879
        %v5947 = vmul.f32 %v5058, %v5880
        %v5948 = vmul.f32 %v5060, %v5880
        %v5949 = vmul.f32 %v5062, %v5881
        %v5950 = vmul.f32 %v5064, %v5881
        %v5951 = vmul.f32 %v5066, %v5882
        %v5952 = vmul.f32 %v5068, %v5882
        %v5953 = vmul.f32 %v5070, %v5883
        %v5954 = vmul.f32 %v5072, %v5883
        %v5955 = vmul.f32 %v5074, %v5884
        %v5956 = vmul.f32 %v5076, %v5884
        %v5957 = vmul.f32 %v5078, %v5885
        %v5958 = vmul.f32 %v5080, %v5885
        %v5959 = vmul.f32 %v5082, %v5886
        %v5960 = vmul.f32 %v5084, %v5886
        %v5961 = vmul.f32 %v5086, %v5887
        %v5962 = vmul.f32 %v5088, %v5887
        %v5963 = vmul.f32 %v5090, %v5888
        %v5964 = vmul.f32 %v5092, %v5888
        %v5965 = vmul.f32 %v5094, %v5889
        %v5966 = vmul.f32 %v5096, %v5889
        %v5967 = vmul.f32 %v5098, %v5890
        %v5968 = vmul.f32 %v5100, %v5890
        %v5969 = vmul.f32 %v5102, %v5891
        %v5970 = vmul.f32 %v5104, %v5891
        %v5971 = vmul.f32 %v5106, %v5892
        %v5972 = vmul.f32 %v5108, %v5892
        %v5973 = vmul.f32 %v5110, %v5893
        %v5974 = vmul.f32 %v5112, %v5893
        %v5975 = vmul.f32 %v5114, %v5894
        %v5976 = vmul.f32 %v5116, %v5894
        %v5977 = vmul.f32 %v5118, %v5895
        %v5978 = vmul.f32 %v5120, %v5895
        %v5979 = vmul.f32 %v5122, %v5896
        %v5980 = vmul.f32 %v5124, %v5896
        %v5981 = vmul.f32 %v5126, %v5897
        %v5982 = vmul.f32 %v5128, %v5897
        %v5983 = vmul.f32 %v5130, %v5898
        %v5984 = vmul.f32 %v5132, %v5898
        %v5985 = vmul.f32 %v5134, %v5899
        %v5986 = vmul.f32 %v5136, %v5899
        %v5987 = vmul.f32 %v5138, %v5900
        %v5988 = vmul.f32 %v5140, %v5900
        %v5989 = vmul.f32 %v5142, %v5901
        %v5990 = vmul.f32 %v5144, %v5901
        %v5991 = vmul.f32 %v5146, %v5902
        %v5992 = vmul.f32 %v5148, %v5902
        %v5993 = vmul.f32 %v5150, %v5903
        %v5994 = vmul.f32 %v5152, %v5903
        %v5995 = vmul.f32 %v5154, %v5904
        %v5996 = vmul.f32 %v5156, %v5904
        %v5997 = vmul.f32 %v5158, %v5905
        %v5998 = vmul.f32 %v5160, %v5905
        %v5999 = vmul.f32 %v5162, %v5906
        %v6000 = vmul.f32 %v5164, %v5906
        %v6001 = vmul.f32 %v5166, %v5907
        %v6002 = vmul.f32 %v5168, %v5907
        %v6003 = vmul.f32 %v5170, %v5908
        %v6004 = vmul.f32 %v5172, %v5908
        %v6005 = vmul.f32 %v5174, %v5909
        %v6006 = vmul.f32 %v5176, %v5909
        %v6007 = vmul.f32 %v5178, %v5910
        %v6008 = vmul.f32 %v5180, %v5910
        %v6009 = vmul.f32 %v5182, %v5911
        %v6010 = vmul.f32 %v5184, %v5911
        %v6011 = vmul.f32 %v5186, %v5912
        %v6012 = vmul.f32 %v5188, %v5912
        %v6013 = vmul.f32 %v5190, %v5913
        %v6014 = vmul.f32 %v5192, %v5913
        %v6015 = vmul.f32 %v5194, %v5914
        %v6016 = vmul.f32 %v5196, %v5914
        %v6017 = vmul.f32 %v5198, %v5915
        %v6018 = vmul.f32 %v5200, %v5915
        %v6019 = vmul.f32 %v5202, %v5916
        %v6020 = vmul.f32 %v5204, %v5916
        %v6021 = vmul.f32 %v5206, %v5917
        %v6022 = vmul.f32 %v5208, %v5917
        %v6023 = vmul.f32 %v5210, %v5918
        %v6024 = vmul.f32 %v5212, %v5918
        %v6025 = vmul.f32 %v5214, %v5919
        %v6026 = vmul.f32 %v5216, %v5919
        %v6027 = vmul.f32 %v5218, %v5920
        %v6028 = vmul.f32 %v5220, %v5920
        %v6029 = vmul.f32 %v5222, %v5921
        %v6030 = vmul.f32 %v5224, %v5921
        %v6031 = vmul.f32 %v5226, %v5922
        %v6032 = vmul.f32 %v5228, %v5922
        %v6033 = vmul.f32 %v5230, %v5923
        %v6034 = vmul.f32 %v5232, %v5923
        %v6035 = vmul.f32 %v5234, %v5924
        %v6036 = vmul.f32 %v5236, %v5924
        %v6037 = vmul.f32 %v5238, %v5925
        %v6038 = vmul.f32 %v5240, %v5925
        %v6039 = vmul.f32 %v5242, %v5926
        %v6040 = vmul.f32 %v5244, %v5926
        %v6041 = vmul.f32 %v5246, %v5927
        %v6042 = vmul.f32 %v5248, %v5927
        %v6043 = vmul.f32 %v5250, %v5928
        %v6044 = vmul.f32 %v5252, %v5928
        %v6045 = vmul.f32 %v5254, %v5929
        %v6046 = vmul.f32 %v5256, %v5929
        %v6047 = vmul.f32 %v5258, %v5930
        %v6048 = vmul.f32 %v5260, %v5930
        %v6049 = vmul.f32 %v5262, %v5931
        %v6050 = vmul.f32 %v5264, %v5931
        %v6051 = vmul.f32 %v5266, %v5932
        %v6052 = vmul.f32 %v5268, %v5932
        %v6053 = vmul.f32 %v5270, %v5933
        %v6054 = vmul.f32 %v5272, %v5933
        %v6055 = vmul.f32 %v5274, %v5934
        %v6056 = vmul.f32 %v5276, %v5934
        %v6057 = vmul.f32 %v5278, %v5935
        %v6058 = vmul.f32 %v5280, %v5935
        %v6059 = vmul.f32 %v5282, %v5936
        %v6060 = vmul.f32 %v5284, %v5936
        %v6061 = vmul.f32 %v5286, %v5937
        %v6062 = vmul.f32 %v5288, %v5937
        %v6063 = vmul.f32 %v5290, %v5938
        %v6064 = vmul.f32 %v5292, %v5938
        %v6065 = vmul.f32 %v5294, %v5939
        %v6066 = vmul.f32 %v5296, %v5939
        %v6067 = vmul.f32 %v5298, %v5940
        %v6068 = vmul.f32 %v5300, %v5940
        %v6069 = vld [vmem:[%s4] sm:$0xff]
        %v6071 = vsel %vm4340, %v5941, 0
        %v6074 = vsel %vm4340, %v5942, 0
        %v6077 = vsel %vm4340, %v5943, 0
        %v6080 = vsel %vm4340, %v5944, 0
        %v6083 = vsel %vm4340, %v5945, 0
        %v6086 = vsel %vm4340, %v5946, 0
        %v6089 = vsel %vm4340, %v5947, 0
        %v6092 = vsel %vm4340, %v5948, 0
        %v6095 = vsel %vm4340, %v5949, 0
        %v6098 = vsel %vm4340, %v5950, 0
        %v6101 = vsel %vm4340, %v5951, 0
        %v6104 = vsel %vm4340, %v5952, 0
        %v6107 = vsel %vm4340, %v5953, 0
        %v6110 = vsel %vm4340, %v5954, 0
        %v6113 = vsel %vm4340, %v5955, 0
        %v6116 = vsel %vm4340, %v5956, 0
        %v6119 = vsel %vm4340, %v5957, 0
        %v6122 = vsel %vm4340, %v5958, 0
        %v6125 = vsel %vm4340, %v5959, 0
        %v6128 = vsel %vm4340, %v5960, 0
        %v6131 = vsel %vm4340, %v5961, 0
        %v6134 = vsel %vm4340, %v5962, 0
        %v6137 = vsel %vm4340, %v5963, 0
        %v6140 = vsel %vm4340, %v5964, 0
        %v6143 = vsel %vm4340, %v5965, 0
        %v6146 = vsel %vm4340, %v5966, 0
        %v6149 = vsel %vm4340, %v5967, 0
        %v6152 = vsel %vm4340, %v5968, 0
        %v6155 = vsel %vm4340, %v5969, 0
        %v6158 = vsel %vm4340, %v5970, 0
        %v6161 = vsel %vm4340, %v5971, 0
        %v6164 = vsel %vm4340, %v5972, 0
        %v6167 = vsel %vm4340, %v5973, 0
        %v6170 = vsel %vm4340, %v5974, 0
        %v6173 = vsel %vm4340, %v5975, 0
        %v6176 = vsel %vm4340, %v5976, 0
        %v6179 = vsel %vm4340, %v5977, 0
        %v6182 = vsel %vm4340, %v5978, 0
        %v6185 = vsel %vm4340, %v5979, 0
        %v6188 = vsel %vm4340, %v5980, 0
        %v6191 = vsel %vm4340, %v5981, 0
        %v6194 = vsel %vm4340, %v5982, 0
        %v6197 = vsel %vm4340, %v5983, 0
        %v6200 = vsel %vm4340, %v5984, 0
        %v6203 = vsel %vm4340, %v5985, 0
        %v6206 = vsel %vm4340, %v5986, 0
        %v6209 = vsel %vm4340, %v5987, 0
        %v6212 = vsel %vm4340, %v5988, 0
        %v6215 = vsel %vm4340, %v5989, 0
        %v6218 = vsel %vm4340, %v5990, 0
        %v6221 = vsel %vm4340, %v5991, 0
        %v6224 = vsel %vm4340, %v5992, 0
        %v6227 = vsel %vm4340, %v5993, 0
        %v6230 = vsel %vm4340, %v5994, 0
        %v6233 = vsel %vm4340, %v5995, 0
        %v6236 = vsel %vm4340, %v5996, 0
        %v6239 = vsel %vm4340, %v5997, 0
        %v6242 = vsel %vm4340, %v5998, 0
        %v6245 = vsel %vm4340, %v5999, 0
        %v6248 = vsel %vm4340, %v6000, 0
        %v6251 = vsel %vm4340, %v6001, 0
        %v6254 = vsel %vm4340, %v6002, 0
        %v6257 = vsel %vm4340, %v6003, 0
        %v6260 = vsel %vm4340, %v6004, 0
        %v6263 = vsel %vm4340, %v6005, 0
        %v6266 = vsel %vm4340, %v6006, 0
        %v6269 = vsel %vm4340, %v6007, 0
        %v6272 = vsel %vm4340, %v6008, 0
        %v6275 = vsel %vm4340, %v6009, 0
        %v6278 = vsel %vm4340, %v6010, 0
        %v6281 = vsel %vm4340, %v6011, 0
        %v6284 = vsel %vm4340, %v6012, 0
        %v6287 = vsel %vm4340, %v6013, 0
        %v6290 = vsel %vm4340, %v6014, 0
        %v6293 = vsel %vm4340, %v6015, 0
        %v6296 = vsel %vm4340, %v6016, 0
        %v6299 = vsel %vm4340, %v6017, 0
        %v6302 = vsel %vm4340, %v6018, 0
        %v6305 = vsel %vm4340, %v6019, 0
        %v6308 = vsel %vm4340, %v6020, 0
        %v6311 = vsel %vm4340, %v6021, 0
        %v6314 = vsel %vm4340, %v6022, 0
        %v6317 = vsel %vm4340, %v6023, 0
        %v6320 = vsel %vm4340, %v6024, 0
        %v6323 = vsel %vm4340, %v6025, 0
        %v6326 = vsel %vm4340, %v6026, 0
        %v6329 = vsel %vm4340, %v6027, 0
        %v6332 = vsel %vm4340, %v6028, 0
        %v6335 = vsel %vm4340, %v6029, 0
        %v6338 = vsel %vm4340, %v6030, 0
        %v6341 = vsel %vm4340, %v6031, 0
        %v6344 = vsel %vm4340, %v6032, 0
        %v6347 = vsel %vm4340, %v6033, 0
        %v6350 = vsel %vm4340, %v6034, 0
        %v6353 = vsel %vm4340, %v6035, 0
        %v6356 = vsel %vm4340, %v6036, 0
        %v6359 = vsel %vm4340, %v6037, 0
        %v6362 = vsel %vm4340, %v6038, 0
        %v6365 = vsel %vm4340, %v6039, 0
        %v6368 = vsel %vm4340, %v6040, 0
        %v6371 = vsel %vm4340, %v6041, 0
        %v6374 = vsel %vm4340, %v6042, 0
        %v6377 = vsel %vm4340, %v6043, 0
        %v6380 = vsel %vm4340, %v6044, 0
        %v6383 = vsel %vm4340, %v6045, 0
        %v6386 = vsel %vm4340, %v6046, 0
        %v6389 = vsel %vm4340, %v6047, 0
        %v6392 = vsel %vm4340, %v6048, 0
        %v6395 = vsel %vm4340, %v6049, 0
        %v6398 = vsel %vm4340, %v6050, 0
        %v6401 = vsel %vm4340, %v6051, 0
        %v6404 = vsel %vm4340, %v6052, 0
        %v6407 = vsel %vm4340, %v6053, 0
        %v6410 = vsel %vm4340, %v6054, 0
        %v6413 = vsel %vm4340, %v6055, 0
        %v6416 = vsel %vm4340, %v6056, 0
        %v6419 = vsel %vm4340, %v6057, 0
        %v6422 = vsel %vm4340, %v6058, 0
        %v6425 = vsel %vm4340, %v6059, 0
        %v6428 = vsel %vm4340, %v6060, 0
        %v6431 = vsel %vm4340, %v6061, 0
        %v6434 = vsel %vm4340, %v6062, 0
        %v6437 = vsel %vm4340, %v6063, 0
        %v6440 = vsel %vm4340, %v6064, 0
        %v6443 = vsel %vm4340, %v6065, 0
        %v6446 = vsel %vm4340, %v6066, 0
        %v6449 = vsel %vm4340, %v6067, 0
        %v6452 = vsel %vm4340, %v6068, 0
        %6454 = vmatpush.msra.mxu0 0.0
        %6455 = vmatpush.msra.mxu0 0.0
        %6456 = vmatpush.msra.mxu0 0.0
        %6457 = vmatpush.msra.mxu0 0.0
        %6458 = vmatpush.msra.mxu0 0.0
        %6459 = vmatpush.msra.mxu0 0.0
        %6460 = vmatpush.msra.mxu0 0.0
        %6461 = vmatpush.msra.mxu0 0.0
        %6462 = vmatpush.msra.mxu0 0.0
        %6463 = vmatpush.msra.mxu0 0.0
        %6464 = vmatpush.msra.mxu0 0.0
        %6465 = vmatpush.msra.mxu0 0.0
        %6466 = vmatpush.msra.mxu0 0.0
        %6467 = vmatpush.msra.mxu0 0.0
        %6468 = vmatpush.msra.mxu0 0.0
        %6469 = vmatpush.msra.mxu0 %v6069
        %6470 = vmatmul.f32.gmra.mxu0 %v6071
        %v6471 = vpop.f32.mrf.mxu0
        %v6472 = vadd.f32 0.0, %v6471
        %6473 = vmatmul.f32.gmra.mxu0 %v6074
        %v6474 = vpop.f32.mrf.mxu0
        %v6475 = vadd.f32 0.0, %v6474
        %6476 = vmatmul.f32.gmra.mxu0 %v6077
        %v6477 = vpop.f32.mrf.mxu0
        %v6478 = vadd.f32 0.0, %v6477
        %6479 = vmatmul.f32.gmra.mxu0 %v6080
        %v6480 = vpop.f32.mrf.mxu0
        %v6481 = vadd.f32 0.0, %v6480
        %6482 = vmatmul.f32.gmra.mxu0 %v6083
        %v6483 = vpop.f32.mrf.mxu0
        %v6484 = vadd.f32 0.0, %v6483
        %6485 = vmatmul.f32.gmra.mxu0 %v6086
        %v6486 = vpop.f32.mrf.mxu0
        %v6487 = vadd.f32 0.0, %v6486
        %6488 = vmatmul.f32.gmra.mxu0 %v6089
        %v6489 = vpop.f32.mrf.mxu0
        %v6490 = vadd.f32 0.0, %v6489
        %6491 = vmatmul.f32.gmra.mxu0 %v6092
        %v6492 = vpop.f32.mrf.mxu0
        %v6493 = vadd.f32 0.0, %v6492
        %6494 = vmatmul.f32.gmra.mxu0 %v6095
        %v6495 = vpop.f32.mrf.mxu0
        %v6496 = vadd.f32 0.0, %v6495
        %6497 = vmatmul.f32.gmra.mxu0 %v6098
        %v6498 = vpop.f32.mrf.mxu0
        %v6499 = vadd.f32 0.0, %v6498
        %6500 = vmatmul.f32.gmra.mxu0 %v6101
        %v6501 = vpop.f32.mrf.mxu0
        %v6502 = vadd.f32 0.0, %v6501
        %6503 = vmatmul.f32.gmra.mxu0 %v6104
        %v6504 = vpop.f32.mrf.mxu0
        %v6505 = vadd.f32 0.0, %v6504
        %6506 = vmatmul.f32.gmra.mxu0 %v6107
        %v6507 = vpop.f32.mrf.mxu0
        %v6508 = vadd.f32 0.0, %v6507
        %6509 = vmatmul.f32.gmra.mxu0 %v6110
        %v6510 = vpop.f32.mrf.mxu0
        %v6511 = vadd.f32 0.0, %v6510
        %6512 = vmatmul.f32.gmra.mxu0 %v6113
        %v6513 = vpop.f32.mrf.mxu0
        %v6514 = vadd.f32 0.0, %v6513
        %6515 = vmatmul.f32.gmra.mxu0 %v6116
        %v6516 = vpop.f32.mrf.mxu0
        %v6517 = vadd.f32 0.0, %v6516
        %6518 = vmatmul.f32.gmra.mxu0 %v6119
        %v6519 = vpop.f32.mrf.mxu0
        %v6520 = vadd.f32 0.0, %v6519
        %6521 = vmatmul.f32.gmra.mxu0 %v6122
        %v6522 = vpop.f32.mrf.mxu0
        %v6523 = vadd.f32 0.0, %v6522
        %6524 = vmatmul.f32.gmra.mxu0 %v6125
        %v6525 = vpop.f32.mrf.mxu0
        %v6526 = vadd.f32 0.0, %v6525
        %6527 = vmatmul.f32.gmra.mxu0 %v6128
        %v6528 = vpop.f32.mrf.mxu0
        %v6529 = vadd.f32 0.0, %v6528
        %6530 = vmatmul.f32.gmra.mxu0 %v6131
        %v6531 = vpop.f32.mrf.mxu0
        %v6532 = vadd.f32 0.0, %v6531
        %6533 = vmatmul.f32.gmra.mxu0 %v6134
        %v6534 = vpop.f32.mrf.mxu0
        %v6535 = vadd.f32 0.0, %v6534
        %6536 = vmatmul.f32.gmra.mxu0 %v6137
        %v6537 = vpop.f32.mrf.mxu0
        %v6538 = vadd.f32 0.0, %v6537
        %6539 = vmatmul.f32.gmra.mxu0 %v6140
        %v6540 = vpop.f32.mrf.mxu0
        %v6541 = vadd.f32 0.0, %v6540
        %6542 = vmatmul.f32.gmra.mxu0 %v6143
        %v6543 = vpop.f32.mrf.mxu0
        %v6544 = vadd.f32 0.0, %v6543
        %6545 = vmatmul.f32.gmra.mxu0 %v6146
        %v6546 = vpop.f32.mrf.mxu0
        %v6547 = vadd.f32 0.0, %v6546
        %6548 = vmatmul.f32.gmra.mxu0 %v6149
        %v6549 = vpop.f32.mrf.mxu0
        %v6550 = vadd.f32 0.0, %v6549
        %6551 = vmatmul.f32.gmra.mxu0 %v6152
        %v6552 = vpop.f32.mrf.mxu0
        %v6553 = vadd.f32 0.0, %v6552
        %6554 = vmatmul.f32.gmra.mxu0 %v6155
        %v6555 = vpop.f32.mrf.mxu0
        %v6556 = vadd.f32 0.0, %v6555
        %6557 = vmatmul.f32.gmra.mxu0 %v6158
        %v6558 = vpop.f32.mrf.mxu0
        %v6559 = vadd.f32 0.0, %v6558
        %6560 = vmatmul.f32.gmra.mxu0 %v6161
        %v6561 = vpop.f32.mrf.mxu0
        %v6562 = vadd.f32 0.0, %v6561
        %6563 = vmatmul.f32.gmra.mxu0 %v6164
        %v6564 = vpop.f32.mrf.mxu0
        %v6565 = vadd.f32 0.0, %v6564
        %6566 = vmatmul.f32.gmra.mxu0 %v6167
        %v6567 = vpop.f32.mrf.mxu0
        %v6568 = vadd.f32 0.0, %v6567
        %6569 = vmatmul.f32.gmra.mxu0 %v6170
        %v6570 = vpop.f32.mrf.mxu0
        %v6571 = vadd.f32 0.0, %v6570
        %6572 = vmatmul.f32.gmra.mxu0 %v6173
        %v6573 = vpop.f32.mrf.mxu0
        %v6574 = vadd.f32 0.0, %v6573
        %6575 = vmatmul.f32.gmra.mxu0 %v6176
        %v6576 = vpop.f32.mrf.mxu0
        %v6577 = vadd.f32 0.0, %v6576
        %6578 = vmatmul.f32.gmra.mxu0 %v6179
        %v6579 = vpop.f32.mrf.mxu0
        %v6580 = vadd.f32 0.0, %v6579
        %6581 = vmatmul.f32.gmra.mxu0 %v6182
        %v6582 = vpop.f32.mrf.mxu0
        %v6583 = vadd.f32 0.0, %v6582
        %6584 = vmatmul.f32.gmra.mxu0 %v6185
        %v6585 = vpop.f32.mrf.mxu0
        %v6586 = vadd.f32 0.0, %v6585
        %6587 = vmatmul.f32.gmra.mxu0 %v6188
        %v6588 = vpop.f32.mrf.mxu0
        %v6589 = vadd.f32 0.0, %v6588
        %6590 = vmatmul.f32.gmra.mxu0 %v6191
        %v6591 = vpop.f32.mrf.mxu0
        %v6592 = vadd.f32 0.0, %v6591
        %6593 = vmatmul.f32.gmra.mxu0 %v6194
        %v6594 = vpop.f32.mrf.mxu0
        %v6595 = vadd.f32 0.0, %v6594
        %6596 = vmatmul.f32.gmra.mxu0 %v6197
        %v6597 = vpop.f32.mrf.mxu0
        %v6598 = vadd.f32 0.0, %v6597
        %6599 = vmatmul.f32.gmra.mxu0 %v6200
        %v6600 = vpop.f32.mrf.mxu0
        %v6601 = vadd.f32 0.0, %v6600
        %6602 = vmatmul.f32.gmra.mxu0 %v6203
        %v6603 = vpop.f32.mrf.mxu0
        %v6604 = vadd.f32 0.0, %v6603
        %6605 = vmatmul.f32.gmra.mxu0 %v6206
        %v6606 = vpop.f32.mrf.mxu0
        %v6607 = vadd.f32 0.0, %v6606
        %6608 = vmatmul.f32.gmra.mxu0 %v6209
        %v6609 = vpop.f32.mrf.mxu0
        %v6610 = vadd.f32 0.0, %v6609
        %6611 = vmatmul.f32.gmra.mxu0 %v6212
        %v6612 = vpop.f32.mrf.mxu0
        %v6613 = vadd.f32 0.0, %v6612
        %6614 = vmatmul.f32.gmra.mxu0 %v6215
        %v6615 = vpop.f32.mrf.mxu0
        %v6616 = vadd.f32 0.0, %v6615
        %6617 = vmatmul.f32.gmra.mxu0 %v6218
        %v6618 = vpop.f32.mrf.mxu0
        %v6619 = vadd.f32 0.0, %v6618
        %6620 = vmatmul.f32.gmra.mxu0 %v6221
        %v6621 = vpop.f32.mrf.mxu0
        %v6622 = vadd.f32 0.0, %v6621
        %6623 = vmatmul.f32.gmra.mxu0 %v6224
        %v6624 = vpop.f32.mrf.mxu0
        %v6625 = vadd.f32 0.0, %v6624
        %6626 = vmatmul.f32.gmra.mxu0 %v6227
        %v6627 = vpop.f32.mrf.mxu0
        %v6628 = vadd.f32 0.0, %v6627
        %6629 = vmatmul.f32.gmra.mxu0 %v6230
        %v6630 = vpop.f32.mrf.mxu0
        %v6631 = vadd.f32 0.0, %v6630
        %6632 = vmatmul.f32.gmra.mxu0 %v6233
        %v6633 = vpop.f32.mrf.mxu0
        %v6634 = vadd.f32 0.0, %v6633
        %6635 = vmatmul.f32.gmra.mxu0 %v6236
        %v6636 = vpop.f32.mrf.mxu0
        %v6637 = vadd.f32 0.0, %v6636
        %6638 = vmatmul.f32.gmra.mxu0 %v6239
        %v6639 = vpop.f32.mrf.mxu0
        %v6640 = vadd.f32 0.0, %v6639
        %6641 = vmatmul.f32.gmra.mxu0 %v6242
        %v6642 = vpop.f32.mrf.mxu0
        %v6643 = vadd.f32 0.0, %v6642
        %6644 = vmatmul.f32.gmra.mxu0 %v6245
        %v6645 = vpop.f32.mrf.mxu0
        %v6646 = vadd.f32 0.0, %v6645
        %6647 = vmatmul.f32.gmra.mxu0 %v6248
        %v6648 = vpop.f32.mrf.mxu0
        %v6649 = vadd.f32 0.0, %v6648
        %6650 = vmatmul.f32.gmra.mxu0 %v6251
        %v6651 = vpop.f32.mrf.mxu0
        %v6652 = vadd.f32 0.0, %v6651
        %6653 = vmatmul.f32.gmra.mxu0 %v6254
        %v6654 = vpop.f32.mrf.mxu0
        %v6655 = vadd.f32 0.0, %v6654
        %6656 = vmatmul.f32.gmra.mxu0 %v6257
        %v6657 = vpop.f32.mrf.mxu0
        %v6658 = vadd.f32 0.0, %v6657
        %6659 = vmatmul.f32.gmra.mxu0 %v6260
        %v6660 = vpop.f32.mrf.mxu0
        %v6661 = vadd.f32 0.0, %v6660
        %6662 = vmatmul.f32.gmra.mxu0 %v6263
        %v6663 = vpop.f32.mrf.mxu0
        %v6664 = vadd.f32 0.0, %v6663
        %6665 = vmatmul.f32.gmra.mxu0 %v6266
        %v6666 = vpop.f32.mrf.mxu0
        %v6667 = vadd.f32 0.0, %v6666
        %6668 = vmatmul.f32.gmra.mxu0 %v6269
        %v6669 = vpop.f32.mrf.mxu0
        %v6670 = vadd.f32 0.0, %v6669
        %6671 = vmatmul.f32.gmra.mxu0 %v6272
        %v6672 = vpop.f32.mrf.mxu0
        %v6673 = vadd.f32 0.0, %v6672
        %6674 = vmatmul.f32.gmra.mxu0 %v6275
        %v6675 = vpop.f32.mrf.mxu0
        %v6676 = vadd.f32 0.0, %v6675
        %6677 = vmatmul.f32.gmra.mxu0 %v6278
        %v6678 = vpop.f32.mrf.mxu0
        %v6679 = vadd.f32 0.0, %v6678
        %6680 = vmatmul.f32.gmra.mxu0 %v6281
        %v6681 = vpop.f32.mrf.mxu0
        %v6682 = vadd.f32 0.0, %v6681
        %6683 = vmatmul.f32.gmra.mxu0 %v6284
        %v6684 = vpop.f32.mrf.mxu0
        %v6685 = vadd.f32 0.0, %v6684
        %6686 = vmatmul.f32.gmra.mxu0 %v6287
        %v6687 = vpop.f32.mrf.mxu0
        %v6688 = vadd.f32 0.0, %v6687
        %6689 = vmatmul.f32.gmra.mxu0 %v6290
        %v6690 = vpop.f32.mrf.mxu0
        %v6691 = vadd.f32 0.0, %v6690
        %6692 = vmatmul.f32.gmra.mxu0 %v6293
        %v6693 = vpop.f32.mrf.mxu0
        %v6694 = vadd.f32 0.0, %v6693
        %6695 = vmatmul.f32.gmra.mxu0 %v6296
        %v6696 = vpop.f32.mrf.mxu0
        %v6697 = vadd.f32 0.0, %v6696
        %6698 = vmatmul.f32.gmra.mxu0 %v6299
        %v6699 = vpop.f32.mrf.mxu0
        %v6700 = vadd.f32 0.0, %v6699
        %6701 = vmatmul.f32.gmra.mxu0 %v6302
        %v6702 = vpop.f32.mrf.mxu0
        %v6703 = vadd.f32 0.0, %v6702
        %6704 = vmatmul.f32.gmra.mxu0 %v6305
        %v6705 = vpop.f32.mrf.mxu0
        %v6706 = vadd.f32 0.0, %v6705
        %6707 = vmatmul.f32.gmra.mxu0 %v6308
        %v6708 = vpop.f32.mrf.mxu0
        %v6709 = vadd.f32 0.0, %v6708
        %6710 = vmatmul.f32.gmra.mxu0 %v6311
        %v6711 = vpop.f32.mrf.mxu0
        %v6712 = vadd.f32 0.0, %v6711
        %6713 = vmatmul.f32.gmra.mxu0 %v6314
        %v6714 = vpop.f32.mrf.mxu0
        %v6715 = vadd.f32 0.0, %v6714
        %6716 = vmatmul.f32.gmra.mxu0 %v6317
        %v6717 = vpop.f32.mrf.mxu0
        %v6718 = vadd.f32 0.0, %v6717
        %6719 = vmatmul.f32.gmra.mxu0 %v6320
        %v6720 = vpop.f32.mrf.mxu0
        %v6721 = vadd.f32 0.0, %v6720
        %6722 = vmatmul.f32.gmra.mxu0 %v6323
        %v6723 = vpop.f32.mrf.mxu0
        %v6724 = vadd.f32 0.0, %v6723
        %6725 = vmatmul.f32.gmra.mxu0 %v6326
        %v6726 = vpop.f32.mrf.mxu0
        %v6727 = vadd.f32 0.0, %v6726
        %6728 = vmatmul.f32.gmra.mxu0 %v6329
        %v6729 = vpop.f32.mrf.mxu0
        %v6730 = vadd.f32 0.0, %v6729
        %6731 = vmatmul.f32.gmra.mxu0 %v6332
        %v6732 = vpop.f32.mrf.mxu0
        %v6733 = vadd.f32 0.0, %v6732
        %6734 = vmatmul.f32.gmra.mxu0 %v6335
        %v6735 = vpop.f32.mrf.mxu0
        %v6736 = vadd.f32 0.0, %v6735
        %6737 = vmatmul.f32.gmra.mxu0 %v6338
        %v6738 = vpop.f32.mrf.mxu0
        %v6739 = vadd.f32 0.0, %v6738
        %6740 = vmatmul.f32.gmra.mxu0 %v6341
        %v6741 = vpop.f32.mrf.mxu0
        %v6742 = vadd.f32 0.0, %v6741
        %6743 = vmatmul.f32.gmra.mxu0 %v6344
        %v6744 = vpop.f32.mrf.mxu0
        %v6745 = vadd.f32 0.0, %v6744
        %6746 = vmatmul.f32.gmra.mxu0 %v6347
        %v6747 = vpop.f32.mrf.mxu0
        %v6748 = vadd.f32 0.0, %v6747
        %6749 = vmatmul.f32.gmra.mxu0 %v6350
        %v6750 = vpop.f32.mrf.mxu0
        %v6751 = vadd.f32 0.0, %v6750
        %6752 = vmatmul.f32.gmra.mxu0 %v6353
        %v6753 = vpop.f32.mrf.mxu0
        %v6754 = vadd.f32 0.0, %v6753
        %6755 = vmatmul.f32.gmra.mxu0 %v6356
        %v6756 = vpop.f32.mrf.mxu0
        %v6757 = vadd.f32 0.0, %v6756
        %6758 = vmatmul.f32.gmra.mxu0 %v6359
        %v6759 = vpop.f32.mrf.mxu0
        %v6760 = vadd.f32 0.0, %v6759
        %6761 = vmatmul.f32.gmra.mxu0 %v6362
        %v6762 = vpop.f32.mrf.mxu0
        %v6763 = vadd.f32 0.0, %v6762
        %6764 = vmatmul.f32.gmra.mxu0 %v6365
        %v6765 = vpop.f32.mrf.mxu0
        %v6766 = vadd.f32 0.0, %v6765
        %6767 = vmatmul.f32.gmra.mxu0 %v6368
        %v6768 = vpop.f32.mrf.mxu0
        %v6769 = vadd.f32 0.0, %v6768
        %6770 = vmatmul.f32.gmra.mxu0 %v6371
        %v6771 = vpop.f32.mrf.mxu0
        %v6772 = vadd.f32 0.0, %v6771
        %6773 = vmatmul.f32.gmra.mxu0 %v6374
        %v6774 = vpop.f32.mrf.mxu0
        %v6775 = vadd.f32 0.0, %v6774
        %6776 = vmatmul.f32.gmra.mxu0 %v6377
        %v6777 = vpop.f32.mrf.mxu0
        %v6778 = vadd.f32 0.0, %v6777
        %6779 = vmatmul.f32.gmra.mxu0 %v6380
        %v6780 = vpop.f32.mrf.mxu0
        %v6781 = vadd.f32 0.0, %v6780
        %6782 = vmatmul.f32.gmra.mxu0 %v6383
        %v6783 = vpop.f32.mrf.mxu0
        %v6784 = vadd.f32 0.0, %v6783
        %6785 = vmatmul.f32.gmra.mxu0 %v6386
        %v6786 = vpop.f32.mrf.mxu0
        %v6787 = vadd.f32 0.0, %v6786
        %6788 = vmatmul.f32.gmra.mxu0 %v6389
        %v6789 = vpop.f32.mrf.mxu0
        %v6790 = vadd.f32 0.0, %v6789
        %6791 = vmatmul.f32.gmra.mxu0 %v6392
        %v6792 = vpop.f32.mrf.mxu0
        %v6793 = vadd.f32 0.0, %v6792
        %6794 = vmatmul.f32.gmra.mxu0 %v6395
        %v6795 = vpop.f32.mrf.mxu0
        %v6796 = vadd.f32 0.0, %v6795
        %6797 = vmatmul.f32.gmra.mxu0 %v6398
        %v6798 = vpop.f32.mrf.mxu0
        %v6799 = vadd.f32 0.0, %v6798
        %6800 = vmatmul.f32.gmra.mxu0 %v6401
        %v6801 = vpop.f32.mrf.mxu0
        %v6802 = vadd.f32 0.0, %v6801
        %6803 = vmatmul.f32.gmra.mxu0 %v6404
        %v6804 = vpop.f32.mrf.mxu0
        %v6805 = vadd.f32 0.0, %v6804
        %6806 = vmatmul.f32.gmra.mxu0 %v6407
        %v6807 = vpop.f32.mrf.mxu0
        %v6808 = vadd.f32 0.0, %v6807
        %6809 = vmatmul.f32.gmra.mxu0 %v6410
        %v6810 = vpop.f32.mrf.mxu0
        %v6811 = vadd.f32 0.0, %v6810
        %6812 = vmatmul.f32.gmra.mxu0 %v6413
        %v6813 = vpop.f32.mrf.mxu0
        %v6814 = vadd.f32 0.0, %v6813
        %6815 = vmatmul.f32.gmra.mxu0 %v6416
        %v6816 = vpop.f32.mrf.mxu0
        %v6817 = vadd.f32 0.0, %v6816
        %6818 = vmatmul.f32.gmra.mxu0 %v6419
        %v6819 = vpop.f32.mrf.mxu0
        %v6820 = vadd.f32 0.0, %v6819
        %6821 = vmatmul.f32.gmra.mxu0 %v6422
        %v6822 = vpop.f32.mrf.mxu0
        %v6823 = vadd.f32 0.0, %v6822
        %6824 = vmatmul.f32.gmra.mxu0 %v6425
        %v6825 = vpop.f32.mrf.mxu0
        %v6826 = vadd.f32 0.0, %v6825
        %6827 = vmatmul.f32.gmra.mxu0 %v6428
        %v6828 = vpop.f32.mrf.mxu0
        %v6829 = vadd.f32 0.0, %v6828
        %6830 = vmatmul.f32.gmra.mxu0 %v6431
        %v6831 = vpop.f32.mrf.mxu0
        %v6832 = vadd.f32 0.0, %v6831
        %6833 = vmatmul.f32.gmra.mxu0 %v6434
        %v6834 = vpop.f32.mrf.mxu0
        %v6835 = vadd.f32 0.0, %v6834
        %6836 = vmatmul.f32.gmra.mxu0 %v6437
        %v6837 = vpop.f32.mrf.mxu0
        %v6838 = vadd.f32 0.0, %v6837
        %6839 = vmatmul.f32.gmra.mxu0 %v6440
        %v6840 = vpop.f32.mrf.mxu0
        %v6841 = vadd.f32 0.0, %v6840
        %6842 = vmatmul.f32.gmra.mxu0 %v6443
        %v6843 = vpop.f32.mrf.mxu0
        %v6844 = vadd.f32 0.0, %v6843
        %6845 = vmatmul.f32.gmra.mxu0 %v6446
        %v6846 = vpop.f32.mrf.mxu0
        %v6847 = vadd.f32 0.0, %v6846
        %6848 = vmatmul.f32.gmra.mxu0 %v6449
        %v6849 = vpop.f32.mrf.mxu0
        %v6850 = vadd.f32 0.0, %v6849
        %6851 = vmatmul.f32.gmra.mxu0 %v6452
        %v6852 = vpop.f32.mrf.mxu0
        %v6853 = vadd.f32 0.0, %v6852
        %6854 = vdwg.mxu0
        %v6855 = vmul.f32 %v6472, %v1962
        %v6856 = vmul.f32 %v6475, %v1964
        %v6857 = vmul.f32 %v6478, %v1967
        %v6858 = vmul.f32 %v6481, %v1969
        %v6859 = vmul.f32 %v6484, %v1972
        %v6860 = vmul.f32 %v6487, %v1974
        %v6861 = vmul.f32 %v6490, %v1977
        %v6862 = vmul.f32 %v6493, %v1979
        %v6863 = vmul.f32 %v6496, %v1982
        %v6864 = vmul.f32 %v6499, %v1984
        %v6865 = vmul.f32 %v6502, %v1987
        %v6866 = vmul.f32 %v6505, %v1989
        %v6867 = vmul.f32 %v6508, %v1992
        %v6868 = vmul.f32 %v6511, %v1994
        %v6869 = vmul.f32 %v6514, %v1997
        %v6870 = vmul.f32 %v6517, %v1999
        %v6871 = vmul.f32 %v6520, %v2002
        %v6872 = vmul.f32 %v6523, %v2004
        %v6873 = vmul.f32 %v6526, %v2007
        %v6874 = vmul.f32 %v6529, %v2009
        %v6875 = vmul.f32 %v6532, %v2012
        %v6876 = vmul.f32 %v6535, %v2014
        %v6877 = vmul.f32 %v6538, %v2017
        %v6878 = vmul.f32 %v6541, %v2019
        %v6879 = vmul.f32 %v6544, %v2022
        %v6880 = vmul.f32 %v6547, %v2024
        %v6881 = vmul.f32 %v6550, %v2027
        %v6882 = vmul.f32 %v6553, %v2029
        %v6883 = vmul.f32 %v6556, %v2032
        %v6884 = vmul.f32 %v6559, %v2034
        %v6885 = vmul.f32 %v6562, %v2037
        %v6886 = vmul.f32 %v6565, %v2039
        %v6887 = vmul.f32 %v6568, %v2042
        %v6888 = vmul.f32 %v6571, %v2044
        %v6889 = vmul.f32 %v6574, %v2047
        %v6890 = vmul.f32 %v6577, %v2049
        %v6891 = vmul.f32 %v6580, %v2052
        %v6892 = vmul.f32 %v6583, %v2054
        %v6893 = vmul.f32 %v6586, %v2057
        %v6894 = vmul.f32 %v6589, %v2059
        %v6895 = vmul.f32 %v6592, %v2062
        %v6896 = vmul.f32 %v6595, %v2064
        %v6897 = vmul.f32 %v6598, %v2067
        %v6898 = vmul.f32 %v6601, %v2069
        %v6899 = vmul.f32 %v6604, %v2072
        %v6900 = vmul.f32 %v6607, %v2074
        %v6901 = vmul.f32 %v6610, %v2077
        %v6902 = vmul.f32 %v6613, %v2079
        %v6903 = vmul.f32 %v6616, %v2082
        %v6904 = vmul.f32 %v6619, %v2084
        %v6905 = vmul.f32 %v6622, %v2087
        %v6906 = vmul.f32 %v6625, %v2089
        %v6907 = vmul.f32 %v6628, %v2092
        %v6908 = vmul.f32 %v6631, %v2094
        %v6909 = vmul.f32 %v6634, %v2097
        %v6910 = vmul.f32 %v6637, %v2099
        %v6911 = vmul.f32 %v6640, %v2102
        %v6912 = vmul.f32 %v6643, %v2104
        %v6913 = vmul.f32 %v6646, %v2107
        %v6914 = vmul.f32 %v6649, %v2109
        %v6915 = vmul.f32 %v6652, %v2112
        %v6916 = vmul.f32 %v6655, %v2114
        %v6917 = vmul.f32 %v6658, %v2117
        %v6918 = vmul.f32 %v6661, %v2119
        %v6919 = vmul.f32 %v6664, %v2122
        %v6920 = vmul.f32 %v6667, %v2124
        %v6921 = vmul.f32 %v6670, %v2127
        %v6922 = vmul.f32 %v6673, %v2129
        %v6923 = vmul.f32 %v6676, %v2132
        %v6924 = vmul.f32 %v6679, %v2134
        %v6925 = vmul.f32 %v6682, %v2137
        %v6926 = vmul.f32 %v6685, %v2139
        %v6927 = vmul.f32 %v6688, %v2142
        %v6928 = vmul.f32 %v6691, %v2144
        %v6929 = vmul.f32 %v6694, %v2147
        %v6930 = vmul.f32 %v6697, %v2149
        %v6931 = vmul.f32 %v6700, %v2152
        %v6932 = vmul.f32 %v6703, %v2154
        %v6933 = vmul.f32 %v6706, %v2157
        %v6934 = vmul.f32 %v6709, %v2159
        %v6935 = vmul.f32 %v6712, %v2162
        %v6936 = vmul.f32 %v6715, %v2164
        %v6937 = vmul.f32 %v6718, %v2167
        %v6938 = vmul.f32 %v6721, %v2169
        %v6939 = vmul.f32 %v6724, %v2172
        %v6940 = vmul.f32 %v6727, %v2174
        %v6941 = vmul.f32 %v6730, %v2177
        %v6942 = vmul.f32 %v6733, %v2179
        %v6943 = vmul.f32 %v6736, %v2182
        %v6944 = vmul.f32 %v6739, %v2184
        %v6945 = vmul.f32 %v6742, %v2187
        %v6946 = vmul.f32 %v6745, %v2189
        %v6947 = vmul.f32 %v6748, %v2192
        %v6948 = vmul.f32 %v6751, %v2194
        %v6949 = vmul.f32 %v6754, %v2197
        %v6950 = vmul.f32 %v6757, %v2199
        %v6951 = vmul.f32 %v6760, %v2202
        %v6952 = vmul.f32 %v6763, %v2204
        %v6953 = vmul.f32 %v6766, %v2207
        %v6954 = vmul.f32 %v6769, %v2209
        %v6955 = vmul.f32 %v6772, %v2212
        %v6956 = vmul.f32 %v6775, %v2214
        %v6957 = vmul.f32 %v6778, %v2217
        %v6958 = vmul.f32 %v6781, %v2219
        %v6959 = vmul.f32 %v6784, %v2222
        %v6960 = vmul.f32 %v6787, %v2224
        %v6961 = vmul.f32 %v6790, %v2227
        %v6962 = vmul.f32 %v6793, %v2229
        %v6963 = vmul.f32 %v6796, %v2232
        %v6964 = vmul.f32 %v6799, %v2234
        %v6965 = vmul.f32 %v6802, %v2237
        %v6966 = vmul.f32 %v6805, %v2239
        %v6967 = vmul.f32 %v6808, %v2242
        %v6968 = vmul.f32 %v6811, %v2244
        %v6969 = vmul.f32 %v6814, %v2247
        %v6970 = vmul.f32 %v6817, %v2249
        %v6971 = vmul.f32 %v6820, %v2252
        %v6972 = vmul.f32 %v6823, %v2254
        %v6973 = vmul.f32 %v6826, %v2257
        %v6974 = vmul.f32 %v6829, %v2259
        %v6975 = vmul.f32 %v6832, %v2262
        %v6976 = vmul.f32 %v6835, %v2264
        %v6977 = vmul.f32 %v6838, %v2267
        %v6978 = vmul.f32 %v6841, %v2269
        %v6979 = vmul.f32 %v6844, %v2272
        %v6980 = vmul.f32 %v6847, %v2274
        %v6981 = vmul.f32 %v6850, %v2277
        %v6982 = vmul.f32 %v6853, %v2279
        %v6983 = vsel %vm2796, %v6855, 0.0
        %v6984 = vsel %vm2796, %v6856, 0.0
        %v6985 = vadd.f32 %v6983, %v6984
        %v6986 = vrot.slane %v6985, 4
        %v6987 = vadd.f32 %v6985, %v6986
        %v6988 = vrot.slane %v6987, 2
        %v6989 = vadd.f32 %v6987, %v6988
        %v6990 = vrot.slane %v6989, 1
        %v6991 = vadd.f32 %v6989, %v6990
        %v6992 = vsel %vm2796, %v6857, 0.0
        %v6993 = vsel %vm2796, %v6858, 0.0
        %v6994 = vadd.f32 %v6992, %v6993
        %v6995 = vrot.slane %v6994, 4
        %v6996 = vadd.f32 %v6994, %v6995
        %v6997 = vrot.slane %v6996, 2
        %v6998 = vadd.f32 %v6996, %v6997
        %v6999 = vrot.slane %v6998, 1
        %v7000 = vadd.f32 %v6998, %v6999
        %v7001 = vsel %vm2796, %v6859, 0.0
        %v7002 = vsel %vm2796, %v6860, 0.0
        %v7003 = vadd.f32 %v7001, %v7002
        %v7004 = vrot.slane %v7003, 4
        %v7005 = vadd.f32 %v7003, %v7004
        %v7006 = vrot.slane %v7005, 2
        %v7007 = vadd.f32 %v7005, %v7006
        %v7008 = vrot.slane %v7007, 1
        %v7009 = vadd.f32 %v7007, %v7008
        %v7010 = vsel %vm2796, %v6861, 0.0
        %v7011 = vsel %vm2796, %v6862, 0.0
        %v7012 = vadd.f32 %v7010, %v7011
        %v7013 = vrot.slane %v7012, 4
        %v7014 = vadd.f32 %v7012, %v7013
        %v7015 = vrot.slane %v7014, 2
        %v7016 = vadd.f32 %v7014, %v7015
        %v7017 = vrot.slane %v7016, 1
        %v7018 = vadd.f32 %v7016, %v7017
        %v7019 = vsel %vm2796, %v6863, 0.0
        %v7020 = vsel %vm2796, %v6864, 0.0
        %v7021 = vadd.f32 %v7019, %v7020
        %v7022 = vrot.slane %v7021, 4
        %v7023 = vadd.f32 %v7021, %v7022
        %v7024 = vrot.slane %v7023, 2
        %v7025 = vadd.f32 %v7023, %v7024
        %v7026 = vrot.slane %v7025, 1
        %v7027 = vadd.f32 %v7025, %v7026
        %v7028 = vsel %vm2796, %v6865, 0.0
        %v7029 = vsel %vm2796, %v6866, 0.0
        %v7030 = vadd.f32 %v7028, %v7029
        %v7031 = vrot.slane %v7030, 4
        %v7032 = vadd.f32 %v7030, %v7031
        %v7033 = vrot.slane %v7032, 2
        %v7034 = vadd.f32 %v7032, %v7033
        %v7035 = vrot.slane %v7034, 1
        %v7036 = vadd.f32 %v7034, %v7035
        %v7037 = vsel %vm2796, %v6867, 0.0
        %v7038 = vsel %vm2796, %v6868, 0.0
        %v7039 = vadd.f32 %v7037, %v7038
        %v7040 = vrot.slane %v7039, 4
        %v7041 = vadd.f32 %v7039, %v7040
        %v7042 = vrot.slane %v7041, 2
        %v7043 = vadd.f32 %v7041, %v7042
        %v7044 = vrot.slane %v7043, 1
        %v7045 = vadd.f32 %v7043, %v7044
        %v7046 = vsel %vm2796, %v6869, 0.0
        %v7047 = vsel %vm2796, %v6870, 0.0
        %v7048 = vadd.f32 %v7046, %v7047
        %v7049 = vrot.slane %v7048, 4
        %v7050 = vadd.f32 %v7048, %v7049
        %v7051 = vrot.slane %v7050, 2
        %v7052 = vadd.f32 %v7050, %v7051
        %v7053 = vrot.slane %v7052, 1
        %v7054 = vadd.f32 %v7052, %v7053
        %v7055 = vsel %vm2796, %v6871, 0.0
        %v7056 = vsel %vm2796, %v6872, 0.0
        %v7057 = vadd.f32 %v7055, %v7056
        %v7058 = vrot.slane %v7057, 4
        %v7059 = vadd.f32 %v7057, %v7058
        %v7060 = vrot.slane %v7059, 2
        %v7061 = vadd.f32 %v7059, %v7060
        %v7062 = vrot.slane %v7061, 1
        %v7063 = vadd.f32 %v7061, %v7062
        %v7064 = vsel %vm2796, %v6873, 0.0
        %v7065 = vsel %vm2796, %v6874, 0.0
        %v7066 = vadd.f32 %v7064, %v7065
        %v7067 = vrot.slane %v7066, 4
        %v7068 = vadd.f32 %v7066, %v7067
        %v7069 = vrot.slane %v7068, 2
        %v7070 = vadd.f32 %v7068, %v7069
        %v7071 = vrot.slane %v7070, 1
        %v7072 = vadd.f32 %v7070, %v7071
        %v7073 = vsel %vm2796, %v6875, 0.0
        %v7074 = vsel %vm2796, %v6876, 0.0
        %v7075 = vadd.f32 %v7073, %v7074
        %v7076 = vrot.slane %v7075, 4
        %v7077 = vadd.f32 %v7075, %v7076
        %v7078 = vrot.slane %v7077, 2
        %v7079 = vadd.f32 %v7077, %v7078
        %v7080 = vrot.slane %v7079, 1
        %v7081 = vadd.f32 %v7079, %v7080
        %v7082 = vsel %vm2796, %v6877, 0.0
        %v7083 = vsel %vm2796, %v6878, 0.0
        %v7084 = vadd.f32 %v7082, %v7083
        %v7085 = vrot.slane %v7084, 4
        %v7086 = vadd.f32 %v7084, %v7085
        %v7087 = vrot.slane %v7086, 2
        %v7088 = vadd.f32 %v7086, %v7087
        %v7089 = vrot.slane %v7088, 1
        %v7090 = vadd.f32 %v7088, %v7089
        %v7091 = vsel %vm2796, %v6879, 0.0
        %v7092 = vsel %vm2796, %v6880, 0.0
        %v7093 = vadd.f32 %v7091, %v7092
        %v7094 = vrot.slane %v7093, 4
        %v7095 = vadd.f32 %v7093, %v7094
        %v7096 = vrot.slane %v7095, 2
        %v7097 = vadd.f32 %v7095, %v7096
        %v7098 = vrot.slane %v7097, 1
        %v7099 = vadd.f32 %v7097, %v7098
        %v7100 = vsel %vm2796, %v6881, 0.0
        %v7101 = vsel %vm2796, %v6882, 0.0
        %v7102 = vadd.f32 %v7100, %v7101
        %v7103 = vrot.slane %v7102, 4
        %v7104 = vadd.f32 %v7102, %v7103
        %v7105 = vrot.slane %v7104, 2
        %v7106 = vadd.f32 %v7104, %v7105
        %v7107 = vrot.slane %v7106, 1
        %v7108 = vadd.f32 %v7106, %v7107
        %v7109 = vsel %vm2796, %v6883, 0.0
        %v7110 = vsel %vm2796, %v6884, 0.0
        %v7111 = vadd.f32 %v7109, %v7110
        %v7112 = vrot.slane %v7111, 4
        %v7113 = vadd.f32 %v7111, %v7112
        %v7114 = vrot.slane %v7113, 2
        %v7115 = vadd.f32 %v7113, %v7114
        %v7116 = vrot.slane %v7115, 1
        %v7117 = vadd.f32 %v7115, %v7116
        %v7118 = vsel %vm2796, %v6885, 0.0
        %v7119 = vsel %vm2796, %v6886, 0.0
        %v7120 = vadd.f32 %v7118, %v7119
        %v7121 = vrot.slane %v7120, 4
        %v7122 = vadd.f32 %v7120, %v7121
        %v7123 = vrot.slane %v7122, 2
        %v7124 = vadd.f32 %v7122, %v7123
        %v7125 = vrot.slane %v7124, 1
        %v7126 = vadd.f32 %v7124, %v7125
        %v7127 = vsel %vm2796, %v6887, 0.0
        %v7128 = vsel %vm2796, %v6888, 0.0
        %v7129 = vadd.f32 %v7127, %v7128
        %v7130 = vrot.slane %v7129, 4
        %v7131 = vadd.f32 %v7129, %v7130
        %v7132 = vrot.slane %v7131, 2
        %v7133 = vadd.f32 %v7131, %v7132
        %v7134 = vrot.slane %v7133, 1
        %v7135 = vadd.f32 %v7133, %v7134
        %v7136 = vsel %vm2796, %v6889, 0.0
        %v7137 = vsel %vm2796, %v6890, 0.0
        %v7138 = vadd.f32 %v7136, %v7137
        %v7139 = vrot.slane %v7138, 4
        %v7140 = vadd.f32 %v7138, %v7139
        %v7141 = vrot.slane %v7140, 2
        %v7142 = vadd.f32 %v7140, %v7141
        %v7143 = vrot.slane %v7142, 1
        %v7144 = vadd.f32 %v7142, %v7143
        %v7145 = vsel %vm2796, %v6891, 0.0
        %v7146 = vsel %vm2796, %v6892, 0.0
        %v7147 = vadd.f32 %v7145, %v7146
        %v7148 = vrot.slane %v7147, 4
        %v7149 = vadd.f32 %v7147, %v7148
        %v7150 = vrot.slane %v7149, 2
        %v7151 = vadd.f32 %v7149, %v7150
        %v7152 = vrot.slane %v7151, 1
        %v7153 = vadd.f32 %v7151, %v7152
        %v7154 = vsel %vm2796, %v6893, 0.0
        %v7155 = vsel %vm2796, %v6894, 0.0
        %v7156 = vadd.f32 %v7154, %v7155
        %v7157 = vrot.slane %v7156, 4
        %v7158 = vadd.f32 %v7156, %v7157
        %v7159 = vrot.slane %v7158, 2
        %v7160 = vadd.f32 %v7158, %v7159
        %v7161 = vrot.slane %v7160, 1
        %v7162 = vadd.f32 %v7160, %v7161
        %v7163 = vsel %vm2796, %v6895, 0.0
        %v7164 = vsel %vm2796, %v6896, 0.0
        %v7165 = vadd.f32 %v7163, %v7164
        %v7166 = vrot.slane %v7165, 4
        %v7167 = vadd.f32 %v7165, %v7166
        %v7168 = vrot.slane %v7167, 2
        %v7169 = vadd.f32 %v7167, %v7168
        %v7170 = vrot.slane %v7169, 1
        %v7171 = vadd.f32 %v7169, %v7170
        %v7172 = vsel %vm2796, %v6897, 0.0
        %v7173 = vsel %vm2796, %v6898, 0.0
        %v7174 = vadd.f32 %v7172, %v7173
        %v7175 = vrot.slane %v7174, 4
        %v7176 = vadd.f32 %v7174, %v7175
        %v7177 = vrot.slane %v7176, 2
        %v7178 = vadd.f32 %v7176, %v7177
        %v7179 = vrot.slane %v7178, 1
        %v7180 = vadd.f32 %v7178, %v7179
        %v7181 = vsel %vm2796, %v6899, 0.0
        %v7182 = vsel %vm2796, %v6900, 0.0
        %v7183 = vadd.f32 %v7181, %v7182
        %v7184 = vrot.slane %v7183, 4
        %v7185 = vadd.f32 %v7183, %v7184
        %v7186 = vrot.slane %v7185, 2
        %v7187 = vadd.f32 %v7185, %v7186
        %v7188 = vrot.slane %v7187, 1
        %v7189 = vadd.f32 %v7187, %v7188
        %v7190 = vsel %vm2796, %v6901, 0.0
        %v7191 = vsel %vm2796, %v6902, 0.0
        %v7192 = vadd.f32 %v7190, %v7191
        %v7193 = vrot.slane %v7192, 4
        %v7194 = vadd.f32 %v7192, %v7193
        %v7195 = vrot.slane %v7194, 2
        %v7196 = vadd.f32 %v7194, %v7195
        %v7197 = vrot.slane %v7196, 1
        %v7198 = vadd.f32 %v7196, %v7197
        %v7199 = vsel %vm2796, %v6903, 0.0
        %v7200 = vsel %vm2796, %v6904, 0.0
        %v7201 = vadd.f32 %v7199, %v7200
        %v7202 = vrot.slane %v7201, 4
        %v7203 = vadd.f32 %v7201, %v7202
        %v7204 = vrot.slane %v7203, 2
        %v7205 = vadd.f32 %v7203, %v7204
        %v7206 = vrot.slane %v7205, 1
        %v7207 = vadd.f32 %v7205, %v7206
        %v7208 = vsel %vm2796, %v6905, 0.0
        %v7209 = vsel %vm2796, %v6906, 0.0
        %v7210 = vadd.f32 %v7208, %v7209
        %v7211 = vrot.slane %v7210, 4
        %v7212 = vadd.f32 %v7210, %v7211
        %v7213 = vrot.slane %v7212, 2
        %v7214 = vadd.f32 %v7212, %v7213
        %v7215 = vrot.slane %v7214, 1
        %v7216 = vadd.f32 %v7214, %v7215
        %v7217 = vsel %vm2796, %v6907, 0.0
        %v7218 = vsel %vm2796, %v6908, 0.0
        %v7219 = vadd.f32 %v7217, %v7218
        %v7220 = vrot.slane %v7219, 4
        %v7221 = vadd.f32 %v7219, %v7220
        %v7222 = vrot.slane %v7221, 2
        %v7223 = vadd.f32 %v7221, %v7222
        %v7224 = vrot.slane %v7223, 1
        %v7225 = vadd.f32 %v7223, %v7224
        %v7226 = vsel %vm2796, %v6909, 0.0
        %v7227 = vsel %vm2796, %v6910, 0.0
        %v7228 = vadd.f32 %v7226, %v7227
        %v7229 = vrot.slane %v7228, 4
        %v7230 = vadd.f32 %v7228, %v7229
        %v7231 = vrot.slane %v7230, 2
        %v7232 = vadd.f32 %v7230, %v7231
        %v7233 = vrot.slane %v7232, 1
        %v7234 = vadd.f32 %v7232, %v7233
        %v7235 = vsel %vm2796, %v6911, 0.0
        %v7236 = vsel %vm2796, %v6912, 0.0
        %v7237 = vadd.f32 %v7235, %v7236
        %v7238 = vrot.slane %v7237, 4
        %v7239 = vadd.f32 %v7237, %v7238
        %v7240 = vrot.slane %v7239, 2
        %v7241 = vadd.f32 %v7239, %v7240
        %v7242 = vrot.slane %v7241, 1
        %v7243 = vadd.f32 %v7241, %v7242
        %v7244 = vsel %vm2796, %v6913, 0.0
        %v7245 = vsel %vm2796, %v6914, 0.0
        %v7246 = vadd.f32 %v7244, %v7245
        %v7247 = vrot.slane %v7246, 4
        %v7248 = vadd.f32 %v7246, %v7247
        %v7249 = vrot.slane %v7248, 2
        %v7250 = vadd.f32 %v7248, %v7249
        %v7251 = vrot.slane %v7250, 1
        %v7252 = vadd.f32 %v7250, %v7251
        %v7253 = vsel %vm2796, %v6915, 0.0
        %v7254 = vsel %vm2796, %v6916, 0.0
        %v7255 = vadd.f32 %v7253, %v7254
        %v7256 = vrot.slane %v7255, 4
        %v7257 = vadd.f32 %v7255, %v7256
        %v7258 = vrot.slane %v7257, 2
        %v7259 = vadd.f32 %v7257, %v7258
        %v7260 = vrot.slane %v7259, 1
        %v7261 = vadd.f32 %v7259, %v7260
        %v7262 = vsel %vm2796, %v6917, 0.0
        %v7263 = vsel %vm2796, %v6918, 0.0
        %v7264 = vadd.f32 %v7262, %v7263
        %v7265 = vrot.slane %v7264, 4
        %v7266 = vadd.f32 %v7264, %v7265
        %v7267 = vrot.slane %v7266, 2
        %v7268 = vadd.f32 %v7266, %v7267
        %v7269 = vrot.slane %v7268, 1
        %v7270 = vadd.f32 %v7268, %v7269
        %v7271 = vsel %vm2796, %v6919, 0.0
        %v7272 = vsel %vm2796, %v6920, 0.0
        %v7273 = vadd.f32 %v7271, %v7272
        %v7274 = vrot.slane %v7273, 4
        %v7275 = vadd.f32 %v7273, %v7274
        %v7276 = vrot.slane %v7275, 2
        %v7277 = vadd.f32 %v7275, %v7276
        %v7278 = vrot.slane %v7277, 1
        %v7279 = vadd.f32 %v7277, %v7278
        %v7280 = vsel %vm2796, %v6921, 0.0
        %v7281 = vsel %vm2796, %v6922, 0.0
        %v7282 = vadd.f32 %v7280, %v7281
        %v7283 = vrot.slane %v7282, 4
        %v7284 = vadd.f32 %v7282, %v7283
        %v7285 = vrot.slane %v7284, 2
        %v7286 = vadd.f32 %v7284, %v7285
        %v7287 = vrot.slane %v7286, 1
        %v7288 = vadd.f32 %v7286, %v7287
        %v7289 = vsel %vm2796, %v6923, 0.0
        %v7290 = vsel %vm2796, %v6924, 0.0
        %v7291 = vadd.f32 %v7289, %v7290
        %v7292 = vrot.slane %v7291, 4
        %v7293 = vadd.f32 %v7291, %v7292
        %v7294 = vrot.slane %v7293, 2
        %v7295 = vadd.f32 %v7293, %v7294
        %v7296 = vrot.slane %v7295, 1
        %v7297 = vadd.f32 %v7295, %v7296
        %v7298 = vsel %vm2796, %v6925, 0.0
        %v7299 = vsel %vm2796, %v6926, 0.0
        %v7300 = vadd.f32 %v7298, %v7299
        %v7301 = vrot.slane %v7300, 4
        %v7302 = vadd.f32 %v7300, %v7301
        %v7303 = vrot.slane %v7302, 2
        %v7304 = vadd.f32 %v7302, %v7303
        %v7305 = vrot.slane %v7304, 1
        %v7306 = vadd.f32 %v7304, %v7305
        %v7307 = vsel %vm2796, %v6927, 0.0
        %v7308 = vsel %vm2796, %v6928, 0.0
        %v7309 = vadd.f32 %v7307, %v7308
        %v7310 = vrot.slane %v7309, 4
        %v7311 = vadd.f32 %v7309, %v7310
        %v7312 = vrot.slane %v7311, 2
        %v7313 = vadd.f32 %v7311, %v7312
        %v7314 = vrot.slane %v7313, 1
        %v7315 = vadd.f32 %v7313, %v7314
        %v7316 = vsel %vm2796, %v6929, 0.0
        %v7317 = vsel %vm2796, %v6930, 0.0
        %v7318 = vadd.f32 %v7316, %v7317
        %v7319 = vrot.slane %v7318, 4
        %v7320 = vadd.f32 %v7318, %v7319
        %v7321 = vrot.slane %v7320, 2
        %v7322 = vadd.f32 %v7320, %v7321
        %v7323 = vrot.slane %v7322, 1
        %v7324 = vadd.f32 %v7322, %v7323
        %v7325 = vsel %vm2796, %v6931, 0.0
        %v7326 = vsel %vm2796, %v6932, 0.0
        %v7327 = vadd.f32 %v7325, %v7326
        %v7328 = vrot.slane %v7327, 4
        %v7329 = vadd.f32 %v7327, %v7328
        %v7330 = vrot.slane %v7329, 2
        %v7331 = vadd.f32 %v7329, %v7330
        %v7332 = vrot.slane %v7331, 1
        %v7333 = vadd.f32 %v7331, %v7332
        %v7334 = vsel %vm2796, %v6933, 0.0
        %v7335 = vsel %vm2796, %v6934, 0.0
        %v7336 = vadd.f32 %v7334, %v7335
        %v7337 = vrot.slane %v7336, 4
        %v7338 = vadd.f32 %v7336, %v7337
        %v7339 = vrot.slane %v7338, 2
        %v7340 = vadd.f32 %v7338, %v7339
        %v7341 = vrot.slane %v7340, 1
        %v7342 = vadd.f32 %v7340, %v7341
        %v7343 = vsel %vm2796, %v6935, 0.0
        %v7344 = vsel %vm2796, %v6936, 0.0
        %v7345 = vadd.f32 %v7343, %v7344
        %v7346 = vrot.slane %v7345, 4
        %v7347 = vadd.f32 %v7345, %v7346
        %v7348 = vrot.slane %v7347, 2
        %v7349 = vadd.f32 %v7347, %v7348
        %v7350 = vrot.slane %v7349, 1
        %v7351 = vadd.f32 %v7349, %v7350
        %v7352 = vsel %vm2796, %v6937, 0.0
        %v7353 = vsel %vm2796, %v6938, 0.0
        %v7354 = vadd.f32 %v7352, %v7353
        %v7355 = vrot.slane %v7354, 4
        %v7356 = vadd.f32 %v7354, %v7355
        %v7357 = vrot.slane %v7356, 2
        %v7358 = vadd.f32 %v7356, %v7357
        %v7359 = vrot.slane %v7358, 1
        %v7360 = vadd.f32 %v7358, %v7359
        %v7361 = vsel %vm2796, %v6939, 0.0
        %v7362 = vsel %vm2796, %v6940, 0.0
        %v7363 = vadd.f32 %v7361, %v7362
        %v7364 = vrot.slane %v7363, 4
        %v7365 = vadd.f32 %v7363, %v7364
        %v7366 = vrot.slane %v7365, 2
        %v7367 = vadd.f32 %v7365, %v7366
        %v7368 = vrot.slane %v7367, 1
        %v7369 = vadd.f32 %v7367, %v7368
        %v7370 = vsel %vm2796, %v6941, 0.0
        %v7371 = vsel %vm2796, %v6942, 0.0
        %v7372 = vadd.f32 %v7370, %v7371
        %v7373 = vrot.slane %v7372, 4
        %v7374 = vadd.f32 %v7372, %v7373
        %v7375 = vrot.slane %v7374, 2
        %v7376 = vadd.f32 %v7374, %v7375
        %v7377 = vrot.slane %v7376, 1
        %v7378 = vadd.f32 %v7376, %v7377
        %v7379 = vsel %vm2796, %v6943, 0.0
        %v7380 = vsel %vm2796, %v6944, 0.0
        %v7381 = vadd.f32 %v7379, %v7380
        %v7382 = vrot.slane %v7381, 4
        %v7383 = vadd.f32 %v7381, %v7382
        %v7384 = vrot.slane %v7383, 2
        %v7385 = vadd.f32 %v7383, %v7384
        %v7386 = vrot.slane %v7385, 1
        %v7387 = vadd.f32 %v7385, %v7386
        %v7388 = vsel %vm2796, %v6945, 0.0
        %v7389 = vsel %vm2796, %v6946, 0.0
        %v7390 = vadd.f32 %v7388, %v7389
        %v7391 = vrot.slane %v7390, 4
        %v7392 = vadd.f32 %v7390, %v7391
        %v7393 = vrot.slane %v7392, 2
        %v7394 = vadd.f32 %v7392, %v7393
        %v7395 = vrot.slane %v7394, 1
        %v7396 = vadd.f32 %v7394, %v7395
        %v7397 = vsel %vm2796, %v6947, 0.0
        %v7398 = vsel %vm2796, %v6948, 0.0
        %v7399 = vadd.f32 %v7397, %v7398
        %v7400 = vrot.slane %v7399, 4
        %v7401 = vadd.f32 %v7399, %v7400
        %v7402 = vrot.slane %v7401, 2
        %v7403 = vadd.f32 %v7401, %v7402
        %v7404 = vrot.slane %v7403, 1
        %v7405 = vadd.f32 %v7403, %v7404
        %v7406 = vsel %vm2796, %v6949, 0.0
        %v7407 = vsel %vm2796, %v6950, 0.0
        %v7408 = vadd.f32 %v7406, %v7407
        %v7409 = vrot.slane %v7408, 4
        %v7410 = vadd.f32 %v7408, %v7409
        %v7411 = vrot.slane %v7410, 2
        %v7412 = vadd.f32 %v7410, %v7411
        %v7413 = vrot.slane %v7412, 1
        %v7414 = vadd.f32 %v7412, %v7413
        %v7415 = vsel %vm2796, %v6951, 0.0
        %v7416 = vsel %vm2796, %v6952, 0.0
        %v7417 = vadd.f32 %v7415, %v7416
        %v7418 = vrot.slane %v7417, 4
        %v7419 = vadd.f32 %v7417, %v7418
        %v7420 = vrot.slane %v7419, 2
        %v7421 = vadd.f32 %v7419, %v7420
        %v7422 = vrot.slane %v7421, 1
        %v7423 = vadd.f32 %v7421, %v7422
        %v7424 = vsel %vm2796, %v6953, 0.0
        %v7425 = vsel %vm2796, %v6954, 0.0
        %v7426 = vadd.f32 %v7424, %v7425
        %v7427 = vrot.slane %v7426, 4
        %v7428 = vadd.f32 %v7426, %v7427
        %v7429 = vrot.slane %v7428, 2
        %v7430 = vadd.f32 %v7428, %v7429
        %v7431 = vrot.slane %v7430, 1
        %v7432 = vadd.f32 %v7430, %v7431
        %v7433 = vsel %vm2796, %v6955, 0.0
        %v7434 = vsel %vm2796, %v6956, 0.0
        %v7435 = vadd.f32 %v7433, %v7434
        %v7436 = vrot.slane %v7435, 4
        %v7437 = vadd.f32 %v7435, %v7436
        %v7438 = vrot.slane %v7437, 2
        %v7439 = vadd.f32 %v7437, %v7438
        %v7440 = vrot.slane %v7439, 1
        %v7441 = vadd.f32 %v7439, %v7440
        %v7442 = vsel %vm2796, %v6957, 0.0
        %v7443 = vsel %vm2796, %v6958, 0.0
        %v7444 = vadd.f32 %v7442, %v7443
        %v7445 = vrot.slane %v7444, 4
        %v7446 = vadd.f32 %v7444, %v7445
        %v7447 = vrot.slane %v7446, 2
        %v7448 = vadd.f32 %v7446, %v7447
        %v7449 = vrot.slane %v7448, 1
        %v7450 = vadd.f32 %v7448, %v7449
        %v7451 = vsel %vm2796, %v6959, 0.0
        %v7452 = vsel %vm2796, %v6960, 0.0
        %v7453 = vadd.f32 %v7451, %v7452
        %v7454 = vrot.slane %v7453, 4
        %v7455 = vadd.f32 %v7453, %v7454
        %v7456 = vrot.slane %v7455, 2
        %v7457 = vadd.f32 %v7455, %v7456
        %v7458 = vrot.slane %v7457, 1
        %v7459 = vadd.f32 %v7457, %v7458
        %v7460 = vsel %vm2796, %v6961, 0.0
        %v7461 = vsel %vm2796, %v6962, 0.0
        %v7462 = vadd.f32 %v7460, %v7461
        %v7463 = vrot.slane %v7462, 4
        %v7464 = vadd.f32 %v7462, %v7463
        %v7465 = vrot.slane %v7464, 2
        %v7466 = vadd.f32 %v7464, %v7465
        %v7467 = vrot.slane %v7466, 1
        %v7468 = vadd.f32 %v7466, %v7467
        %v7469 = vsel %vm2796, %v6963, 0.0
        %v7470 = vsel %vm2796, %v6964, 0.0
        %v7471 = vadd.f32 %v7469, %v7470
        %v7472 = vrot.slane %v7471, 4
        %v7473 = vadd.f32 %v7471, %v7472
        %v7474 = vrot.slane %v7473, 2
        %v7475 = vadd.f32 %v7473, %v7474
        %v7476 = vrot.slane %v7475, 1
        %v7477 = vadd.f32 %v7475, %v7476
        %v7478 = vsel %vm2796, %v6965, 0.0
        %v7479 = vsel %vm2796, %v6966, 0.0
        %v7480 = vadd.f32 %v7478, %v7479
        %v7481 = vrot.slane %v7480, 4
        %v7482 = vadd.f32 %v7480, %v7481
        %v7483 = vrot.slane %v7482, 2
        %v7484 = vadd.f32 %v7482, %v7483
        %v7485 = vrot.slane %v7484, 1
        %v7486 = vadd.f32 %v7484, %v7485
        %v7487 = vsel %vm2796, %v6967, 0.0
        %v7488 = vsel %vm2796, %v6968, 0.0
        %v7489 = vadd.f32 %v7487, %v7488
        %v7490 = vrot.slane %v7489, 4
        %v7491 = vadd.f32 %v7489, %v7490
        %v7492 = vrot.slane %v7491, 2
        %v7493 = vadd.f32 %v7491, %v7492
        %v7494 = vrot.slane %v7493, 1
        %v7495 = vadd.f32 %v7493, %v7494
        %v7496 = vsel %vm2796, %v6969, 0.0
        %v7497 = vsel %vm2796, %v6970, 0.0
        %v7498 = vadd.f32 %v7496, %v7497
        %v7499 = vrot.slane %v7498, 4
        %v7500 = vadd.f32 %v7498, %v7499
        %v7501 = vrot.slane %v7500, 2
        %v7502 = vadd.f32 %v7500, %v7501
        %v7503 = vrot.slane %v7502, 1
        %v7504 = vadd.f32 %v7502, %v7503
        %v7505 = vsel %vm2796, %v6971, 0.0
        %v7506 = vsel %vm2796, %v6972, 0.0
        %v7507 = vadd.f32 %v7505, %v7506
        %v7508 = vrot.slane %v7507, 4
        %v7509 = vadd.f32 %v7507, %v7508
        %v7510 = vrot.slane %v7509, 2
        %v7511 = vadd.f32 %v7509, %v7510
        %v7512 = vrot.slane %v7511, 1
        %v7513 = vadd.f32 %v7511, %v7512
        %v7514 = vsel %vm2796, %v6973, 0.0
        %v7515 = vsel %vm2796, %v6974, 0.0
        %v7516 = vadd.f32 %v7514, %v7515
        %v7517 = vrot.slane %v7516, 4
        %v7518 = vadd.f32 %v7516, %v7517
        %v7519 = vrot.slane %v7518, 2
        %v7520 = vadd.f32 %v7518, %v7519
        %v7521 = vrot.slane %v7520, 1
        %v7522 = vadd.f32 %v7520, %v7521
        %v7523 = vsel %vm2796, %v6975, 0.0
        %v7524 = vsel %vm2796, %v6976, 0.0
        %v7525 = vadd.f32 %v7523, %v7524
        %v7526 = vrot.slane %v7525, 4
        %v7527 = vadd.f32 %v7525, %v7526
        %v7528 = vrot.slane %v7527, 2
        %v7529 = vadd.f32 %v7527, %v7528
        %v7530 = vrot.slane %v7529, 1
        %v7531 = vadd.f32 %v7529, %v7530
        %v7532 = vsel %vm2796, %v6977, 0.0
        %v7533 = vsel %vm2796, %v6978, 0.0
        %v7534 = vadd.f32 %v7532, %v7533
        %v7535 = vrot.slane %v7534, 4
        %v7536 = vadd.f32 %v7534, %v7535
        %v7537 = vrot.slane %v7536, 2
        %v7538 = vadd.f32 %v7536, %v7537
        %v7539 = vrot.slane %v7538, 1
        %v7540 = vadd.f32 %v7538, %v7539
        %v7541 = vsel %vm2796, %v6979, 0.0
        %v7542 = vsel %vm2796, %v6980, 0.0
        %v7543 = vadd.f32 %v7541, %v7542
        %v7544 = vrot.slane %v7543, 4
        %v7545 = vadd.f32 %v7543, %v7544
        %v7546 = vrot.slane %v7545, 2
        %v7547 = vadd.f32 %v7545, %v7546
        %v7548 = vrot.slane %v7547, 1
        %v7549 = vadd.f32 %v7547, %v7548
        %v7550 = vsel %vm2796, %v6981, 0.0
        %v7551 = vsel %vm2796, %v6982, 0.0
        %v7552 = vadd.f32 %v7550, %v7551
        %v7553 = vrot.slane %v7552, 4
        %v7554 = vadd.f32 %v7552, %v7553
        %v7555 = vrot.slane %v7554, 2
        %v7556 = vadd.f32 %v7554, %v7555
        %v7557 = vrot.slane %v7556, 1
        %v7558 = vadd.f32 %v7556, %v7557
        %v7559 = vpack.c.bf16 %v6991, %v6991
        %v7560 = vpack.c.bf16 %v7000, %v7000
        %v7561 = vpack.c.bf16 %v7009, %v7009
        %v7562 = vpack.c.bf16 %v7018, %v7018
        %v7563 = vpack.c.bf16 %v7027, %v7027
        %v7564 = vpack.c.bf16 %v7036, %v7036
        %v7565 = vpack.c.bf16 %v7045, %v7045
        %v7566 = vpack.c.bf16 %v7054, %v7054
        %v7567 = vpack.c.bf16 %v7063, %v7063
        %v7568 = vpack.c.bf16 %v7072, %v7072
        %v7569 = vpack.c.bf16 %v7081, %v7081
        %v7570 = vpack.c.bf16 %v7090, %v7090
        %v7571 = vpack.c.bf16 %v7099, %v7099
        %v7572 = vpack.c.bf16 %v7108, %v7108
        %v7573 = vpack.c.bf16 %v7117, %v7117
        %v7574 = vpack.c.bf16 %v7126, %v7126
        %v7575 = vpack.c.bf16 %v7135, %v7135
        %v7576 = vpack.c.bf16 %v7144, %v7144
        %v7577 = vpack.c.bf16 %v7153, %v7153
        %v7578 = vpack.c.bf16 %v7162, %v7162
        %v7579 = vpack.c.bf16 %v7171, %v7171
        %v7580 = vpack.c.bf16 %v7180, %v7180
        %v7581 = vpack.c.bf16 %v7189, %v7189
        %v7582 = vpack.c.bf16 %v7198, %v7198
        %v7583 = vpack.c.bf16 %v7207, %v7207
        %v7584 = vpack.c.bf16 %v7216, %v7216
        %v7585 = vpack.c.bf16 %v7225, %v7225
        %v7586 = vpack.c.bf16 %v7234, %v7234
        %v7587 = vpack.c.bf16 %v7243, %v7243
        %v7588 = vpack.c.bf16 %v7252, %v7252
        %v7589 = vpack.c.bf16 %v7261, %v7261
        %v7590 = vpack.c.bf16 %v7270, %v7270
        %v7591 = vpack.c.bf16 %v7279, %v7279
        %v7592 = vpack.c.bf16 %v7288, %v7288
        %v7593 = vpack.c.bf16 %v7297, %v7297
        %v7594 = vpack.c.bf16 %v7306, %v7306
        %v7595 = vpack.c.bf16 %v7315, %v7315
        %v7596 = vpack.c.bf16 %v7324, %v7324
        %v7597 = vpack.c.bf16 %v7333, %v7333
        %v7598 = vpack.c.bf16 %v7342, %v7342
        %v7599 = vpack.c.bf16 %v7351, %v7351
        %v7600 = vpack.c.bf16 %v7360, %v7360
        %v7601 = vpack.c.bf16 %v7369, %v7369
        %v7602 = vpack.c.bf16 %v7378, %v7378
        %v7603 = vpack.c.bf16 %v7387, %v7387
        %v7604 = vpack.c.bf16 %v7396, %v7396
        %v7605 = vpack.c.bf16 %v7405, %v7405
        %v7606 = vpack.c.bf16 %v7414, %v7414
        %v7607 = vpack.c.bf16 %v7423, %v7423
        %v7608 = vpack.c.bf16 %v7432, %v7432
        %v7609 = vpack.c.bf16 %v7441, %v7441
        %v7610 = vpack.c.bf16 %v7450, %v7450
        %v7611 = vpack.c.bf16 %v7459, %v7459
        %v7612 = vpack.c.bf16 %v7468, %v7468
        %v7613 = vpack.c.bf16 %v7477, %v7477
        %v7614 = vpack.c.bf16 %v7486, %v7486
        %v7615 = vpack.c.bf16 %v7495, %v7495
        %v7616 = vpack.c.bf16 %v7504, %v7504
        %v7617 = vpack.c.bf16 %v7513, %v7513
        %v7618 = vpack.c.bf16 %v7522, %v7522
        %v7619 = vpack.c.bf16 %v7531, %v7531
        %v7620 = vpack.c.bf16 %v7540, %v7540
        %v7621 = vpack.c.bf16 %v7549, %v7549
        %v7622 = vpack.c.bf16 %v7558, %v7558
        %v7623 = vld [vmem:[%s13] sm:$0xf]
        %v7624 = vld [vmem:[%s13 + $0x4] sm:$0xf]
        %v7625 = vld [vmem:[%s13 + $0x8] sm:$0xf]
        %v7626 = vld [vmem:[%s13 + $0xc] sm:$0xf]
        %v7627 = vld [vmem:[%s13 + $0x10] sm:$0xf]
        %v7628 = vld [vmem:[%s13 + $0x14] sm:$0xf]
        %v7629 = vld [vmem:[%s13 + $0x18] sm:$0xf]
        %v7630 = vld [vmem:[%s13 + $0x1c] sm:$0xf]
        %v7631 = vpack.c.bf16 %v840, %v839
        %v7632 = vpack.c.bf16 %v842, %v841
        %v7633 = vpack.c.bf16 %v844, %v843
        %v7634 = vpack.c.bf16 %v846, %v845
        %v7635 = vld [vmem:[%s14] sm:$0xf]
        %v7636 = vld [vmem:[%s14 + $0x4] sm:$0xf]
        %v7637 = vld [vmem:[%s14 + $0x8] sm:$0xf]
        %v7638 = vld [vmem:[%s14 + $0xc] sm:$0xf]
        %v7639 = vld [vmem:[%s14 + $0x10] sm:$0xf]
        %v7640 = vld [vmem:[%s14 + $0x14] sm:$0xf]
        %v7641 = vld [vmem:[%s14 + $0x18] sm:$0xf]
        %v7642 = vld [vmem:[%s14 + $0x1c] sm:$0xf]
        %v7651 = vunpack.c.l.b16 %v7635
        %v7652 = vunpack.c.l.b16 %v7636
        %v7653 = vunpack.c.l.b16 %v7637
        %v7654 = vunpack.c.l.b16 %v7638
        %v7655 = vunpack.c.l.b16 %v7639
        %v7656 = vunpack.c.l.b16 %v7640
        %v7657 = vunpack.c.l.b16 %v7641
        %v7658 = vunpack.c.l.b16 %v7642
        %v7659 = vpack.c.b16 %v7652, %v7651
        %v7660 = vpack.c.b16 %v7654, %v7653
        %v7661 = vpack.c.b16 %v7656, %v7655
        %v7662 = vpack.c.b16 %v7658, %v7657
        %v7668 = vsel %vm2796, %v7631, 0
        %v7671 = vsel %vm2796, %v7632, 0
        %v7674 = vsel %vm2796, %v7633, 0
        %v7677 = vsel %vm2796, %v7634, 0
        %7679 = vmatpush.bf16.msra.mxu0 0
        %7680 = vmatpush.bf16.msra.mxu0 0
        %7681 = vmatpush.bf16.msra.mxu0 0
        %7682 = vmatpush.bf16.msra.mxu0 0
        %7683 = vmatpush.bf16.msra.mxu0 %v7662
        %7684 = vmatpush.bf16.msra.mxu0 %v7661
        %7685 = vmatpush.bf16.msra.mxu0 %v7660
        %7686 = vmatpush.bf16.msra.mxu0 %v7659
        %7687 = vmatmul.bf16.gmra.mxu0 %v7668
        %v7688 = vpop.f32.mrf.mxu0
        %v7689 = vadd.f32 0.0, %v7688
        %v7690 = vpop.f32.mrf.mxu0
        %v7691 = vadd.f32 0.0, %v7690
        %7692 = vmatmul.bf16.gmra.mxu0 %v7671
        %v7693 = vpop.f32.mrf.mxu0
        %v7694 = vadd.f32 0.0, %v7693
        %v7695 = vpop.f32.mrf.mxu0
        %v7696 = vadd.f32 0.0, %v7695
        %7697 = vmatmul.bf16.gmra.mxu0 %v7674
        %v7698 = vpop.f32.mrf.mxu0
        %v7699 = vadd.f32 0.0, %v7698
        %v7700 = vpop.f32.mrf.mxu0
        %v7701 = vadd.f32 0.0, %v7700
        %7702 = vmatmul.bf16.gmra.mxu0 %v7677
        %v7703 = vpop.f32.mrf.mxu0
        %v7704 = vadd.f32 0.0, %v7703
        %v7705 = vpop.f32.mrf.mxu0
        %v7706 = vadd.f32 0.0, %v7705
        %7707 = vdwg.mxu0
        %v7772 = vunpack.c.l.b16 %v7559
        %v7773 = vunpack.c.l.b16 %v7560
        %v7774 = vunpack.c.l.b16 %v7561
        %v7775 = vunpack.c.l.b16 %v7562
        %v7776 = vunpack.c.l.b16 %v7563
        %v7777 = vunpack.c.l.b16 %v7564
        %v7778 = vunpack.c.l.b16 %v7565
        %v7779 = vunpack.c.l.b16 %v7566
        %v7780 = vunpack.c.l.b16 %v7567
        %v7781 = vunpack.c.l.b16 %v7568
        %v7782 = vunpack.c.l.b16 %v7569
        %v7783 = vunpack.c.l.b16 %v7570
        %v7784 = vunpack.c.l.b16 %v7571
        %v7785 = vunpack.c.l.b16 %v7572
        %v7786 = vunpack.c.l.b16 %v7573
        %v7787 = vunpack.c.l.b16 %v7574
        %v7788 = vunpack.c.l.b16 %v7575
        %v7789 = vunpack.c.l.b16 %v7576
        %v7790 = vunpack.c.l.b16 %v7577
        %v7791 = vunpack.c.l.b16 %v7578
        %v7792 = vunpack.c.l.b16 %v7579
        %v7793 = vunpack.c.l.b16 %v7580
        %v7794 = vunpack.c.l.b16 %v7581
        %v7795 = vunpack.c.l.b16 %v7582
        %v7796 = vunpack.c.l.b16 %v7583
        %v7797 = vunpack.c.l.b16 %v7584
        %v7798 = vunpack.c.l.b16 %v7585
        %v7799 = vunpack.c.l.b16 %v7586
        %v7800 = vunpack.c.l.b16 %v7587
        %v7801 = vunpack.c.l.b16 %v7588
        %v7802 = vunpack.c.l.b16 %v7589
        %v7803 = vunpack.c.l.b16 %v7590
        %v7804 = vunpack.c.l.b16 %v7591
        %v7805 = vunpack.c.l.b16 %v7592
        %v7806 = vunpack.c.l.b16 %v7593
        %v7807 = vunpack.c.l.b16 %v7594
        %v7808 = vunpack.c.l.b16 %v7595
        %v7809 = vunpack.c.l.b16 %v7596
        %v7810 = vunpack.c.l.b16 %v7597
        %v7811 = vunpack.c.l.b16 %v7598
        %v7812 = vunpack.c.l.b16 %v7599
        %v7813 = vunpack.c.l.b16 %v7600
        %v7814 = vunpack.c.l.b16 %v7601
        %v7815 = vunpack.c.l.b16 %v7602
        %v7816 = vunpack.c.l.b16 %v7603
        %v7817 = vunpack.c.l.b16 %v7604
        %v7818 = vunpack.c.l.b16 %v7605
        %v7819 = vunpack.c.l.b16 %v7606
        %v7820 = vunpack.c.l.b16 %v7607
        %v7821 = vunpack.c.l.b16 %v7608
        %v7822 = vunpack.c.l.b16 %v7609
        %v7823 = vunpack.c.l.b16 %v7610
        %v7824 = vunpack.c.l.b16 %v7611
        %v7825 = vunpack.c.l.b16 %v7612
        %v7826 = vunpack.c.l.b16 %v7613
        %v7827 = vunpack.c.l.b16 %v7614
        %v7828 = vunpack.c.l.b16 %v7615
        %v7829 = vunpack.c.l.b16 %v7616
        %v7830 = vunpack.c.l.b16 %v7617
        %v7831 = vunpack.c.l.b16 %v7618
        %v7832 = vunpack.c.l.b16 %v7619
        %v7833 = vunpack.c.l.b16 %v7620
        %v7834 = vunpack.c.l.b16 %v7621
        %v7835 = vunpack.c.l.b16 %v7622
        %vm7836 = vcmask 1041409
        %v7837 = vsel %vm7836, %v7773, %v7772
        %vm7838 = vcmask 1042434
        %v7839 = vsel %vm7838, %v7774, %v7837
        %vm7840 = vcmask 1043459
        %v7841 = vsel %vm7840, %v7775, %v7839
        %vm7842 = vcmask 1044484
        %v7843 = vsel %vm7842, %v7776, %v7841
        %vm7844 = vcmask 1045509
        %v7845 = vsel %vm7844, %v7777, %v7843
        %vm7846 = vcmask 1046534
        %v7847 = vsel %vm7846, %v7778, %v7845
        %vm7848 = vcmask 1047559
        %v7849 = vsel %vm7848, %v7779, %v7847
        %v7850 = vsel %vm7836, %v7781, %v7780
        %v7851 = vsel %vm7838, %v7782, %v7850
        %v7852 = vsel %vm7840, %v7783, %v7851
        %v7853 = vsel %vm7842, %v7784, %v7852
        %v7854 = vsel %vm7844, %v7785, %v7853
        %v7855 = vsel %vm7846, %v7786, %v7854
        %v7856 = vsel %vm7848, %v7787, %v7855
        %v7857 = vsel %vm7836, %v7789, %v7788
        %v7858 = vsel %vm7838, %v7790, %v7857
        %v7859 = vsel %vm7840, %v7791, %v7858
        %v7860 = vsel %vm7842, %v7792, %v7859
        %v7861 = vsel %vm7844, %v7793, %v7860
        %v7862 = vsel %vm7846, %v7794, %v7861
        %v7863 = vsel %vm7848, %v7795, %v7862
        %v7864 = vsel %vm7836, %v7797, %v7796
        %v7865 = vsel %vm7838, %v7798, %v7864
        %v7866 = vsel %vm7840, %v7799, %v7865
        %v7867 = vsel %vm7842, %v7800, %v7866
        %v7868 = vsel %vm7844, %v7801, %v7867
        %v7869 = vsel %vm7846, %v7802, %v7868
        %v7870 = vsel %vm7848, %v7803, %v7869
        %v7871 = vsel %vm7836, %v7805, %v7804
        %v7872 = vsel %vm7838, %v7806, %v7871
        %v7873 = vsel %vm7840, %v7807, %v7872
        %v7874 = vsel %vm7842, %v7808, %v7873
        %v7875 = vsel %vm7844, %v7809, %v7874
        %v7876 = vsel %vm7846, %v7810, %v7875
        %v7877 = vsel %vm7848, %v7811, %v7876
        %v7878 = vsel %vm7836, %v7813, %v7812
        %v7879 = vsel %vm7838, %v7814, %v7878
        %v7880 = vsel %vm7840, %v7815, %v7879
        %v7881 = vsel %vm7842, %v7816, %v7880
        %v7882 = vsel %vm7844, %v7817, %v7881
        %v7883 = vsel %vm7846, %v7818, %v7882
        %v7884 = vsel %vm7848, %v7819, %v7883
        %v7885 = vsel %vm7836, %v7821, %v7820
        %v7886 = vsel %vm7838, %v7822, %v7885
        %v7887 = vsel %vm7840, %v7823, %v7886
        %v7888 = vsel %vm7842, %v7824, %v7887
        %v7889 = vsel %vm7844, %v7825, %v7888
        %v7890 = vsel %vm7846, %v7826, %v7889
        %v7891 = vsel %vm7848, %v7827, %v7890
        %v7892 = vsel %vm7836, %v7829, %v7828
        %v7893 = vsel %vm7838, %v7830, %v7892
        %v7894 = vsel %vm7840, %v7831, %v7893
        %v7895 = vsel %vm7842, %v7832, %v7894
        %v7896 = vsel %vm7844, %v7833, %v7895
        %v7897 = vsel %vm7846, %v7834, %v7896
        %v7898 = vsel %vm7848, %v7835, %v7897
        %v7899 = vpack.c.b16 %v7856, %v7849
        %v7900 = vpack.c.b16 %v7870, %v7863
        %v7901 = vpack.c.b16 %v7884, %v7877
        %v7902 = vpack.c.b16 %v7898, %v7891
        %v7911 = vunpack.c.l.b16 %v7623
        %v7912 = vunpack.c.l.b16 %v7624
        %v7913 = vunpack.c.l.b16 %v7625
        %v7914 = vunpack.c.l.b16 %v7626
        %v7915 = vunpack.c.l.b16 %v7627
        %v7916 = vunpack.c.l.b16 %v7628
        %v7917 = vunpack.c.l.b16 %v7629
        %v7918 = vunpack.c.l.b16 %v7630
        %v7919 = vpack.c.b16 %v7912, %v7911
        %v7920 = vpack.c.b16 %v7914, %v7913
        %v7921 = vpack.c.b16 %v7916, %v7915
        %v7922 = vpack.c.b16 %v7918, %v7917
        %v7928 = vsel %vm2796, %v7899, 0
        %v7931 = vsel %vm2796, %v7900, 0
        %v7934 = vsel %vm2796, %v7901, 0
        %v7937 = vsel %vm2796, %v7902, 0
        %7939 = vmatpush.bf16.msra.mxu0 0
        %7940 = vmatpush.bf16.msra.mxu0 0
        %7941 = vmatpush.bf16.msra.mxu0 0
        %7942 = vmatpush.bf16.msra.mxu0 0
        %7943 = vmatpush.bf16.msra.mxu0 %v7922
        %7944 = vmatpush.bf16.msra.mxu0 %v7921
        %7945 = vmatpush.bf16.msra.mxu0 %v7920
        %7946 = vmatpush.bf16.msra.mxu0 %v7919
        %7947 = vmatmul.bf16.gmra.mxu0 %v7928
        %v7948 = vpop.f32.mrf.mxu0
        %v7949 = vadd.f32 %v7689, %v7948
        %v7950 = vpop.f32.mrf.mxu0
        %v7951 = vadd.f32 %v7691, %v7950
        %7952 = vmatmul.bf16.gmra.mxu0 %v7931
        %v7953 = vpop.f32.mrf.mxu0
        %v7954 = vadd.f32 %v7694, %v7953
        %v7955 = vpop.f32.mrf.mxu0
        %v7956 = vadd.f32 %v7696, %v7955
        %7957 = vmatmul.bf16.gmra.mxu0 %v7934
        %v7958 = vpop.f32.mrf.mxu0
        %v7959 = vadd.f32 %v7699, %v7958
        %v7960 = vpop.f32.mrf.mxu0
        %v7961 = vadd.f32 %v7701, %v7960
        %7962 = vmatmul.bf16.gmra.mxu0 %v7937
        %v7963 = vpop.f32.mrf.mxu0
        %v7964 = vadd.f32 %v7704, %v7963
        %v7965 = vpop.f32.mrf.mxu0
        %v7966 = vadd.f32 %v7706, %v7965
        %7967 = vdwg.mxu0
        %v7968 = vld [vmem:[%s15] sm:$0x1]
        %v7970 = vperm.slane %v7968, 0
        %v7972 = vadd.f32 %v7949, %v7970
        %v7973 = vadd.f32 %v7951, %v7970
        %v7974 = vadd.f32 %v7954, %v7970
        %v7975 = vadd.f32 %v7956, %v7970
        %v7976 = vadd.f32 %v7959, %v7970
        %v7977 = vadd.f32 %v7961, %v7970
        %v7978 = vadd.f32 %v7964, %v7970
        %v7979 = vadd.f32 %v7966, %v7970
        %v7980 = vadd.f32 %v839, %v7972
        %v7981 = vadd.f32 %v840, %v7973
        %v7982 = vadd.f32 %v841, %v7974
        %v7983 = vadd.f32 %v842, %v7975
        %v7984 = vadd.f32 %v843, %v7976
        %v7985 = vadd.f32 %v844, %v7977
        %v7986 = vadd.f32 %v845, %v7978
        %v7987 = vadd.f32 %v846, %v7979
        %v7988 = vld [vmem:[%s16] sm:$0x1]
        %v7989 = vld [vmem:[%s17] sm:$0x1]
        %v7990 = vsel %vm2796, %v7980, 0.0
        %7991 = vadd.xlane.f32.xlu0 %v7990
        %v7992 = vpop.xlane.xlu0 %7991
        %v7993 = vsel %vm2796, %v7981, 0.0
        %7994 = vadd.xlane.f32.xlu0 %v7993
        %v7995 = vpop.xlane.xlu0 %7994
        %v7996 = vsel %vm2796, %v7982, 0.0
        %7997 = vadd.xlane.f32.xlu0 %v7996
        %v7998 = vpop.xlane.xlu0 %7997
        %v7999 = vsel %vm2796, %v7983, 0.0
        %8000 = vadd.xlane.f32.xlu0 %v7999
        %v8001 = vpop.xlane.xlu0 %8000
        %v8002 = vsel %vm2796, %v7984, 0.0
        %8003 = vadd.xlane.f32.xlu0 %v8002
        %v8004 = vpop.xlane.xlu0 %8003
        %v8005 = vsel %vm2796, %v7985, 0.0
        %8006 = vadd.xlane.f32.xlu0 %v8005
        %v8007 = vpop.xlane.xlu0 %8006
        %v8008 = vsel %vm2796, %v7986, 0.0
        %8009 = vadd.xlane.f32.xlu0 %v8008
        %v8010 = vpop.xlane.xlu0 %8009
        %v8011 = vsel %vm2796, %v7987, 0.0
        %8012 = vadd.xlane.f32.xlu0 %v8011
        %v8013 = vpop.xlane.xlu0 %8012
        %v8014 = vmul.f32 %v7992, %v2827
        %v8015 = vmul.f32 %v7995, %v2827
        %v8016 = vmul.f32 %v7998, %v2827
        %v8017 = vmul.f32 %v8001, %v2827
        %v8018 = vmul.f32 %v8004, %v2827
        %v8019 = vmul.f32 %v8007, %v2827
        %v8020 = vmul.f32 %v8010, %v2827
        %v8021 = vmul.f32 %v8013, %v2827
        %v8022 = vsub.f32 %v7980, %v8014
        %v8023 = vsub.f32 %v7981, %v8015
        %v8024 = vsub.f32 %v7982, %v8016
        %v8025 = vsub.f32 %v7983, %v8017
        %v8026 = vsub.f32 %v7984, %v8018
        %v8027 = vsub.f32 %v7985, %v8019
        %v8028 = vsub.f32 %v7986, %v8020
        %v8029 = vsub.f32 %v7987, %v8021
        %v8030 = vmul.f32 %v8022, %v8022
        %v8031 = vmul.f32 %v8023, %v8023
        %v8032 = vmul.f32 %v8024, %v8024
        %v8033 = vmul.f32 %v8025, %v8025
        %v8034 = vmul.f32 %v8026, %v8026
        %v8035 = vmul.f32 %v8027, %v8027
        %v8036 = vmul.f32 %v8028, %v8028
        %v8037 = vmul.f32 %v8029, %v8029
        %v8038 = vsel %vm2796, %v8030, 0.0
        %8039 = vadd.xlane.f32.xlu0 %v8038
        %v8040 = vpop.xlane.xlu0 %8039
        %v8041 = vsel %vm2796, %v8031, 0.0
        %8042 = vadd.xlane.f32.xlu0 %v8041
        %v8043 = vpop.xlane.xlu0 %8042
        %v8044 = vsel %vm2796, %v8032, 0.0
        %8045 = vadd.xlane.f32.xlu0 %v8044
        %v8046 = vpop.xlane.xlu0 %8045
        %v8047 = vsel %vm2796, %v8033, 0.0
        %8048 = vadd.xlane.f32.xlu0 %v8047
        %v8049 = vpop.xlane.xlu0 %8048
        %v8050 = vsel %vm2796, %v8034, 0.0
        %8051 = vadd.xlane.f32.xlu0 %v8050
        %v8052 = vpop.xlane.xlu0 %8051
        %v8053 = vsel %vm2796, %v8035, 0.0
        %8054 = vadd.xlane.f32.xlu0 %v8053
        %v8055 = vpop.xlane.xlu0 %8054
        %v8056 = vsel %vm2796, %v8036, 0.0
        %8057 = vadd.xlane.f32.xlu0 %v8056
        %v8058 = vpop.xlane.xlu0 %8057
        %v8059 = vsel %vm2796, %v8037, 0.0
        %8060 = vadd.xlane.f32.xlu0 %v8059
        %v8061 = vpop.xlane.xlu0 %8060
        %v8062 = vmul.f32 %v8040, %v2827
        %v8063 = vmul.f32 %v8043, %v2827
        %v8064 = vmul.f32 %v8046, %v2827
        %v8065 = vmul.f32 %v8049, %v2827
        %v8066 = vmul.f32 %v8052, %v2827
        %v8067 = vmul.f32 %v8055, %v2827
        %v8068 = vmul.f32 %v8058, %v2827
        %v8069 = vmul.f32 %v8061, %v2827
        %v8070 = vadd.f32 %v8062, 1e-05
        %v8071 = vadd.f32 %v8063, 1e-05
        %v8072 = vadd.f32 %v8064, 1e-05
        %v8073 = vadd.f32 %v8065, 1e-05
        %v8074 = vadd.f32 %v8066, 1e-05
        %v8075 = vadd.f32 %v8067, 1e-05
        %v8076 = vadd.f32 %v8068, 1e-05
        %v8077 = vadd.f32 %v8069, 1e-05
        %v8078 = vrsqrt.pop %v8070
        %v8079 = vmul.f32 %v8078, %v8070
        %v8080 = vmul.f32 %v8079, %v8078
        %v8081 = vmul.f32 0.5, %v8080
        %v8082 = vsub.f32 1.5, %v8081
        %v8083 = vmul.f32 %v8078, %v8082
        %vm8084 = vweird.f32 %v8070
        %vm8085 = vweird.f32 %v8078
        %vm8086 = vmor %vm8084, %vm8085
        %v8087 = vsel %vm8086, %v8078, %v8083
        %v8088 = vrsqrt.pop %v8071
        %v8089 = vmul.f32 %v8088, %v8071
        %v8090 = vmul.f32 %v8089, %v8088
        %v8091 = vmul.f32 0.5, %v8090
        %v8092 = vsub.f32 1.5, %v8091
        %v8093 = vmul.f32 %v8088, %v8092
        %vm8094 = vweird.f32 %v8071
        %vm8095 = vweird.f32 %v8088
        %vm8096 = vmor %vm8094, %vm8095
        %v8097 = vsel %vm8096, %v8088, %v8093
        %v8098 = vrsqrt.pop %v8072
        %v8099 = vmul.f32 %v8098, %v8072
        %v8100 = vmul.f32 %v8099, %v8098
        %v8101 = vmul.f32 0.5, %v8100
        %v8102 = vsub.f32 1.5, %v8101
        %v8103 = vmul.f32 %v8098, %v8102
        %vm8104 = vweird.f32 %v8072
        %vm8105 = vweird.f32 %v8098
        %vm8106 = vmor %vm8104, %vm8105
        %v8107 = vsel %vm8106, %v8098, %v8103
        %v8108 = vrsqrt.pop %v8073
        %v8109 = vmul.f32 %v8108, %v8073
        %v8110 = vmul.f32 %v8109, %v8108
        %v8111 = vmul.f32 0.5, %v8110
        %v8112 = vsub.f32 1.5, %v8111
        %v8113 = vmul.f32 %v8108, %v8112
        %vm8114 = vweird.f32 %v8073
        %vm8115 = vweird.f32 %v8108
        %vm8116 = vmor %vm8114, %vm8115
        %v8117 = vsel %vm8116, %v8108, %v8113
        %v8118 = vrsqrt.pop %v8074
        %v8119 = vmul.f32 %v8118, %v8074
        %v8120 = vmul.f32 %v8119, %v8118
        %v8121 = vmul.f32 0.5, %v8120
        %v8122 = vsub.f32 1.5, %v8121
        %v8123 = vmul.f32 %v8118, %v8122
        %vm8124 = vweird.f32 %v8074
        %vm8125 = vweird.f32 %v8118
        %vm8126 = vmor %vm8124, %vm8125
        %v8127 = vsel %vm8126, %v8118, %v8123
        %v8128 = vrsqrt.pop %v8075
        %v8129 = vmul.f32 %v8128, %v8075
        %v8130 = vmul.f32 %v8129, %v8128
        %v8131 = vmul.f32 0.5, %v8130
        %v8132 = vsub.f32 1.5, %v8131
        %v8133 = vmul.f32 %v8128, %v8132
        %vm8134 = vweird.f32 %v8075
        %vm8135 = vweird.f32 %v8128
        %vm8136 = vmor %vm8134, %vm8135
        %v8137 = vsel %vm8136, %v8128, %v8133
        %v8138 = vrsqrt.pop %v8076
        %v8139 = vmul.f32 %v8138, %v8076
        %v8140 = vmul.f32 %v8139, %v8138
        %v8141 = vmul.f32 0.5, %v8140
        %v8142 = vsub.f32 1.5, %v8141
        %v8143 = vmul.f32 %v8138, %v8142
        %vm8144 = vweird.f32 %v8076
        %vm8145 = vweird.f32 %v8138
        %vm8146 = vmor %vm8144, %vm8145
        %v8147 = vsel %vm8146, %v8138, %v8143
        %v8148 = vrsqrt.pop %v8077
        %v8149 = vmul.f32 %v8148, %v8077
        %v8150 = vmul.f32 %v8149, %v8148
        %v8151 = vmul.f32 0.5, %v8150
        %v8152 = vsub.f32 1.5, %v8151
        %v8153 = vmul.f32 %v8148, %v8152
        %vm8154 = vweird.f32 %v8077
        %vm8155 = vweird.f32 %v8148
        %vm8156 = vmor %vm8154, %vm8155
        %v8157 = vsel %vm8156, %v8148, %v8153
        %v8158 = vmul.f32 %v8022, %v8087
        %v8159 = vmul.f32 %v8023, %v8097
        %v8160 = vmul.f32 %v8024, %v8107
        %v8161 = vmul.f32 %v8025, %v8117
        %v8162 = vmul.f32 %v8026, %v8127
        %v8163 = vmul.f32 %v8027, %v8137
        %v8164 = vmul.f32 %v8028, %v8147
        %v8165 = vmul.f32 %v8029, %v8157
        %v8167 = vperm.slane %v7988, 0
        %v8169 = vmul.f32 %v8158, %v8167
        %v8170 = vmul.f32 %v8159, %v8167
        %v8171 = vmul.f32 %v8160, %v8167
        %v8172 = vmul.f32 %v8161, %v8167
        %v8173 = vmul.f32 %v8162, %v8167
        %v8174 = vmul.f32 %v8163, %v8167
        %v8175 = vmul.f32 %v8164, %v8167
        %v8176 = vmul.f32 %v8165, %v8167
        %v8178 = vperm.slane %v7989, 0
        %v8180 = vadd.f32 %v8169, %v8178
        %v8181 = vadd.f32 %v8170, %v8178
        %v8182 = vadd.f32 %v8171, %v8178
        %v8183 = vadd.f32 %v8172, %v8178
        %v8184 = vadd.f32 %v8173, %v8178
        %v8185 = vadd.f32 %v8174, %v8178
        %v8186 = vadd.f32 %v8175, %v8178
        %v8187 = vadd.f32 %v8176, %v8178
        %v8188 = vpack.c.bf16 %v8181, %v8180
        %v8189 = vpack.c.bf16 %v8183, %v8182
        %v8190 = vpack.c.bf16 %v8185, %v8184
        %v8191 = vpack.c.bf16 %v8187, %v8186
        %v8192 = vld [vmem:[%s18] sm:$0xf]
        %v8193 = vld [vmem:[%s18 + $0x4] sm:$0xf]
        %v8194 = vld [vmem:[%s18 + $0x8] sm:$0xf]
        %v8195 = vld [vmem:[%s18 + $0xc] sm:$0xf]
        %v8196 = vld [vmem:[%s18 + $0x10] sm:$0xf]
        %v8197 = vld [vmem:[%s18 + $0x14] sm:$0xf]
        %v8198 = vld [vmem:[%s18 + $0x18] sm:$0xf]
        %v8199 = vld [vmem:[%s18 + $0x1c] sm:$0xf]
        %v8200 = vld [vmem:[%s19] sm:$0x1]
        %v8202 = vperm.slane %v8200, 0
        %v8212 = vunpack.c.l.b16 %v8192
        %v8213 = vunpack.c.l.b16 %v8193
        %v8214 = vunpack.c.l.b16 %v8194
        %v8215 = vunpack.c.l.b16 %v8195
        %v8216 = vunpack.c.l.b16 %v8196
        %v8217 = vunpack.c.l.b16 %v8197
        %v8218 = vunpack.c.l.b16 %v8198
        %v8219 = vunpack.c.l.b16 %v8199
        %v8220 = vpack.c.b16 %v8213, %v8212
        %v8221 = vpack.c.b16 %v8215, %v8214
        %v8222 = vpack.c.b16 %v8217, %v8216
        %v8223 = vpack.c.b16 %v8219, %v8218
        %v8229 = vsel %vm2796, %v8188, 0
        %v8232 = vsel %vm2796, %v8189, 0
        %v8235 = vsel %vm2796, %v8190, 0
        %v8238 = vsel %vm2796, %v8191, 0
        %8240 = vmatpush.bf16.msra.mxu0 0
        %8241 = vmatpush.bf16.msra.mxu0 0
        %8242 = vmatpush.bf16.msra.mxu0 0
        %8243 = vmatpush.bf16.msra.mxu0 0
        %8244 = vmatpush.bf16.msra.mxu0 %v8223
        %8245 = vmatpush.bf16.msra.mxu0 %v8222
        %8246 = vmatpush.bf16.msra.mxu0 %v8221
        %8247 = vmatpush.bf16.msra.mxu0 %v8220
        %8248 = vmatmul.bf16.gmra.mxu0 %v8229
        %v8249 = vpop.f32.mrf.mxu0
        %v8250 = vadd.f32 %v8202, %v8249
        %v8251 = vpop.f32.mrf.mxu0
        %v8252 = vadd.f32 %v8202, %v8251
        %8253 = vmatmul.bf16.gmra.mxu0 %v8232
        %v8254 = vpop.f32.mrf.mxu0
        %v8255 = vadd.f32 %v8202, %v8254
        %v8256 = vpop.f32.mrf.mxu0
        %v8257 = vadd.f32 %v8202, %v8256
        %8258 = vmatmul.bf16.gmra.mxu0 %v8235
        %v8259 = vpop.f32.mrf.mxu0
        %v8260 = vadd.f32 %v8202, %v8259
        %v8261 = vpop.f32.mrf.mxu0
        %v8262 = vadd.f32 %v8202, %v8261
        %8263 = vmatmul.bf16.gmra.mxu0 %v8238
        %v8264 = vpop.f32.mrf.mxu0
        %v8265 = vadd.f32 %v8202, %v8264
        %v8266 = vpop.f32.mrf.mxu0
        %v8267 = vadd.f32 %v8202, %v8266
        %8268 = vdwg.mxu0
        %v8269 = vmul.f32 %v8250, 0.5
        %v8270 = vmul.f32 %v8252, 0.5
        %v8271 = vmul.f32 %v8255, 0.5
        %v8272 = vmul.f32 %v8257, 0.5
        %v8273 = vmul.f32 %v8260, 0.5
        %v8274 = vmul.f32 %v8262, 0.5
        %v8275 = vmul.f32 %v8265, 0.5
        %v8276 = vmul.f32 %v8267, 0.5
        %v8277 = vmul.f32 %v8250, 0.044715
        %v8278 = vmul.f32 %v8252, 0.044715
        %v8279 = vmul.f32 %v8255, 0.044715
        %v8280 = vmul.f32 %v8257, 0.044715
        %v8281 = vmul.f32 %v8260, 0.044715
        %v8282 = vmul.f32 %v8262, 0.044715
        %v8283 = vmul.f32 %v8265, 0.044715
        %v8284 = vmul.f32 %v8267, 0.044715
        %v8285 = vmul.f32 %v8277, %v8250
        %v8286 = vmul.f32 %v8278, %v8252
        %v8287 = vmul.f32 %v8279, %v8255
        %v8288 = vmul.f32 %v8280, %v8257
        %v8289 = vmul.f32 %v8281, %v8260
        %v8290 = vmul.f32 %v8282, %v8262
        %v8291 = vmul.f32 %v8283, %v8265
        %v8292 = vmul.f32 %v8284, %v8267
        %v8293 = vmul.f32 %v8285, %v8250
        %v8294 = vmul.f32 %v8286, %v8252
        %v8295 = vmul.f32 %v8287, %v8255
        %v8296 = vmul.f32 %v8288, %v8257
        %v8297 = vmul.f32 %v8289, %v8260
        %v8298 = vmul.f32 %v8290, %v8262
        %v8299 = vmul.f32 %v8291, %v8265
        %v8300 = vmul.f32 %v8292, %v8267
        %v8301 = vadd.f32 %v8250, %v8293
        %v8302 = vadd.f32 %v8252, %v8294
        %v8303 = vadd.f32 %v8255, %v8295
        %v8304 = vadd.f32 %v8257, %v8296
        %v8305 = vadd.f32 %v8260, %v8297
        %v8306 = vadd.f32 %v8262, %v8298
        %v8307 = vadd.f32 %v8265, %v8299
        %v8308 = vadd.f32 %v8267, %v8300
        %v8309 = vmul.f32 %v8301, 0.7978846
        %v8310 = vmul.f32 %v8302, 0.7978846
        %v8311 = vmul.f32 %v8303, 0.7978846
        %v8312 = vmul.f32 %v8304, 0.7978846
        %v8313 = vmul.f32 %v8305, 0.7978846
        %v8314 = vmul.f32 %v8306, 0.7978846
        %v8315 = vmul.f32 %v8307, 0.7978846
        %v8316 = vmul.f32 %v8308, 0.7978846
        %v8317 = vtanh.pop %v8309
        %v8318 = vtanh.pop %v8310
        %v8319 = vtanh.pop %v8311
        %v8320 = vtanh.pop %v8312
        %v8321 = vtanh.pop %v8313
        %v8322 = vtanh.pop %v8314
        %v8323 = vtanh.pop %v8315
        %v8324 = vtanh.pop %v8316
        %v8325 = vadd.f32 %v8317, 1.0
        %v8326 = vadd.f32 %v8318, 1.0
        %v8327 = vadd.f32 %v8319, 1.0
        %v8328 = vadd.f32 %v8320, 1.0
        %v8329 = vadd.f32 %v8321, 1.0
        %v8330 = vadd.f32 %v8322, 1.0
        %v8331 = vadd.f32 %v8323, 1.0
        %v8332 = vadd.f32 %v8324, 1.0
        %v8333 = vmul.f32 %v8269, %v8325
        %v8334 = vmul.f32 %v8270, %v8326
        %v8335 = vmul.f32 %v8271, %v8327
        %v8336 = vmul.f32 %v8272, %v8328
        %v8337 = vmul.f32 %v8273, %v8329
        %v8338 = vmul.f32 %v8274, %v8330
        %v8339 = vmul.f32 %v8275, %v8331
        %v8340 = vmul.f32 %v8276, %v8332
        %v8341 = vpack.c.bf16 %v8334, %v8333
        %v8342 = vpack.c.bf16 %v8336, %v8335
        %v8343 = vpack.c.bf16 %v8338, %v8337
        %v8344 = vpack.c.bf16 %v8340, %v8339
        %v8345 = vld [vmem:[%s20] sm:$0xf]
        %v8346 = vld [vmem:[%s20 + $0x4] sm:$0xf]
        %v8347 = vld [vmem:[%s20 + $0x8] sm:$0xf]
        %v8348 = vld [vmem:[%s20 + $0xc] sm:$0xf]
        %v8349 = vld [vmem:[%s20 + $0x10] sm:$0xf]
        %v8350 = vld [vmem:[%s20 + $0x14] sm:$0xf]
        %v8351 = vld [vmem:[%s20 + $0x18] sm:$0xf]
        %v8352 = vld [vmem:[%s20 + $0x1c] sm:$0xf]
        %v8353 = vld [vmem:[%s21] sm:$0x1]
        %v8355 = vperm.slane %v8353, 0
        %v8365 = vunpack.c.l.b16 %v8345
        %v8366 = vunpack.c.l.b16 %v8346
        %v8367 = vunpack.c.l.b16 %v8347
        %v8368 = vunpack.c.l.b16 %v8348
        %v8369 = vunpack.c.l.b16 %v8349
        %v8370 = vunpack.c.l.b16 %v8350
        %v8371 = vunpack.c.l.b16 %v8351
        %v8372 = vunpack.c.l.b16 %v8352
        %v8373 = vpack.c.b16 %v8366, %v8365
        %v8374 = vpack.c.b16 %v8368, %v8367
        %v8375 = vpack.c.b16 %v8370, %v8369
        %v8376 = vpack.c.b16 %v8372, %v8371
        %v8382 = vsel %vm2796, %v8341, 0
        %v8385 = vsel %vm2796, %v8342, 0
        %v8388 = vsel %vm2796, %v8343, 0
        %v8391 = vsel %vm2796, %v8344, 0
        %8393 = vmatpush.bf16.msra.mxu0 0
        %8394 = vmatpush.bf16.msra.mxu0 0
        %8395 = vmatpush.bf16.msra.mxu0 0
        %8396 = vmatpush.bf16.msra.mxu0 0
        %8397 = vmatpush.bf16.msra.mxu0 %v8376
        %8398 = vmatpush.bf16.msra.mxu0 %v8375
        %8399 = vmatpush.bf16.msra.mxu0 %v8374
        %8400 = vmatpush.bf16.msra.mxu0 %v8373
        %8401 = vmatmul.bf16.gmra.mxu0 %v8382
        %v8402 = vpop.f32.mrf.mxu0
        %v8403 = vadd.f32 %v8355, %v8402
        %v8404 = vpop.f32.mrf.mxu0
        %v8405 = vadd.f32 %v8355, %v8404
        %8406 = vmatmul.bf16.gmra.mxu0 %v8385
        %v8407 = vpop.f32.mrf.mxu0
        %v8408 = vadd.f32 %v8355, %v8407
        %v8409 = vpop.f32.mrf.mxu0
        %v8410 = vadd.f32 %v8355, %v8409
        %8411 = vmatmul.bf16.gmra.mxu0 %v8388
        %v8412 = vpop.f32.mrf.mxu0
        %v8413 = vadd.f32 %v8355, %v8412
        %v8414 = vpop.f32.mrf.mxu0
        %v8415 = vadd.f32 %v8355, %v8414
        %8416 = vmatmul.bf16.gmra.mxu0 %v8391
        %v8417 = vpop.f32.mrf.mxu0
        %v8418 = vadd.f32 %v8355, %v8417
        %v8419 = vpop.f32.mrf.mxu0
        %v8420 = vadd.f32 %v8355, %v8419
        %8421 = vdwg.mxu0
        %v8422 = vadd.f32 %v7980, %v8403
        %v8423 = vadd.f32 %v7981, %v8405
        %v8424 = vadd.f32 %v7982, %v8408
        %v8425 = vadd.f32 %v7983, %v8410
        %v8426 = vadd.f32 %v7984, %v8413
        %v8427 = vadd.f32 %v7985, %v8415
        %v8428 = vadd.f32 %v7986, %v8418
        %v8429 = vadd.f32 %v7987, %v8420
        %8430 = vst.msk [vmem:[%s822] sm:$0xff] %vm2796, %v8422
        %8431 = vst.msk [vmem:[%s822 + $0x8] sm:$0xff] %vm2796, %v8423
        %8432 = vst.msk [vmem:[%s822 + $0x10] sm:$0xff] %vm2796, %v8424
        %8433 = vst.msk [vmem:[%s822 + $0x18] sm:$0xff] %vm2796, %v8425
        %8434 = vst.msk [vmem:[%s822 + $0x20] sm:$0xff] %vm2796, %v8426
        %8435 = vst.msk [vmem:[%s822 + $0x28] sm:$0xff] %vm2796, %v8427
        %8436 = vst.msk [vmem:[%s822 + $0x30] sm:$0xff] %vm2796, %v8428
        %8437 = vst.msk [vmem:[%s822 + $0x38] sm:$0xff] %vm2796, %v8429
        %s8438 = smul.u32 8, %s39
        %p8439 = scmp.lt.s32.totalorder %s8438, 15
        %s8440 = scalar_select %p8439, %s8438, 15
        %s8441 = smul.addr %s8440, 8
        %s8442 = scalar_lea.vmem %s22, %s8441
        %s8443 = smul.u32 64, %s39
        %p8444 = scmp.lt.s32.totalorder %s8443, 127
        %s8445 = scalar_select %p8444, %s8443, 127
        %s8446 = smul.addr %s8445, 2
        %s8447 = smul.addr %s8446, 4
        %s8448 = scalar_lea.vmem %s23, %s8447
        %s8449 = smul.u32 64, %s39
        %p8450 = scmp.lt.s32.totalorder %s8449, 127
        %s8451 = scalar_select %p8450, %s8449, 127
        %s8452 = smul.addr %s8451, 2
        %s8453 = smul.addr %s8452, 4
        %s8454 = scalar_lea.vmem %s24, %s8453
        // Predicated region
        $region113: #{tpu_custom_call.1} parent=107 // pred_check
          %p8455 = pneg %p534
        $region114: #{tpu_custom_call.1} parent=107 // pred_check_branch
          %8457 = sbr.rel (%p8455) target = $region116
        $region115: #{tpu_custom_call.1} parent=107 // pred_region
          %s8458 = smul.u32 8, %s39
        $region116: #{tpu_custom_call.1} parent=107 // pred_fallthru
          _
        // Predicated region
        $region117: #{tpu_custom_call.1} parent=107 // pred_check
          %p8459 = pneg %p560
        $region118: #{tpu_custom_call.1} parent=107 // pred_check_branch
          %8461 = sbr.rel (%p8459) target = $region120
        $region119: #{tpu_custom_call.1} parent=107 // pred_region
          %s8462 = smul.u32 64, %s39
        $region120: #{tpu_custom_call.1} parent=107 // pred_fallthru
          _
        // Predicated region
        $region121: #{tpu_custom_call.1} parent=107 // pred_check
          %p8463 = pneg %p586
        $region122: #{tpu_custom_call.1} parent=107 // pred_check_branch
          %8465 = sbr.rel (%p8463) target = $region124
        $region123: #{tpu_custom_call.1} parent=107 // pred_region
          %s8466 = smul.u32 64, %s39
        $region124: #{tpu_custom_call.1} parent=107 // pred_fallthru
          _
      $region108: #{tpu_custom_call.1} parent=5 // pred_fallthru
        _
      %p8467 = scmp.le.s32.totalorder 2, %s34
      // Predicated region
      $region125: #{tpu_custom_call.1} parent=5 // pred_check
        %p8468 = pneg %p8467
      $region126: #{tpu_custom_call.1} parent=5 // pred_check_branch
        %8470 = sbr.rel (%p8468) target = $region128
      $region127: #{tpu_custom_call.1} parent=5 // pred_region
        %s8471 = ssub.s32 %s34, 2
        // Predicated region
        $region129: #{tpu_custom_call.1} parent=127 // pred_check
          %p8472 = pneg %p540
        $region130: #{tpu_custom_call.1} parent=127 // pred_check_branch
          %8474 = sbr.rel (%p8472) target = $region132
        $region131: #{tpu_custom_call.1} parent=127 // pred_region
          %s8475 = smul.u32 8, %s40
          %p8476 = scmp.lt.s32.totalorder %s8475, 15
          %s8477 = scalar_select %p8476, %s8475, 15
          %s8478 = smul.addr %s8477, 8
          %s8479 = scalar_lea.vmem %s22, %s8478
        $region132: #{tpu_custom_call.1} parent=127 // pred_fallthru
          _
        // Predicated region
        $region133: #{tpu_custom_call.1} parent=127 // pred_check
          %p8480 = pneg %p566
        $region134: #{tpu_custom_call.1} parent=127 // pred_check_branch
          %8482 = sbr.rel (%p8480) target = $region136
        $region135: #{tpu_custom_call.1} parent=127 // pred_region
          %s8483 = smul.u32 64, %s40
          %p8484 = scmp.lt.s32.totalorder %s8483, 127
          %s8485 = scalar_select %p8484, %s8483, 127
          %s8486 = smul.addr %s8485, 2
          %s8487 = smul.addr %s8486, 4
          %s8488 = scalar_lea.vmem %s23, %s8487
        $region136: #{tpu_custom_call.1} parent=127 // pred_fallthru
          _
        // Predicated region
        $region137: #{tpu_custom_call.1} parent=127 // pred_check
          %p8489 = pneg %p592
        $region138: #{tpu_custom_call.1} parent=127 // pred_check_branch
          %8491 = sbr.rel (%p8489) target = $region140
        $region139: #{tpu_custom_call.1} parent=127 // pred_region
          %s8492 = smul.u32 64, %s40
          %p8493 = scmp.lt.s32.totalorder %s8492, 127
          %s8494 = scalar_select %p8493, %s8492, 127
          %s8495 = smul.addr %s8494, 2
          %s8496 = smul.addr %s8495, 4
          %s8497 = scalar_lea.vmem %s24, %s8496
        $region140: #{tpu_custom_call.1} parent=127 // pred_fallthru
          _
      $region128: #{tpu_custom_call.1} parent=5 // pred_fallthru
        _
    $region6: #{tpu_custom_call.1} parent=1 // loop_footer
      %s38 = sadd.s32 1, %s34
    $region7: #{tpu_custom_call.1} parent=1 // loop_footer_branch
      %33 = sbr.rel target = $region3
    $region8: #{tpu_custom_call.1} parent=1 // loop_exit
      _
    %8498 = vsyncpa [#allocation3], 1
    %s8499 = scalar_lea.sflag [#allocation3], 1
    %8500 = vsyncpa %s8499, 1

</llo_original>
